<compile_context>
chip_gen: v5e
topology: v5e:2x2
jax: 0.10.0
libtpu: 0.0.40
codegen_flags: <defaults>
</compile_context>

<pallas_src>
import functools
import math

import jax
import jax.numpy as jnp
from jax.experimental import pallas as pl
from jax.experimental.pallas import tpu as pltpu


def _cab_kernel(xp_ref, w1_ref, wmh_ref, wd1_ref, wd2_ref, attn_ref, alpha_ref,
                o_ref, rhs_ref, pad_ref, w2_ref, *, H, W, S):
    # xp_ref  : (1, C, Lp)    zero-padded input image, flattened with row stride W+2
    # w1_ref  : (C, 9C)       conv1 weights, column (ky*3+kx)*C + i = W1[o, i, ky, kx]
    # wmh_ref : (nh, C, 9C)   per-head DA conv weights (constant block, DMA'd once)
    # wd1_ref : (Cr, C)  wd2_ref : (C, Cr)   CALayer squeeze/excite 1x1 convs
    # attn_ref: (B, nh) SMEM  softmax head gates
    # alpha_ref: (1,)   SMEM  PReLU slope
    # o_ref   : (1, C, N)     output slab in padded-row-stride layout (wrapper slices)
    # rhs_ref : (9C, N)       im2col scratch (reused by both convs)
    # pad_ref : (C, Lp2)      lane-aligned re-padded conv1 output
    # w2_ref  : (C, 9C)       per-batch head-folded conv2 weight
    b = pl.program_id(0)
    Wp = W + 2
    N = H * Wp
    HW = H * W
    C = w1_ref.shape[0]
    nh = wmh_ref.shape[0]

    # One-row junk-column mask (columns w >= W of every stride-(W+2) row).
    col = jax.lax.broadcasted_iota(jnp.int32, (1, N), 1) % Wp
    valid = col < W

    # ---- conv1: 3x3, padding=1, no bias -> single im2col matmul ---------------
    for k in range(9):
        off = (k // 3) * Wp + (k % 3)
        rhs_ref[k * C:(k + 1) * C, :] = xp_ref[0, :, off:off + N]
    acc = jnp.dot(w1_ref[...], rhs_ref[...], preferred_element_type=jnp.float32)

    # ---- act1: PReLU; zero junk columns so they act as conv2's zero padding ---
    alpha = alpha_ref[0]
    acc = jnp.where(acc >= 0.0, acc, alpha * acc)
    acc = jnp.where(valid, acc, 0.0)

    # ---- rebuild a zero-padded image for conv2 inside VMEM --------------------
    # Only the border bands the conv2 windows read ([S-Wp-1, S) and [S+N, S+N+Wp+1))
    # need zeros; the interior [S, S+N) is fully overwritten each step.
    zband = jnp.zeros((C, Wp + 1), jnp.float32)
    pad_ref[:, S - (Wp + 1):S] = zband
    pad_ref[:, S + N:S + N + (Wp + 1)] = zband
    pad_ref[:, S:S + N] = acc                       # lane-aligned interior store

    # ---- fold DA head gating into the conv2 weight (nh scaled adds) -----------
    w2 = attn_ref[b, 0] * wmh_ref[0]
    for h in range(1, nh):
        w2 = w2 + attn_ref[b, h] * wmh_ref[h]
    w2_ref[...] = w2

    # ---- DA conv: 3x3 conv with the folded weight -> single im2col matmul -----
    base = S - Wp - 1
    for k in range(9):
        off = base + (k // 3) * Wp + (k % 3)
        rhs_ref[k * C:(k + 1) * C, :] = pad_ref[:, off:off + N]
    acc2 = jnp.dot(w2_ref[...], rhs_ref[...], preferred_element_type=jnp.float32)

    # ---- CA: global average pool + 1x1 squeeze/excite + sigmoid gate ----------
    pooled = jnp.sum(jnp.where(valid, acc2, 0.0), axis=1, keepdims=True)
    pooled = pooled * (1.0 / HW)                                         # (C, 1)
    hid = jnp.maximum(
        jnp.dot(wd1_ref[...], pooled, preferred_element_type=jnp.float32), 0.0)
    gate = jax.nn.sigmoid(
        jnp.dot(wd2_ref[...], hid, preferred_element_type=jnp.float32))  # (C, 1)

    # ---- scale + residual add (padded layout; junk cols dropped in wrapper) ---
    x_res = xp_ref[0, :, Wp + 1:Wp + 1 + N]
    o_ref[0] = (acc2 * gate + x_res).astype(o_ref.dtype)


def cab_forward(x, index_emb, params):
    """CAB forward pass. x: (B, C, H, W) f32, index_emb: (B, type_emb_dim)."""
    w1 = params['conv1']            # (C, C, 3, 3)
    alpha = params['prelu_alpha']   # scalar
    w_mh = params['da_conv_mh']     # (nh*C, C, 3, 3)
    ws1 = params['da_sig_w1']       # (T//4, T)
    ws2 = params['da_sig_w2']       # (nh, T//4)
    wd1 = params['ca_w1']           # (C//red, C)
    wd2 = params['ca_w2']           # (C, C//red)

    B, C, H, W = x.shape
    nh = ws2.shape[0]
    Cr = wd1.shape[0]
    Wp = W + 2
    N = H * Wp
    Lp = (H + 3) * Wp               # padded + flattened input length

    # Lane-aligned interior start of the conv1->conv2 handoff scratch.
    S = ((Wp + 1 + 127) // 128) * 128
    Lp2 = ((S + N + Wp + 1 + 127) // 128) * 128

    # Zero-pad spatially and flatten with row stride W+2 (replaces the implicit
    # padding of BOTH 3x3 convs; the only layout op in the wrapper besides the
    # final junk-column slice).
    xp = jnp.pad(x, ((0, 0), (0, 0), (1, 2), (1, 1))).reshape(B, C, Lp)

    # conv1 weight -> (C, 9C); column order (ky*3+kx)*C + i matches the im2col rows.
    w1r = jnp.transpose(w1, (0, 2, 3, 1)).reshape(C, 9 * C)
    # DA multi-head conv weights -> (nh, C, 9C) constant block (folded in-kernel).
    wmhr = jnp.transpose(w_mh.reshape(nh, C, C, 3, 3),
                         (0, 1, 3, 4, 2)).reshape(nh, C, 9 * C)

    # DA gating (tiny parameter-space MLP + softmax) -> (B, nh), rides in SMEM.
    hgate = jnp.maximum(index_emb @ ws1.T, 0.0)
    attn = jax.nn.softmax(hgate @ ws2.T, axis=-1).astype(jnp.float32)

    alpha_arr = jnp.reshape(jnp.asarray(alpha, dtype=jnp.float32), (1,))

    kernel = functools.partial(_cab_kernel, H=H, W=W, S=S)

    out_pad = pl.pallas_call(
        kernel,
        out_shape=jax.ShapeDtypeStruct((B, C, N), x.dtype),
        grid_spec=pltpu.PrefetchScalarGridSpec(
            num_scalar_prefetch=0,
            grid=(B,),
            in_specs=[
                pl.BlockSpec((1, C, Lp), lambda b: (b, 0, 0)),          # padded x
                pl.BlockSpec((C, 9 * C), lambda b: (0, 0)),             # conv1 weight
                pl.BlockSpec((nh, C, 9 * C), lambda b: (0, 0, 0)),      # DA head weights
                pl.BlockSpec((Cr, C), lambda b: (0, 0)),                # CA wd1
                pl.BlockSpec((C, Cr), lambda b: (0, 0)),                # CA wd2
                pl.BlockSpec(memory_space=pltpu.MemorySpace.SMEM),      # attn (B, nh)
                pl.BlockSpec(memory_space=pltpu.MemorySpace.SMEM),      # PReLU alpha
            ],
            out_specs=pl.BlockSpec((1, C, N), lambda b: (b, 0, 0)),
            scratch_shapes=[
                pltpu.VMEM((9 * C, N), jnp.float32),   # im2col RHS (shared by both convs)
                pltpu.VMEM((C, Lp2), jnp.float32),     # lane-aligned re-padded conv1 output
                pltpu.VMEM((C, 9 * C), jnp.float32),   # per-batch folded conv2 weight
            ]),
        compiler_params=pltpu.CompilerParams(
            dimension_semantics=("parallel",)),
    )(xp, w1r, wmhr, wd1, wd2, attn, alpha_arr)

    # Drop the 2 junk columns of each stride-(W+2) row with a cheap XLA slice.
    return out_pad.reshape(B, C, H, Wp)[:, :, :, :W]


# ----------------------------- pure-JAX reference -----------------------------
def _conv3x3(x, w):
    return jax.lax.conv_general_dilated(
        x, w, window_strides=(1, 1), padding=((1, 1), (1, 1)),
        dimension_numbers=('NCHW', 'OIHW', 'NCHW'))


def _reference(x, index_emb, params):
    w1, alpha = params['conv1'], params['prelu_alpha']
    w_mh, ws1, ws2 = params['da_conv_mh'], params['da_sig_w1'], params['da_sig_w2']
    wd1, wd2 = params['ca_w1'], params['ca_w2']
    B, C, H, W = x.shape
    nh = ws2.shape[0]

    res = _conv3x3(x, w1)
    res = jnp.where(res >= 0.0, res, alpha * res)                    # PReLU

    y = _conv3x3(res, w_mh)                                          # (B, nh*C, H, W)
    hgate = jnp.maximum(index_emb @ ws1.T, 0.0)
    attn = jax.nn.softmax(hgate @ ws2.T, axis=-1)                    # (B, nh)
    res = jnp.sum(y.reshape(B, nh, C, H, W)
                  * attn[:, :, None, None, None], axis=1)            # DALayer

    pooled = res.mean(axis=(2, 3))                                   # (B, C)
    gate = jax.nn.sigmoid(jnp.maximum(pooled @ wd1.T, 0.0) @ wd2.T)  # conv_du
    res = res * gate[:, :, None, None]                               # CALayer
    return res + x


if __name__ == "__main__":
    # CAB(n_feat=64, kernel_size=3, reduction=4, bias=False, act=nn.PReLU(),
    #     type_emb_dim=8, degrade_num=3)
    B, C, H, W = 2, 64, 16, 16
    reduction = 4
    T = 8                   # type_emb_dim
    nh = 3                  # degrade_num (DA heads)
    Cr = C // reduction
    Th = T // 4             # DALayer internal reduction = 4 (default)

    key = jax.random.PRNGKey(0)
    ks = jax.random.split(key, 8)

    def u(k, shape, fan_in):
        b = 1.0 / math.sqrt(fan_in)
        return jax.random.uniform(k, shape, minval=-b, maxval=b, dtype=jnp.float32)

    x = jax.random.normal(ks[0], (B, C, H, W), dtype=jnp.float32)
    index_emb = jax.random.normal(ks[1], (B, T), dtype=jnp.float32)

    params = {
        'conv1': u(ks[2], (C, C, 3, 3), C * 9),
        'prelu_alpha': jnp.float32(0.25),              # act1 = nn.PReLU()
        'da_conv_mh': u(ks[3], (nh * C, C, 3, 3), C * 9),
        'da_sig_w1': u(ks[4], (Th, T), T),
        'da_sig_w2': u(ks[5], (nh, Th), Th),
        'ca_w1': u(ks[6], (Cr, C), C),
        'ca_w2': u(ks[7], (C, Cr), Cr),
    }

    out = jax.block_until_ready(cab_forward(x, index_emb, params))
    ref = _reference(x, index_emb, params)

    assert out.shape == (B, C, H, W), out.shape
    max_err = float(jnp.max(jnp.abs(out - ref)))
    assert jnp.allclose(out, ref, atol=1e-4, rtol=1e-4), max_err

    print("KERNEL_OK")
</pallas_src>

<mosaic_0001>
module attributes {stable_mosaic.version = 11 : i64} {
  func.func @_cab_kernel(%arg0: i32, %arg1: memref<1x64x342xf32, #tpu.memory_space<vmem>>, %arg2: memref<64x576xf32, #tpu.memory_space<vmem>>, %arg3: memref<3x64x576xf32, #tpu.memory_space<vmem>>, %arg4: memref<16x64xf32, #tpu.memory_space<vmem>>, %arg5: memref<64x16xf32, #tpu.memory_space<vmem>>, %arg6: memref<2x3xf32, #tpu.memory_space<smem>>, %arg7: memref<1xf32, #tpu.memory_space<smem>>, %arg8: memref<1x64x288xf32, #tpu.memory_space<vmem>>, %arg9: memref<576x288xf32, #tpu.memory_space<vmem>>, %arg10: memref<64x512xf32, #tpu.memory_space<vmem>>, %arg11: memref<64x576xf32, #tpu.memory_space<vmem>>) attributes {dimension_semantics = [#tpu.dimension_semantics<parallel>], iteration_bounds = array<i64: 2>, scalar_prefetch = 0 : i64, scratch_operands = 3 : i64, tpu.core_type = #tpu.core_type<tc>, window_params = [{transform_indices = @transform_0, window_bounds = array<i64: 1, 64, 342>}, {pipeline_mode = #tpu.pipeline_mode<synchronous>, transform_indices = @transform_1, window_bounds = array<i64: 64, 576>}, {pipeline_mode = #tpu.pipeline_mode<synchronous>, transform_indices = @transform_2, window_bounds = array<i64: 3, 64, 576>}, {pipeline_mode = #tpu.pipeline_mode<synchronous>, transform_indices = @transform_3, window_bounds = array<i64: 16, 64>}, {pipeline_mode = #tpu.pipeline_mode<synchronous>, transform_indices = @transform_4, window_bounds = array<i64: 64, 16>}, {transform_indices = @transform_5, window_bounds = array<i64: 2, 3>}, {transform_indices = @transform_6, window_bounds = array<i64: 1>}, {transform_indices = @transform_7, window_bounds = array<i64: 1, 64, 288>}]} {
    %0 = tpu.iota {dimensions = array<i32: 1>} : vector<1x288xi32>
    %c18_i32 = arith.constant 18 : i32
    %c0_i32 = arith.constant 0 : i32
    %1 = arith.cmpi eq, %c18_i32, %c0_i32 : i32
    %c1_i32 = arith.constant 1 : i32
    %2 = arith.select %1, %c1_i32, %c18_i32 : i32
    %3 = vector.broadcast %2 : i32 to vector<1x288xi32>
    %4 = arith.remsi %0, %3 : vector<1x288xi32>
    %c0_i32_0 = arith.constant 0 : i32
    %5 = vector.broadcast %c0_i32_0 : i32 to vector<1x288xi32>
    %6 = arith.cmpi ne, %4, %5 : vector<1x288xi32>
    %c0_i32_1 = arith.constant 0 : i32
    %7 = vector.broadcast %c0_i32_1 : i32 to vector<1x288xi32>
    %8 = arith.cmpi slt, %4, %7 : vector<1x288xi32>
    %c0_i32_2 = arith.constant 0 : i32
    %9 = arith.cmpi slt, %2, %c0_i32_2 : i32
    %10 = vector.broadcast %9 : i1 to vector<1x288xi1>
    %11 = vector.broadcast %10 : vector<1x288xi1> to vector<1x288xi1>
    %12 = arith.xori %8, %11 : vector<1x288xi1>
    %13 = arith.andi %12, %6 : vector<1x288xi1>
    %14 = vector.broadcast %2 : i32 to vector<1x288xi32>
    %15 = arith.addi %4, %14 : vector<1x288xi32>
    %16 = arith.select %13, %15, %4 : vector<1x288xi1>, vector<1x288xi32>
    %c16_i32 = arith.constant 16 : i32
    %17 = vector.broadcast %c16_i32 : i32 to vector<1x288xi32>
    %18 = arith.cmpi slt, %16, %17 : vector<1x288xi32>
    %c0 = arith.constant 0 : index
    %c0_3 = arith.constant 0 : index
    %c0_4 = arith.constant 0 : index
    %19 = vector.load %arg1[%c0, %c0_3, %c0_4] : memref<1x64x342xf32, #tpu.memory_space<vmem>>, vector<1x64x288xf32>
    %20 = vector.shape_cast %19 : vector<1x64x288xf32> to vector<64x288xf32>
    %c0_5 = arith.constant 0 : index
    %c0_6 = arith.constant 0 : index
    %21 = vector.load %arg9[%c0_5, %c0_6] : memref<576x288xf32, #tpu.memory_space<vmem>>, vector<64x288xf32>
    tpu.vector_store %arg9[%c0_5, %c0_6], %20 {strides = array<i32>} : memref<576x288xf32, #tpu.memory_space<vmem>>, vector<64x288xf32>,
    %c0_7 = arith.constant 0 : index
    %c0_8 = arith.constant 0 : index
    %c1 = arith.constant 1 : index
    %22 = vector.load %arg1[%c0_7, %c0_8, %c1] : memref<1x64x342xf32, #tpu.memory_space<vmem>>, vector<1x64x288xf32>
    %23 = vector.shape_cast %22 : vector<1x64x288xf32> to vector<64x288xf32>
    %c64 = arith.constant 64 : index
    %c0_9 = arith.constant 0 : index
    %24 = vector.load %arg9[%c64, %c0_9] : memref<576x288xf32, #tpu.memory_space<vmem>>, vector<64x288xf32>
    tpu.vector_store %arg9[%c64, %c0_9], %23 {strides = array<i32>} : memref<576x288xf32, #tpu.memory_space<vmem>>, vector<64x288xf32>,
    %c0_10 = arith.constant 0 : index
    %c0_11 = arith.constant 0 : index
    %c2 = arith.constant 2 : index
    %25 = vector.load %arg1[%c0_10, %c0_11, %c2] : memref<1x64x342xf32, #tpu.memory_space<vmem>>, vector<1x64x288xf32>
    %26 = vector.shape_cast %25 : vector<1x64x288xf32> to vector<64x288xf32>
    %c128 = arith.constant 128 : index
    %c0_12 = arith.constant 0 : index
    %27 = vector.load %arg9[%c128, %c0_12] : memref<576x288xf32, #tpu.memory_space<vmem>>, vector<64x288xf32>
    tpu.vector_store %arg9[%c128, %c0_12], %26 {strides = array<i32>} : memref<576x288xf32, #tpu.memory_space<vmem>>, vector<64x288xf32>,
    %c0_13 = arith.constant 0 : index
    %c0_14 = arith.constant 0 : index
    %c18 = arith.constant 18 : index
    %28 = vector.load %arg1[%c0_13, %c0_14, %c18] : memref<1x64x342xf32, #tpu.memory_space<vmem>>, vector<1x64x288xf32>
    %29 = vector.shape_cast %28 : vector<1x64x288xf32> to vector<64x288xf32>
    %c192 = arith.constant 192 : index
    %c0_15 = arith.constant 0 : index
    %30 = vector.load %arg9[%c192, %c0_15] : memref<576x288xf32, #tpu.memory_space<vmem>>, vector<64x288xf32>
    tpu.vector_store %arg9[%c192, %c0_15], %29 {strides = array<i32>} : memref<576x288xf32, #tpu.memory_space<vmem>>, vector<64x288xf32>,
    %c0_16 = arith.constant 0 : index
    %c0_17 = arith.constant 0 : index
    %c19 = arith.constant 19 : index
    %31 = vector.load %arg1[%c0_16, %c0_17, %c19] : memref<1x64x342xf32, #tpu.memory_space<vmem>>, vector<1x64x288xf32>
    %32 = vector.shape_cast %31 : vector<1x64x288xf32> to vector<64x288xf32>
    %c256 = arith.constant 256 : index
    %c0_18 = arith.constant 0 : index
    %33 = vector.load %arg9[%c256, %c0_18] : memref<576x288xf32, #tpu.memory_space<vmem>>, vector<64x288xf32>
    tpu.vector_store %arg9[%c256, %c0_18], %32 {strides = array<i32>} : memref<576x288xf32, #tpu.memory_space<vmem>>, vector<64x288xf32>,
    %c0_19 = arith.constant 0 : index
    %c0_20 = arith.constant 0 : index
    %c20 = arith.constant 20 : index
    %34 = vector.load %arg1[%c0_19, %c0_20, %c20] : memref<1x64x342xf32, #tpu.memory_space<vmem>>, vector<1x64x288xf32>
    %35 = vector.shape_cast %34 : vector<1x64x288xf32> to vector<64x288xf32>
    %c320 = arith.constant 320 : index
    %c0_21 = arith.constant 0 : index
    %36 = vector.load %arg9[%c320, %c0_21] : memref<576x288xf32, #tpu.memory_space<vmem>>, vector<64x288xf32>
    tpu.vector_store %arg9[%c320, %c0_21], %35 {strides = array<i32>} : memref<576x288xf32, #tpu.memory_space<vmem>>, vector<64x288xf32>,
    %c0_22 = arith.constant 0 : index
    %c0_23 = arith.constant 0 : index
    %c36 = arith.constant 36 : index
    %37 = vector.load %arg1[%c0_22, %c0_23, %c36] : memref<1x64x342xf32, #tpu.memory_space<vmem>>, vector<1x64x288xf32>
    %38 = vector.shape_cast %37 : vector<1x64x288xf32> to vector<64x288xf32>
    %c384 = arith.constant 384 : index
    %c0_24 = arith.constant 0 : index
    %39 = vector.load %arg9[%c384, %c0_24] : memref<576x288xf32, #tpu.memory_space<vmem>>, vector<64x288xf32>
    tpu.vector_store %arg9[%c384, %c0_24], %38 {strides = array<i32>} : memref<576x288xf32, #tpu.memory_space<vmem>>, vector<64x288xf32>,
    %c0_25 = arith.constant 0 : index
    %c0_26 = arith.constant 0 : index
    %c37 = arith.constant 37 : index
    %40 = vector.load %arg1[%c0_25, %c0_26, %c37] : memref<1x64x342xf32, #tpu.memory_space<vmem>>, vector<1x64x288xf32>
    %41 = vector.shape_cast %40 : vector<1x64x288xf32> to vector<64x288xf32>
    %c448 = arith.constant 448 : index
    %c0_27 = arith.constant 0 : index
    %42 = vector.load %arg9[%c448, %c0_27] : memref<576x288xf32, #tpu.memory_space<vmem>>, vector<64x288xf32>
    tpu.vector_store %arg9[%c448, %c0_27], %41 {strides = array<i32>} : memref<576x288xf32, #tpu.memory_space<vmem>>, vector<64x288xf32>,
    %c0_28 = arith.constant 0 : index
    %c0_29 = arith.constant 0 : index
    %c38 = arith.constant 38 : index
    %43 = vector.load %arg1[%c0_28, %c0_29, %c38] : memref<1x64x342xf32, #tpu.memory_space<vmem>>, vector<1x64x288xf32>
    %44 = vector.shape_cast %43 : vector<1x64x288xf32> to vector<64x288xf32>
    %c512 = arith.constant 512 : index
    %c0_30 = arith.constant 0 : index
    %45 = vector.load %arg9[%c512, %c0_30] : memref<576x288xf32, #tpu.memory_space<vmem>>, vector<64x288xf32>
    tpu.vector_store %arg9[%c512, %c0_30], %44 {strides = array<i32>} : memref<576x288xf32, #tpu.memory_space<vmem>>, vector<64x288xf32>,
    %c0_31 = arith.constant 0 : index
    %c0_32 = arith.constant 0 : index
    %46 = vector.load %arg2[%c0_31, %c0_32] : memref<64x576xf32, #tpu.memory_space<vmem>>, vector<64x576xf32>
    %c0_33 = arith.constant 0 : index
    %c0_34 = arith.constant 0 : index
    %47 = vector.load %arg9[%c0_33, %c0_34] : memref<576x288xf32, #tpu.memory_space<vmem>>, vector<576x288xf32>
    %cst = arith.constant dense<0.000000e+00> : vector<64x288xf32>
    %48 = tpu.matmul %46, %47, %cst {dimension_numbers = #tpu.dot_dimension_numbers<[1], [0], [0], [1], [0, 0, 1, 1], [], []>} : vector<64x576xf32>, vector<576x288xf32>, vector<64x288xf32> -> vector<64x288xf32>
    %c0_35 = arith.constant 0 : index
    %49 = memref.load %arg7[%c0_35] : memref<1xf32, #tpu.memory_space<smem>>
    %cst_36 = arith.constant 0.000000e+00 : f32
    %50 = vector.broadcast %cst_36 : f32 to vector<64x288xf32>
    %51 = arith.cmpf oge, %48, %50 : vector<64x288xf32>
    %52 = vector.broadcast %49 : f32 to vector<64x288xf32>
    %53 = arith.mulf %52, %48 : vector<64x288xf32>
    %54 = arith.select %51, %48, %53 : vector<64x288xi1>, vector<64x288xf32>
    %cst_37 = arith.constant 0.000000e+00 : f32
    %55 = vector.shape_cast %18 : vector<1x288xi1> to vector<1x288xi1>
    %56 = vector.broadcast %55 : vector<1x288xi1> to vector<64x288xi1>
    %57 = vector.broadcast %cst_37 : f32 to vector<64x288xf32>
    %58 = arith.select %56, %54, %57 : vector<64x288xi1>, vector<64x288xf32>
    %cst_38 = arith.constant 0.000000e+00 : f32
    %59 = vector.broadcast %cst_38 : f32 to vector<64x19xf32>
    %c0_39 = arith.constant 0 : index
    %c109 = arith.constant 109 : index
    %60 = vector.load %arg10[%c0_39, %c109] : memref<64x512xf32, #tpu.memory_space<vmem>>, vector<64x19xf32>
    tpu.vector_store %arg10[%c0_39, %c109], %59 {strides = array<i32>} : memref<64x512xf32, #tpu.memory_space<vmem>>, vector<64x19xf32>,
    %c0_40 = arith.constant 0 : index
    %c416 = arith.constant 416 : index
    %61 = vector.load %arg10[%c0_40, %c416] : memref<64x512xf32, #tpu.memory_space<vmem>>, vector<64x19xf32>
    tpu.vector_store %arg10[%c0_40, %c416], %59 {strides = array<i32>} : memref<64x512xf32, #tpu.memory_space<vmem>>, vector<64x19xf32>,
    %c0_41 = arith.constant 0 : index
    %c128_42 = arith.constant 128 : index
    %62 = vector.load %arg10[%c0_41, %c128_42] : memref<64x512xf32, #tpu.memory_space<vmem>>, vector<64x288xf32>
    tpu.vector_store %arg10[%c0_41, %c128_42], %58 {strides = array<i32>} : memref<64x512xf32, #tpu.memory_space<vmem>>, vector<64x288xf32>,
    %63 = arith.index_cast %arg0 : i32 to index
    %c0_43 = arith.constant 0 : index
    %64 = memref.load %arg6[%63, %c0_43] : memref<2x3xf32, #tpu.memory_space<smem>>
    %c0_44 = arith.constant 0 : index
    %c0_45 = arith.constant 0 : index
    %c0_46 = arith.constant 0 : index
    %65 = vector.load %arg3[%c0_44, %c0_45, %c0_46] : memref<3x64x576xf32, #tpu.memory_space<vmem>>, vector<1x64x576xf32>
    %66 = vector.shape_cast %65 : vector<1x64x576xf32> to vector<64x576xf32>
    %67 = vector.broadcast %64 : f32 to vector<64x576xf32>
    %68 = arith.mulf %67, %66 : vector<64x576xf32>
    %69 = arith.index_cast %arg0 : i32 to index
    %c1_47 = arith.constant 1 : index
    %70 = memref.load %arg6[%69, %c1_47] : memref<2x3xf32, #tpu.memory_space<smem>>
    %c1_48 = arith.constant 1 : index
    %c0_49 = arith.constant 0 : index
    %c0_50 = arith.constant 0 : index
    %71 = vector.load %arg3[%c1_48, %c0_49, %c0_50] : memref<3x64x576xf32, #tpu.memory_space<vmem>>, vector<1x64x576xf32>
    %72 = vector.shape_cast %71 : vector<1x64x576xf32> to vector<64x576xf32>
    %73 = vector.broadcast %70 : f32 to vector<64x576xf32>
    %74 = arith.mulf %73, %72 : vector<64x576xf32>
    %75 = arith.addf %68, %74 : vector<64x576xf32>
    %76 = arith.index_cast %arg0 : i32 to index
    %c2_51 = arith.constant 2 : index
    %77 = memref.load %arg6[%76, %c2_51] : memref<2x3xf32, #tpu.memory_space<smem>>
    %c2_52 = arith.constant 2 : index
    %c0_53 = arith.constant 0 : index
    %c0_54 = arith.constant 0 : index
    %78 = vector.load %arg3[%c2_52, %c0_53, %c0_54] : memref<3x64x576xf32, #tpu.memory_space<vmem>>, vector<1x64x576xf32>
    %79 = vector.shape_cast %78 : vector<1x64x576xf32> to vector<64x576xf32>
    %80 = vector.broadcast %77 : f32 to vector<64x576xf32>
    %81 = arith.mulf %80, %79 : vector<64x576xf32>
    %82 = arith.addf %75, %81 : vector<64x576xf32>
    %c0_55 = arith.constant 0 : index
    %c0_56 = arith.constant 0 : index
    %83 = vector.load %arg11[%c0_55, %c0_56] : memref<64x576xf32, #tpu.memory_space<vmem>>, vector<64x576xf32>
    tpu.vector_store %arg11[%c0_55, %c0_56], %82 {strides = array<i32>} : memref<64x576xf32, #tpu.memory_space<vmem>>, vector<64x576xf32>,
    %c0_57 = arith.constant 0 : index
    %c109_58 = arith.constant 109 : index
    %84 = vector.load %arg10[%c0_57, %c109_58] : memref<64x512xf32, #tpu.memory_space<vmem>>, vector<64x288xf32>
    %c0_59 = arith.constant 0 : index
    %c0_60 = arith.constant 0 : index
    %85 = vector.load %arg9[%c0_59, %c0_60] : memref<576x288xf32, #tpu.memory_space<vmem>>, vector<64x288xf32>
    tpu.vector_store %arg9[%c0_59, %c0_60], %84 {strides = array<i32>} : memref<576x288xf32, #tpu.memory_space<vmem>>, vector<64x288xf32>,
    %c0_61 = arith.constant 0 : index
    %c110 = arith.constant 110 : index
    %86 = vector.load %arg10[%c0_61, %c110] : memref<64x512xf32, #tpu.memory_space<vmem>>, vector<64x288xf32>
    %c64_62 = arith.constant 64 : index
    %c0_63 = arith.constant 0 : index
    %87 = vector.load %arg9[%c64_62, %c0_63] : memref<576x288xf32, #tpu.memory_space<vmem>>, vector<64x288xf32>
    tpu.vector_store %arg9[%c64_62, %c0_63], %86 {strides = array<i32>} : memref<576x288xf32, #tpu.memory_space<vmem>>, vector<64x288xf32>,
    %c0_64 = arith.constant 0 : index
    %c111 = arith.constant 111 : index
    %88 = vector.load %arg10[%c0_64, %c111] : memref<64x512xf32, #tpu.memory_space<vmem>>, vector<64x288xf32>
    %c128_65 = arith.constant 128 : index
    %c0_66 = arith.constant 0 : index
    %89 = vector.load %arg9[%c128_65, %c0_66] : memref<576x288xf32, #tpu.memory_space<vmem>>, vector<64x288xf32>
    tpu.vector_store %arg9[%c128_65, %c0_66], %88 {strides = array<i32>} : memref<576x288xf32, #tpu.memory_space<vmem>>, vector<64x288xf32>,
    %c0_67 = arith.constant 0 : index
    %c127 = arith.constant 127 : index
    %90 = vector.load %arg10[%c0_67, %c127] : memref<64x512xf32, #tpu.memory_space<vmem>>, vector<64x288xf32>
    %c192_68 = arith.constant 192 : index
    %c0_69 = arith.constant 0 : index
    %91 = vector.load %arg9[%c192_68, %c0_69] : memref<576x288xf32, #tpu.memory_space<vmem>>, vector<64x288xf32>
    tpu.vector_store %arg9[%c192_68, %c0_69], %90 {strides = array<i32>} : memref<576x288xf32, #tpu.memory_space<vmem>>, vector<64x288xf32>,
    %c0_70 = arith.constant 0 : index
    %c128_71 = arith.constant 128 : index
    %92 = vector.load %arg10[%c0_70, %c128_71] : memref<64x512xf32, #tpu.memory_space<vmem>>, vector<64x288xf32>
    %c256_72 = arith.constant 256 : index
    %c0_73 = arith.constant 0 : index
    %93 = vector.load %arg9[%c256_72, %c0_73] : memref<576x288xf32, #tpu.memory_space<vmem>>, vector<64x288xf32>
    tpu.vector_store %arg9[%c256_72, %c0_73], %92 {strides = array<i32>} : memref<576x288xf32, #tpu.memory_space<vmem>>, vector<64x288xf32>,
    %c0_74 = arith.constant 0 : index
    %c129 = arith.constant 129 : index
    %94 = vector.load %arg10[%c0_74, %c129] : memref<64x512xf32, #tpu.memory_space<vmem>>, vector<64x288xf32>
    %c320_75 = arith.constant 320 : index
    %c0_76 = arith.constant 0 : index
    %95 = vector.load %arg9[%c320_75, %c0_76] : memref<576x288xf32, #tpu.memory_space<vmem>>, vector<64x288xf32>
    tpu.vector_store %arg9[%c320_75, %c0_76], %94 {strides = array<i32>} : memref<576x288xf32, #tpu.memory_space<vmem>>, vector<64x288xf32>,
    %c0_77 = arith.constant 0 : index
    %c145 = arith.constant 145 : index
    %96 = vector.load %arg10[%c0_77, %c145] : memref<64x512xf32, #tpu.memory_space<vmem>>, vector<64x288xf32>
    %c384_78 = arith.constant 384 : index
    %c0_79 = arith.constant 0 : index
    %97 = vector.load %arg9[%c384_78, %c0_79] : memref<576x288xf32, #tpu.memory_space<vmem>>, vector<64x288xf32>
    tpu.vector_store %arg9[%c384_78, %c0_79], %96 {strides = array<i32>} : memref<576x288xf32, #tpu.memory_space<vmem>>, vector<64x288xf32>,
    %c0_80 = arith.constant 0 : index
    %c146 = arith.constant 146 : index
    %98 = vector.load %arg10[%c0_80, %c146] : memref<64x512xf32, #tpu.memory_space<vmem>>, vector<64x288xf32>
    %c448_81 = arith.constant 448 : index
    %c0_82 = arith.constant 0 : index
    %99 = vector.load %arg9[%c448_81, %c0_82] : memref<576x288xf32, #tpu.memory_space<vmem>>, vector<64x288xf32>
    tpu.vector_store %arg9[%c448_81, %c0_82], %98 {strides = array<i32>} : memref<576x288xf32, #tpu.memory_space<vmem>>, vector<64x288xf32>,
    %c0_83 = arith.constant 0 : index
    %c147 = arith.constant 147 : index
    %100 = vector.load %arg10[%c0_83, %c147] : memref<64x512xf32, #tpu.memory_space<vmem>>, vector<64x288xf32>
    %c512_84 = arith.constant 512 : index
    %c0_85 = arith.constant 0 : index
    %101 = vector.load %arg9[%c512_84, %c0_85] : memref<576x288xf32, #tpu.memory_space<vmem>>, vector<64x288xf32>
    tpu.vector_store %arg9[%c512_84, %c0_85], %100 {strides = array<i32>} : memref<576x288xf32, #tpu.memory_space<vmem>>, vector<64x288xf32>,
    %c0_86 = arith.constant 0 : index
    %c0_87 = arith.constant 0 : index
    %102 = vector.load %arg11[%c0_86, %c0_87] : memref<64x576xf32, #tpu.memory_space<vmem>>, vector<64x576xf32>
    %c0_88 = arith.constant 0 : index
    %c0_89 = arith.constant 0 : index
    %103 = vector.load %arg9[%c0_88, %c0_89] : memref<576x288xf32, #tpu.memory_space<vmem>>, vector<576x288xf32>
    %cst_90 = arith.constant dense<0.000000e+00> : vector<64x288xf32>
    %104 = tpu.matmul %102, %103, %cst_90 {dimension_numbers = #tpu.dot_dimension_numbers<[1], [0], [0], [1], [0, 0, 1, 1], [], []>} : vector<64x576xf32>, vector<576x288xf32>, vector<64x288xf32> -> vector<64x288xf32>
    %cst_91 = arith.constant 0.000000e+00 : f32
    %105 = vector.shape_cast %18 : vector<1x288xi1> to vector<1x288xi1>
    %106 = vector.broadcast %105 : vector<1x288xi1> to vector<64x288xi1>
    %107 = vector.broadcast %cst_91 : f32 to vector<64x288xf32>
    %108 = arith.select %106, %104, %107 : vector<64x288xi1>, vector<64x288xf32>
    %cst_92 = arith.constant dense<0.000000e+00> : vector<64xf32>
    %109 = vector.multi_reduction <add>, %108, %cst_92 [1] : vector<64x288xf32> to vector<64xf32>
    %110 = vector.shape_cast %109 : vector<64xf32> to vector<64x1xf32>
    %cst_93 = arith.constant 3.906250e-03 : f32
    %111 = vector.broadcast %cst_93 : f32 to vector<64x1xf32>
    %112 = arith.mulf %110, %111 : vector<64x1xf32>
    %c0_94 = arith.constant 0 : index
    %c0_95 = arith.constant 0 : index
    %113 = vector.load %arg4[%c0_94, %c0_95] : memref<16x64xf32, #tpu.memory_space<vmem>>, vector<16x64xf32>
    %cst_96 = arith.constant dense<0.000000e+00> : vector<16x1xf32>
    %114 = tpu.matmul %113, %112, %cst_96 {dimension_numbers = #tpu.dot_dimension_numbers<[1], [0], [0], [1], [0, 0, 1, 1], [], []>} : vector<16x64xf32>, vector<64x1xf32>, vector<16x1xf32> -> vector<16x1xf32>
    %cst_97 = arith.constant 0.000000e+00 : f32
    %115 = vector.broadcast %cst_97 : f32 to vector<16x1xf32>
    %116 = arith.maximumf %114, %115 : vector<16x1xf32>
    %c0_98 = arith.constant 0 : index
    %c0_99 = arith.constant 0 : index
    %117 = vector.load %arg5[%c0_98, %c0_99] : memref<64x16xf32, #tpu.memory_space<vmem>>, vector<64x16xf32>
    %cst_100 = arith.constant dense<0.000000e+00> : vector<64x1xf32>
    %118 = tpu.matmul %117, %116, %cst_100 {dimension_numbers = #tpu.dot_dimension_numbers<[1], [0], [0], [1], [0, 0, 1, 1], [], []>} : vector<64x16xf32>, vector<16x1xf32>, vector<64x1xf32> -> vector<64x1xf32>
    %119 = arith.negf %118 : vector<64x1xf32>
    %120 = math.exp %119 : vector<64x1xf32>
    %cst_101 = arith.constant 1.000000e+00 : f32
    %121 = vector.broadcast %cst_101 : f32 to vector<64x1xf32>
    %122 = arith.addf %121, %120 : vector<64x1xf32>
    %123 = arith.divf %121, %122 : vector<64x1xf32>
    %c0_102 = arith.constant 0 : index
    %c0_103 = arith.constant 0 : index
    %c19_104 = arith.constant 19 : index
    %124 = vector.load %arg1[%c0_102, %c0_103, %c19_104] : memref<1x64x342xf32, #tpu.memory_space<vmem>>, vector<1x64x288xf32>
    %125 = vector.shape_cast %124 : vector<1x64x288xf32> to vector<64x288xf32>
    %126 = vector.broadcast %123 : vector<64x1xf32> to vector<64x288xf32>
    %127 = arith.mulf %104, %126 : vector<64x288xf32>
    %128 = arith.addf %127, %125 : vector<64x288xf32>
    %c0_105 = arith.constant 0 : index
    %c0_106 = arith.constant 0 : index
    %c0_107 = arith.constant 0 : index
    %129 = vector.load %arg8[%c0_105, %c0_106, %c0_107] : memref<1x64x288xf32, #tpu.memory_space<vmem>>, vector<1x64x288xf32>
    %130 = vector.shape_cast %129 : vector<1x64x288xf32> to vector<64x288xf32>
    %131 = vector.shape_cast %128 : vector<64x288xf32> to vector<1x64x288xf32>
    tpu.vector_store %arg8[%c0_105, %c0_106, %c0_107], %131 {strides = array<i32>} : memref<1x64x288xf32, #tpu.memory_space<vmem>>, vector<1x64x288xf32>,
    return
  }
  func.func @transform_0(%arg0: i32) -> (i32, i32, i32) {
    %c0_i32 = arith.constant 0 : i32
    %c0_i32_0 = arith.constant 0 : i32
    %c0_i32_1 = arith.constant 0 : i32
    return %arg0, %c0_i32, %c0_i32_0 : i32, i32, i32
  }
  func.func @transform_1(%arg0: i32) -> (i32, i32) {
    %c0_i32 = arith.constant 0 : i32
    %c0_i32_0 = arith.constant 0 : i32
    %c0_i32_1 = arith.constant 0 : i32
    return %c0_i32, %c0_i32_0 : i32, i32
  }
  func.func @transform_2(%arg0: i32) -> (i32, i32, i32) {
    %c0_i32 = arith.constant 0 : i32
    %c0_i32_0 = arith.constant 0 : i32
    %c0_i32_1 = arith.constant 0 : i32
    %c0_i32_2 = arith.constant 0 : i32
    return %c0_i32, %c0_i32_0, %c0_i32_1 : i32, i32, i32
  }
  func.func @transform_3(%arg0: i32) -> (i32, i32) {
    %c0_i32 = arith.constant 0 : i32
    %c0_i32_0 = arith.constant 0 : i32
    %c0_i32_1 = arith.constant 0 : i32
    return %c0_i32, %c0_i32_0 : i32, i32
  }
  func.func @transform_4(%arg0: i32) -> (i32, i32) {
    %c0_i32 = arith.constant 0 : i32
    %c0_i32_0 = arith.constant 0 : i32
    %c0_i32_1 = arith.constant 0 : i32
    return %c0_i32, %c0_i32_0 : i32, i32
  }
  func.func @transform_5(%arg0: i32) -> (i32, i32) {
    %c0_i32 = arith.constant 0 : i32
    %c0_i32_0 = arith.constant 0 : i32
    %c0_i32_1 = arith.constant 0 : i32
    return %c0_i32, %c0_i32_0 : i32, i32
  }
  func.func @transform_6(%arg0: i32) -> i32 {
    %c0_i32 = arith.constant 0 : i32
    %c0_i32_0 = arith.constant 0 : i32
    return %c0_i32 : i32
  }
  func.func @transform_7(%arg0: i32) -> (i32, i32, i32) {
    %c0_i32 = arith.constant 0 : i32
    %c0_i32_0 = arith.constant 0 : i32
    %c0_i32_1 = arith.constant 0 : i32
    return %arg0, %c0_i32, %c0_i32_0 : i32, i32, i32
  }
}

</mosaic_0001>

<llo_original>
// kernel: tpu_custom_call.1
$region0: #{tpu_custom_call.1}
  #allocation0 [shape = 'u32[]', space=smem, size = 0x4, offset = 0x4, fixed_abs, tag = 'smem constant byte address 0x4 - core index']
  #allocation1 [shape = 'u32[72,128]{1,0:T(1,128)}', space=vmem, size = 0x9000, scoped, tag = 'internal scratch']
  #allocation2 [shape = 'f32[576,288]{1,0:T(8,128)}', space=vmem, size = 0xd8000, scoped, tag = 'scratch operand']
  #allocation3 [shape = 'f32[64,512]{1,0:T(8,128)}', space=vmem, size = 0x20000, scoped, tag = 'scratch operand']
  #allocation4 [shape = 'f32[64,576]{1,0:T(8,128)}', space=vmem, size = 0x28000, scoped, tag = 'scratch operand']
  #allocation5 [shape = 'f32[1]{0:T(128)S(6)}', space=smem, size = 0x200, scoped, tag = 'scoped memory for tpu_custom_call.1']
  %s0 = inlined_call_operand.hbm [shape: f32[2,64,342], index: 0, kind: input, shape index: {}]
  %s1 = inlined_call_operand.hbm [shape: f32[64,576], index: 1, kind: input, shape index: {}]
  %s2 = inlined_call_operand.hbm [shape: f32[3,64,576], index: 2, kind: input, shape index: {}]
  %s3 = inlined_call_operand.vmem [shape: f32[16,64], index: 3, kind: input, shape index: {}]
  %s4 = inlined_call_operand.vmem [shape: f32[64,16], index: 4, kind: input, shape index: {}]
  %s5 = inlined_call_operand.vmem [shape: f32[2,3], index: 5, kind: input, shape index: {}]
  %s6 = inlined_call_operand.<no memory space> [shape: f32[1], index: 6, kind: input, shape index: {}]
  %s7 = inlined_call_operand.hbm [shape: f32[2,64,288], index: 7, kind: output, shape index: {}]
  %s8 = sld [smem:[#allocation0]]
  $region77: #{tpu_custom_call.1} parent=0
    _
  %s10 = ssub.s32 1, %s8
  %s11 = scalar_select 0, %s10, %s8
  %12 = sst [smem:[#allocation5]] %s6
  $region1: #{tpu_custom_call.1} parent=0
    #allocation6 [shape = 'u8[196608]{0}', space=vmem, size = 0x30000, scoped, tag = 'input window, operand 0']
    #allocation7 [shape = 's32[2]{0}', space=sflag, size = 0x8, scoped, tag = 'scoped memory for tpu_custom_call.1']
    #allocation8 [shape = 's32[2]{0}', space=sflag, size = 0x8, scoped, tag = 'scoped memory for tpu_custom_call.1']
    #allocation9 [shape = 's32[2]{0}', space=sflag, size = 0x8, scoped, tag = 'scoped memory for tpu_custom_call.1']
    #allocation10 [shape = 'u8[163840]{0}', space=vmem, size = 0x28000, scoped, tag = 'input window, operand 1, single buffered']
    #allocation11 [shape = 's32[1]{0}', space=sflag, size = 0x4, scoped, tag = 'scoped memory for tpu_custom_call.1']
    #allocation12 [shape = 'u8[491520]{0}', space=vmem, size = 0x78000, scoped, tag = 'input window, operand 2, single buffered']
    #allocation13 [shape = 'u8[1024]{0}', space=smem, size = 0x400, scoped, tag = 'input window, operand 5, single buffered']
    #allocation14 [shape = 'u8[196608]{0}', space=vmem, size = 0x30000, scoped, tag = 'output window, operand 0']
    %13 = vsyncpa [#allocation7], 0
    %s14 = scalar_lea.sflag [#allocation7], 1
    %15 = vsyncpa %s14, 0
    %16 = vsyncpa [#allocation11], 0
    %17 = vsyncpa [#allocation9], 0
    %18 = vsyncpa [#allocation8], 0
    %s19 = scalar_lea.sflag [#allocation8], 1
    %20 = vsyncpa %s19, 0
    loop: start=0, step=1, limit=4
    $region2: #{tpu_custom_call.1} parent=1 // loop_pre_header
      _
    $region3: #{tpu_custom_call.1} parent=1 // loop_header
      %s22 = sphi 0, %s26
      %p23 = scmp.ge.s32.totalorder %s22, 4
      %s32 = sphi 0, %s34
      %s35 = sphi 0, %s32
      %s36 = sphi 0, %s35
      %s52 = sphi 0, %s36
      %s56 = sphi 0, %s56
      %s58 = sphi 0, %s56
      %s59 = sphi 0, %s58
      %s73 = sphi 0, %s59
      %s77 = sphi 0, %s77
      %s79 = sphi 0, %s77
      %s80 = sphi 0, %s79
      %s94 = sphi 0, %s80
      %s98 = sphi 0, %s98
      %s100 = sphi 0, %s98
      %s101 = sphi 0, %s100
      %s115 = sphi 0, %s101
      %s119 = sphi 0, %s119
      %s121 = sphi 0, %s119
      %s122 = sphi 0, %s121
      %s136 = sphi 0, %s122
      %s140 = sphi 0, %s140
      %s142 = sphi 0, %s140
      %s143 = sphi 0, %s142
      %s157 = sphi 0, %s143
      %s161 = sphi 0, %s161
      %s163 = sphi 0, %s161
      %s164 = sphi 0, %s163
      %s178 = sphi 0, %s164
      %s184 = sphi 0, %s186
      %s187 = sphi 0, %s184
      %s188 = sphi 0, %s187
      %s204 = sphi 0, %s188
    $region4: #{tpu_custom_call.1} parent=1 // loop_header_branch
      %25 = sbr.rel (%p23) target = $region8
    $region5: #{tpu_custom_call.1} parent=1 // loop_body
      %s27 = ssub.s32 %s22, 1
      %s28 = ssub.s32 %s22, 2
      %s29 = sadd.s32 %s22, 1
      %s30 = ssub.s32 %s22, %s29
      %p31 = scmp.eq.s32.totalorder %s30, 0
      %s33 = sadd.s32 %s32, 1
      %s34 = scalar_select %p31, %s32, %s33
      %p37 = pneg %p31
      %p38 = scmp.eq.s32.totalorder %s22, 1
      %p39 = por %p37, %p38
      %p40 = scmp.ne.s32.totalorder %s32, %s35
      %p41 = scmp.eq.s32.totalorder %s22, 0
      %p42 = por %p40, %p41
      %p43 = scmp.ne.s32.totalorder %s32, %s35
      %p44 = scmp.eq.s32.totalorder %s27, 1
      %p45 = por %p43, %p44
      %p46 = scmp.ne.s32.totalorder %s35, %s36
      %p47 = scmp.eq.s32.totalorder %s27, 0
      %p48 = por %p46, %p47
      %p49 = scmp.ne.s32.totalorder %s35, %s36
      %p50 = scmp.eq.s32.totalorder %s28, 1
      %p51 = por %p49, %p50
      %p53 = scmp.ne.s32.totalorder %s36, %s52
      %p54 = scmp.eq.s32.totalorder %s28, 0
      %p55 = por %p53, %p54
      %s57 = sadd.s32 %s56, 1
      %p60 = scmp.eq.s32.totalorder %s22, 1
      %p61 = scmp.ne.s32.totalorder %s56, %s58
      %p62 = scmp.eq.s32.totalorder %s22, 0
      %p63 = por %p61, %p62
      %p64 = scmp.ne.s32.totalorder %s56, %s58
      %p65 = scmp.eq.s32.totalorder %s27, 1
      %p66 = por %p64, %p65
      %p67 = scmp.ne.s32.totalorder %s58, %s59
      %p68 = scmp.eq.s32.totalorder %s27, 0
      %p69 = por %p67, %p68
      %p70 = scmp.ne.s32.totalorder %s58, %s59
      %p71 = scmp.eq.s32.totalorder %s28, 1
      %p72 = por %p70, %p71
      %p74 = scmp.ne.s32.totalorder %s59, %s73
      %p75 = scmp.eq.s32.totalorder %s28, 0
      %p76 = por %p74, %p75
      %s78 = sadd.s32 %s77, 1
      %p81 = scmp.eq.s32.totalorder %s22, 1
      %p82 = scmp.ne.s32.totalorder %s77, %s79
      %p83 = scmp.eq.s32.totalorder %s22, 0
      %p84 = por %p82, %p83
      %p85 = scmp.ne.s32.totalorder %s77, %s79
      %p86 = scmp.eq.s32.totalorder %s27, 1
      %p87 = por %p85, %p86
      %p88 = scmp.ne.s32.totalorder %s79, %s80
      %p89 = scmp.eq.s32.totalorder %s27, 0
      %p90 = por %p88, %p89
      %p91 = scmp.ne.s32.totalorder %s79, %s80
      %p92 = scmp.eq.s32.totalorder %s28, 1
      %p93 = por %p91, %p92
      %p95 = scmp.ne.s32.totalorder %s80, %s94
      %p96 = scmp.eq.s32.totalorder %s28, 0
      %p97 = por %p95, %p96
      %s99 = sadd.s32 %s98, 1
      %p102 = scmp.eq.s32.totalorder %s22, 1
      %p103 = scmp.ne.s32.totalorder %s98, %s100
      %p104 = scmp.eq.s32.totalorder %s22, 0
      %p105 = por %p103, %p104
      %p106 = scmp.ne.s32.totalorder %s98, %s100
      %p107 = scmp.eq.s32.totalorder %s27, 1
      %p108 = por %p106, %p107
      %p109 = scmp.ne.s32.totalorder %s100, %s101
      %p110 = scmp.eq.s32.totalorder %s27, 0
      %p111 = por %p109, %p110
      %p112 = scmp.ne.s32.totalorder %s100, %s101
      %p113 = scmp.eq.s32.totalorder %s28, 1
      %p114 = por %p112, %p113
      %p116 = scmp.ne.s32.totalorder %s101, %s115
      %p117 = scmp.eq.s32.totalorder %s28, 0
      %p118 = por %p116, %p117
      %s120 = sadd.s32 %s119, 1
      %p123 = scmp.eq.s32.totalorder %s22, 1
      %p124 = scmp.ne.s32.totalorder %s119, %s121
      %p125 = scmp.eq.s32.totalorder %s22, 0
      %p126 = por %p124, %p125
      %p127 = scmp.ne.s32.totalorder %s119, %s121
      %p128 = scmp.eq.s32.totalorder %s27, 1
      %p129 = por %p127, %p128
      %p130 = scmp.ne.s32.totalorder %s121, %s122
      %p131 = scmp.eq.s32.totalorder %s27, 0
      %p132 = por %p130, %p131
      %p133 = scmp.ne.s32.totalorder %s121, %s122
      %p134 = scmp.eq.s32.totalorder %s28, 1
      %p135 = por %p133, %p134
      %p137 = scmp.ne.s32.totalorder %s122, %s136
      %p138 = scmp.eq.s32.totalorder %s28, 0
      %p139 = por %p137, %p138
      %s141 = sadd.s32 %s140, 1
      %p144 = scmp.eq.s32.totalorder %s22, 1
      %p145 = scmp.ne.s32.totalorder %s140, %s142
      %p146 = scmp.eq.s32.totalorder %s22, 0
      %p147 = por %p145, %p146
      %p148 = scmp.ne.s32.totalorder %s140, %s142
      %p149 = scmp.eq.s32.totalorder %s27, 1
      %p150 = por %p148, %p149
      %p151 = scmp.ne.s32.totalorder %s142, %s143
      %p152 = scmp.eq.s32.totalorder %s27, 0
      %p153 = por %p151, %p152
      %p154 = scmp.ne.s32.totalorder %s142, %s143
      %p155 = scmp.eq.s32.totalorder %s28, 1
      %p156 = por %p154, %p155
      %p158 = scmp.ne.s32.totalorder %s143, %s157
      %p159 = scmp.eq.s32.totalorder %s28, 0
      %p160 = por %p158, %p159
      %s162 = sadd.s32 %s161, 1
      %p165 = scmp.eq.s32.totalorder %s22, 1
      %p166 = scmp.ne.s32.totalorder %s161, %s163
      %p167 = scmp.eq.s32.totalorder %s22, 0
      %p168 = por %p166, %p167
      %p169 = scmp.ne.s32.totalorder %s161, %s163
      %p170 = scmp.eq.s32.totalorder %s27, 1
      %p171 = por %p169, %p170
      %p172 = scmp.ne.s32.totalorder %s163, %s164
      %p173 = scmp.eq.s32.totalorder %s27, 0
      %p174 = por %p172, %p173
      %p175 = scmp.ne.s32.totalorder %s163, %s164
      %p176 = scmp.eq.s32.totalorder %s28, 1
      %p177 = por %p175, %p176
      %p179 = scmp.ne.s32.totalorder %s164, %s178
      %p180 = scmp.eq.s32.totalorder %s28, 0
      %p181 = por %p179, %p180
      %s182 = ssub.s32 %s22, %s29
      %p183 = scmp.eq.s32.totalorder %s182, 0
      %s185 = sadd.s32 %s184, 1
      %s186 = scalar_select %p183, %s184, %s185
      %p189 = pneg %p183
      %p190 = scmp.eq.s32.totalorder %s22, 1
      %p191 = por %p189, %p190
      %p192 = scmp.ne.s32.totalorder %s184, %s187
      %p193 = scmp.eq.s32.totalorder %s22, 0
      %p194 = por %p192, %p193
      %p195 = scmp.ne.s32.totalorder %s184, %s187
      %p196 = scmp.eq.s32.totalorder %s27, 1
      %p197 = por %p195, %p196
      %p198 = scmp.ne.s32.totalorder %s187, %s188
      %p199 = scmp.eq.s32.totalorder %s27, 0
      %p200 = por %p198, %p199
      %p201 = scmp.ne.s32.totalorder %s187, %s188
      %p202 = scmp.eq.s32.totalorder %s28, 1
      %p203 = por %p201, %p202
      %p205 = scmp.ne.s32.totalorder %s188, %s204
      %p206 = scmp.eq.s32.totalorder %s28, 0
      %p207 = por %p205, %p206
      %p208 = scmp.le.s32.totalorder 1, %s22
      %p209 = scmp.lt.s32.totalorder %s22, 3
      %p210 = pnand %p208, %p209
      %p211 = pneg %p210
      // Predicated region
      $region9: #{tpu_custom_call.1} parent=5 // pred_check
        _
      $region10: #{tpu_custom_call.1} parent=5 // pred_check_branch
        %213 = sbr.rel (%p210) target = $region12
      $region11: #{tpu_custom_call.1} parent=5 // pred_region
        %s214 = ssub.s32 %s22, 1
        // Predicated region
        $region13: #{tpu_custom_call.1} parent=11 // pred_check
          %p215 = pneg %p69
        $region14: #{tpu_custom_call.1} parent=11 // pred_check_branch
          %217 = sbr.rel (%p215) target = $region16
        $region15: #{tpu_custom_call.1} parent=11 // pred_region
          %219 = vsyncadd [#allocation11], 0
          %s220 = sshll.u32 %s1, 4
          %s221 = int_to_ptr.hbm [resolvable:$true] %s220
          %s222 = sshll.u32 [#allocation10], 4
          %s223 = int_to_ptr.vmem [resolvable:$true] %s222
          %228 = dma.hbm_to_vmem [thread:$0]  %s221, 5120, %s223, [#allocation11], 640, 640, 40
        $region16: #{tpu_custom_call.1} parent=11 // pred_fallthru
          _
        // Predicated region
        $region17: #{tpu_custom_call.1} parent=11 // pred_check
          %p229 = pneg %p90
        $region18: #{tpu_custom_call.1} parent=11 // pred_check_branch
          %231 = sbr.rel (%p229) target = $region20
        $region19: #{tpu_custom_call.1} parent=11 // pred_region
          %233 = vsyncadd [#allocation11], 0
          %s234 = sshll.u32 %s2, 4
          %s235 = int_to_ptr.hbm [resolvable:$true] %s234
          %s236 = sshll.u32 [#allocation12], 4
          %s237 = int_to_ptr.vmem [resolvable:$true] %s236
          %242 = dma.hbm_to_vmem [thread:$0]  %s235, 15360, %s237, [#allocation11], 640, 640, 40
        $region20: #{tpu_custom_call.1} parent=11 // pred_fallthru
          _
        // Predicated region
        $region21: #{tpu_custom_call.1} parent=11 // pred_check
          %p243 = pneg %p111
        $region22: #{tpu_custom_call.1} parent=11 // pred_check_branch
          %245 = sbr.rel (%p243) target = $region24
        $region23: #{tpu_custom_call.1} parent=11 // pred_region
          _
        $region24: #{tpu_custom_call.1} parent=11 // pred_fallthru
          _
        // Predicated region
        $region25: #{tpu_custom_call.1} parent=11 // pred_check
          %p246 = pneg %p132
        $region26: #{tpu_custom_call.1} parent=11 // pred_check_branch
          %248 = sbr.rel (%p246) target = $region28
        $region27: #{tpu_custom_call.1} parent=11 // pred_region
          _
        $region28: #{tpu_custom_call.1} parent=11 // pred_fallthru
          _
        // Predicated region
        $region29: #{tpu_custom_call.1} parent=11 // pred_check
          %p249 = pneg %p153
        $region30: #{tpu_custom_call.1} parent=11 // pred_check_branch
          %251 = sbr.rel (%p249) target = $region32
        $region31: #{tpu_custom_call.1} parent=11 // pred_region
          %253 = vsyncadd [#allocation9], 0
          %s255 = sshll.u32 %s5, 4
          %s256 = int_to_ptr.vmem [resolvable:$true] %s255
          %258 = dma.vmem_to_smem %s256, 32, [#allocation13], [#allocation9]
        $region32: #{tpu_custom_call.1} parent=11 // pred_fallthru
          _
        // Predicated region
        $region33: #{tpu_custom_call.1} parent=11 // pred_check
          %p259 = pneg %p174
        $region34: #{tpu_custom_call.1} parent=11 // pred_check_branch
          %261 = sbr.rel (%p259) target = $region36
        $region35: #{tpu_custom_call.1} parent=11 // pred_region
          _
        $region36: #{tpu_custom_call.1} parent=11 // pred_fallthru
          _
      $region12: #{tpu_custom_call.1} parent=5 // pred_fallthru
        _
      %p262 = scmp.lt.s32.totalorder %s22, 2
      // Predicated region
      $region37: #{tpu_custom_call.1} parent=5 // pred_check
        %p263 = pneg %p262
      $region38: #{tpu_custom_call.1} parent=5 // pred_check_branch
        %265 = sbr.rel (%p263) target = $region40
      $region39: #{tpu_custom_call.1} parent=5 // pred_region
        // Predicated region
        $region41: #{tpu_custom_call.1} parent=39 // pred_check
          %p266 = pneg %p42
        $region42: #{tpu_custom_call.1} parent=39 // pred_check_branch
          %268 = sbr.rel (%p266) target = $region44
        $region43: #{tpu_custom_call.1} parent=39 // pred_region
          %s269 = sand.u32 %s32, 1
          %s270 = scalar_lea.sflag [#allocation7], %s269
          %s271 = sand.u32 %s32, 1
          %s272 = smul.addr %s271, 192
          %s273 = scalar_lea.vmem [#allocation6], %s272
          %275 = vsyncadd %s270, 0
          %s276 = smul.addr %s22, 24
          %s277 = smul.addr %s276, 8
          %s278 = scalar_lea.hbm %s0, %s277
          %s279 = sshll.u32 %s278, 4
          %s280 = int_to_ptr.hbm [resolvable:$true] %s279
          %s281 = sshll.u32 %s273, 4
          %s282 = int_to_ptr.vmem [resolvable:$true] %s281
          %287 = dma.hbm_to_vmem [thread:$0]  %s280, 3072, %s282, %s270, 384, 384, 24
        $region44: #{tpu_custom_call.1} parent=39 // pred_fallthru
          _
      $region40: #{tpu_custom_call.1} parent=5 // pred_fallthru
        _
      %p288 = scmp.le.s32.totalorder 1, %s22
      %p289 = scmp.lt.s32.totalorder %s22, 3
      %p290 = pnand %p288, %p289
      %p291 = pneg %p290
      // Predicated region
      $region45: #{tpu_custom_call.1} parent=5 // pred_check
        _
      $region46: #{tpu_custom_call.1} parent=5 // pred_check_branch
        %293 = sbr.rel (%p290) target = $region48
      $region47: #{tpu_custom_call.1} parent=5 // pred_region
        %s294 = ssub.s32 %s22, 1
        %s295 = sand.u32 %s35, 1
        %s296 = scalar_lea.sflag [#allocation7], %s295
        %s297 = sand.u32 %s35, 1
        %s298 = smul.addr %s297, 192
        %s299 = scalar_lea.vmem [#allocation6], %s298
        // Predicated region
        $region49: #{tpu_custom_call.1} parent=47 // pred_check
          %p300 = pneg %p48
        $region50: #{tpu_custom_call.1} parent=47 // pred_check_branch
          %302 = sbr.rel (%p300) target = $region52
        $region51: #{tpu_custom_call.1} parent=47 // pred_region
          %304 = dma.done %s296, 3072
        $region52: #{tpu_custom_call.1} parent=47 // pred_fallthru
          _
        // Predicated region
        $region53: #{tpu_custom_call.1} parent=47 // pred_check
          %p305 = pneg %p69
        $region54: #{tpu_custom_call.1} parent=47 // pred_check_branch
          %307 = sbr.rel (%p305) target = $region56
        $region55: #{tpu_custom_call.1} parent=47 // pred_region
          %309 = dma.done [#allocation11], 5120
        $region56: #{tpu_custom_call.1} parent=47 // pred_fallthru
          _
        // Predicated region
        $region57: #{tpu_custom_call.1} parent=47 // pred_check
          %p310 = pneg %p90
        $region58: #{tpu_custom_call.1} parent=47 // pred_check_branch
          %312 = sbr.rel (%p310) target = $region60
        $region59: #{tpu_custom_call.1} parent=47 // pred_region
          %314 = dma.done [#allocation11], 15360
        $region60: #{tpu_custom_call.1} parent=47 // pred_fallthru
          _
        // Predicated region
        $region61: #{tpu_custom_call.1} parent=47 // pred_check
          %p315 = pneg %p153
        $region62: #{tpu_custom_call.1} parent=47 // pred_check_branch
          %317 = sbr.rel (%p315) target = $region64
        $region63: #{tpu_custom_call.1} parent=47 // pred_region
          %319 = dma.done [#allocation9], 32
        $region64: #{tpu_custom_call.1} parent=47 // pred_fallthru
          _
        %320 = sfence
        %s321 = sand.u32 %s35, 1
        %s322 = scalar_lea.sflag [#allocation7], %s321
        %s323 = sand.u32 %s35, 1
        %s324 = smul.addr %s323, 192
        %s325 = scalar_lea.vmem [#allocation6], %s324
        %p326 = pneg %p48
        %p327 = pneg %p45
        %p328 = pneg %p69
        %p329 = pneg %p66
        %p330 = pneg %p90
        %p331 = pneg %p87
        %p332 = pneg %p111
        %p333 = pneg %p108
        %p334 = pneg %p132
        %p335 = pneg %p129
        %p336 = pneg %p153
        %p337 = pneg %p150
        %p338 = pneg %p174
        %p339 = pneg %p171
        %p340 = pneg %p200
        %p341 = pneg %p197
        %s342 = sand.u32 %s187, 1
        %s343 = scalar_lea.sflag [#allocation8], %s342
        %s344 = sand.u32 %s187, 1
        %s345 = smul.addr %s344, 192
        %s346 = scalar_lea.vmem [#allocation14], %s345
        %v347 = vlaneseq
        %v348 = vand.u32 %v347, 127
        %v349 = vadd.s32 %v348, 128
        %v350 = vadd.s32 %v348, 256
        %vm351 = vcmp.lt.s32.totalorder %v348, 0
        %v352 = vsub.s32 0, %v348
        %v353 = vsel %vm351, %v352, %v348
        %v354 = vand.u32 %v353, 65535
        %v355 = vshrl.u32 %v353, 16
        %v357 = vmul.u32 %v354, 14564
        %v358 = vmul.u32 %v354, 58254
        %v359 = vmul.u32 %v355, 14564
        %v360 = vmul.u32 %v355, 58254
        %v361 = vshll.u32 %v358, 16
        %v362 = vshrl.u32 %v358, 16
        %v363 = vshll.u32 %v359, 16
        %v364 = vshrl.u32 %v359, 16
        %vm365 = vc.u32 %v357, %v361
        %v366 = vsel %vm365, 1, 0
        %v367 = vadd.s32 %v357, %v361
        %v368 = vadd.s32 %v360, %v366
        %vm369 = vc.u32 %v367, %v363
        %v370 = vsel %vm369, 1, 0
        %v371 = vadd.s32 %v367, %v363
        %v372 = vadd.s32 %v368, %v370
        %v373 = vadd.s32 %v372, %v362
        %v374 = vadd.s32 %v373, %v364
        %v375 = vshrl.u32 %v374, 4
        %v376 = vmul.u32 %v375, 18
        %v377 = vsub.s32 %v353, %v376
        %v378 = vsub.s32 0, %v377
        %v379 = vsel %vm351, %v378, %v377
        %vm380 = vcmp.lt.s32.totalorder %v349, 0
        %v381 = vsub.s32 0, %v349
        %v382 = vsel %vm380, %v381, %v349
        %v383 = vand.u32 %v382, 65535
        %v384 = vshrl.u32 %v382, 16
        %v386 = vmul.u32 %v383, 14564
        %v387 = vmul.u32 %v383, 58254
        %v388 = vmul.u32 %v384, 14564
        %v389 = vmul.u32 %v384, 58254
        %v390 = vshll.u32 %v387, 16
        %v391 = vshrl.u32 %v387, 16
        %v392 = vshll.u32 %v388, 16
        %v393 = vshrl.u32 %v388, 16
        %vm394 = vc.u32 %v386, %v390
        %v395 = vsel %vm394, 1, 0
        %v396 = vadd.s32 %v386, %v390
        %v397 = vadd.s32 %v389, %v395
        %vm398 = vc.u32 %v396, %v392
        %v399 = vsel %vm398, 1, 0
        %v400 = vadd.s32 %v396, %v392
        %v401 = vadd.s32 %v397, %v399
        %v402 = vadd.s32 %v401, %v391
        %v403 = vadd.s32 %v402, %v393
        %v404 = vshrl.u32 %v403, 4
        %v405 = vmul.u32 %v404, 18
        %v406 = vsub.s32 %v382, %v405
        %v407 = vsub.s32 0, %v406
        %v408 = vsel %vm380, %v407, %v406
        %vm409 = vcmp.lt.s32.totalorder %v350, 0
        %v410 = vsub.s32 0, %v350
        %v411 = vsel %vm409, %v410, %v350
        %v412 = vand.u32 %v411, 65535
        %v413 = vshrl.u32 %v411, 16
        %v415 = vmul.u32 %v412, 14564
        %v416 = vmul.u32 %v412, 58254
        %v417 = vmul.u32 %v413, 14564
        %v418 = vmul.u32 %v413, 58254
        %v419 = vshll.u32 %v416, 16
        %v420 = vshrl.u32 %v416, 16
        %v421 = vshll.u32 %v417, 16
        %v422 = vshrl.u32 %v417, 16
        %vm423 = vc.u32 %v415, %v419
        %v424 = vsel %vm423, 1, 0
        %v425 = vadd.s32 %v415, %v419
        %v426 = vadd.s32 %v418, %v424
        %vm427 = vc.u32 %v425, %v421
        %v428 = vsel %vm427, 1, 0
        %v429 = vadd.s32 %v425, %v421
        %v430 = vadd.s32 %v426, %v428
        %v431 = vadd.s32 %v430, %v420
        %v432 = vadd.s32 %v431, %v422
        %v433 = vshrl.u32 %v432, 4
        %v434 = vmul.u32 %v433, 18
        %v435 = vsub.s32 %v411, %v434
        %v436 = vsub.s32 0, %v435
        %v437 = vsel %vm409, %v436, %v435
        %vm438 = vcmp.ne.s32.totalorder %v379, 0
        %vm439 = vcmp.ne.s32.totalorder %v408, 0
        %vm440 = vcmp.ne.s32.totalorder %v437, 0
        %vm441 = vcmp.lt.s32.totalorder %v379, 0
        %vm442 = vcmp.lt.s32.totalorder %v408, 0
        %vm443 = vcmp.lt.s32.totalorder %v437, 0
        %vm444 = vmand %vm441, %vm438
        %vm445 = vmand %vm442, %vm439
        %vm446 = vmand %vm443, %vm440
        %v447 = vadd.s32 %v379, 18
        %v448 = vadd.s32 %v408, 18
        %v449 = vadd.s32 %v437, 18
        %v450 = vsel %vm444, %v447, %v379
        %v451 = vsel %vm445, %v448, %v408
        %v452 = vsel %vm446, %v449, %v437
        %vm453 = vcmp.lt.s32.totalorder %v450, 16
        %vm454 = vcmp.lt.s32.totalorder %v451, 16
        %vm455 = vcmp.lt.s32.totalorder %v452, 16
        %v456 = vld [vmem:[%s299] sm:$0xff]
        %v457 = vld [vmem:[%s299 + $0x8] sm:$0xff]
        %v458 = vld [vmem:[%s299 + $0x10] sm:$0xff]
        %v459 = vld [vmem:[%s299 + $0x18] sm:$0xff]
        %v460 = vld [vmem:[%s299 + $0x20] sm:$0xff]
        %v461 = vld [vmem:[%s299 + $0x28] sm:$0xff]
        %v462 = vld [vmem:[%s299 + $0x30] sm:$0xff]
        %v463 = vld [vmem:[%s299 + $0x38] sm:$0xff]
        %v464 = vld [vmem:[%s299 + $0x40] sm:$0xff]
        %v465 = vld [vmem:[%s299 + $0x48] sm:$0xff]
        %v466 = vld [vmem:[%s299 + $0x50] sm:$0xff]
        %v467 = vld [vmem:[%s299 + $0x58] sm:$0xff]
        %v468 = vld [vmem:[%s299 + $0x60] sm:$0xff]
        %v469 = vld [vmem:[%s299 + $0x68] sm:$0xff]
        %v470 = vld [vmem:[%s299 + $0x70] sm:$0xff]
        %v471 = vld [vmem:[%s299 + $0x78] sm:$0xff]
        %v472 = vld [vmem:[%s299 + $0x80] sm:$0xff]
        %v473 = vld [vmem:[%s299 + $0x88] sm:$0xff]
        %v474 = vld [vmem:[%s299 + $0x90] sm:$0xff]
        %v475 = vld [vmem:[%s299 + $0x98] sm:$0xff]
        %v476 = vld [vmem:[%s299 + $0xa0] sm:$0xff]
        %v477 = vld [vmem:[%s299 + $0xa8] sm:$0xff]
        %v478 = vld [vmem:[%s299 + $0xb0] sm:$0xff]
        %v479 = vld [vmem:[%s299 + $0xb8] sm:$0xff]
        %480 = vst [vmem:[#allocation2] sm:$0xff] %v456
        %481 = vst [vmem:[#allocation2 + $0x8] sm:$0xff] %v457
        %vm482 = vcmask 261120
        %483 = vst.msk [vmem:[#allocation2 + $0x10] sm:$0xff] %vm482, %v458
        %484 = vst [vmem:[#allocation2 + $0x18] sm:$0xff] %v459
        %485 = vst [vmem:[#allocation2 + $0x20] sm:$0xff] %v460
        %486 = vst.msk [vmem:[#allocation2 + $0x28] sm:$0xff] %vm482, %v461
        %487 = vst [vmem:[#allocation2 + $0x30] sm:$0xff] %v462
        %488 = vst [vmem:[#allocation2 + $0x38] sm:$0xff] %v463
        %489 = vst.msk [vmem:[#allocation2 + $0x40] sm:$0xff] %vm482, %v464
        %490 = vst [vmem:[#allocation2 + $0x48] sm:$0xff] %v465
        %491 = vst [vmem:[#allocation2 + $0x50] sm:$0xff] %v466
        %492 = vst.msk [vmem:[#allocation2 + $0x58] sm:$0xff] %vm482, %v467
        %493 = vst [vmem:[#allocation2 + $0x60] sm:$0xff] %v468
        %494 = vst [vmem:[#allocation2 + $0x68] sm:$0xff] %v469
        %495 = vst.msk [vmem:[#allocation2 + $0x70] sm:$0xff] %vm482, %v470
        %496 = vst [vmem:[#allocation2 + $0x78] sm:$0xff] %v471
        %497 = vst [vmem:[#allocation2 + $0x80] sm:$0xff] %v472
        %498 = vst.msk [vmem:[#allocation2 + $0x88] sm:$0xff] %vm482, %v473
        %499 = vst [vmem:[#allocation2 + $0x90] sm:$0xff] %v474
        %500 = vst [vmem:[#allocation2 + $0x98] sm:$0xff] %v475
        %501 = vst.msk [vmem:[#allocation2 + $0xa0] sm:$0xff] %vm482, %v476
        %502 = vst [vmem:[#allocation2 + $0xa8] sm:$0xff] %v477
        %503 = vst [vmem:[#allocation2 + $0xb0] sm:$0xff] %v478
        %504 = vst.msk [vmem:[#allocation2 + $0xb8] sm:$0xff] %vm482, %v479
        %v505 = vld [vmem:[%s299] sm:$0xff]
        %v506 = vld [vmem:[%s299 + $0x8] sm:$0xff]
        %v507 = vld [vmem:[%s299 + $0x10] sm:$0xff]
        %v508 = vld [vmem:[%s299 + $0x18] sm:$0xff]
        %v509 = vld [vmem:[%s299 + $0x20] sm:$0xff]
        %v510 = vld [vmem:[%s299 + $0x28] sm:$0xff]
        %v511 = vld [vmem:[%s299 + $0x30] sm:$0xff]
        %v512 = vld [vmem:[%s299 + $0x38] sm:$0xff]
        %v513 = vld [vmem:[%s299 + $0x40] sm:$0xff]
        %v514 = vld [vmem:[%s299 + $0x48] sm:$0xff]
        %v515 = vld [vmem:[%s299 + $0x50] sm:$0xff]
        %v516 = vld [vmem:[%s299 + $0x58] sm:$0xff]
        %v517 = vld [vmem:[%s299 + $0x60] sm:$0xff]
        %v518 = vld [vmem:[%s299 + $0x68] sm:$0xff]
        %v519 = vld [vmem:[%s299 + $0x70] sm:$0xff]
        %v520 = vld [vmem:[%s299 + $0x78] sm:$0xff]
        %v521 = vld [vmem:[%s299 + $0x80] sm:$0xff]
        %v522 = vld [vmem:[%s299 + $0x88] sm:$0xff]
        %v523 = vld [vmem:[%s299 + $0x90] sm:$0xff]
        %v524 = vld [vmem:[%s299 + $0x98] sm:$0xff]
        %v525 = vld [vmem:[%s299 + $0xa0] sm:$0xff]
        %v526 = vld [vmem:[%s299 + $0xa8] sm:$0xff]
        %v527 = vld [vmem:[%s299 + $0xb0] sm:$0xff]
        %v528 = vld [vmem:[%s299 + $0xb8] sm:$0xff]
        %553 = vrot.lane.b32.xlu0 %v505, 127
        %v554 = vpop.permute.xlu0 %553
        %555 = vrot.lane.b32.xlu0 %v506, 127
        %v556 = vpop.permute.xlu0 %555
        %557 = vrot.lane.b32.xlu0 %v507, 127
        %v558 = vpop.permute.xlu0 %557
        %559 = vrot.lane.b32.xlu0 %v508, 127
        %v560 = vpop.permute.xlu0 %559
        %561 = vrot.lane.b32.xlu0 %v509, 127
        %v562 = vpop.permute.xlu0 %561
        %563 = vrot.lane.b32.xlu0 %v510, 127
        %v564 = vpop.permute.xlu0 %563
        %565 = vrot.lane.b32.xlu0 %v511, 127
        %v566 = vpop.permute.xlu0 %565
        %567 = vrot.lane.b32.xlu0 %v512, 127
        %v568 = vpop.permute.xlu0 %567
        %569 = vrot.lane.b32.xlu0 %v513, 127
        %v570 = vpop.permute.xlu0 %569
        %571 = vrot.lane.b32.xlu0 %v514, 127
        %v572 = vpop.permute.xlu0 %571
        %573 = vrot.lane.b32.xlu0 %v515, 127
        %v574 = vpop.permute.xlu0 %573
        %575 = vrot.lane.b32.xlu0 %v516, 127
        %v576 = vpop.permute.xlu0 %575
        %577 = vrot.lane.b32.xlu0 %v517, 127
        %v578 = vpop.permute.xlu0 %577
        %579 = vrot.lane.b32.xlu0 %v518, 127
        %v580 = vpop.permute.xlu0 %579
        %581 = vrot.lane.b32.xlu0 %v519, 127
        %v582 = vpop.permute.xlu0 %581
        %583 = vrot.lane.b32.xlu0 %v520, 127
        %v584 = vpop.permute.xlu0 %583
        %585 = vrot.lane.b32.xlu0 %v521, 127
        %v586 = vpop.permute.xlu0 %585
        %587 = vrot.lane.b32.xlu0 %v522, 127
        %v588 = vpop.permute.xlu0 %587
        %589 = vrot.lane.b32.xlu0 %v523, 127
        %v590 = vpop.permute.xlu0 %589
        %591 = vrot.lane.b32.xlu0 %v524, 127
        %v592 = vpop.permute.xlu0 %591
        %593 = vrot.lane.b32.xlu0 %v525, 127
        %v594 = vpop.permute.xlu0 %593
        %595 = vrot.lane.b32.xlu0 %v526, 127
        %v596 = vpop.permute.xlu0 %595
        %597 = vrot.lane.b32.xlu0 %v527, 127
        %v598 = vpop.permute.xlu0 %597
        %599 = vrot.lane.b32.xlu0 %v528, 127
        %v600 = vpop.permute.xlu0 %599
        %vm601 = vcmask 1039360
        %v602 = vsel %vm601, %v554, %v556
        %v603 = vsel %vm601, %v556, %v558
        %v604 = vsel %vm601, %v560, %v562
        %v605 = vsel %vm601, %v562, %v564
        %v606 = vsel %vm601, %v566, %v568
        %v607 = vsel %vm601, %v568, %v570
        %v608 = vsel %vm601, %v572, %v574
        %v609 = vsel %vm601, %v574, %v576
        %v610 = vsel %vm601, %v578, %v580
        %v611 = vsel %vm601, %v580, %v582
        %v612 = vsel %vm601, %v584, %v586
        %v613 = vsel %vm601, %v586, %v588
        %v614 = vsel %vm601, %v590, %v592
        %v615 = vsel %vm601, %v592, %v594
        %v616 = vsel %vm601, %v596, %v598
        %v617 = vsel %vm601, %v598, %v600
        %642 = vst [vmem:[#allocation2 + $0xc0] sm:$0xff] %v602
        %643 = vst [vmem:[#allocation2 + $0xc8] sm:$0xff] %v603
        %644 = vst.msk [vmem:[#allocation2 + $0xd0] sm:$0xff] %vm482, %v558
        %645 = vst [vmem:[#allocation2 + $0xd8] sm:$0xff] %v604
        %646 = vst [vmem:[#allocation2 + $0xe0] sm:$0xff] %v605
        %647 = vst.msk [vmem:[#allocation2 + $0xe8] sm:$0xff] %vm482, %v564
        %648 = vst [vmem:[#allocation2 + $0xf0] sm:$0xff] %v606
        %649 = vst [vmem:[#allocation2 + $0xf8] sm:$0xff] %v607
        %650 = vst.msk [vmem:[#allocation2 + $0x100] sm:$0xff] %vm482, %v570
        %651 = vst [vmem:[#allocation2 + $0x108] sm:$0xff] %v608
        %652 = vst [vmem:[#allocation2 + $0x110] sm:$0xff] %v609
        %653 = vst.msk [vmem:[#allocation2 + $0x118] sm:$0xff] %vm482, %v576
        %654 = vst [vmem:[#allocation2 + $0x120] sm:$0xff] %v610
        %655 = vst [vmem:[#allocation2 + $0x128] sm:$0xff] %v611
        %656 = vst.msk [vmem:[#allocation2 + $0x130] sm:$0xff] %vm482, %v582
        %657 = vst [vmem:[#allocation2 + $0x138] sm:$0xff] %v612
        %658 = vst [vmem:[#allocation2 + $0x140] sm:$0xff] %v613
        %659 = vst.msk [vmem:[#allocation2 + $0x148] sm:$0xff] %vm482, %v588
        %660 = vst [vmem:[#allocation2 + $0x150] sm:$0xff] %v614
        %661 = vst [vmem:[#allocation2 + $0x158] sm:$0xff] %v615
        %662 = vst.msk [vmem:[#allocation2 + $0x160] sm:$0xff] %vm482, %v594
        %663 = vst [vmem:[#allocation2 + $0x168] sm:$0xff] %v616
        %664 = vst [vmem:[#allocation2 + $0x170] sm:$0xff] %v617
        %665 = vst.msk [vmem:[#allocation2 + $0x178] sm:$0xff] %vm482, %v600
        %v666 = vld [vmem:[%s299] sm:$0xff]
        %v667 = vld [vmem:[%s299 + $0x8] sm:$0xff]
        %v668 = vld [vmem:[%s299 + $0x10] sm:$0xff]
        %v669 = vld [vmem:[%s299 + $0x18] sm:$0xff]
        %v670 = vld [vmem:[%s299 + $0x20] sm:$0xff]
        %v671 = vld [vmem:[%s299 + $0x28] sm:$0xff]
        %v672 = vld [vmem:[%s299 + $0x30] sm:$0xff]
        %v673 = vld [vmem:[%s299 + $0x38] sm:$0xff]
        %v674 = vld [vmem:[%s299 + $0x40] sm:$0xff]
        %v675 = vld [vmem:[%s299 + $0x48] sm:$0xff]
        %v676 = vld [vmem:[%s299 + $0x50] sm:$0xff]
        %v677 = vld [vmem:[%s299 + $0x58] sm:$0xff]
        %v678 = vld [vmem:[%s299 + $0x60] sm:$0xff]
        %v679 = vld [vmem:[%s299 + $0x68] sm:$0xff]
        %v680 = vld [vmem:[%s299 + $0x70] sm:$0xff]
        %v681 = vld [vmem:[%s299 + $0x78] sm:$0xff]
        %v682 = vld [vmem:[%s299 + $0x80] sm:$0xff]
        %v683 = vld [vmem:[%s299 + $0x88] sm:$0xff]
        %v684 = vld [vmem:[%s299 + $0x90] sm:$0xff]
        %v685 = vld [vmem:[%s299 + $0x98] sm:$0xff]
        %v686 = vld [vmem:[%s299 + $0xa0] sm:$0xff]
        %v687 = vld [vmem:[%s299 + $0xa8] sm:$0xff]
        %v688 = vld [vmem:[%s299 + $0xb0] sm:$0xff]
        %v689 = vld [vmem:[%s299 + $0xb8] sm:$0xff]
        %714 = vrot.lane.b32.xlu0 %v666, 126
        %v715 = vpop.permute.xlu0 %714
        %716 = vrot.lane.b32.xlu0 %v667, 126
        %v717 = vpop.permute.xlu0 %716
        %718 = vrot.lane.b32.xlu0 %v668, 126
        %v719 = vpop.permute.xlu0 %718
        %720 = vrot.lane.b32.xlu0 %v669, 126
        %v721 = vpop.permute.xlu0 %720
        %722 = vrot.lane.b32.xlu0 %v670, 126
        %v723 = vpop.permute.xlu0 %722
        %724 = vrot.lane.b32.xlu0 %v671, 126
        %v725 = vpop.permute.xlu0 %724
        %726 = vrot.lane.b32.xlu0 %v672, 126
        %v727 = vpop.permute.xlu0 %726
        %728 = vrot.lane.b32.xlu0 %v673, 126
        %v729 = vpop.permute.xlu0 %728
        %730 = vrot.lane.b32.xlu0 %v674, 126
        %v731 = vpop.permute.xlu0 %730
        %732 = vrot.lane.b32.xlu0 %v675, 126
        %v733 = vpop.permute.xlu0 %732
        %734 = vrot.lane.b32.xlu0 %v676, 126
        %v735 = vpop.permute.xlu0 %734
        %736 = vrot.lane.b32.xlu0 %v677, 126
        %v737 = vpop.permute.xlu0 %736
        %738 = vrot.lane.b32.xlu0 %v678, 126
        %v739 = vpop.permute.xlu0 %738
        %740 = vrot.lane.b32.xlu0 %v679, 126
        %v741 = vpop.permute.xlu0 %740
        %742 = vrot.lane.b32.xlu0 %v680, 126
        %v743 = vpop.permute.xlu0 %742
        %744 = vrot.lane.b32.xlu0 %v681, 126
        %v745 = vpop.permute.xlu0 %744
        %746 = vrot.lane.b32.xlu0 %v682, 126
        %v747 = vpop.permute.xlu0 %746
        %748 = vrot.lane.b32.xlu0 %v683, 126
        %v749 = vpop.permute.xlu0 %748
        %750 = vrot.lane.b32.xlu0 %v684, 126
        %v751 = vpop.permute.xlu0 %750
        %752 = vrot.lane.b32.xlu0 %v685, 126
        %v753 = vpop.permute.xlu0 %752
        %754 = vrot.lane.b32.xlu0 %v686, 126
        %v755 = vpop.permute.xlu0 %754
        %756 = vrot.lane.b32.xlu0 %v687, 126
        %v757 = vpop.permute.xlu0 %756
        %758 = vrot.lane.b32.xlu0 %v688, 126
        %v759 = vpop.permute.xlu0 %758
        %760 = vrot.lane.b32.xlu0 %v689, 126
        %v761 = vpop.permute.xlu0 %760
        %vm762 = vcmask 1031168
        %v763 = vsel %vm762, %v715, %v717
        %v764 = vsel %vm762, %v717, %v719
        %v765 = vsel %vm762, %v721, %v723
        %v766 = vsel %vm762, %v723, %v725
        %v767 = vsel %vm762, %v727, %v729
        %v768 = vsel %vm762, %v729, %v731
        %v769 = vsel %vm762, %v733, %v735
        %v770 = vsel %vm762, %v735, %v737
        %v771 = vsel %vm762, %v739, %v741
        %v772 = vsel %vm762, %v741, %v743
        %v773 = vsel %vm762, %v745, %v747
        %v774 = vsel %vm762, %v747, %v749
        %v775 = vsel %vm762, %v751, %v753
        %v776 = vsel %vm762, %v753, %v755
        %v777 = vsel %vm762, %v757, %v759
        %v778 = vsel %vm762, %v759, %v761
        %803 = vst [vmem:[#allocation2 + $0x180] sm:$0xff] %v763
        %804 = vst [vmem:[#allocation2 + $0x188] sm:$0xff] %v764
        %805 = vst.msk [vmem:[#allocation2 + $0x190] sm:$0xff] %vm482, %v719
        %806 = vst [vmem:[#allocation2 + $0x198] sm:$0xff] %v765
        %807 = vst [vmem:[#allocation2 + $0x1a0] sm:$0xff] %v766
        %808 = vst.msk [vmem:[#allocation2 + $0x1a8] sm:$0xff] %vm482, %v725
        %809 = vst [vmem:[#allocation2 + $0x1b0] sm:$0xff] %v767
        %810 = vst [vmem:[#allocation2 + $0x1b8] sm:$0xff] %v768
        %811 = vst.msk [vmem:[#allocation2 + $0x1c0] sm:$0xff] %vm482, %v731
        %812 = vst [vmem:[#allocation2 + $0x1c8] sm:$0xff] %v769
        %813 = vst [vmem:[#allocation2 + $0x1d0] sm:$0xff] %v770
        %814 = vst.msk [vmem:[#allocation2 + $0x1d8] sm:$0xff] %vm482, %v737
        %815 = vst [vmem:[#allocation2 + $0x1e0] sm:$0xff] %v771
        %816 = vst [vmem:[#allocation2 + $0x1e8] sm:$0xff] %v772
        %817 = vst.msk [vmem:[#allocation2 + $0x1f0] sm:$0xff] %vm482, %v743
        %818 = vst [vmem:[#allocation2 + $0x1f8] sm:$0xff] %v773
        %819 = vst [vmem:[#allocation2 + $0x200] sm:$0xff] %v774
        %820 = vst.msk [vmem:[#allocation2 + $0x208] sm:$0xff] %vm482, %v749
        %821 = vst [vmem:[#allocation2 + $0x210] sm:$0xff] %v775
        %822 = vst [vmem:[#allocation2 + $0x218] sm:$0xff] %v776
        %823 = vst.msk [vmem:[#allocation2 + $0x220] sm:$0xff] %vm482, %v755
        %824 = vst [vmem:[#allocation2 + $0x228] sm:$0xff] %v777
        %825 = vst [vmem:[#allocation2 + $0x230] sm:$0xff] %v778
        %826 = vst.msk [vmem:[#allocation2 + $0x238] sm:$0xff] %vm482, %v761
        %v827 = vld [vmem:[%s299] sm:$0xff]
        %v828 = vld [vmem:[%s299 + $0x8] sm:$0xff]
        %v829 = vld [vmem:[%s299 + $0x10] sm:$0xff]
        %v830 = vld [vmem:[%s299 + $0x18] sm:$0xff]
        %v831 = vld [vmem:[%s299 + $0x20] sm:$0xff]
        %v832 = vld [vmem:[%s299 + $0x28] sm:$0xff]
        %v833 = vld [vmem:[%s299 + $0x30] sm:$0xff]
        %v834 = vld [vmem:[%s299 + $0x38] sm:$0xff]
        %v835 = vld [vmem:[%s299 + $0x40] sm:$0xff]
        %v836 = vld [vmem:[%s299 + $0x48] sm:$0xff]
        %v837 = vld [vmem:[%s299 + $0x50] sm:$0xff]
        %v838 = vld [vmem:[%s299 + $0x58] sm:$0xff]
        %v839 = vld [vmem:[%s299 + $0x60] sm:$0xff]
        %v840 = vld [vmem:[%s299 + $0x68] sm:$0xff]
        %v841 = vld [vmem:[%s299 + $0x70] sm:$0xff]
        %v842 = vld [vmem:[%s299 + $0x78] sm:$0xff]
        %v843 = vld [vmem:[%s299 + $0x80] sm:$0xff]
        %v844 = vld [vmem:[%s299 + $0x88] sm:$0xff]
        %v845 = vld [vmem:[%s299 + $0x90] sm:$0xff]
        %v846 = vld [vmem:[%s299 + $0x98] sm:$0xff]
        %v847 = vld [vmem:[%s299 + $0xa0] sm:$0xff]
        %v848 = vld [vmem:[%s299 + $0xa8] sm:$0xff]
        %v849 = vld [vmem:[%s299 + $0xb0] sm:$0xff]
        %v850 = vld [vmem:[%s299 + $0xb8] sm:$0xff]
        %875 = vrot.lane.b32.xlu0 %v827, 110
        %v876 = vpop.permute.xlu0 %875
        %877 = vrot.lane.b32.xlu0 %v828, 110
        %v878 = vpop.permute.xlu0 %877
        %879 = vrot.lane.b32.xlu0 %v829, 110
        %v880 = vpop.permute.xlu0 %879
        %881 = vrot.lane.b32.xlu0 %v830, 110
        %v882 = vpop.permute.xlu0 %881
        %883 = vrot.lane.b32.xlu0 %v831, 110
        %v884 = vpop.permute.xlu0 %883
        %885 = vrot.lane.b32.xlu0 %v832, 110
        %v886 = vpop.permute.xlu0 %885
        %887 = vrot.lane.b32.xlu0 %v833, 110
        %v888 = vpop.permute.xlu0 %887
        %889 = vrot.lane.b32.xlu0 %v834, 110
        %v890 = vpop.permute.xlu0 %889
        %891 = vrot.lane.b32.xlu0 %v835, 110
        %v892 = vpop.permute.xlu0 %891
        %893 = vrot.lane.b32.xlu0 %v836, 110
        %v894 = vpop.permute.xlu0 %893
        %895 = vrot.lane.b32.xlu0 %v837, 110
        %v896 = vpop.permute.xlu0 %895
        %897 = vrot.lane.b32.xlu0 %v838, 110
        %v898 = vpop.permute.xlu0 %897
        %899 = vrot.lane.b32.xlu0 %v839, 110
        %v900 = vpop.permute.xlu0 %899
        %901 = vrot.lane.b32.xlu0 %v840, 110
        %v902 = vpop.permute.xlu0 %901
        %903 = vrot.lane.b32.xlu0 %v841, 110
        %v904 = vpop.permute.xlu0 %903
        %905 = vrot.lane.b32.xlu0 %v842, 110
        %v906 = vpop.permute.xlu0 %905
        %907 = vrot.lane.b32.xlu0 %v843, 110
        %v908 = vpop.permute.xlu0 %907
        %909 = vrot.lane.b32.xlu0 %v844, 110
        %v910 = vpop.permute.xlu0 %909
        %911 = vrot.lane.b32.xlu0 %v845, 110
        %v912 = vpop.permute.xlu0 %911
        %913 = vrot.lane.b32.xlu0 %v846, 110
        %v914 = vpop.permute.xlu0 %913
        %915 = vrot.lane.b32.xlu0 %v847, 110
        %v916 = vpop.permute.xlu0 %915
        %917 = vrot.lane.b32.xlu0 %v848, 110
        %v918 = vpop.permute.xlu0 %917
        %919 = vrot.lane.b32.xlu0 %v849, 110
        %v920 = vpop.permute.xlu0 %919
        %921 = vrot.lane.b32.xlu0 %v850, 110
        %v922 = vpop.permute.xlu0 %921
        %vm923 = vcmask 900096
        %v924 = vsel %vm923, %v876, %v878
        %v925 = vsel %vm923, %v878, %v880
        %v926 = vsel %vm923, %v882, %v884
        %v927 = vsel %vm923, %v884, %v886
        %v928 = vsel %vm923, %v888, %v890
        %v929 = vsel %vm923, %v890, %v892
        %v930 = vsel %vm923, %v894, %v896
        %v931 = vsel %vm923, %v896, %v898
        %v932 = vsel %vm923, %v900, %v902
        %v933 = vsel %vm923, %v902, %v904
        %v934 = vsel %vm923, %v906, %v908
        %v935 = vsel %vm923, %v908, %v910
        %v936 = vsel %vm923, %v912, %v914
        %v937 = vsel %vm923, %v914, %v916
        %v938 = vsel %vm923, %v918, %v920
        %v939 = vsel %vm923, %v920, %v922
        %964 = vst [vmem:[#allocation2 + $0x240] sm:$0xff] %v924
        %965 = vst [vmem:[#allocation2 + $0x248] sm:$0xff] %v925
        %966 = vst.msk [vmem:[#allocation2 + $0x250] sm:$0xff] %vm482, %v880
        %967 = vst [vmem:[#allocation2 + $0x258] sm:$0xff] %v926
        %968 = vst [vmem:[#allocation2 + $0x260] sm:$0xff] %v927
        %969 = vst.msk [vmem:[#allocation2 + $0x268] sm:$0xff] %vm482, %v886
        %970 = vst [vmem:[#allocation2 + $0x270] sm:$0xff] %v928
        %971 = vst [vmem:[#allocation2 + $0x278] sm:$0xff] %v929
        %972 = vst.msk [vmem:[#allocation2 + $0x280] sm:$0xff] %vm482, %v892
        %973 = vst [vmem:[#allocation2 + $0x288] sm:$0xff] %v930
        %974 = vst [vmem:[#allocation2 + $0x290] sm:$0xff] %v931
        %975 = vst.msk [vmem:[#allocation2 + $0x298] sm:$0xff] %vm482, %v898
        %976 = vst [vmem:[#allocation2 + $0x2a0] sm:$0xff] %v932
        %977 = vst [vmem:[#allocation2 + $0x2a8] sm:$0xff] %v933
        %978 = vst.msk [vmem:[#allocation2 + $0x2b0] sm:$0xff] %vm482, %v904
        %979 = vst [vmem:[#allocation2 + $0x2b8] sm:$0xff] %v934
        %980 = vst [vmem:[#allocation2 + $0x2c0] sm:$0xff] %v935
        %981 = vst.msk [vmem:[#allocation2 + $0x2c8] sm:$0xff] %vm482, %v910
        %982 = vst [vmem:[#allocation2 + $0x2d0] sm:$0xff] %v936
        %983 = vst [vmem:[#allocation2 + $0x2d8] sm:$0xff] %v937
        %984 = vst.msk [vmem:[#allocation2 + $0x2e0] sm:$0xff] %vm482, %v916
        %985 = vst [vmem:[#allocation2 + $0x2e8] sm:$0xff] %v938
        %986 = vst [vmem:[#allocation2 + $0x2f0] sm:$0xff] %v939
        %987 = vst.msk [vmem:[#allocation2 + $0x2f8] sm:$0xff] %vm482, %v922
        %v988 = vld [vmem:[%s299] sm:$0xff]
        %v989 = vld [vmem:[%s299 + $0x8] sm:$0xff]
        %v990 = vld [vmem:[%s299 + $0x10] sm:$0xff]
        %v991 = vld [vmem:[%s299 + $0x18] sm:$0xff]
        %v992 = vld [vmem:[%s299 + $0x20] sm:$0xff]
        %v993 = vld [vmem:[%s299 + $0x28] sm:$0xff]
        %v994 = vld [vmem:[%s299 + $0x30] sm:$0xff]
        %v995 = vld [vmem:[%s299 + $0x38] sm:$0xff]
        %v996 = vld [vmem:[%s299 + $0x40] sm:$0xff]
        %v997 = vld [vmem:[%s299 + $0x48] sm:$0xff]
        %v998 = vld [vmem:[%s299 + $0x50] sm:$0xff]
        %v999 = vld [vmem:[%s299 + $0x58] sm:$0xff]
        %v1000 = vld [vmem:[%s299 + $0x60] sm:$0xff]
        %v1001 = vld [vmem:[%s299 + $0x68] sm:$0xff]
        %v1002 = vld [vmem:[%s299 + $0x70] sm:$0xff]
        %v1003 = vld [vmem:[%s299 + $0x78] sm:$0xff]
        %v1004 = vld [vmem:[%s299 + $0x80] sm:$0xff]
        %v1005 = vld [vmem:[%s299 + $0x88] sm:$0xff]
        %v1006 = vld [vmem:[%s299 + $0x90] sm:$0xff]
        %v1007 = vld [vmem:[%s299 + $0x98] sm:$0xff]
        %v1008 = vld [vmem:[%s299 + $0xa0] sm:$0xff]
        %v1009 = vld [vmem:[%s299 + $0xa8] sm:$0xff]
        %v1010 = vld [vmem:[%s299 + $0xb0] sm:$0xff]
        %v1011 = vld [vmem:[%s299 + $0xb8] sm:$0xff]
        %1036 = vrot.lane.b32.xlu0 %v988, 109
        %v1037 = vpop.permute.xlu0 %1036
        %1038 = vrot.lane.b32.xlu0 %v989, 109
        %v1039 = vpop.permute.xlu0 %1038
        %1040 = vrot.lane.b32.xlu0 %v990, 109
        %v1041 = vpop.permute.xlu0 %1040
        %1042 = vrot.lane.b32.xlu0 %v991, 109
        %v1043 = vpop.permute.xlu0 %1042
        %1044 = vrot.lane.b32.xlu0 %v992, 109
        %v1045 = vpop.permute.xlu0 %1044
        %1046 = vrot.lane.b32.xlu0 %v993, 109
        %v1047 = vpop.permute.xlu0 %1046
        %1048 = vrot.lane.b32.xlu0 %v994, 109
        %v1049 = vpop.permute.xlu0 %1048
        %1050 = vrot.lane.b32.xlu0 %v995, 109
        %v1051 = vpop.permute.xlu0 %1050
        %1052 = vrot.lane.b32.xlu0 %v996, 109
        %v1053 = vpop.permute.xlu0 %1052
        %1054 = vrot.lane.b32.xlu0 %v997, 109
        %v1055 = vpop.permute.xlu0 %1054
        %1056 = vrot.lane.b32.xlu0 %v998, 109
        %v1057 = vpop.permute.xlu0 %1056
        %1058 = vrot.lane.b32.xlu0 %v999, 109
        %v1059 = vpop.permute.xlu0 %1058
        %1060 = vrot.lane.b32.xlu0 %v1000, 109
        %v1061 = vpop.permute.xlu0 %1060
        %1062 = vrot.lane.b32.xlu0 %v1001, 109
        %v1063 = vpop.permute.xlu0 %1062
        %1064 = vrot.lane.b32.xlu0 %v1002, 109
        %v1065 = vpop.permute.xlu0 %1064
        %1066 = vrot.lane.b32.xlu0 %v1003, 109
        %v1067 = vpop.permute.xlu0 %1066
        %1068 = vrot.lane.b32.xlu0 %v1004, 109
        %v1069 = vpop.permute.xlu0 %1068
        %1070 = vrot.lane.b32.xlu0 %v1005, 109
        %v1071 = vpop.permute.xlu0 %1070
        %1072 = vrot.lane.b32.xlu0 %v1006, 109
        %v1073 = vpop.permute.xlu0 %1072
        %1074 = vrot.lane.b32.xlu0 %v1007, 109
        %v1075 = vpop.permute.xlu0 %1074
        %1076 = vrot.lane.b32.xlu0 %v1008, 109
        %v1077 = vpop.permute.xlu0 %1076
        %1078 = vrot.lane.b32.xlu0 %v1009, 109
        %v1079 = vpop.permute.xlu0 %1078
        %1080 = vrot.lane.b32.xlu0 %v1010, 109
        %v1081 = vpop.permute.xlu0 %1080
        %1082 = vrot.lane.b32.xlu0 %v1011, 109
        %v1083 = vpop.permute.xlu0 %1082
        %vm1084 = vcmask 891904
        %v1085 = vsel %vm1084, %v1037, %v1039
        %v1086 = vsel %vm1084, %v1039, %v1041
        %v1087 = vsel %vm1084, %v1043, %v1045
        %v1088 = vsel %vm1084, %v1045, %v1047
        %v1089 = vsel %vm1084, %v1049, %v1051
        %v1090 = vsel %vm1084, %v1051, %v1053
        %v1091 = vsel %vm1084, %v1055, %v1057
        %v1092 = vsel %vm1084, %v1057, %v1059
        %v1093 = vsel %vm1084, %v1061, %v1063
        %v1094 = vsel %vm1084, %v1063, %v1065
        %v1095 = vsel %vm1084, %v1067, %v1069
        %v1096 = vsel %vm1084, %v1069, %v1071
        %v1097 = vsel %vm1084, %v1073, %v1075
        %v1098 = vsel %vm1084, %v1075, %v1077
        %v1099 = vsel %vm1084, %v1079, %v1081
        %v1100 = vsel %vm1084, %v1081, %v1083
        %1125 = vst [vmem:[#allocation2 + $0x300] sm:$0xff] %v1085
        %1126 = vst [vmem:[#allocation2 + $0x308] sm:$0xff] %v1086
        %1127 = vst.msk [vmem:[#allocation2 + $0x310] sm:$0xff] %vm482, %v1041
        %1128 = vst [vmem:[#allocation2 + $0x318] sm:$0xff] %v1087
        %1129 = vst [vmem:[#allocation2 + $0x320] sm:$0xff] %v1088
        %1130 = vst.msk [vmem:[#allocation2 + $0x328] sm:$0xff] %vm482, %v1047
        %1131 = vst [vmem:[#allocation2 + $0x330] sm:$0xff] %v1089
        %1132 = vst [vmem:[#allocation2 + $0x338] sm:$0xff] %v1090
        %1133 = vst.msk [vmem:[#allocation2 + $0x340] sm:$0xff] %vm482, %v1053
        %1134 = vst [vmem:[#allocation2 + $0x348] sm:$0xff] %v1091
        %1135 = vst [vmem:[#allocation2 + $0x350] sm:$0xff] %v1092
        %1136 = vst.msk [vmem:[#allocation2 + $0x358] sm:$0xff] %vm482, %v1059
        %1137 = vst [vmem:[#allocation2 + $0x360] sm:$0xff] %v1093
        %1138 = vst [vmem:[#allocation2 + $0x368] sm:$0xff] %v1094
        %1139 = vst.msk [vmem:[#allocation2 + $0x370] sm:$0xff] %vm482, %v1065
        %1140 = vst [vmem:[#allocation2 + $0x378] sm:$0xff] %v1095
        %1141 = vst [vmem:[#allocation2 + $0x380] sm:$0xff] %v1096
        %1142 = vst.msk [vmem:[#allocation2 + $0x388] sm:$0xff] %vm482, %v1071
        %1143 = vst [vmem:[#allocation2 + $0x390] sm:$0xff] %v1097
        %1144 = vst [vmem:[#allocation2 + $0x398] sm:$0xff] %v1098
        %1145 = vst.msk [vmem:[#allocation2 + $0x3a0] sm:$0xff] %vm482, %v1077
        %1146 = vst [vmem:[#allocation2 + $0x3a8] sm:$0xff] %v1099
        %1147 = vst [vmem:[#allocation2 + $0x3b0] sm:$0xff] %v1100
        %1148 = vst.msk [vmem:[#allocation2 + $0x3b8] sm:$0xff] %vm482, %v1083
        %v1149 = vld [vmem:[%s299] sm:$0xff]
        %v1150 = vld [vmem:[%s299 + $0x8] sm:$0xff]
        %v1151 = vld [vmem:[%s299 + $0x10] sm:$0xff]
        %v1152 = vld [vmem:[%s299 + $0x18] sm:$0xff]
        %v1153 = vld [vmem:[%s299 + $0x20] sm:$0xff]
        %v1154 = vld [vmem:[%s299 + $0x28] sm:$0xff]
        %v1155 = vld [vmem:[%s299 + $0x30] sm:$0xff]
        %v1156 = vld [vmem:[%s299 + $0x38] sm:$0xff]
        %v1157 = vld [vmem:[%s299 + $0x40] sm:$0xff]
        %v1158 = vld [vmem:[%s299 + $0x48] sm:$0xff]
        %v1159 = vld [vmem:[%s299 + $0x50] sm:$0xff]
        %v1160 = vld [vmem:[%s299 + $0x58] sm:$0xff]
        %v1161 = vld [vmem:[%s299 + $0x60] sm:$0xff]
        %v1162 = vld [vmem:[%s299 + $0x68] sm:$0xff]
        %v1163 = vld [vmem:[%s299 + $0x70] sm:$0xff]
        %v1164 = vld [vmem:[%s299 + $0x78] sm:$0xff]
        %v1165 = vld [vmem:[%s299 + $0x80] sm:$0xff]
        %v1166 = vld [vmem:[%s299 + $0x88] sm:$0xff]
        %v1167 = vld [vmem:[%s299 + $0x90] sm:$0xff]
        %v1168 = vld [vmem:[%s299 + $0x98] sm:$0xff]
        %v1169 = vld [vmem:[%s299 + $0xa0] sm:$0xff]
        %v1170 = vld [vmem:[%s299 + $0xa8] sm:$0xff]
        %v1171 = vld [vmem:[%s299 + $0xb0] sm:$0xff]
        %v1172 = vld [vmem:[%s299 + $0xb8] sm:$0xff]
        %1197 = vrot.lane.b32.xlu0 %v1149, 108
        %v1198 = vpop.permute.xlu0 %1197
        %1199 = vrot.lane.b32.xlu0 %v1150, 108
        %v1200 = vpop.permute.xlu0 %1199
        %1201 = vrot.lane.b32.xlu0 %v1151, 108
        %v1202 = vpop.permute.xlu0 %1201
        %1203 = vrot.lane.b32.xlu0 %v1152, 108
        %v1204 = vpop.permute.xlu0 %1203
        %1205 = vrot.lane.b32.xlu0 %v1153, 108
        %v1206 = vpop.permute.xlu0 %1205
        %1207 = vrot.lane.b32.xlu0 %v1154, 108
        %v1208 = vpop.permute.xlu0 %1207
        %1209 = vrot.lane.b32.xlu0 %v1155, 108
        %v1210 = vpop.permute.xlu0 %1209
        %1211 = vrot.lane.b32.xlu0 %v1156, 108
        %v1212 = vpop.permute.xlu0 %1211
        %1213 = vrot.lane.b32.xlu0 %v1157, 108
        %v1214 = vpop.permute.xlu0 %1213
        %1215 = vrot.lane.b32.xlu0 %v1158, 108
        %v1216 = vpop.permute.xlu0 %1215
        %1217 = vrot.lane.b32.xlu0 %v1159, 108
        %v1218 = vpop.permute.xlu0 %1217
        %1219 = vrot.lane.b32.xlu0 %v1160, 108
        %v1220 = vpop.permute.xlu0 %1219
        %1221 = vrot.lane.b32.xlu0 %v1161, 108
        %v1222 = vpop.permute.xlu0 %1221
        %1223 = vrot.lane.b32.xlu0 %v1162, 108
        %v1224 = vpop.permute.xlu0 %1223
        %1225 = vrot.lane.b32.xlu0 %v1163, 108
        %v1226 = vpop.permute.xlu0 %1225
        %1227 = vrot.lane.b32.xlu0 %v1164, 108
        %v1228 = vpop.permute.xlu0 %1227
        %1229 = vrot.lane.b32.xlu0 %v1165, 108
        %v1230 = vpop.permute.xlu0 %1229
        %1231 = vrot.lane.b32.xlu0 %v1166, 108
        %v1232 = vpop.permute.xlu0 %1231
        %1233 = vrot.lane.b32.xlu0 %v1167, 108
        %v1234 = vpop.permute.xlu0 %1233
        %1235 = vrot.lane.b32.xlu0 %v1168, 108
        %v1236 = vpop.permute.xlu0 %1235
        %1237 = vrot.lane.b32.xlu0 %v1169, 108
        %v1238 = vpop.permute.xlu0 %1237
        %1239 = vrot.lane.b32.xlu0 %v1170, 108
        %v1240 = vpop.permute.xlu0 %1239
        %1241 = vrot.lane.b32.xlu0 %v1171, 108
        %v1242 = vpop.permute.xlu0 %1241
        %1243 = vrot.lane.b32.xlu0 %v1172, 108
        %v1244 = vpop.permute.xlu0 %1243
        %vm1245 = vcmask 883712
        %v1246 = vsel %vm1245, %v1198, %v1200
        %v1247 = vsel %vm1245, %v1200, %v1202
        %v1248 = vsel %vm1245, %v1204, %v1206
        %v1249 = vsel %vm1245, %v1206, %v1208
        %v1250 = vsel %vm1245, %v1210, %v1212
        %v1251 = vsel %vm1245, %v1212, %v1214
        %v1252 = vsel %vm1245, %v1216, %v1218
        %v1253 = vsel %vm1245, %v1218, %v1220
        %v1254 = vsel %vm1245, %v1222, %v1224
        %v1255 = vsel %vm1245, %v1224, %v1226
        %v1256 = vsel %vm1245, %v1228, %v1230
        %v1257 = vsel %vm1245, %v1230, %v1232
        %v1258 = vsel %vm1245, %v1234, %v1236
        %v1259 = vsel %vm1245, %v1236, %v1238
        %v1260 = vsel %vm1245, %v1240, %v1242
        %v1261 = vsel %vm1245, %v1242, %v1244
        %1286 = vst [vmem:[#allocation2 + $0x3c0] sm:$0xff] %v1246
        %1287 = vst [vmem:[#allocation2 + $0x3c8] sm:$0xff] %v1247
        %1288 = vst.msk [vmem:[#allocation2 + $0x3d0] sm:$0xff] %vm482, %v1202
        %1289 = vst [vmem:[#allocation2 + $0x3d8] sm:$0xff] %v1248
        %1290 = vst [vmem:[#allocation2 + $0x3e0] sm:$0xff] %v1249
        %1291 = vst.msk [vmem:[#allocation2 + $0x3e8] sm:$0xff] %vm482, %v1208
        %1292 = vst [vmem:[#allocation2 + $0x3f0] sm:$0xff] %v1250
        %1293 = vst [vmem:[#allocation2 + $0x3f8] sm:$0xff] %v1251
        %1294 = vst.msk [vmem:[#allocation2 + $0x400] sm:$0xff] %vm482, %v1214
        %1295 = vst [vmem:[#allocation2 + $0x408] sm:$0xff] %v1252
        %1296 = vst [vmem:[#allocation2 + $0x410] sm:$0xff] %v1253
        %1297 = vst.msk [vmem:[#allocation2 + $0x418] sm:$0xff] %vm482, %v1220
        %1298 = vst [vmem:[#allocation2 + $0x420] sm:$0xff] %v1254
        %1299 = vst [vmem:[#allocation2 + $0x428] sm:$0xff] %v1255
        %1300 = vst.msk [vmem:[#allocation2 + $0x430] sm:$0xff] %vm482, %v1226
        %1301 = vst [vmem:[#allocation2 + $0x438] sm:$0xff] %v1256
        %1302 = vst [vmem:[#allocation2 + $0x440] sm:$0xff] %v1257
        %1303 = vst.msk [vmem:[#allocation2 + $0x448] sm:$0xff] %vm482, %v1232
        %1304 = vst [vmem:[#allocation2 + $0x450] sm:$0xff] %v1258
        %1305 = vst [vmem:[#allocation2 + $0x458] sm:$0xff] %v1259
        %1306 = vst.msk [vmem:[#allocation2 + $0x460] sm:$0xff] %vm482, %v1238
        %1307 = vst [vmem:[#allocation2 + $0x468] sm:$0xff] %v1260
        %1308 = vst [vmem:[#allocation2 + $0x470] sm:$0xff] %v1261
        %1309 = vst.msk [vmem:[#allocation2 + $0x478] sm:$0xff] %vm482, %v1244
        %v1310 = vld [vmem:[%s299] sm:$0xff]
        %v1311 = vld [vmem:[%s299 + $0x8] sm:$0xff]
        %v1312 = vld [vmem:[%s299 + $0x10] sm:$0xff]
        %v1313 = vld [vmem:[%s299 + $0x18] sm:$0xff]
        %v1314 = vld [vmem:[%s299 + $0x20] sm:$0xff]
        %v1315 = vld [vmem:[%s299 + $0x28] sm:$0xff]
        %v1316 = vld [vmem:[%s299 + $0x30] sm:$0xff]
        %v1317 = vld [vmem:[%s299 + $0x38] sm:$0xff]
        %v1318 = vld [vmem:[%s299 + $0x40] sm:$0xff]
        %v1319 = vld [vmem:[%s299 + $0x48] sm:$0xff]
        %v1320 = vld [vmem:[%s299 + $0x50] sm:$0xff]
        %v1321 = vld [vmem:[%s299 + $0x58] sm:$0xff]
        %v1322 = vld [vmem:[%s299 + $0x60] sm:$0xff]
        %v1323 = vld [vmem:[%s299 + $0x68] sm:$0xff]
        %v1324 = vld [vmem:[%s299 + $0x70] sm:$0xff]
        %v1325 = vld [vmem:[%s299 + $0x78] sm:$0xff]
        %v1326 = vld [vmem:[%s299 + $0x80] sm:$0xff]
        %v1327 = vld [vmem:[%s299 + $0x88] sm:$0xff]
        %v1328 = vld [vmem:[%s299 + $0x90] sm:$0xff]
        %v1329 = vld [vmem:[%s299 + $0x98] sm:$0xff]
        %v1330 = vld [vmem:[%s299 + $0xa0] sm:$0xff]
        %v1331 = vld [vmem:[%s299 + $0xa8] sm:$0xff]
        %v1332 = vld [vmem:[%s299 + $0xb0] sm:$0xff]
        %v1333 = vld [vmem:[%s299 + $0xb8] sm:$0xff]
        %1358 = vrot.lane.b32.xlu0 %v1310, 92
        %v1359 = vpop.permute.xlu0 %1358
        %1360 = vrot.lane.b32.xlu0 %v1311, 92
        %v1361 = vpop.permute.xlu0 %1360
        %1362 = vrot.lane.b32.xlu0 %v1312, 92
        %v1363 = vpop.permute.xlu0 %1362
        %1364 = vrot.lane.b32.xlu0 %v1313, 92
        %v1365 = vpop.permute.xlu0 %1364
        %1366 = vrot.lane.b32.xlu0 %v1314, 92
        %v1367 = vpop.permute.xlu0 %1366
        %1368 = vrot.lane.b32.xlu0 %v1315, 92
        %v1369 = vpop.permute.xlu0 %1368
        %1370 = vrot.lane.b32.xlu0 %v1316, 92
        %v1371 = vpop.permute.xlu0 %1370
        %1372 = vrot.lane.b32.xlu0 %v1317, 92
        %v1373 = vpop.permute.xlu0 %1372
        %1374 = vrot.lane.b32.xlu0 %v1318, 92
        %v1375 = vpop.permute.xlu0 %1374
        %1376 = vrot.lane.b32.xlu0 %v1319, 92
        %v1377 = vpop.permute.xlu0 %1376
        %1378 = vrot.lane.b32.xlu0 %v1320, 92
        %v1379 = vpop.permute.xlu0 %1378
        %1380 = vrot.lane.b32.xlu0 %v1321, 92
        %v1381 = vpop.permute.xlu0 %1380
        %1382 = vrot.lane.b32.xlu0 %v1322, 92
        %v1383 = vpop.permute.xlu0 %1382
        %1384 = vrot.lane.b32.xlu0 %v1323, 92
        %v1385 = vpop.permute.xlu0 %1384
        %1386 = vrot.lane.b32.xlu0 %v1324, 92
        %v1387 = vpop.permute.xlu0 %1386
        %1388 = vrot.lane.b32.xlu0 %v1325, 92
        %v1389 = vpop.permute.xlu0 %1388
        %1390 = vrot.lane.b32.xlu0 %v1326, 92
        %v1391 = vpop.permute.xlu0 %1390
        %1392 = vrot.lane.b32.xlu0 %v1327, 92
        %v1393 = vpop.permute.xlu0 %1392
        %1394 = vrot.lane.b32.xlu0 %v1328, 92
        %v1395 = vpop.permute.xlu0 %1394
        %1396 = vrot.lane.b32.xlu0 %v1329, 92
        %v1397 = vpop.permute.xlu0 %1396
        %1398 = vrot.lane.b32.xlu0 %v1330, 92
        %v1399 = vpop.permute.xlu0 %1398
        %1400 = vrot.lane.b32.xlu0 %v1331, 92
        %v1401 = vpop.permute.xlu0 %1400
        %1402 = vrot.lane.b32.xlu0 %v1332, 92
        %v1403 = vpop.permute.xlu0 %1402
        %1404 = vrot.lane.b32.xlu0 %v1333, 92
        %v1405 = vpop.permute.xlu0 %1404
        %vm1406 = vcmask 752640
        %v1407 = vsel %vm1406, %v1359, %v1361
        %v1408 = vsel %vm1406, %v1361, %v1363
        %v1409 = vsel %vm1406, %v1365, %v1367
        %v1410 = vsel %vm1406, %v1367, %v1369
        %v1411 = vsel %vm1406, %v1371, %v1373
        %v1412 = vsel %vm1406, %v1373, %v1375
        %v1413 = vsel %vm1406, %v1377, %v1379
        %v1414 = vsel %vm1406, %v1379, %v1381
        %v1415 = vsel %vm1406, %v1383, %v1385
        %v1416 = vsel %vm1406, %v1385, %v1387
        %v1417 = vsel %vm1406, %v1389, %v1391
        %v1418 = vsel %vm1406, %v1391, %v1393
        %v1419 = vsel %vm1406, %v1395, %v1397
        %v1420 = vsel %vm1406, %v1397, %v1399
        %v1421 = vsel %vm1406, %v1401, %v1403
        %v1422 = vsel %vm1406, %v1403, %v1405
        %1447 = vst [vmem:[#allocation2 + $0x480] sm:$0xff] %v1407
        %1448 = vst [vmem:[#allocation2 + $0x488] sm:$0xff] %v1408
        %1449 = vst.msk [vmem:[#allocation2 + $0x490] sm:$0xff] %vm482, %v1363
        %1450 = vst [vmem:[#allocation2 + $0x498] sm:$0xff] %v1409
        %1451 = vst [vmem:[#allocation2 + $0x4a0] sm:$0xff] %v1410
        %1452 = vst.msk [vmem:[#allocation2 + $0x4a8] sm:$0xff] %vm482, %v1369
        %1453 = vst [vmem:[#allocation2 + $0x4b0] sm:$0xff] %v1411
        %1454 = vst [vmem:[#allocation2 + $0x4b8] sm:$0xff] %v1412
        %1455 = vst.msk [vmem:[#allocation2 + $0x4c0] sm:$0xff] %vm482, %v1375
        %1456 = vst [vmem:[#allocation2 + $0x4c8] sm:$0xff] %v1413
        %1457 = vst [vmem:[#allocation2 + $0x4d0] sm:$0xff] %v1414
        %1458 = vst.msk [vmem:[#allocation2 + $0x4d8] sm:$0xff] %vm482, %v1381
        %1459 = vst [vmem:[#allocation2 + $0x4e0] sm:$0xff] %v1415
        %1460 = vst [vmem:[#allocation2 + $0x4e8] sm:$0xff] %v1416
        %1461 = vst.msk [vmem:[#allocation2 + $0x4f0] sm:$0xff] %vm482, %v1387
        %1462 = vst [vmem:[#allocation2 + $0x4f8] sm:$0xff] %v1417
        %1463 = vst [vmem:[#allocation2 + $0x500] sm:$0xff] %v1418
        %1464 = vst.msk [vmem:[#allocation2 + $0x508] sm:$0xff] %vm482, %v1393
        %1465 = vst [vmem:[#allocation2 + $0x510] sm:$0xff] %v1419
        %1466 = vst [vmem:[#allocation2 + $0x518] sm:$0xff] %v1420
        %1467 = vst.msk [vmem:[#allocation2 + $0x520] sm:$0xff] %vm482, %v1399
        %1468 = vst [vmem:[#allocation2 + $0x528] sm:$0xff] %v1421
        %1469 = vst [vmem:[#allocation2 + $0x530] sm:$0xff] %v1422
        %1470 = vst.msk [vmem:[#allocation2 + $0x538] sm:$0xff] %vm482, %v1405
        %v1471 = vld [vmem:[%s299] sm:$0xff]
        %v1472 = vld [vmem:[%s299 + $0x8] sm:$0xff]
        %v1473 = vld [vmem:[%s299 + $0x10] sm:$0xff]
        %v1474 = vld [vmem:[%s299 + $0x18] sm:$0xff]
        %v1475 = vld [vmem:[%s299 + $0x20] sm:$0xff]
        %v1476 = vld [vmem:[%s299 + $0x28] sm:$0xff]
        %v1477 = vld [vmem:[%s299 + $0x30] sm:$0xff]
        %v1478 = vld [vmem:[%s299 + $0x38] sm:$0xff]
        %v1479 = vld [vmem:[%s299 + $0x40] sm:$0xff]
        %v1480 = vld [vmem:[%s299 + $0x48] sm:$0xff]
        %v1481 = vld [vmem:[%s299 + $0x50] sm:$0xff]
        %v1482 = vld [vmem:[%s299 + $0x58] sm:$0xff]
        %v1483 = vld [vmem:[%s299 + $0x60] sm:$0xff]
        %v1484 = vld [vmem:[%s299 + $0x68] sm:$0xff]
        %v1485 = vld [vmem:[%s299 + $0x70] sm:$0xff]
        %v1486 = vld [vmem:[%s299 + $0x78] sm:$0xff]
        %v1487 = vld [vmem:[%s299 + $0x80] sm:$0xff]
        %v1488 = vld [vmem:[%s299 + $0x88] sm:$0xff]
        %v1489 = vld [vmem:[%s299 + $0x90] sm:$0xff]
        %v1490 = vld [vmem:[%s299 + $0x98] sm:$0xff]
        %v1491 = vld [vmem:[%s299 + $0xa0] sm:$0xff]
        %v1492 = vld [vmem:[%s299 + $0xa8] sm:$0xff]
        %v1493 = vld [vmem:[%s299 + $0xb0] sm:$0xff]
        %v1494 = vld [vmem:[%s299 + $0xb8] sm:$0xff]
        %1519 = vrot.lane.b32.xlu0 %v1471, 91
        %v1520 = vpop.permute.xlu0 %1519
        %1521 = vrot.lane.b32.xlu0 %v1472, 91
        %v1522 = vpop.permute.xlu0 %1521
        %1523 = vrot.lane.b32.xlu0 %v1473, 91
        %v1524 = vpop.permute.xlu0 %1523
        %1525 = vrot.lane.b32.xlu0 %v1474, 91
        %v1526 = vpop.permute.xlu0 %1525
        %1527 = vrot.lane.b32.xlu0 %v1475, 91
        %v1528 = vpop.permute.xlu0 %1527
        %1529 = vrot.lane.b32.xlu0 %v1476, 91
        %v1530 = vpop.permute.xlu0 %1529
        %1531 = vrot.lane.b32.xlu0 %v1477, 91
        %v1532 = vpop.permute.xlu0 %1531
        %1533 = vrot.lane.b32.xlu0 %v1478, 91
        %v1534 = vpop.permute.xlu0 %1533
        %1535 = vrot.lane.b32.xlu0 %v1479, 91
        %v1536 = vpop.permute.xlu0 %1535
        %1537 = vrot.lane.b32.xlu0 %v1480, 91
        %v1538 = vpop.permute.xlu0 %1537
        %1539 = vrot.lane.b32.xlu0 %v1481, 91
        %v1540 = vpop.permute.xlu0 %1539
        %1541 = vrot.lane.b32.xlu0 %v1482, 91
        %v1542 = vpop.permute.xlu0 %1541
        %1543 = vrot.lane.b32.xlu0 %v1483, 91
        %v1544 = vpop.permute.xlu0 %1543
        %1545 = vrot.lane.b32.xlu0 %v1484, 91
        %v1546 = vpop.permute.xlu0 %1545
        %1547 = vrot.lane.b32.xlu0 %v1485, 91
        %v1548 = vpop.permute.xlu0 %1547
        %1549 = vrot.lane.b32.xlu0 %v1486, 91
        %v1550 = vpop.permute.xlu0 %1549
        %1551 = vrot.lane.b32.xlu0 %v1487, 91
        %v1552 = vpop.permute.xlu0 %1551
        %1553 = vrot.lane.b32.xlu0 %v1488, 91
        %v1554 = vpop.permute.xlu0 %1553
        %1555 = vrot.lane.b32.xlu0 %v1489, 91
        %v1556 = vpop.permute.xlu0 %1555
        %1557 = vrot.lane.b32.xlu0 %v1490, 91
        %v1558 = vpop.permute.xlu0 %1557
        %1559 = vrot.lane.b32.xlu0 %v1491, 91
        %v1560 = vpop.permute.xlu0 %1559
        %1561 = vrot.lane.b32.xlu0 %v1492, 91
        %v1562 = vpop.permute.xlu0 %1561
        %1563 = vrot.lane.b32.xlu0 %v1493, 91
        %v1564 = vpop.permute.xlu0 %1563
        %1565 = vrot.lane.b32.xlu0 %v1494, 91
        %v1566 = vpop.permute.xlu0 %1565
        %vm1567 = vcmask 744448
        %v1568 = vsel %vm1567, %v1520, %v1522
        %v1569 = vsel %vm1567, %v1522, %v1524
        %v1570 = vsel %vm1567, %v1526, %v1528
        %v1571 = vsel %vm1567, %v1528, %v1530
        %v1572 = vsel %vm1567, %v1532, %v1534
        %v1573 = vsel %vm1567, %v1534, %v1536
        %v1574 = vsel %vm1567, %v1538, %v1540
        %v1575 = vsel %vm1567, %v1540, %v1542
        %v1576 = vsel %vm1567, %v1544, %v1546
        %v1577 = vsel %vm1567, %v1546, %v1548
        %v1578 = vsel %vm1567, %v1550, %v1552
        %v1579 = vsel %vm1567, %v1552, %v1554
        %v1580 = vsel %vm1567, %v1556, %v1558
        %v1581 = vsel %vm1567, %v1558, %v1560
        %v1582 = vsel %vm1567, %v1562, %v1564
        %v1583 = vsel %vm1567, %v1564, %v1566
        %1608 = vst [vmem:[#allocation2 + $0x540] sm:$0xff] %v1568
        %1609 = vst [vmem:[#allocation2 + $0x548] sm:$0xff] %v1569
        %1610 = vst.msk [vmem:[#allocation2 + $0x550] sm:$0xff] %vm482, %v1524
        %1611 = vst [vmem:[#allocation2 + $0x558] sm:$0xff] %v1570
        %1612 = vst [vmem:[#allocation2 + $0x560] sm:$0xff] %v1571
        %1613 = vst.msk [vmem:[#allocation2 + $0x568] sm:$0xff] %vm482, %v1530
        %1614 = vst [vmem:[#allocation2 + $0x570] sm:$0xff] %v1572
        %1615 = vst [vmem:[#allocation2 + $0x578] sm:$0xff] %v1573
        %1616 = vst.msk [vmem:[#allocation2 + $0x580] sm:$0xff] %vm482, %v1536
        %1617 = vst [vmem:[#allocation2 + $0x588] sm:$0xff] %v1574
        %1618 = vst [vmem:[#allocation2 + $0x590] sm:$0xff] %v1575
        %1619 = vst.msk [vmem:[#allocation2 + $0x598] sm:$0xff] %vm482, %v1542
        %1620 = vst [vmem:[#allocation2 + $0x5a0] sm:$0xff] %v1576
        %1621 = vst [vmem:[#allocation2 + $0x5a8] sm:$0xff] %v1577
        %1622 = vst.msk [vmem:[#allocation2 + $0x5b0] sm:$0xff] %vm482, %v1548
        %1623 = vst [vmem:[#allocation2 + $0x5b8] sm:$0xff] %v1578
        %1624 = vst [vmem:[#allocation2 + $0x5c0] sm:$0xff] %v1579
        %1625 = vst.msk [vmem:[#allocation2 + $0x5c8] sm:$0xff] %vm482, %v1554
        %1626 = vst [vmem:[#allocation2 + $0x5d0] sm:$0xff] %v1580
        %1627 = vst [vmem:[#allocation2 + $0x5d8] sm:$0xff] %v1581
        %1628 = vst.msk [vmem:[#allocation2 + $0x5e0] sm:$0xff] %vm482, %v1560
        %1629 = vst [vmem:[#allocation2 + $0x5e8] sm:$0xff] %v1582
        %1630 = vst [vmem:[#allocation2 + $0x5f0] sm:$0xff] %v1583
        %1631 = vst.msk [vmem:[#allocation2 + $0x5f8] sm:$0xff] %vm482, %v1566
        %v1632 = vld [vmem:[%s299] sm:$0xff]
        %v1633 = vld [vmem:[%s299 + $0x8] sm:$0xff]
        %v1634 = vld [vmem:[%s299 + $0x10] sm:$0xff]
        %v1635 = vld [vmem:[%s299 + $0x18] sm:$0xff]
        %v1636 = vld [vmem:[%s299 + $0x20] sm:$0xff]
        %v1637 = vld [vmem:[%s299 + $0x28] sm:$0xff]
        %v1638 = vld [vmem:[%s299 + $0x30] sm:$0xff]
        %v1639 = vld [vmem:[%s299 + $0x38] sm:$0xff]
        %v1640 = vld [vmem:[%s299 + $0x40] sm:$0xff]
        %v1641 = vld [vmem:[%s299 + $0x48] sm:$0xff]
        %v1642 = vld [vmem:[%s299 + $0x50] sm:$0xff]
        %v1643 = vld [vmem:[%s299 + $0x58] sm:$0xff]
        %v1644 = vld [vmem:[%s299 + $0x60] sm:$0xff]
        %v1645 = vld [vmem:[%s299 + $0x68] sm:$0xff]
        %v1646 = vld [vmem:[%s299 + $0x70] sm:$0xff]
        %v1647 = vld [vmem:[%s299 + $0x78] sm:$0xff]
        %v1648 = vld [vmem:[%s299 + $0x80] sm:$0xff]
        %v1649 = vld [vmem:[%s299 + $0x88] sm:$0xff]
        %v1650 = vld [vmem:[%s299 + $0x90] sm:$0xff]
        %v1651 = vld [vmem:[%s299 + $0x98] sm:$0xff]
        %v1652 = vld [vmem:[%s299 + $0xa0] sm:$0xff]
        %v1653 = vld [vmem:[%s299 + $0xa8] sm:$0xff]
        %v1654 = vld [vmem:[%s299 + $0xb0] sm:$0xff]
        %v1655 = vld [vmem:[%s299 + $0xb8] sm:$0xff]
        %1680 = vrot.lane.b32.xlu0 %v1632, 90
        %v1681 = vpop.permute.xlu0 %1680
        %1682 = vrot.lane.b32.xlu0 %v1633, 90
        %v1683 = vpop.permute.xlu0 %1682
        %1684 = vrot.lane.b32.xlu0 %v1634, 90
        %v1685 = vpop.permute.xlu0 %1684
        %1686 = vrot.lane.b32.xlu0 %v1635, 90
        %v1687 = vpop.permute.xlu0 %1686
        %1688 = vrot.lane.b32.xlu0 %v1636, 90
        %v1689 = vpop.permute.xlu0 %1688
        %1690 = vrot.lane.b32.xlu0 %v1637, 90
        %v1691 = vpop.permute.xlu0 %1690
        %1692 = vrot.lane.b32.xlu0 %v1638, 90
        %v1693 = vpop.permute.xlu0 %1692
        %1694 = vrot.lane.b32.xlu0 %v1639, 90
        %v1695 = vpop.permute.xlu0 %1694
        %1696 = vrot.lane.b32.xlu0 %v1640, 90
        %v1697 = vpop.permute.xlu0 %1696
        %1698 = vrot.lane.b32.xlu0 %v1641, 90
        %v1699 = vpop.permute.xlu0 %1698
        %1700 = vrot.lane.b32.xlu0 %v1642, 90
        %v1701 = vpop.permute.xlu0 %1700
        %1702 = vrot.lane.b32.xlu0 %v1643, 90
        %v1703 = vpop.permute.xlu0 %1702
        %1704 = vrot.lane.b32.xlu0 %v1644, 90
        %v1705 = vpop.permute.xlu0 %1704
        %1706 = vrot.lane.b32.xlu0 %v1645, 90
        %v1707 = vpop.permute.xlu0 %1706
        %1708 = vrot.lane.b32.xlu0 %v1646, 90
        %v1709 = vpop.permute.xlu0 %1708
        %1710 = vrot.lane.b32.xlu0 %v1647, 90
        %v1711 = vpop.permute.xlu0 %1710
        %1712 = vrot.lane.b32.xlu0 %v1648, 90
        %v1713 = vpop.permute.xlu0 %1712
        %1714 = vrot.lane.b32.xlu0 %v1649, 90
        %v1715 = vpop.permute.xlu0 %1714
        %1716 = vrot.lane.b32.xlu0 %v1650, 90
        %v1717 = vpop.permute.xlu0 %1716
        %1718 = vrot.lane.b32.xlu0 %v1651, 90
        %v1719 = vpop.permute.xlu0 %1718
        %1720 = vrot.lane.b32.xlu0 %v1652, 90
        %v1721 = vpop.permute.xlu0 %1720
        %1722 = vrot.lane.b32.xlu0 %v1653, 90
        %v1723 = vpop.permute.xlu0 %1722
        %1724 = vrot.lane.b32.xlu0 %v1654, 90
        %v1725 = vpop.permute.xlu0 %1724
        %1726 = vrot.lane.b32.xlu0 %v1655, 90
        %v1727 = vpop.permute.xlu0 %1726
        %vm1728 = vcmask 736256
        %v1729 = vsel %vm1728, %v1681, %v1683
        %v1730 = vsel %vm1728, %v1683, %v1685
        %v1731 = vsel %vm1728, %v1687, %v1689
        %v1732 = vsel %vm1728, %v1689, %v1691
        %v1733 = vsel %vm1728, %v1693, %v1695
        %v1734 = vsel %vm1728, %v1695, %v1697
        %v1735 = vsel %vm1728, %v1699, %v1701
        %v1736 = vsel %vm1728, %v1701, %v1703
        %v1737 = vsel %vm1728, %v1705, %v1707
        %v1738 = vsel %vm1728, %v1707, %v1709
        %v1739 = vsel %vm1728, %v1711, %v1713
        %v1740 = vsel %vm1728, %v1713, %v1715
        %v1741 = vsel %vm1728, %v1717, %v1719
        %v1742 = vsel %vm1728, %v1719, %v1721
        %v1743 = vsel %vm1728, %v1723, %v1725
        %v1744 = vsel %vm1728, %v1725, %v1727
        %1769 = vst [vmem:[#allocation2 + $0x600] sm:$0xff] %v1729
        %1770 = vst [vmem:[#allocation2 + $0x608] sm:$0xff] %v1730
        %1771 = vst.msk [vmem:[#allocation2 + $0x610] sm:$0xff] %vm482, %v1685
        %1772 = vst [vmem:[#allocation2 + $0x618] sm:$0xff] %v1731
        %1773 = vst [vmem:[#allocation2 + $0x620] sm:$0xff] %v1732
        %1774 = vst.msk [vmem:[#allocation2 + $0x628] sm:$0xff] %vm482, %v1691
        %1775 = vst [vmem:[#allocation2 + $0x630] sm:$0xff] %v1733
        %1776 = vst [vmem:[#allocation2 + $0x638] sm:$0xff] %v1734
        %1777 = vst.msk [vmem:[#allocation2 + $0x640] sm:$0xff] %vm482, %v1697
        %1778 = vst [vmem:[#allocation2 + $0x648] sm:$0xff] %v1735
        %1779 = vst [vmem:[#allocation2 + $0x650] sm:$0xff] %v1736
        %1780 = vst.msk [vmem:[#allocation2 + $0x658] sm:$0xff] %vm482, %v1703
        %1781 = vst [vmem:[#allocation2 + $0x660] sm:$0xff] %v1737
        %1782 = vst [vmem:[#allocation2 + $0x668] sm:$0xff] %v1738
        %1783 = vst.msk [vmem:[#allocation2 + $0x670] sm:$0xff] %vm482, %v1709
        %1784 = vst [vmem:[#allocation2 + $0x678] sm:$0xff] %v1739
        %1785 = vst [vmem:[#allocation2 + $0x680] sm:$0xff] %v1740
        %1786 = vst.msk [vmem:[#allocation2 + $0x688] sm:$0xff] %vm482, %v1715
        %1787 = vst [vmem:[#allocation2 + $0x690] sm:$0xff] %v1741
        %1788 = vst [vmem:[#allocation2 + $0x698] sm:$0xff] %v1742
        %1789 = vst.msk [vmem:[#allocation2 + $0x6a0] sm:$0xff] %vm482, %v1721
        %1790 = vst [vmem:[#allocation2 + $0x6a8] sm:$0xff] %v1743
        %1791 = vst [vmem:[#allocation2 + $0x6b0] sm:$0xff] %v1744
        %1792 = vst.msk [vmem:[#allocation2 + $0x6b8] sm:$0xff] %vm482, %v1727
        %v1793 = vld [vmem:[#allocation10] sm:$0xff]
        %v1794 = vld [vmem:[#allocation10 + $0x8] sm:$0xff]
        %v1795 = vld [vmem:[#allocation10 + $0x10] sm:$0xff]
        %v1796 = vld [vmem:[#allocation10 + $0x18] sm:$0xff]
        %v1797 = vld [vmem:[#allocation10 + $0x20] sm:$0xff]
        %v1798 = vld [vmem:[#allocation10 + $0x28] sm:$0xff]
        %v1799 = vld [vmem:[#allocation10 + $0x30] sm:$0xff]
        %v1800 = vld [vmem:[#allocation10 + $0x38] sm:$0xff]
        %v1801 = vld [vmem:[#allocation10 + $0x40] sm:$0xff]
        %v1802 = vld [vmem:[#allocation10 + $0x48] sm:$0xff]
        %v1803 = vld [vmem:[#allocation10 + $0x50] sm:$0xff]
        %v1804 = vld [vmem:[#allocation10 + $0x58] sm:$0xff]
        %v1805 = vld [vmem:[#allocation10 + $0x60] sm:$0xff]
        %v1806 = vld [vmem:[#allocation10 + $0x68] sm:$0xff]
        %v1807 = vld [vmem:[#allocation10 + $0x70] sm:$0xff]
        %v1808 = vld [vmem:[#allocation10 + $0x78] sm:$0xff]
        %v1809 = vld [vmem:[#allocation10 + $0x80] sm:$0xff]
        %v1810 = vld [vmem:[#allocation10 + $0x88] sm:$0xff]
        %v1811 = vld [vmem:[#allocation10 + $0x90] sm:$0xff]
        %v1812 = vld [vmem:[#allocation10 + $0x98] sm:$0xff]
        %v1813 = vld [vmem:[#allocation10 + $0xa0] sm:$0xff]
        %v1814 = vld [vmem:[#allocation10 + $0xa8] sm:$0xff]
        %v1815 = vld [vmem:[#allocation10 + $0xb0] sm:$0xff]
        %v1816 = vld [vmem:[#allocation10 + $0xb8] sm:$0xff]
        %v1817 = vld [vmem:[#allocation10 + $0xc0] sm:$0xff]
        %v1818 = vld [vmem:[#allocation10 + $0xc8] sm:$0xff]
        %v1819 = vld [vmem:[#allocation10 + $0xd0] sm:$0xff]
        %v1820 = vld [vmem:[#allocation10 + $0xd8] sm:$0xff]
        %v1821 = vld [vmem:[#allocation10 + $0xe0] sm:$0xff]
        %v1822 = vld [vmem:[#allocation10 + $0xe8] sm:$0xff]
        %v1823 = vld [vmem:[#allocation10 + $0xf0] sm:$0xff]
        %v1824 = vld [vmem:[#allocation10 + $0xf8] sm:$0xff]
        %v1825 = vld [vmem:[#allocation10 + $0x100] sm:$0xff]
        %v1826 = vld [vmem:[#allocation10 + $0x108] sm:$0xff]
        %v1827 = vld [vmem:[#allocation10 + $0x110] sm:$0xff]
        %v1828 = vld [vmem:[#allocation10 + $0x118] sm:$0xff]
        %v1829 = vld [vmem:[#allocation10 + $0x120] sm:$0xff]
        %v1830 = vld [vmem:[#allocation10 + $0x128] sm:$0xff]
        %v1831 = vld [vmem:[#allocation10 + $0x130] sm:$0xff]
        %v1832 = vld [vmem:[#allocation10 + $0x138] sm:$0xff]
        %v1833 = vld [vmem:[#allocation2] sm:$0xff]
        %v1834 = vld [vmem:[#allocation2 + $0x8] sm:$0xff]
        %v1835 = vld [vmem:[#allocation2 + $0x10] sm:$0xff]
        %v1836 = vld [vmem:[#allocation2 + $0x18] sm:$0xff]
        %v1837 = vld [vmem:[#allocation2 + $0x20] sm:$0xff]
        %v1838 = vld [vmem:[#allocation2 + $0x28] sm:$0xff]
        %v1839 = vld [vmem:[#allocation2 + $0x30] sm:$0xff]
        %v1840 = vld [vmem:[#allocation2 + $0x38] sm:$0xff]
        %v1841 = vld [vmem:[#allocation2 + $0x40] sm:$0xff]
        %v1842 = vld [vmem:[#allocation2 + $0x48] sm:$0xff]
        %v1843 = vld [vmem:[#allocation2 + $0x50] sm:$0xff]
        %v1844 = vld [vmem:[#allocation2 + $0x58] sm:$0xff]
        %v1845 = vld [vmem:[#allocation2 + $0x60] sm:$0xff]
        %v1846 = vld [vmem:[#allocation2 + $0x68] sm:$0xff]
        %v1847 = vld [vmem:[#allocation2 + $0x70] sm:$0xff]
        %v1848 = vld [vmem:[#allocation2 + $0x78] sm:$0xff]
        %v1849 = vld [vmem:[#allocation2 + $0x80] sm:$0xff]
        %v1850 = vld [vmem:[#allocation2 + $0x88] sm:$0xff]
        %v1851 = vld [vmem:[#allocation2 + $0x90] sm:$0xff]
        %v1852 = vld [vmem:[#allocation2 + $0x98] sm:$0xff]
        %v1853 = vld [vmem:[#allocation2 + $0xa0] sm:$0xff]
        %v1854 = vld [vmem:[#allocation2 + $0xa8] sm:$0xff]
        %v1855 = vld [vmem:[#allocation2 + $0xb0] sm:$0xff]
        %v1856 = vld [vmem:[#allocation2 + $0xb8] sm:$0xff]
        %v1857 = vld [vmem:[#allocation2 + $0xc0] sm:$0xff]
        %v1858 = vld [vmem:[#allocation2 + $0xc8] sm:$0xff]
        %v1859 = vld [vmem:[#allocation2 + $0xd0] sm:$0xff]
        %v1860 = vld [vmem:[#allocation2 + $0xd8] sm:$0xff]
        %v1861 = vld [vmem:[#allocation2 + $0xe0] sm:$0xff]
        %v1862 = vld [vmem:[#allocation2 + $0xe8] sm:$0xff]
        %v1863 = vld [vmem:[#allocation2 + $0xf0] sm:$0xff]
        %v1864 = vld [vmem:[#allocation2 + $0xf8] sm:$0xff]
        %v1865 = vld [vmem:[#allocation2 + $0x100] sm:$0xff]
        %v1866 = vld [vmem:[#allocation2 + $0x108] sm:$0xff]
        %v1867 = vld [vmem:[#allocation2 + $0x110] sm:$0xff]
        %v1868 = vld [vmem:[#allocation2 + $0x118] sm:$0xff]
        %v1869 = vld [vmem:[#allocation2 + $0x120] sm:$0xff]
        %v1870 = vld [vmem:[#allocation2 + $0x128] sm:$0xff]
        %v1871 = vld [vmem:[#allocation2 + $0x130] sm:$0xff]
        %v1872 = vld [vmem:[#allocation2 + $0x138] sm:$0xff]
        %v1873 = vld [vmem:[#allocation2 + $0x140] sm:$0xff]
        %v1874 = vld [vmem:[#allocation2 + $0x148] sm:$0xff]
        %v1875 = vld [vmem:[#allocation2 + $0x150] sm:$0xff]
        %v1876 = vld [vmem:[#allocation2 + $0x158] sm:$0xff]
        %v1877 = vld [vmem:[#allocation2 + $0x160] sm:$0xff]
        %v1878 = vld [vmem:[#allocation2 + $0x168] sm:$0xff]
        %v1879 = vld [vmem:[#allocation2 + $0x170] sm:$0xff]
        %v1880 = vld [vmem:[#allocation2 + $0x178] sm:$0xff]
        %v1881 = vld [vmem:[#allocation2 + $0x180] sm:$0xff]
        %v1882 = vld [vmem:[#allocation2 + $0x188] sm:$0xff]
        %v1883 = vld [vmem:[#allocation2 + $0x190] sm:$0xff]
        %v1884 = vld [vmem:[#allocation2 + $0x198] sm:$0xff]
        %v1885 = vld [vmem:[#allocation2 + $0x1a0] sm:$0xff]
        %v1886 = vld [vmem:[#allocation2 + $0x1a8] sm:$0xff]
        %v1887 = vld [vmem:[#allocation2 + $0x1b0] sm:$0xff]
        %v1888 = vld [vmem:[#allocation2 + $0x1b8] sm:$0xff]
        %v1889 = vld [vmem:[#allocation2 + $0x1c0] sm:$0xff]
        %v1890 = vld [vmem:[#allocation2 + $0x1c8] sm:$0xff]
        %v1891 = vld [vmem:[#allocation2 + $0x1d0] sm:$0xff]
        %v1892 = vld [vmem:[#allocation2 + $0x1d8] sm:$0xff]
        %v1893 = vld [vmem:[#allocation2 + $0x1e0] sm:$0xff]
        %v1894 = vld [vmem:[#allocation2 + $0x1e8] sm:$0xff]
        %v1895 = vld [vmem:[#allocation2 + $0x1f0] sm:$0xff]
        %v1896 = vld [vmem:[#allocation2 + $0x1f8] sm:$0xff]
        %v1897 = vld [vmem:[#allocation2 + $0x200] sm:$0xff]
        %v1898 = vld [vmem:[#allocation2 + $0x208] sm:$0xff]
        %v1899 = vld [vmem:[#allocation2 + $0x210] sm:$0xff]
        %v1900 = vld [vmem:[#allocation2 + $0x218] sm:$0xff]
        %v1901 = vld [vmem:[#allocation2 + $0x220] sm:$0xff]
        %v1902 = vld [vmem:[#allocation2 + $0x228] sm:$0xff]
        %v1903 = vld [vmem:[#allocation2 + $0x230] sm:$0xff]
        %v1904 = vld [vmem:[#allocation2 + $0x238] sm:$0xff]
        %v1905 = vld [vmem:[#allocation2 + $0x240] sm:$0xff]
        %v1906 = vld [vmem:[#allocation2 + $0x248] sm:$0xff]
        %v1907 = vld [vmem:[#allocation2 + $0x250] sm:$0xff]
        %v1908 = vld [vmem:[#allocation2 + $0x258] sm:$0xff]
        %v1909 = vld [vmem:[#allocation2 + $0x260] sm:$0xff]
        %v1910 = vld [vmem:[#allocation2 + $0x268] sm:$0xff]
        %v1911 = vld [vmem:[#allocation2 + $0x270] sm:$0xff]
        %v1912 = vld [vmem:[#allocation2 + $0x278] sm:$0xff]
        %v1913 = vld [vmem:[#allocation2 + $0x280] sm:$0xff]
        %v1914 = vld [vmem:[#allocation2 + $0x288] sm:$0xff]
        %v1915 = vld [vmem:[#allocation2 + $0x290] sm:$0xff]
        %v1916 = vld [vmem:[#allocation2 + $0x298] sm:$0xff]
        %v1917 = vld [vmem:[#allocation2 + $0x2a0] sm:$0xff]
        %v1918 = vld [vmem:[#allocation2 + $0x2a8] sm:$0xff]
        %v1919 = vld [vmem:[#allocation2 + $0x2b0] sm:$0xff]
        %v1920 = vld [vmem:[#allocation2 + $0x2b8] sm:$0xff]
        %v1921 = vld [vmem:[#allocation2 + $0x2c0] sm:$0xff]
        %v1922 = vld [vmem:[#allocation2 + $0x2c8] sm:$0xff]
        %v1923 = vld [vmem:[#allocation2 + $0x2d0] sm:$0xff]
        %v1924 = vld [vmem:[#allocation2 + $0x2d8] sm:$0xff]
        %v1925 = vld [vmem:[#allocation2 + $0x2e0] sm:$0xff]
        %v1926 = vld [vmem:[#allocation2 + $0x2e8] sm:$0xff]
        %v1927 = vld [vmem:[#allocation2 + $0x2f0] sm:$0xff]
        %v1928 = vld [vmem:[#allocation2 + $0x2f8] sm:$0xff]
        %v1929 = vld [vmem:[#allocation2 + $0x300] sm:$0xff]
        %v1930 = vld [vmem:[#allocation2 + $0x308] sm:$0xff]
        %v1931 = vld [vmem:[#allocation2 + $0x310] sm:$0xff]
        %v1932 = vld [vmem:[#allocation2 + $0x318] sm:$0xff]
        %v1933 = vld [vmem:[#allocation2 + $0x320] sm:$0xff]
        %v1934 = vld [vmem:[#allocation2 + $0x328] sm:$0xff]
        %v1935 = vld [vmem:[#allocation2 + $0x330] sm:$0xff]
        %v1936 = vld [vmem:[#allocation2 + $0x338] sm:$0xff]
        %v1937 = vld [vmem:[#allocation2 + $0x340] sm:$0xff]
        %v1938 = vld [vmem:[#allocation2 + $0x348] sm:$0xff]
        %v1939 = vld [vmem:[#allocation2 + $0x350] sm:$0xff]
        %v1940 = vld [vmem:[#allocation2 + $0x358] sm:$0xff]
        %v1941 = vld [vmem:[#allocation2 + $0x360] sm:$0xff]
        %v1942 = vld [vmem:[#allocation2 + $0x368] sm:$0xff]
        %v1943 = vld [vmem:[#allocation2 + $0x370] sm:$0xff]
        %v1944 = vld [vmem:[#allocation2 + $0x378] sm:$0xff]
        %v1945 = vld [vmem:[#allocation2 + $0x380] sm:$0xff]
        %v1946 = vld [vmem:[#allocation2 + $0x388] sm:$0xff]
        %v1947 = vld [vmem:[#allocation2 + $0x390] sm:$0xff]
        %v1948 = vld [vmem:[#allocation2 + $0x398] sm:$0xff]
        %v1949 = vld [vmem:[#allocation2 + $0x3a0] sm:$0xff]
        %v1950 = vld [vmem:[#allocation2 + $0x3a8] sm:$0xff]
        %v1951 = vld [vmem:[#allocation2 + $0x3b0] sm:$0xff]
        %v1952 = vld [vmem:[#allocation2 + $0x3b8] sm:$0xff]
        %v1953 = vld [vmem:[#allocation2 + $0x3c0] sm:$0xff]
        %v1954 = vld [vmem:[#allocation2 + $0x3c8] sm:$0xff]
        %v1955 = vld [vmem:[#allocation2 + $0x3d0] sm:$0xff]
        %v1956 = vld [vmem:[#allocation2 + $0x3d8] sm:$0xff]
        %v1957 = vld [vmem:[#allocation2 + $0x3e0] sm:$0xff]
        %v1958 = vld [vmem:[#allocation2 + $0x3e8] sm:$0xff]
        %v1959 = vld [vmem:[#allocation2 + $0x3f0] sm:$0xff]
        %v1960 = vld [vmem:[#allocation2 + $0x3f8] sm:$0xff]
        %v1961 = vld [vmem:[#allocation2 + $0x400] sm:$0xff]
        %v1962 = vld [vmem:[#allocation2 + $0x408] sm:$0xff]
        %v1963 = vld [vmem:[#allocation2 + $0x410] sm:$0xff]
        %v1964 = vld [vmem:[#allocation2 + $0x418] sm:$0xff]
        %v1965 = vld [vmem:[#allocation2 + $0x420] sm:$0xff]
        %v1966 = vld [vmem:[#allocation2 + $0x428] sm:$0xff]
        %v1967 = vld [vmem:[#allocation2 + $0x430] sm:$0xff]
        %v1968 = vld [vmem:[#allocation2 + $0x438] sm:$0xff]
        %v1969 = vld [vmem:[#allocation2 + $0x440] sm:$0xff]
        %v1970 = vld [vmem:[#allocation2 + $0x448] sm:$0xff]
        %v1971 = vld [vmem:[#allocation2 + $0x450] sm:$0xff]
        %v1972 = vld [vmem:[#allocation2 + $0x458] sm:$0xff]
        %v1973 = vld [vmem:[#allocation2 + $0x460] sm:$0xff]
        %v1974 = vld [vmem:[#allocation2 + $0x468] sm:$0xff]
        %v1975 = vld [vmem:[#allocation2 + $0x470] sm:$0xff]
        %v1976 = vld [vmem:[#allocation2 + $0x478] sm:$0xff]
        %v1977 = vld [vmem:[#allocation2 + $0x480] sm:$0xff]
        %v1978 = vld [vmem:[#allocation2 + $0x488] sm:$0xff]
        %v1979 = vld [vmem:[#allocation2 + $0x490] sm:$0xff]
        %v1980 = vld [vmem:[#allocation2 + $0x498] sm:$0xff]
        %v1981 = vld [vmem:[#allocation2 + $0x4a0] sm:$0xff]
        %v1982 = vld [vmem:[#allocation2 + $0x4a8] sm:$0xff]
        %v1983 = vld [vmem:[#allocation2 + $0x4b0] sm:$0xff]
        %v1984 = vld [vmem:[#allocation2 + $0x4b8] sm:$0xff]
        %v1985 = vld [vmem:[#allocation2 + $0x4c0] sm:$0xff]
        %v1986 = vld [vmem:[#allocation2 + $0x4c8] sm:$0xff]
        %v1987 = vld [vmem:[#allocation2 + $0x4d0] sm:$0xff]
        %v1988 = vld [vmem:[#allocation2 + $0x4d8] sm:$0xff]
        %v1989 = vld [vmem:[#allocation2 + $0x4e0] sm:$0xff]
        %v1990 = vld [vmem:[#allocation2 + $0x4e8] sm:$0xff]
        %v1991 = vld [vmem:[#allocation2 + $0x4f0] sm:$0xff]
        %v1992 = vld [vmem:[#allocation2 + $0x4f8] sm:$0xff]
        %v1993 = vld [vmem:[#allocation2 + $0x500] sm:$0xff]
        %v1994 = vld [vmem:[#allocation2 + $0x508] sm:$0xff]
        %v1995 = vld [vmem:[#allocation2 + $0x510] sm:$0xff]
        %v1996 = vld [vmem:[#allocation2 + $0x518] sm:$0xff]
        %v1997 = vld [vmem:[#allocation2 + $0x520] sm:$0xff]
        %v1998 = vld [vmem:[#allocation2 + $0x528] sm:$0xff]
        %v1999 = vld [vmem:[#allocation2 + $0x530] sm:$0xff]
        %v2000 = vld [vmem:[#allocation2 + $0x538] sm:$0xff]
        %v2001 = vld [vmem:[#allocation2 + $0x540] sm:$0xff]
        %v2002 = vld [vmem:[#allocation2 + $0x548] sm:$0xff]
        %v2003 = vld [vmem:[#allocation2 + $0x550] sm:$0xff]
        %v2004 = vld [vmem:[#allocation2 + $0x558] sm:$0xff]
        %v2005 = vld [vmem:[#allocation2 + $0x560] sm:$0xff]
        %v2006 = vld [vmem:[#allocation2 + $0x568] sm:$0xff]
        %v2007 = vld [vmem:[#allocation2 + $0x570] sm:$0xff]
        %v2008 = vld [vmem:[#allocation2 + $0x578] sm:$0xff]
        %v2009 = vld [vmem:[#allocation2 + $0x580] sm:$0xff]
        %v2010 = vld [vmem:[#allocation2 + $0x588] sm:$0xff]
        %v2011 = vld [vmem:[#allocation2 + $0x590] sm:$0xff]
        %v2012 = vld [vmem:[#allocation2 + $0x598] sm:$0xff]
        %v2013 = vld [vmem:[#allocation2 + $0x5a0] sm:$0xff]
        %v2014 = vld [vmem:[#allocation2 + $0x5a8] sm:$0xff]
        %v2015 = vld [vmem:[#allocation2 + $0x5b0] sm:$0xff]
        %v2016 = vld [vmem:[#allocation2 + $0x5b8] sm:$0xff]
        %v2017 = vld [vmem:[#allocation2 + $0x5c0] sm:$0xff]
        %v2018 = vld [vmem:[#allocation2 + $0x5c8] sm:$0xff]
        %v2019 = vld [vmem:[#allocation2 + $0x5d0] sm:$0xff]
        %v2020 = vld [vmem:[#allocation2 + $0x5d8] sm:$0xff]
        %v2021 = vld [vmem:[#allocation2 + $0x5e0] sm:$0xff]
        %v2022 = vld [vmem:[#allocation2 + $0x5e8] sm:$0xff]
        %v2023 = vld [vmem:[#allocation2 + $0x5f0] sm:$0xff]
        %v2024 = vld [vmem:[#allocation2 + $0x5f8] sm:$0xff]
        %v2025 = vld [vmem:[#allocation2 + $0x600] sm:$0xff]
        %v2026 = vld [vmem:[#allocation2 + $0x608] sm:$0xff]
        %v2027 = vld [vmem:[#allocation2 + $0x610] sm:$0xff]
        %v2028 = vld [vmem:[#allocation2 + $0x618] sm:$0xff]
        %v2029 = vld [vmem:[#allocation2 + $0x620] sm:$0xff]
        %v2030 = vld [vmem:[#allocation2 + $0x628] sm:$0xff]
        %v2031 = vld [vmem:[#allocation2 + $0x630] sm:$0xff]
        %v2032 = vld [vmem:[#allocation2 + $0x638] sm:$0xff]
        %v2033 = vld [vmem:[#allocation2 + $0x640] sm:$0xff]
        %v2034 = vld [vmem:[#allocation2 + $0x648] sm:$0xff]
        %v2035 = vld [vmem:[#allocation2 + $0x650] sm:$0xff]
        %v2036 = vld [vmem:[#allocation2 + $0x658] sm:$0xff]
        %v2037 = vld [vmem:[#allocation2 + $0x660] sm:$0xff]
        %v2038 = vld [vmem:[#allocation2 + $0x668] sm:$0xff]
        %v2039 = vld [vmem:[#allocation2 + $0x670] sm:$0xff]
        %v2040 = vld [vmem:[#allocation2 + $0x678] sm:$0xff]
        %v2041 = vld [vmem:[#allocation2 + $0x680] sm:$0xff]
        %v2042 = vld [vmem:[#allocation2 + $0x688] sm:$0xff]
        %v2043 = vld [vmem:[#allocation2 + $0x690] sm:$0xff]
        %v2044 = vld [vmem:[#allocation2 + $0x698] sm:$0xff]
        %v2045 = vld [vmem:[#allocation2 + $0x6a0] sm:$0xff]
        %v2046 = vld [vmem:[#allocation2 + $0x6a8] sm:$0xff]
        %v2047 = vld [vmem:[#allocation2 + $0x6b0] sm:$0xff]
        %v2048 = vld [vmem:[#allocation2 + $0x6b8] sm:$0xff]
        %vm2049 = vcmask 523264
        %v2051 = vsel %vm2049, %v1797, 0
        %v2054 = vsel %vm2049, %v1802, 0
        %v2057 = vsel %vm2049, %v1807, 0
        %v2060 = vsel %vm2049, %v1812, 0
        %v2063 = vsel %vm2049, %v1817, 0
        %v2066 = vsel %vm2049, %v1822, 0
        %v2069 = vsel %vm2049, %v1827, 0
        %v2072 = vsel %vm2049, %v1832, 0
        %2074 = vmatpush.msra.mxu0 %v1878
        %2075 = vmatpush.msra.mxu0 %v1875
        %2076 = vmatpush.msra.mxu0 %v1872
        %2077 = vmatpush.msra.mxu0 %v1869
        %2078 = vmatpush.msra.mxu0 %v1866
        %2079 = vmatpush.msra.mxu0 %v1863
        %2080 = vmatpush.msra.mxu0 %v1860
        %2081 = vmatpush.msra.mxu0 %v1857
        %2082 = vmatpush.msra.mxu0 %v1854
        %2083 = vmatpush.msra.mxu0 %v1851
        %2084 = vmatpush.msra.mxu0 %v1848
        %2085 = vmatpush.msra.mxu0 %v1845
        %2086 = vmatpush.msra.mxu0 %v1842
        %2087 = vmatpush.msra.mxu0 %v1839
        %2088 = vmatpush.msra.mxu0 %v1836
        %2089 = vmatpush.msra.mxu0 %v1833
        %2090 = vmatmul.f32.gmra.mxu0 %v1793
        %v2091 = vpop.f32.mrf.mxu0
        %v2092 = vadd.f32 0.0, %v2091
        %2093 = vmatmul.f32.gmra.mxu0 %v1798
        %v2094 = vpop.f32.mrf.mxu0
        %v2095 = vadd.f32 0.0, %v2094
        %2096 = vmatmul.f32.gmra.mxu0 %v1803
        %v2097 = vpop.f32.mrf.mxu0
        %v2098 = vadd.f32 0.0, %v2097
        %2099 = vmatmul.f32.gmra.mxu0 %v1808
        %v2100 = vpop.f32.mrf.mxu0
        %v2101 = vadd.f32 0.0, %v2100
        %2102 = vmatmul.f32.gmra.mxu0 %v1813
        %v2103 = vpop.f32.mrf.mxu0
        %v2104 = vadd.f32 0.0, %v2103
        %2105 = vmatmul.f32.gmra.mxu0 %v1818
        %v2106 = vpop.f32.mrf.mxu0
        %v2107 = vadd.f32 0.0, %v2106
        %2108 = vmatmul.f32.gmra.mxu0 %v1823
        %v2109 = vpop.f32.mrf.mxu0
        %v2110 = vadd.f32 0.0, %v2109
        %2111 = vmatmul.f32.gmra.mxu0 %v1828
        %v2112 = vpop.f32.mrf.mxu0
        %v2113 = vadd.f32 0.0, %v2112
        %2114 = vdwg.mxu0
        %2115 = vmatpush.msra.mxu0 %v1926
        %2116 = vmatpush.msra.mxu0 %v1923
        %2117 = vmatpush.msra.mxu0 %v1920
        %2118 = vmatpush.msra.mxu0 %v1917
        %2119 = vmatpush.msra.mxu0 %v1914
        %2120 = vmatpush.msra.mxu0 %v1911
        %2121 = vmatpush.msra.mxu0 %v1908
        %2122 = vmatpush.msra.mxu0 %v1905
        %2123 = vmatpush.msra.mxu0 %v1902
        %2124 = vmatpush.msra.mxu0 %v1899
        %2125 = vmatpush.msra.mxu0 %v1896
        %2126 = vmatpush.msra.mxu0 %v1893
        %2127 = vmatpush.msra.mxu0 %v1890
        %2128 = vmatpush.msra.mxu0 %v1887
        %2129 = vmatpush.msra.mxu0 %v1884
        %2130 = vmatpush.msra.mxu0 %v1881
        %2131 = vmatmul.f32.gmra.mxu0 %v1794
        %v2132 = vpop.f32.mrf.mxu0
        %v2133 = vadd.f32 %v2092, %v2132
        %2134 = vmatmul.f32.gmra.mxu0 %v1799
        %v2135 = vpop.f32.mrf.mxu0
        %v2136 = vadd.f32 %v2095, %v2135
        %2137 = vmatmul.f32.gmra.mxu0 %v1804
        %v2138 = vpop.f32.mrf.mxu0
        %v2139 = vadd.f32 %v2098, %v2138
        %2140 = vmatmul.f32.gmra.mxu0 %v1809
        %v2141 = vpop.f32.mrf.mxu0
        %v2142 = vadd.f32 %v2101, %v2141
        %2143 = vmatmul.f32.gmra.mxu0 %v1814
        %v2144 = vpop.f32.mrf.mxu0
        %v2145 = vadd.f32 %v2104, %v2144
        %2146 = vmatmul.f32.gmra.mxu0 %v1819
        %v2147 = vpop.f32.mrf.mxu0
        %v2148 = vadd.f32 %v2107, %v2147
        %2149 = vmatmul.f32.gmra.mxu0 %v1824
        %v2150 = vpop.f32.mrf.mxu0
        %v2151 = vadd.f32 %v2110, %v2150
        %2152 = vmatmul.f32.gmra.mxu0 %v1829
        %v2153 = vpop.f32.mrf.mxu0
        %v2154 = vadd.f32 %v2113, %v2153
        %2155 = vdwg.mxu0
        %2156 = vmatpush.msra.mxu0 %v1974
        %2157 = vmatpush.msra.mxu0 %v1971
        %2158 = vmatpush.msra.mxu0 %v1968
        %2159 = vmatpush.msra.mxu0 %v1965
        %2160 = vmatpush.msra.mxu0 %v1962
        %2161 = vmatpush.msra.mxu0 %v1959
        %2162 = vmatpush.msra.mxu0 %v1956
        %2163 = vmatpush.msra.mxu0 %v1953
        %2164 = vmatpush.msra.mxu0 %v1950
        %2165 = vmatpush.msra.mxu0 %v1947
        %2166 = vmatpush.msra.mxu0 %v1944
        %2167 = vmatpush.msra.mxu0 %v1941
        %2168 = vmatpush.msra.mxu0 %v1938
        %2169 = vmatpush.msra.mxu0 %v1935
        %2170 = vmatpush.msra.mxu0 %v1932
        %2171 = vmatpush.msra.mxu0 %v1929
        %2172 = vmatmul.f32.gmra.mxu0 %v1795
        %v2173 = vpop.f32.mrf.mxu0
        %v2174 = vadd.f32 %v2133, %v2173
        %2175 = vmatmul.f32.gmra.mxu0 %v1800
        %v2176 = vpop.f32.mrf.mxu0
        %v2177 = vadd.f32 %v2136, %v2176
        %2178 = vmatmul.f32.gmra.mxu0 %v1805
        %v2179 = vpop.f32.mrf.mxu0
        %v2180 = vadd.f32 %v2139, %v2179
        %2181 = vmatmul.f32.gmra.mxu0 %v1810
        %v2182 = vpop.f32.mrf.mxu0
        %v2183 = vadd.f32 %v2142, %v2182
        %2184 = vmatmul.f32.gmra.mxu0 %v1815
        %v2185 = vpop.f32.mrf.mxu0
        %v2186 = vadd.f32 %v2145, %v2185
        %2187 = vmatmul.f32.gmra.mxu0 %v1820
        %v2188 = vpop.f32.mrf.mxu0
        %v2189 = vadd.f32 %v2148, %v2188
        %2190 = vmatmul.f32.gmra.mxu0 %v1825
        %v2191 = vpop.f32.mrf.mxu0
        %v2192 = vadd.f32 %v2151, %v2191
        %2193 = vmatmul.f32.gmra.mxu0 %v1830
        %v2194 = vpop.f32.mrf.mxu0
        %v2195 = vadd.f32 %v2154, %v2194
        %2196 = vdwg.mxu0
        %2197 = vmatpush.msra.mxu0 %v2022
        %2198 = vmatpush.msra.mxu0 %v2019
        %2199 = vmatpush.msra.mxu0 %v2016
        %2200 = vmatpush.msra.mxu0 %v2013
        %2201 = vmatpush.msra.mxu0 %v2010
        %2202 = vmatpush.msra.mxu0 %v2007
        %2203 = vmatpush.msra.mxu0 %v2004
        %2204 = vmatpush.msra.mxu0 %v2001
        %2205 = vmatpush.msra.mxu0 %v1998
        %2206 = vmatpush.msra.mxu0 %v1995
        %2207 = vmatpush.msra.mxu0 %v1992
        %2208 = vmatpush.msra.mxu0 %v1989
        %2209 = vmatpush.msra.mxu0 %v1986
        %2210 = vmatpush.msra.mxu0 %v1983
        %2211 = vmatpush.msra.mxu0 %v1980
        %2212 = vmatpush.msra.mxu0 %v1977
        %2213 = vmatmul.f32.gmra.mxu0 %v1796
        %v2214 = vpop.f32.mrf.mxu0
        %v2215 = vadd.f32 %v2174, %v2214
        %2216 = vmatmul.f32.gmra.mxu0 %v1801
        %v2217 = vpop.f32.mrf.mxu0
        %v2218 = vadd.f32 %v2177, %v2217
        %2219 = vmatmul.f32.gmra.mxu0 %v1806
        %v2220 = vpop.f32.mrf.mxu0
        %v2221 = vadd.f32 %v2180, %v2220
        %2222 = vmatmul.f32.gmra.mxu0 %v1811
        %v2223 = vpop.f32.mrf.mxu0
        %v2224 = vadd.f32 %v2183, %v2223
        %2225 = vmatmul.f32.gmra.mxu0 %v1816
        %v2226 = vpop.f32.mrf.mxu0
        %v2227 = vadd.f32 %v2186, %v2226
        %2228 = vmatmul.f32.gmra.mxu0 %v1821
        %v2229 = vpop.f32.mrf.mxu0
        %v2230 = vadd.f32 %v2189, %v2229
        %2231 = vmatmul.f32.gmra.mxu0 %v1826
        %v2232 = vpop.f32.mrf.mxu0
        %v2233 = vadd.f32 %v2192, %v2232
        %2234 = vmatmul.f32.gmra.mxu0 %v1831
        %v2235 = vpop.f32.mrf.mxu0
        %v2236 = vadd.f32 %v2195, %v2235
        %2237 = vdwg.mxu0
        %2238 = vmatpush.msra.mxu0 0.0
        %2239 = vmatpush.msra.mxu0 0.0
        %2240 = vmatpush.msra.mxu0 0.0
        %2241 = vmatpush.msra.mxu0 0.0
        %2242 = vmatpush.msra.mxu0 0.0
        %2243 = vmatpush.msra.mxu0 0.0
        %2244 = vmatpush.msra.mxu0 0.0
        %2245 = vmatpush.msra.mxu0 0.0
        %2246 = vmatpush.msra.mxu0 %v2046
        %2247 = vmatpush.msra.mxu0 %v2043
        %2248 = vmatpush.msra.mxu0 %v2040
        %2249 = vmatpush.msra.mxu0 %v2037
        %2250 = vmatpush.msra.mxu0 %v2034
        %2251 = vmatpush.msra.mxu0 %v2031
        %2252 = vmatpush.msra.mxu0 %v2028
        %2253 = vmatpush.msra.mxu0 %v2025
        %2254 = vmatmul.f32.gmra.mxu0 %v2051
        %v2255 = vpop.f32.mrf.mxu0
        %v2256 = vadd.f32 %v2215, %v2255
        %2257 = vmatmul.f32.gmra.mxu0 %v2054
        %v2258 = vpop.f32.mrf.mxu0
        %v2259 = vadd.f32 %v2218, %v2258
        %2260 = vmatmul.f32.gmra.mxu0 %v2057
        %v2261 = vpop.f32.mrf.mxu0
        %v2262 = vadd.f32 %v2221, %v2261
        %2263 = vmatmul.f32.gmra.mxu0 %v2060
        %v2264 = vpop.f32.mrf.mxu0
        %v2265 = vadd.f32 %v2224, %v2264
        %2266 = vmatmul.f32.gmra.mxu0 %v2063
        %v2267 = vpop.f32.mrf.mxu0
        %v2268 = vadd.f32 %v2227, %v2267
        %2269 = vmatmul.f32.gmra.mxu0 %v2066
        %v2270 = vpop.f32.mrf.mxu0
        %v2271 = vadd.f32 %v2230, %v2270
        %2272 = vmatmul.f32.gmra.mxu0 %v2069
        %v2273 = vpop.f32.mrf.mxu0
        %v2274 = vadd.f32 %v2233, %v2273
        %2275 = vmatmul.f32.gmra.mxu0 %v2072
        %v2276 = vpop.f32.mrf.mxu0
        %v2277 = vadd.f32 %v2236, %v2276
        %2278 = vdwg.mxu0
        %2279 = vmatpush.msra.mxu0 %v1879
        %2280 = vmatpush.msra.mxu0 %v1876
        %2281 = vmatpush.msra.mxu0 %v1873
        %2282 = vmatpush.msra.mxu0 %v1870
        %2283 = vmatpush.msra.mxu0 %v1867
        %2284 = vmatpush.msra.mxu0 %v1864
        %2285 = vmatpush.msra.mxu0 %v1861
        %2286 = vmatpush.msra.mxu0 %v1858
        %2287 = vmatpush.msra.mxu0 %v1855
        %2288 = vmatpush.msra.mxu0 %v1852
        %2289 = vmatpush.msra.mxu0 %v1849
        %2290 = vmatpush.msra.mxu0 %v1846
        %2291 = vmatpush.msra.mxu0 %v1843
        %2292 = vmatpush.msra.mxu0 %v1840
        %2293 = vmatpush.msra.mxu0 %v1837
        %2294 = vmatpush.msra.mxu0 %v1834
        %2295 = vmatmul.f32.gmra.mxu0 %v1793
        %v2296 = vpop.f32.mrf.mxu0
        %v2297 = vadd.f32 0.0, %v2296
        %2298 = vmatmul.f32.gmra.mxu0 %v1798
        %v2299 = vpop.f32.mrf.mxu0
        %v2300 = vadd.f32 0.0, %v2299
        %2301 = vmatmul.f32.gmra.mxu0 %v1803
        %v2302 = vpop.f32.mrf.mxu0
        %v2303 = vadd.f32 0.0, %v2302
        %2304 = vmatmul.f32.gmra.mxu0 %v1808
        %v2305 = vpop.f32.mrf.mxu0
        %v2306 = vadd.f32 0.0, %v2305
        %2307 = vmatmul.f32.gmra.mxu0 %v1813
        %v2308 = vpop.f32.mrf.mxu0
        %v2309 = vadd.f32 0.0, %v2308
        %2310 = vmatmul.f32.gmra.mxu0 %v1818
        %v2311 = vpop.f32.mrf.mxu0
        %v2312 = vadd.f32 0.0, %v2311
        %2313 = vmatmul.f32.gmra.mxu0 %v1823
        %v2314 = vpop.f32.mrf.mxu0
        %v2315 = vadd.f32 0.0, %v2314
        %2316 = vmatmul.f32.gmra.mxu0 %v1828
        %v2317 = vpop.f32.mrf.mxu0
        %v2318 = vadd.f32 0.0, %v2317
        %2319 = vdwg.mxu0
        %2320 = vmatpush.msra.mxu0 %v1927
        %2321 = vmatpush.msra.mxu0 %v1924
        %2322 = vmatpush.msra.mxu0 %v1921
        %2323 = vmatpush.msra.mxu0 %v1918
        %2324 = vmatpush.msra.mxu0 %v1915
        %2325 = vmatpush.msra.mxu0 %v1912
        %2326 = vmatpush.msra.mxu0 %v1909
        %2327 = vmatpush.msra.mxu0 %v1906
        %2328 = vmatpush.msra.mxu0 %v1903
        %2329 = vmatpush.msra.mxu0 %v1900
        %2330 = vmatpush.msra.mxu0 %v1897
        %2331 = vmatpush.msra.mxu0 %v1894
        %2332 = vmatpush.msra.mxu0 %v1891
        %2333 = vmatpush.msra.mxu0 %v1888
        %2334 = vmatpush.msra.mxu0 %v1885
        %2335 = vmatpush.msra.mxu0 %v1882
        %2336 = vmatmul.f32.gmra.mxu0 %v1794
        %v2337 = vpop.f32.mrf.mxu0
        %v2338 = vadd.f32 %v2297, %v2337
        %2339 = vmatmul.f32.gmra.mxu0 %v1799
        %v2340 = vpop.f32.mrf.mxu0
        %v2341 = vadd.f32 %v2300, %v2340
        %2342 = vmatmul.f32.gmra.mxu0 %v1804
        %v2343 = vpop.f32.mrf.mxu0
        %v2344 = vadd.f32 %v2303, %v2343
        %2345 = vmatmul.f32.gmra.mxu0 %v1809
        %v2346 = vpop.f32.mrf.mxu0
        %v2347 = vadd.f32 %v2306, %v2346
        %2348 = vmatmul.f32.gmra.mxu0 %v1814
        %v2349 = vpop.f32.mrf.mxu0
        %v2350 = vadd.f32 %v2309, %v2349
        %2351 = vmatmul.f32.gmra.mxu0 %v1819
        %v2352 = vpop.f32.mrf.mxu0
        %v2353 = vadd.f32 %v2312, %v2352
        %2354 = vmatmul.f32.gmra.mxu0 %v1824
        %v2355 = vpop.f32.mrf.mxu0
        %v2356 = vadd.f32 %v2315, %v2355
        %2357 = vmatmul.f32.gmra.mxu0 %v1829
        %v2358 = vpop.f32.mrf.mxu0
        %v2359 = vadd.f32 %v2318, %v2358
        %2360 = vdwg.mxu0
        %2361 = vmatpush.msra.mxu0 %v1975
        %2362 = vmatpush.msra.mxu0 %v1972
        %2363 = vmatpush.msra.mxu0 %v1969
        %2364 = vmatpush.msra.mxu0 %v1966
        %2365 = vmatpush.msra.mxu0 %v1963
        %2366 = vmatpush.msra.mxu0 %v1960
        %2367 = vmatpush.msra.mxu0 %v1957
        %2368 = vmatpush.msra.mxu0 %v1954
        %2369 = vmatpush.msra.mxu0 %v1951
        %2370 = vmatpush.msra.mxu0 %v1948
        %2371 = vmatpush.msra.mxu0 %v1945
        %2372 = vmatpush.msra.mxu0 %v1942
        %2373 = vmatpush.msra.mxu0 %v1939
        %2374 = vmatpush.msra.mxu0 %v1936
        %2375 = vmatpush.msra.mxu0 %v1933
        %2376 = vmatpush.msra.mxu0 %v1930
        %2377 = vmatmul.f32.gmra.mxu0 %v1795
        %v2378 = vpop.f32.mrf.mxu0
        %v2379 = vadd.f32 %v2338, %v2378
        %2380 = vmatmul.f32.gmra.mxu0 %v1800
        %v2381 = vpop.f32.mrf.mxu0
        %v2382 = vadd.f32 %v2341, %v2381
        %2383 = vmatmul.f32.gmra.mxu0 %v1805
        %v2384 = vpop.f32.mrf.mxu0
        %v2385 = vadd.f32 %v2344, %v2384
        %2386 = vmatmul.f32.gmra.mxu0 %v1810
        %v2387 = vpop.f32.mrf.mxu0
        %v2388 = vadd.f32 %v2347, %v2387
        %2389 = vmatmul.f32.gmra.mxu0 %v1815
        %v2390 = vpop.f32.mrf.mxu0
        %v2391 = vadd.f32 %v2350, %v2390
        %2392 = vmatmul.f32.gmra.mxu0 %v1820
        %v2393 = vpop.f32.mrf.mxu0
        %v2394 = vadd.f32 %v2353, %v2393
        %2395 = vmatmul.f32.gmra.mxu0 %v1825
        %v2396 = vpop.f32.mrf.mxu0
        %v2397 = vadd.f32 %v2356, %v2396
        %2398 = vmatmul.f32.gmra.mxu0 %v1830
        %v2399 = vpop.f32.mrf.mxu0
        %v2400 = vadd.f32 %v2359, %v2399
        %2401 = vdwg.mxu0
        %2402 = vmatpush.msra.mxu0 %v2023
        %2403 = vmatpush.msra.mxu0 %v2020
        %2404 = vmatpush.msra.mxu0 %v2017
        %2405 = vmatpush.msra.mxu0 %v2014
        %2406 = vmatpush.msra.mxu0 %v2011
        %2407 = vmatpush.msra.mxu0 %v2008
        %2408 = vmatpush.msra.mxu0 %v2005
        %2409 = vmatpush.msra.mxu0 %v2002
        %2410 = vmatpush.msra.mxu0 %v1999
        %2411 = vmatpush.msra.mxu0 %v1996
        %2412 = vmatpush.msra.mxu0 %v1993
        %2413 = vmatpush.msra.mxu0 %v1990
        %2414 = vmatpush.msra.mxu0 %v1987
        %2415 = vmatpush.msra.mxu0 %v1984
        %2416 = vmatpush.msra.mxu0 %v1981
        %2417 = vmatpush.msra.mxu0 %v1978
        %2418 = vmatmul.f32.gmra.mxu0 %v1796
        %v2419 = vpop.f32.mrf.mxu0
        %v2420 = vadd.f32 %v2379, %v2419
        %2421 = vmatmul.f32.gmra.mxu0 %v1801
        %v2422 = vpop.f32.mrf.mxu0
        %v2423 = vadd.f32 %v2382, %v2422
        %2424 = vmatmul.f32.gmra.mxu0 %v1806
        %v2425 = vpop.f32.mrf.mxu0
        %v2426 = vadd.f32 %v2385, %v2425
        %2427 = vmatmul.f32.gmra.mxu0 %v1811
        %v2428 = vpop.f32.mrf.mxu0
        %v2429 = vadd.f32 %v2388, %v2428
        %2430 = vmatmul.f32.gmra.mxu0 %v1816
        %v2431 = vpop.f32.mrf.mxu0
        %v2432 = vadd.f32 %v2391, %v2431
        %2433 = vmatmul.f32.gmra.mxu0 %v1821
        %v2434 = vpop.f32.mrf.mxu0
        %v2435 = vadd.f32 %v2394, %v2434
        %2436 = vmatmul.f32.gmra.mxu0 %v1826
        %v2437 = vpop.f32.mrf.mxu0
        %v2438 = vadd.f32 %v2397, %v2437
        %2439 = vmatmul.f32.gmra.mxu0 %v1831
        %v2440 = vpop.f32.mrf.mxu0
        %v2441 = vadd.f32 %v2400, %v2440
        %2442 = vdwg.mxu0
        %2443 = vmatpush.msra.mxu0 0.0
        %2444 = vmatpush.msra.mxu0 0.0
        %2445 = vmatpush.msra.mxu0 0.0
        %2446 = vmatpush.msra.mxu0 0.0
        %2447 = vmatpush.msra.mxu0 0.0
        %2448 = vmatpush.msra.mxu0 0.0
        %2449 = vmatpush.msra.mxu0 0.0
        %2450 = vmatpush.msra.mxu0 0.0
        %2451 = vmatpush.msra.mxu0 %v2047
        %2452 = vmatpush.msra.mxu0 %v2044
        %2453 = vmatpush.msra.mxu0 %v2041
        %2454 = vmatpush.msra.mxu0 %v2038
        %2455 = vmatpush.msra.mxu0 %v2035
        %2456 = vmatpush.msra.mxu0 %v2032
        %2457 = vmatpush.msra.mxu0 %v2029
        %2458 = vmatpush.msra.mxu0 %v2026
        %2459 = vmatmul.f32.gmra.mxu0 %v2051
        %v2460 = vpop.f32.mrf.mxu0
        %v2461 = vadd.f32 %v2420, %v2460
        %2462 = vmatmul.f32.gmra.mxu0 %v2054
        %v2463 = vpop.f32.mrf.mxu0
        %v2464 = vadd.f32 %v2423, %v2463
        %2465 = vmatmul.f32.gmra.mxu0 %v2057
        %v2466 = vpop.f32.mrf.mxu0
        %v2467 = vadd.f32 %v2426, %v2466
        %2468 = vmatmul.f32.gmra.mxu0 %v2060
        %v2469 = vpop.f32.mrf.mxu0
        %v2470 = vadd.f32 %v2429, %v2469
        %2471 = vmatmul.f32.gmra.mxu0 %v2063
        %v2472 = vpop.f32.mrf.mxu0
        %v2473 = vadd.f32 %v2432, %v2472
        %2474 = vmatmul.f32.gmra.mxu0 %v2066
        %v2475 = vpop.f32.mrf.mxu0
        %v2476 = vadd.f32 %v2435, %v2475
        %2477 = vmatmul.f32.gmra.mxu0 %v2069
        %v2478 = vpop.f32.mrf.mxu0
        %v2479 = vadd.f32 %v2438, %v2478
        %2480 = vmatmul.f32.gmra.mxu0 %v2072
        %v2481 = vpop.f32.mrf.mxu0
        %v2482 = vadd.f32 %v2441, %v2481
        %2483 = vdwg.mxu0
        %2484 = vmatpush.msra.mxu0 %v1880
        %2485 = vmatpush.msra.mxu0 %v1877
        %2486 = vmatpush.msra.mxu0 %v1874
        %2487 = vmatpush.msra.mxu0 %v1871
        %2488 = vmatpush.msra.mxu0 %v1868
        %2489 = vmatpush.msra.mxu0 %v1865
        %2490 = vmatpush.msra.mxu0 %v1862
        %2491 = vmatpush.msra.mxu0 %v1859
        %2492 = vmatpush.msra.mxu0 %v1856
        %2493 = vmatpush.msra.mxu0 %v1853
        %2494 = vmatpush.msra.mxu0 %v1850
        %2495 = vmatpush.msra.mxu0 %v1847
        %2496 = vmatpush.msra.mxu0 %v1844
        %2497 = vmatpush.msra.mxu0 %v1841
        %2498 = vmatpush.msra.mxu0 %v1838
        %2499 = vmatpush.msra.mxu0 %v1835
        %2500 = vmatmul.f32.gmra.mxu0 %v1793
        %v2501 = vpop.f32.mrf.mxu0
        %v2502 = vadd.f32 0.0, %v2501
        %2503 = vmatmul.f32.gmra.mxu0 %v1798
        %v2504 = vpop.f32.mrf.mxu0
        %v2505 = vadd.f32 0.0, %v2504
        %2506 = vmatmul.f32.gmra.mxu0 %v1803
        %v2507 = vpop.f32.mrf.mxu0
        %v2508 = vadd.f32 0.0, %v2507
        %2509 = vmatmul.f32.gmra.mxu0 %v1808
        %v2510 = vpop.f32.mrf.mxu0
        %v2511 = vadd.f32 0.0, %v2510
        %2512 = vmatmul.f32.gmra.mxu0 %v1813
        %v2513 = vpop.f32.mrf.mxu0
        %v2514 = vadd.f32 0.0, %v2513
        %2515 = vmatmul.f32.gmra.mxu0 %v1818
        %v2516 = vpop.f32.mrf.mxu0
        %v2517 = vadd.f32 0.0, %v2516
        %2518 = vmatmul.f32.gmra.mxu0 %v1823
        %v2519 = vpop.f32.mrf.mxu0
        %v2520 = vadd.f32 0.0, %v2519
        %2521 = vmatmul.f32.gmra.mxu0 %v1828
        %v2522 = vpop.f32.mrf.mxu0
        %v2523 = vadd.f32 0.0, %v2522
        %2524 = vdwg.mxu0
        %2525 = vmatpush.msra.mxu0 %v1928
        %2526 = vmatpush.msra.mxu0 %v1925
        %2527 = vmatpush.msra.mxu0 %v1922
        %2528 = vmatpush.msra.mxu0 %v1919
        %2529 = vmatpush.msra.mxu0 %v1916
        %2530 = vmatpush.msra.mxu0 %v1913
        %2531 = vmatpush.msra.mxu0 %v1910
        %2532 = vmatpush.msra.mxu0 %v1907
        %2533 = vmatpush.msra.mxu0 %v1904
        %2534 = vmatpush.msra.mxu0 %v1901
        %2535 = vmatpush.msra.mxu0 %v1898
        %2536 = vmatpush.msra.mxu0 %v1895
        %2537 = vmatpush.msra.mxu0 %v1892
        %2538 = vmatpush.msra.mxu0 %v1889
        %2539 = vmatpush.msra.mxu0 %v1886
        %2540 = vmatpush.msra.mxu0 %v1883
        %2541 = vmatmul.f32.gmra.mxu0 %v1794
        %v2542 = vpop.f32.mrf.mxu0
        %v2543 = vadd.f32 %v2502, %v2542
        %2544 = vmatmul.f32.gmra.mxu0 %v1799
        %v2545 = vpop.f32.mrf.mxu0
        %v2546 = vadd.f32 %v2505, %v2545
        %2547 = vmatmul.f32.gmra.mxu0 %v1804
        %v2548 = vpop.f32.mrf.mxu0
        %v2549 = vadd.f32 %v2508, %v2548
        %2550 = vmatmul.f32.gmra.mxu0 %v1809
        %v2551 = vpop.f32.mrf.mxu0
        %v2552 = vadd.f32 %v2511, %v2551
        %2553 = vmatmul.f32.gmra.mxu0 %v1814
        %v2554 = vpop.f32.mrf.mxu0
        %v2555 = vadd.f32 %v2514, %v2554
        %2556 = vmatmul.f32.gmra.mxu0 %v1819
        %v2557 = vpop.f32.mrf.mxu0
        %v2558 = vadd.f32 %v2517, %v2557
        %2559 = vmatmul.f32.gmra.mxu0 %v1824
        %v2560 = vpop.f32.mrf.mxu0
        %v2561 = vadd.f32 %v2520, %v2560
        %2562 = vmatmul.f32.gmra.mxu0 %v1829
        %v2563 = vpop.f32.mrf.mxu0
        %v2564 = vadd.f32 %v2523, %v2563
        %2565 = vdwg.mxu0
        %2566 = vmatpush.msra.mxu0 %v1976
        %2567 = vmatpush.msra.mxu0 %v1973
        %2568 = vmatpush.msra.mxu0 %v1970
        %2569 = vmatpush.msra.mxu0 %v1967
        %2570 = vmatpush.msra.mxu0 %v1964
        %2571 = vmatpush.msra.mxu0 %v1961
        %2572 = vmatpush.msra.mxu0 %v1958
        %2573 = vmatpush.msra.mxu0 %v1955
        %2574 = vmatpush.msra.mxu0 %v1952
        %2575 = vmatpush.msra.mxu0 %v1949
        %2576 = vmatpush.msra.mxu0 %v1946
        %2577 = vmatpush.msra.mxu0 %v1943
        %2578 = vmatpush.msra.mxu0 %v1940
        %2579 = vmatpush.msra.mxu0 %v1937
        %2580 = vmatpush.msra.mxu0 %v1934
        %2581 = vmatpush.msra.mxu0 %v1931
        %2582 = vmatmul.f32.gmra.mxu0 %v1795
        %v2583 = vpop.f32.mrf.mxu0
        %v2584 = vadd.f32 %v2543, %v2583
        %2585 = vmatmul.f32.gmra.mxu0 %v1800
        %v2586 = vpop.f32.mrf.mxu0
        %v2587 = vadd.f32 %v2546, %v2586
        %2588 = vmatmul.f32.gmra.mxu0 %v1805
        %v2589 = vpop.f32.mrf.mxu0
        %v2590 = vadd.f32 %v2549, %v2589
        %2591 = vmatmul.f32.gmra.mxu0 %v1810
        %v2592 = vpop.f32.mrf.mxu0
        %v2593 = vadd.f32 %v2552, %v2592
        %2594 = vmatmul.f32.gmra.mxu0 %v1815
        %v2595 = vpop.f32.mrf.mxu0
        %v2596 = vadd.f32 %v2555, %v2595
        %2597 = vmatmul.f32.gmra.mxu0 %v1820
        %v2598 = vpop.f32.mrf.mxu0
        %v2599 = vadd.f32 %v2558, %v2598
        %2600 = vmatmul.f32.gmra.mxu0 %v1825
        %v2601 = vpop.f32.mrf.mxu0
        %v2602 = vadd.f32 %v2561, %v2601
        %2603 = vmatmul.f32.gmra.mxu0 %v1830
        %v2604 = vpop.f32.mrf.mxu0
        %v2605 = vadd.f32 %v2564, %v2604
        %2606 = vdwg.mxu0
        %2607 = vmatpush.msra.mxu0 %v2024
        %2608 = vmatpush.msra.mxu0 %v2021
        %2609 = vmatpush.msra.mxu0 %v2018
        %2610 = vmatpush.msra.mxu0 %v2015
        %2611 = vmatpush.msra.mxu0 %v2012
        %2612 = vmatpush.msra.mxu0 %v2009
        %2613 = vmatpush.msra.mxu0 %v2006
        %2614 = vmatpush.msra.mxu0 %v2003
        %2615 = vmatpush.msra.mxu0 %v2000
        %2616 = vmatpush.msra.mxu0 %v1997
        %2617 = vmatpush.msra.mxu0 %v1994
        %2618 = vmatpush.msra.mxu0 %v1991
        %2619 = vmatpush.msra.mxu0 %v1988
        %2620 = vmatpush.msra.mxu0 %v1985
        %2621 = vmatpush.msra.mxu0 %v1982
        %2622 = vmatpush.msra.mxu0 %v1979
        %2623 = vmatmul.f32.gmra.mxu0 %v1796
        %v2624 = vpop.f32.mrf.mxu0
        %v2625 = vadd.f32 %v2584, %v2624
        %2626 = vmatmul.f32.gmra.mxu0 %v1801
        %v2627 = vpop.f32.mrf.mxu0
        %v2628 = vadd.f32 %v2587, %v2627
        %2629 = vmatmul.f32.gmra.mxu0 %v1806
        %v2630 = vpop.f32.mrf.mxu0
        %v2631 = vadd.f32 %v2590, %v2630
        %2632 = vmatmul.f32.gmra.mxu0 %v1811
        %v2633 = vpop.f32.mrf.mxu0
        %v2634 = vadd.f32 %v2593, %v2633
        %2635 = vmatmul.f32.gmra.mxu0 %v1816
        %v2636 = vpop.f32.mrf.mxu0
        %v2637 = vadd.f32 %v2596, %v2636
        %2638 = vmatmul.f32.gmra.mxu0 %v1821
        %v2639 = vpop.f32.mrf.mxu0
        %v2640 = vadd.f32 %v2599, %v2639
        %2641 = vmatmul.f32.gmra.mxu0 %v1826
        %v2642 = vpop.f32.mrf.mxu0
        %v2643 = vadd.f32 %v2602, %v2642
        %2644 = vmatmul.f32.gmra.mxu0 %v1831
        %v2645 = vpop.f32.mrf.mxu0
        %v2646 = vadd.f32 %v2605, %v2645
        %2647 = vdwg.mxu0
        %2648 = vmatpush.msra.mxu0 0.0
        %2649 = vmatpush.msra.mxu0 0.0
        %2650 = vmatpush.msra.mxu0 0.0
        %2651 = vmatpush.msra.mxu0 0.0
        %2652 = vmatpush.msra.mxu0 0.0
        %2653 = vmatpush.msra.mxu0 0.0
        %2654 = vmatpush.msra.mxu0 0.0
        %2655 = vmatpush.msra.mxu0 0.0
        %2656 = vmatpush.msra.mxu0 %v2048
        %2657 = vmatpush.msra.mxu0 %v2045
        %2658 = vmatpush.msra.mxu0 %v2042
        %2659 = vmatpush.msra.mxu0 %v2039
        %2660 = vmatpush.msra.mxu0 %v2036
        %2661 = vmatpush.msra.mxu0 %v2033
        %2662 = vmatpush.msra.mxu0 %v2030
        %2663 = vmatpush.msra.mxu0 %v2027
        %2664 = vmatmul.f32.gmra.mxu0 %v2051
        %v2665 = vpop.f32.mrf.mxu0
        %v2666 = vadd.f32 %v2625, %v2665
        %2667 = vmatmul.f32.gmra.mxu0 %v2054
        %v2668 = vpop.f32.mrf.mxu0
        %v2669 = vadd.f32 %v2628, %v2668
        %2670 = vmatmul.f32.gmra.mxu0 %v2057
        %v2671 = vpop.f32.mrf.mxu0
        %v2672 = vadd.f32 %v2631, %v2671
        %2673 = vmatmul.f32.gmra.mxu0 %v2060
        %v2674 = vpop.f32.mrf.mxu0
        %v2675 = vadd.f32 %v2634, %v2674
        %2676 = vmatmul.f32.gmra.mxu0 %v2063
        %v2677 = vpop.f32.mrf.mxu0
        %v2678 = vadd.f32 %v2637, %v2677
        %2679 = vmatmul.f32.gmra.mxu0 %v2066
        %v2680 = vpop.f32.mrf.mxu0
        %v2681 = vadd.f32 %v2640, %v2680
        %2682 = vmatmul.f32.gmra.mxu0 %v2069
        %v2683 = vpop.f32.mrf.mxu0
        %v2684 = vadd.f32 %v2643, %v2683
        %2685 = vmatmul.f32.gmra.mxu0 %v2072
        %v2686 = vpop.f32.mrf.mxu0
        %v2687 = vadd.f32 %v2646, %v2686
        %2688 = vdwg.mxu0
        %s2689 = sld [smem:[#allocation5]]
        %vm2690 = vcmp.ge.f32.partialorder %v2256, 0.0
        %vm2691 = vcmp.ge.f32.partialorder %v2461, 0.0
        %vm2692 = vcmp.ge.f32.partialorder %v2666, 0.0
        %vm2693 = vcmp.ge.f32.partialorder %v2259, 0.0
        %vm2694 = vcmp.ge.f32.partialorder %v2464, 0.0
        %vm2695 = vcmp.ge.f32.partialorder %v2669, 0.0
        %vm2696 = vcmp.ge.f32.partialorder %v2262, 0.0
        %vm2697 = vcmp.ge.f32.partialorder %v2467, 0.0
        %vm2698 = vcmp.ge.f32.partialorder %v2672, 0.0
        %vm2699 = vcmp.ge.f32.partialorder %v2265, 0.0
        %vm2700 = vcmp.ge.f32.partialorder %v2470, 0.0
        %vm2701 = vcmp.ge.f32.partialorder %v2675, 0.0
        %vm2702 = vcmp.ge.f32.partialorder %v2268, 0.0
        %vm2703 = vcmp.ge.f32.partialorder %v2473, 0.0
        %vm2704 = vcmp.ge.f32.partialorder %v2678, 0.0
        %vm2705 = vcmp.ge.f32.partialorder %v2271, 0.0
        %vm2706 = vcmp.ge.f32.partialorder %v2476, 0.0
        %vm2707 = vcmp.ge.f32.partialorder %v2681, 0.0
        %vm2708 = vcmp.ge.f32.partialorder %v2274, 0.0
        %vm2709 = vcmp.ge.f32.partialorder %v2479, 0.0
        %vm2710 = vcmp.ge.f32.partialorder %v2684, 0.0
        %vm2711 = vcmp.ge.f32.partialorder %v2277, 0.0
        %vm2712 = vcmp.ge.f32.partialorder %v2482, 0.0
        %vm2713 = vcmp.ge.f32.partialorder %v2687, 0.0
        %v2714 = vstv %s2689
        %v2715 = vmul.f32 %v2714, %v2256
        %v2716 = vmul.f32 %v2714, %v2461
        %v2717 = vmul.f32 %v2714, %v2666
        %v2718 = vmul.f32 %v2714, %v2259
        %v2719 = vmul.f32 %v2714, %v2464
        %v2720 = vmul.f32 %v2714, %v2669
        %v2721 = vmul.f32 %v2714, %v2262
        %v2722 = vmul.f32 %v2714, %v2467
        %v2723 = vmul.f32 %v2714, %v2672
        %v2724 = vmul.f32 %v2714, %v2265
        %v2725 = vmul.f32 %v2714, %v2470
        %v2726 = vmul.f32 %v2714, %v2675
        %v2727 = vmul.f32 %v2714, %v2268
        %v2728 = vmul.f32 %v2714, %v2473
        %v2729 = vmul.f32 %v2714, %v2678
        %v2730 = vmul.f32 %v2714, %v2271
        %v2731 = vmul.f32 %v2714, %v2476
        %v2732 = vmul.f32 %v2714, %v2681
        %v2733 = vmul.f32 %v2714, %v2274
        %v2734 = vmul.f32 %v2714, %v2479
        %v2735 = vmul.f32 %v2714, %v2684
        %v2736 = vmul.f32 %v2714, %v2277
        %v2737 = vmul.f32 %v2714, %v2482
        %v2738 = vmul.f32 %v2714, %v2687
        %v2739 = vsel %vm2690, %v2256, %v2715
        %v2740 = vsel %vm2691, %v2461, %v2716
        %v2741 = vsel %vm2692, %v2666, %v2717
        %v2742 = vsel %vm2693, %v2259, %v2718
        %v2743 = vsel %vm2694, %v2464, %v2719
        %v2744 = vsel %vm2695, %v2669, %v2720
        %v2745 = vsel %vm2696, %v2262, %v2721
        %v2746 = vsel %vm2697, %v2467, %v2722
        %v2747 = vsel %vm2698, %v2672, %v2723
        %v2748 = vsel %vm2699, %v2265, %v2724
        %v2749 = vsel %vm2700, %v2470, %v2725
        %v2750 = vsel %vm2701, %v2675, %v2726
        %v2751 = vsel %vm2702, %v2268, %v2727
        %v2752 = vsel %vm2703, %v2473, %v2728
        %v2753 = vsel %vm2704, %v2678, %v2729
        %v2754 = vsel %vm2705, %v2271, %v2730
        %v2755 = vsel %vm2706, %v2476, %v2731
        %v2756 = vsel %vm2707, %v2681, %v2732
        %v2757 = vsel %vm2708, %v2274, %v2733
        %v2758 = vsel %vm2709, %v2479, %v2734
        %v2759 = vsel %vm2710, %v2684, %v2735
        %v2760 = vsel %vm2711, %v2277, %v2736
        %v2761 = vsel %vm2712, %v2482, %v2737
        %v2762 = vsel %vm2713, %v2687, %v2738
        %v2763 = vsel %vm453, 1, 0
        %v2764 = vsel %vm454, 1, 0
        %v2765 = vsel %vm455, 1, 0
        %vm2766 = vcmp.eq.s32.totalorder %v2763, 1
        %vm2767 = vcmp.eq.s32.totalorder %v2764, 1
        %vm2768 = vcmp.eq.s32.totalorder %v2765, 1
        %v2769 = vsel %vm2766, %v2739, 0.0
        %v2770 = vsel %vm2767, %v2740, 0.0
        %v2771 = vsel %vm2768, %v2741, 0.0
        %v2772 = vsel %vm2766, %v2742, 0.0
        %v2773 = vsel %vm2767, %v2743, 0.0
        %v2774 = vsel %vm2768, %v2744, 0.0
        %v2775 = vsel %vm2766, %v2745, 0.0
        %v2776 = vsel %vm2767, %v2746, 0.0
        %v2777 = vsel %vm2768, %v2747, 0.0
        %v2778 = vsel %vm2766, %v2748, 0.0
        %v2779 = vsel %vm2767, %v2749, 0.0
        %v2780 = vsel %vm2768, %v2750, 0.0
        %v2781 = vsel %vm2766, %v2751, 0.0
        %v2782 = vsel %vm2767, %v2752, 0.0
        %v2783 = vsel %vm2768, %v2753, 0.0
        %v2784 = vsel %vm2766, %v2754, 0.0
        %v2785 = vsel %vm2767, %v2755, 0.0
        %v2786 = vsel %vm2768, %v2756, 0.0
        %v2787 = vsel %vm2766, %v2757, 0.0
        %v2788 = vsel %vm2767, %v2758, 0.0
        %v2789 = vsel %vm2768, %v2759, 0.0
        %v2790 = vsel %vm2766, %v2760, 0.0
        %v2791 = vsel %vm2767, %v2761, 0.0
        %v2792 = vsel %vm2768, %v2762, 0.0
        %vm2793 = vcmask 1048424
        %2794 = vst.msk [vmem:[#allocation3] sm:$0xff] %vm2793, 0.0
        %2795 = vst.msk [vmem:[#allocation3 + $0x20] sm:$0xff] %vm2793, 0.0
        %2796 = vst.msk [vmem:[#allocation3 + $0x40] sm:$0xff] %vm2793, 0.0
        %2797 = vst.msk [vmem:[#allocation3 + $0x60] sm:$0xff] %vm2793, 0.0
        %2798 = vst.msk [vmem:[#allocation3 + $0x80] sm:$0xff] %vm2793, 0.0
        %2799 = vst.msk [vmem:[#allocation3 + $0xa0] sm:$0xff] %vm2793, 0.0
        %2800 = vst.msk [vmem:[#allocation3 + $0xc0] sm:$0xff] %vm2793, 0.0
        %2801 = vst.msk [vmem:[#allocation3 + $0xe0] sm:$0xff] %vm2793, 0.0
        %vm2802 = vcmask 417024
        %2803 = vst.msk [vmem:[#allocation3 + $0x18] sm:$0xff] %vm2802, 0.0
        %2804 = vst.msk [vmem:[#allocation3 + $0x38] sm:$0xff] %vm2802, 0.0
        %2805 = vst.msk [vmem:[#allocation3 + $0x58] sm:$0xff] %vm2802, 0.0
        %2806 = vst.msk [vmem:[#allocation3 + $0x78] sm:$0xff] %vm2802, 0.0
        %2807 = vst.msk [vmem:[#allocation3 + $0x98] sm:$0xff] %vm2802, 0.0
        %2808 = vst.msk [vmem:[#allocation3 + $0xb8] sm:$0xff] %vm2802, 0.0
        %2809 = vst.msk [vmem:[#allocation3 + $0xd8] sm:$0xff] %vm2802, 0.0
        %2810 = vst.msk [vmem:[#allocation3 + $0xf8] sm:$0xff] %vm2802, 0.0
        %2811 = vst [vmem:[#allocation3 + $0x8] sm:$0xff] %v2769
        %2812 = vst [vmem:[#allocation3 + $0x10] sm:$0xff] %v2770
        %2813 = vst.msk [vmem:[#allocation3 + $0x18] sm:$0xff] %vm482, %v2771
        %2814 = vst [vmem:[#allocation3 + $0x28] sm:$0xff] %v2772
        %2815 = vst [vmem:[#allocation3 + $0x30] sm:$0xff] %v2773
        %2816 = vst.msk [vmem:[#allocation3 + $0x38] sm:$0xff] %vm482, %v2774
        %2817 = vst [vmem:[#allocation3 + $0x48] sm:$0xff] %v2775
        %2818 = vst [vmem:[#allocation3 + $0x50] sm:$0xff] %v2776
        %2819 = vst.msk [vmem:[#allocation3 + $0x58] sm:$0xff] %vm482, %v2777
        %2820 = vst [vmem:[#allocation3 + $0x68] sm:$0xff] %v2778
        %2821 = vst [vmem:[#allocation3 + $0x70] sm:$0xff] %v2779
        %2822 = vst.msk [vmem:[#allocation3 + $0x78] sm:$0xff] %vm482, %v2780
        %2823 = vst [vmem:[#allocation3 + $0x88] sm:$0xff] %v2781
        %2824 = vst [vmem:[#allocation3 + $0x90] sm:$0xff] %v2782
        %2825 = vst.msk [vmem:[#allocation3 + $0x98] sm:$0xff] %vm482, %v2783
        %2826 = vst [vmem:[#allocation3 + $0xa8] sm:$0xff] %v2784
        %2827 = vst [vmem:[#allocation3 + $0xb0] sm:$0xff] %v2785
        %2828 = vst.msk [vmem:[#allocation3 + $0xb8] sm:$0xff] %vm482, %v2786
        %2829 = vst [vmem:[#allocation3 + $0xc8] sm:$0xff] %v2787
        %2830 = vst [vmem:[#allocation3 + $0xd0] sm:$0xff] %v2788
        %2831 = vst.msk [vmem:[#allocation3 + $0xd8] sm:$0xff] %vm482, %v2789
        %2832 = vst [vmem:[#allocation3 + $0xe8] sm:$0xff] %v2790
        %2833 = vst [vmem:[#allocation3 + $0xf0] sm:$0xff] %v2791
        %2834 = vst.msk [vmem:[#allocation3 + $0xf8] sm:$0xff] %vm482, %v2792
        %s2835 = smul.u32 %s27, 128
        %s2836 = sld [smem:[#allocation13 + %s2835]]
        %v2837 = vld [vmem:[#allocation12] sm:$0xff]
        %v2838 = vld [vmem:[#allocation12 + $0x8] sm:$0xff]
        %v2839 = vld [vmem:[#allocation12 + $0x10] sm:$0xff]
        %v2840 = vld [vmem:[#allocation12 + $0x18] sm:$0xff]
        %v2841 = vld [vmem:[#allocation12 + $0x20] sm:$0xff]
        %v2842 = vld [vmem:[#allocation12 + $0x28] sm:$0xff]
        %v2843 = vld [vmem:[#allocation12 + $0x30] sm:$0xff]
        %v2844 = vld [vmem:[#allocation12 + $0x38] sm:$0xff]
        %v2845 = vld [vmem:[#allocation12 + $0x40] sm:$0xff]
        %v2846 = vld [vmem:[#allocation12 + $0x48] sm:$0xff]
        %v2847 = vld [vmem:[#allocation12 + $0x50] sm:$0xff]
        %v2848 = vld [vmem:[#allocation12 + $0x58] sm:$0xff]
        %v2849 = vld [vmem:[#allocation12 + $0x60] sm:$0xff]
        %v2850 = vld [vmem:[#allocation12 + $0x68] sm:$0xff]
        %v2851 = vld [vmem:[#allocation12 + $0x70] sm:$0xff]
        %v2852 = vld [vmem:[#allocation12 + $0x78] sm:$0xff]
        %v2853 = vld [vmem:[#allocation12 + $0x80] sm:$0xff]
        %v2854 = vld [vmem:[#allocation12 + $0x88] sm:$0xff]
        %v2855 = vld [vmem:[#allocation12 + $0x90] sm:$0xff]
        %v2856 = vld [vmem:[#allocation12 + $0x98] sm:$0xff]
        %v2857 = vld [vmem:[#allocation12 + $0xa0] sm:$0xff]
        %v2858 = vld [vmem:[#allocation12 + $0xa8] sm:$0xff]
        %v2859 = vld [vmem:[#allocation12 + $0xb0] sm:$0xff]
        %v2860 = vld [vmem:[#allocation12 + $0xb8] sm:$0xff]
        %v2861 = vld [vmem:[#allocation12 + $0xc0] sm:$0xff]
        %v2862 = vld [vmem:[#allocation12 + $0xc8] sm:$0xff]
        %v2863 = vld [vmem:[#allocation12 + $0xd0] sm:$0xff]
        %v2864 = vld [vmem:[#allocation12 + $0xd8] sm:$0xff]
        %v2865 = vld [vmem:[#allocation12 + $0xe0] sm:$0xff]
        %v2866 = vld [vmem:[#allocation12 + $0xe8] sm:$0xff]
        %v2867 = vld [vmem:[#allocation12 + $0xf0] sm:$0xff]
        %v2868 = vld [vmem:[#allocation12 + $0xf8] sm:$0xff]
        %v2869 = vld [vmem:[#allocation12 + $0x100] sm:$0xff]
        %v2870 = vld [vmem:[#allocation12 + $0x108] sm:$0xff]
        %v2871 = vld [vmem:[#allocation12 + $0x110] sm:$0xff]
        %v2872 = vld [vmem:[#allocation12 + $0x118] sm:$0xff]
        %v2873 = vld [vmem:[#allocation12 + $0x120] sm:$0xff]
        %v2874 = vld [vmem:[#allocation12 + $0x128] sm:$0xff]
        %v2875 = vld [vmem:[#allocation12 + $0x130] sm:$0xff]
        %v2876 = vld [vmem:[#allocation12 + $0x138] sm:$0xff]
        %v2877 = vstv %s2836
        %v2878 = vmul.f32 %v2877, %v2837
        %v2879 = vmul.f32 %v2877, %v2838
        %v2880 = vmul.f32 %v2877, %v2839
        %v2881 = vmul.f32 %v2877, %v2840
        %v2882 = vmul.f32 %v2877, %v2841
        %v2883 = vmul.f32 %v2877, %v2842
        %v2884 = vmul.f32 %v2877, %v2843
        %v2885 = vmul.f32 %v2877, %v2844
        %v2886 = vmul.f32 %v2877, %v2845
        %v2887 = vmul.f32 %v2877, %v2846
        %v2888 = vmul.f32 %v2877, %v2847
        %v2889 = vmul.f32 %v2877, %v2848
        %v2890 = vmul.f32 %v2877, %v2849
        %v2891 = vmul.f32 %v2877, %v2850
        %v2892 = vmul.f32 %v2877, %v2851
        %v2893 = vmul.f32 %v2877, %v2852
        %v2894 = vmul.f32 %v2877, %v2853
        %v2895 = vmul.f32 %v2877, %v2854
        %v2896 = vmul.f32 %v2877, %v2855
        %v2897 = vmul.f32 %v2877, %v2856
        %v2898 = vmul.f32 %v2877, %v2857
        %v2899 = vmul.f32 %v2877, %v2858
        %v2900 = vmul.f32 %v2877, %v2859
        %v2901 = vmul.f32 %v2877, %v2860
        %v2902 = vmul.f32 %v2877, %v2861
        %v2903 = vmul.f32 %v2877, %v2862
        %v2904 = vmul.f32 %v2877, %v2863
        %v2905 = vmul.f32 %v2877, %v2864
        %v2906 = vmul.f32 %v2877, %v2865
        %v2907 = vmul.f32 %v2877, %v2866
        %v2908 = vmul.f32 %v2877, %v2867
        %v2909 = vmul.f32 %v2877, %v2868
        %v2910 = vmul.f32 %v2877, %v2869
        %v2911 = vmul.f32 %v2877, %v2870
        %v2912 = vmul.f32 %v2877, %v2871
        %v2913 = vmul.f32 %v2877, %v2872
        %v2914 = vmul.f32 %v2877, %v2873
        %v2915 = vmul.f32 %v2877, %v2874
        %v2916 = vmul.f32 %v2877, %v2875
        %v2917 = vmul.f32 %v2877, %v2876
        %s2918 = sadd.s32 %s2835, 1
        %s2919 = sld [smem:[#allocation13 + %s2918]]
        %s2920 = scalar_lea.vmem [#allocation12], 320
        %v2921 = vld [vmem:[%s2920] sm:$0xff]
        %v2922 = vld [vmem:[%s2920 + $0x8] sm:$0xff]
        %v2923 = vld [vmem:[%s2920 + $0x10] sm:$0xff]
        %v2924 = vld [vmem:[%s2920 + $0x18] sm:$0xff]
        %v2925 = vld [vmem:[%s2920 + $0x20] sm:$0xff]
        %v2926 = vld [vmem:[%s2920 + $0x28] sm:$0xff]
        %v2927 = vld [vmem:[%s2920 + $0x30] sm:$0xff]
        %v2928 = vld [vmem:[%s2920 + $0x38] sm:$0xff]
        %v2929 = vld [vmem:[%s2920 + $0x40] sm:$0xff]
        %v2930 = vld [vmem:[%s2920 + $0x48] sm:$0xff]
        %v2931 = vld [vmem:[%s2920 + $0x50] sm:$0xff]
        %v2932 = vld [vmem:[%s2920 + $0x58] sm:$0xff]
        %v2933 = vld [vmem:[%s2920 + $0x60] sm:$0xff]
        %v2934 = vld [vmem:[%s2920 + $0x68] sm:$0xff]
        %v2935 = vld [vmem:[%s2920 + $0x70] sm:$0xff]
        %v2936 = vld [vmem:[%s2920 + $0x78] sm:$0xff]
        %v2937 = vld [vmem:[%s2920 + $0x80] sm:$0xff]
        %v2938 = vld [vmem:[%s2920 + $0x88] sm:$0xff]
        %v2939 = vld [vmem:[%s2920 + $0x90] sm:$0xff]
        %v2940 = vld [vmem:[%s2920 + $0x98] sm:$0xff]
        %v2941 = vld [vmem:[%s2920 + $0xa0] sm:$0xff]
        %v2942 = vld [vmem:[%s2920 + $0xa8] sm:$0xff]
        %v2943 = vld [vmem:[%s2920 + $0xb0] sm:$0xff]
        %v2944 = vld [vmem:[%s2920 + $0xb8] sm:$0xff]
        %v2945 = vld [vmem:[%s2920 + $0xc0] sm:$0xff]
        %v2946 = vld [vmem:[%s2920 + $0xc8] sm:$0xff]
        %v2947 = vld [vmem:[%s2920 + $0xd0] sm:$0xff]
        %v2948 = vld [vmem:[%s2920 + $0xd8] sm:$0xff]
        %v2949 = vld [vmem:[%s2920 + $0xe0] sm:$0xff]
        %v2950 = vld [vmem:[%s2920 + $0xe8] sm:$0xff]
        %v2951 = vld [vmem:[%s2920 + $0xf0] sm:$0xff]
        %v2952 = vld [vmem:[%s2920 + $0xf8] sm:$0xff]
        %v2953 = vld [vmem:[%s2920 + $0x100] sm:$0xff]
        %v2954 = vld [vmem:[%s2920 + $0x108] sm:$0xff]
        %v2955 = vld [vmem:[%s2920 + $0x110] sm:$0xff]
        %v2956 = vld [vmem:[%s2920 + $0x118] sm:$0xff]
        %v2957 = vld [vmem:[%s2920 + $0x120] sm:$0xff]
        %v2958 = vld [vmem:[%s2920 + $0x128] sm:$0xff]
        %v2959 = vld [vmem:[%s2920 + $0x130] sm:$0xff]
        %v2960 = vld [vmem:[%s2920 + $0x138] sm:$0xff]
        %v2961 = vstv %s2919
        %v2962 = vmul.f32 %v2961, %v2921
        %v2963 = vmul.f32 %v2961, %v2922
        %v2964 = vmul.f32 %v2961, %v2923
        %v2965 = vmul.f32 %v2961, %v2924
        %v2966 = vmul.f32 %v2961, %v2925
        %v2967 = vmul.f32 %v2961, %v2926
        %v2968 = vmul.f32 %v2961, %v2927
        %v2969 = vmul.f32 %v2961, %v2928
        %v2970 = vmul.f32 %v2961, %v2929
        %v2971 = vmul.f32 %v2961, %v2930
        %v2972 = vmul.f32 %v2961, %v2931
        %v2973 = vmul.f32 %v2961, %v2932
        %v2974 = vmul.f32 %v2961, %v2933
        %v2975 = vmul.f32 %v2961, %v2934
        %v2976 = vmul.f32 %v2961, %v2935
        %v2977 = vmul.f32 %v2961, %v2936
        %v2978 = vmul.f32 %v2961, %v2937
        %v2979 = vmul.f32 %v2961, %v2938
        %v2980 = vmul.f32 %v2961, %v2939
        %v2981 = vmul.f32 %v2961, %v2940
        %v2982 = vmul.f32 %v2961, %v2941
        %v2983 = vmul.f32 %v2961, %v2942
        %v2984 = vmul.f32 %v2961, %v2943
        %v2985 = vmul.f32 %v2961, %v2944
        %v2986 = vmul.f32 %v2961, %v2945
        %v2987 = vmul.f32 %v2961, %v2946
        %v2988 = vmul.f32 %v2961, %v2947
        %v2989 = vmul.f32 %v2961, %v2948
        %v2990 = vmul.f32 %v2961, %v2949
        %v2991 = vmul.f32 %v2961, %v2950
        %v2992 = vmul.f32 %v2961, %v2951
        %v2993 = vmul.f32 %v2961, %v2952
        %v2994 = vmul.f32 %v2961, %v2953
        %v2995 = vmul.f32 %v2961, %v2954
        %v2996 = vmul.f32 %v2961, %v2955
        %v2997 = vmul.f32 %v2961, %v2956
        %v2998 = vmul.f32 %v2961, %v2957
        %v2999 = vmul.f32 %v2961, %v2958
        %v3000 = vmul.f32 %v2961, %v2959
        %v3001 = vmul.f32 %v2961, %v2960
        %v3002 = vadd.f32 %v2878, %v2962
        %v3003 = vadd.f32 %v2879, %v2963
        %v3004 = vadd.f32 %v2880, %v2964
        %v3005 = vadd.f32 %v2881, %v2965
        %v3006 = vadd.f32 %v2882, %v2966
        %v3007 = vadd.f32 %v2883, %v2967
        %v3008 = vadd.f32 %v2884, %v2968
        %v3009 = vadd.f32 %v2885, %v2969
        %v3010 = vadd.f32 %v2886, %v2970
        %v3011 = vadd.f32 %v2887, %v2971
        %v3012 = vadd.f32 %v2888, %v2972
        %v3013 = vadd.f32 %v2889, %v2973
        %v3014 = vadd.f32 %v2890, %v2974
        %v3015 = vadd.f32 %v2891, %v2975
        %v3016 = vadd.f32 %v2892, %v2976
        %v3017 = vadd.f32 %v2893, %v2977
        %v3018 = vadd.f32 %v2894, %v2978
        %v3019 = vadd.f32 %v2895, %v2979
        %v3020 = vadd.f32 %v2896, %v2980
        %v3021 = vadd.f32 %v2897, %v2981
        %v3022 = vadd.f32 %v2898, %v2982
        %v3023 = vadd.f32 %v2899, %v2983
        %v3024 = vadd.f32 %v2900, %v2984
        %v3025 = vadd.f32 %v2901, %v2985
        %v3026 = vadd.f32 %v2902, %v2986
        %v3027 = vadd.f32 %v2903, %v2987
        %v3028 = vadd.f32 %v2904, %v2988
        %v3029 = vadd.f32 %v2905, %v2989
        %v3030 = vadd.f32 %v2906, %v2990
        %v3031 = vadd.f32 %v2907, %v2991
        %v3032 = vadd.f32 %v2908, %v2992
        %v3033 = vadd.f32 %v2909, %v2993
        %v3034 = vadd.f32 %v2910, %v2994
        %v3035 = vadd.f32 %v2911, %v2995
        %v3036 = vadd.f32 %v2912, %v2996
        %v3037 = vadd.f32 %v2913, %v2997
        %v3038 = vadd.f32 %v2914, %v2998
        %v3039 = vadd.f32 %v2915, %v2999
        %v3040 = vadd.f32 %v2916, %v3000
        %v3041 = vadd.f32 %v2917, %v3001
        %s3042 = sadd.s32 %s2835, 2
        %s3043 = sld [smem:[#allocation13 + %s3042]]
        %s3044 = scalar_lea.vmem [#allocation12], 640
        %v3045 = vld [vmem:[%s3044] sm:$0xff]
        %v3046 = vld [vmem:[%s3044 + $0x8] sm:$0xff]
        %v3047 = vld [vmem:[%s3044 + $0x10] sm:$0xff]
        %v3048 = vld [vmem:[%s3044 + $0x18] sm:$0xff]
        %v3049 = vld [vmem:[%s3044 + $0x20] sm:$0xff]
        %v3050 = vld [vmem:[%s3044 + $0x28] sm:$0xff]
        %v3051 = vld [vmem:[%s3044 + $0x30] sm:$0xff]
        %v3052 = vld [vmem:[%s3044 + $0x38] sm:$0xff]
        %v3053 = vld [vmem:[%s3044 + $0x40] sm:$0xff]
        %v3054 = vld [vmem:[%s3044 + $0x48] sm:$0xff]
        %v3055 = vld [vmem:[%s3044 + $0x50] sm:$0xff]
        %v3056 = vld [vmem:[%s3044 + $0x58] sm:$0xff]
        %v3057 = vld [vmem:[%s3044 + $0x60] sm:$0xff]
        %v3058 = vld [vmem:[%s3044 + $0x68] sm:$0xff]
        %v3059 = vld [vmem:[%s3044 + $0x70] sm:$0xff]
        %v3060 = vld [vmem:[%s3044 + $0x78] sm:$0xff]
        %v3061 = vld [vmem:[%s3044 + $0x80] sm:$0xff]
        %v3062 = vld [vmem:[%s3044 + $0x88] sm:$0xff]
        %v3063 = vld [vmem:[%s3044 + $0x90] sm:$0xff]
        %v3064 = vld [vmem:[%s3044 + $0x98] sm:$0xff]
        %v3065 = vld [vmem:[%s3044 + $0xa0] sm:$0xff]
        %v3066 = vld [vmem:[%s3044 + $0xa8] sm:$0xff]
        %v3067 = vld [vmem:[%s3044 + $0xb0] sm:$0xff]
        %v3068 = vld [vmem:[%s3044 + $0xb8] sm:$0xff]
        %v3069 = vld [vmem:[%s3044 + $0xc0] sm:$0xff]
        %v3070 = vld [vmem:[%s3044 + $0xc8] sm:$0xff]
        %v3071 = vld [vmem:[%s3044 + $0xd0] sm:$0xff]
        %v3072 = vld [vmem:[%s3044 + $0xd8] sm:$0xff]
        %v3073 = vld [vmem:[%s3044 + $0xe0] sm:$0xff]
        %v3074 = vld [vmem:[%s3044 + $0xe8] sm:$0xff]
        %v3075 = vld [vmem:[%s3044 + $0xf0] sm:$0xff]
        %v3076 = vld [vmem:[%s3044 + $0xf8] sm:$0xff]
        %v3077 = vld [vmem:[%s3044 + $0x100] sm:$0xff]
        %v3078 = vld [vmem:[%s3044 + $0x108] sm:$0xff]
        %v3079 = vld [vmem:[%s3044 + $0x110] sm:$0xff]
        %v3080 = vld [vmem:[%s3044 + $0x118] sm:$0xff]
        %v3081 = vld [vmem:[%s3044 + $0x120] sm:$0xff]
        %v3082 = vld [vmem:[%s3044 + $0x128] sm:$0xff]
        %v3083 = vld [vmem:[%s3044 + $0x130] sm:$0xff]
        %v3084 = vld [vmem:[%s3044 + $0x138] sm:$0xff]
        %v3085 = vstv %s3043
        %v3086 = vmul.f32 %v3085, %v3045
        %v3087 = vmul.f32 %v3085, %v3046
        %v3088 = vmul.f32 %v3085, %v3047
        %v3089 = vmul.f32 %v3085, %v3048
        %v3090 = vmul.f32 %v3085, %v3049
        %v3091 = vmul.f32 %v3085, %v3050
        %v3092 = vmul.f32 %v3085, %v3051
        %v3093 = vmul.f32 %v3085, %v3052
        %v3094 = vmul.f32 %v3085, %v3053
        %v3095 = vmul.f32 %v3085, %v3054
        %v3096 = vmul.f32 %v3085, %v3055
        %v3097 = vmul.f32 %v3085, %v3056
        %v3098 = vmul.f32 %v3085, %v3057
        %v3099 = vmul.f32 %v3085, %v3058
        %v3100 = vmul.f32 %v3085, %v3059
        %v3101 = vmul.f32 %v3085, %v3060
        %v3102 = vmul.f32 %v3085, %v3061
        %v3103 = vmul.f32 %v3085, %v3062
        %v3104 = vmul.f32 %v3085, %v3063
        %v3105 = vmul.f32 %v3085, %v3064
        %v3106 = vmul.f32 %v3085, %v3065
        %v3107 = vmul.f32 %v3085, %v3066
        %v3108 = vmul.f32 %v3085, %v3067
        %v3109 = vmul.f32 %v3085, %v3068
        %v3110 = vmul.f32 %v3085, %v3069
        %v3111 = vmul.f32 %v3085, %v3070
        %v3112 = vmul.f32 %v3085, %v3071
        %v3113 = vmul.f32 %v3085, %v3072
        %v3114 = vmul.f32 %v3085, %v3073
        %v3115 = vmul.f32 %v3085, %v3074
        %v3116 = vmul.f32 %v3085, %v3075
        %v3117 = vmul.f32 %v3085, %v3076
        %v3118 = vmul.f32 %v3085, %v3077
        %v3119 = vmul.f32 %v3085, %v3078
        %v3120 = vmul.f32 %v3085, %v3079
        %v3121 = vmul.f32 %v3085, %v3080
        %v3122 = vmul.f32 %v3085, %v3081
        %v3123 = vmul.f32 %v3085, %v3082
        %v3124 = vmul.f32 %v3085, %v3083
        %v3125 = vmul.f32 %v3085, %v3084
        %v3126 = vadd.f32 %v3002, %v3086
        %v3127 = vadd.f32 %v3003, %v3087
        %v3128 = vadd.f32 %v3004, %v3088
        %v3129 = vadd.f32 %v3005, %v3089
        %v3130 = vadd.f32 %v3006, %v3090
        %v3131 = vadd.f32 %v3007, %v3091
        %v3132 = vadd.f32 %v3008, %v3092
        %v3133 = vadd.f32 %v3009, %v3093
        %v3134 = vadd.f32 %v3010, %v3094
        %v3135 = vadd.f32 %v3011, %v3095
        %v3136 = vadd.f32 %v3012, %v3096
        %v3137 = vadd.f32 %v3013, %v3097
        %v3138 = vadd.f32 %v3014, %v3098
        %v3139 = vadd.f32 %v3015, %v3099
        %v3140 = vadd.f32 %v3016, %v3100
        %v3141 = vadd.f32 %v3017, %v3101
        %v3142 = vadd.f32 %v3018, %v3102
        %v3143 = vadd.f32 %v3019, %v3103
        %v3144 = vadd.f32 %v3020, %v3104
        %v3145 = vadd.f32 %v3021, %v3105
        %v3146 = vadd.f32 %v3022, %v3106
        %v3147 = vadd.f32 %v3023, %v3107
        %v3148 = vadd.f32 %v3024, %v3108
        %v3149 = vadd.f32 %v3025, %v3109
        %v3150 = vadd.f32 %v3026, %v3110
        %v3151 = vadd.f32 %v3027, %v3111
        %v3152 = vadd.f32 %v3028, %v3112
        %v3153 = vadd.f32 %v3029, %v3113
        %v3154 = vadd.f32 %v3030, %v3114
        %v3155 = vadd.f32 %v3031, %v3115
        %v3156 = vadd.f32 %v3032, %v3116
        %v3157 = vadd.f32 %v3033, %v3117
        %v3158 = vadd.f32 %v3034, %v3118
        %v3159 = vadd.f32 %v3035, %v3119
        %v3160 = vadd.f32 %v3036, %v3120
        %v3161 = vadd.f32 %v3037, %v3121
        %v3162 = vadd.f32 %v3038, %v3122
        %v3163 = vadd.f32 %v3039, %v3123
        %v3164 = vadd.f32 %v3040, %v3124
        %v3165 = vadd.f32 %v3041, %v3125
        %3166 = vst [vmem:[#allocation4] sm:$0xff] %v3126
        %3167 = vst [vmem:[#allocation4 + $0x8] sm:$0xff] %v3127
        %3168 = vst [vmem:[#allocation4 + $0x10] sm:$0xff] %v3128
        %3169 = vst [vmem:[#allocation4 + $0x18] sm:$0xff] %v3129
        %3170 = vst.msk [vmem:[#allocation4 + $0x20] sm:$0xff] %vm2049, %v3130
        %3171 = vst [vmem:[#allocation4 + $0x28] sm:$0xff] %v3131
        %3172 = vst [vmem:[#allocation4 + $0x30] sm:$0xff] %v3132
        %3173 = vst [vmem:[#allocation4 + $0x38] sm:$0xff] %v3133
        %3174 = vst [vmem:[#allocation4 + $0x40] sm:$0xff] %v3134
        %3175 = vst.msk [vmem:[#allocation4 + $0x48] sm:$0xff] %vm2049, %v3135
        %3176 = vst [vmem:[#allocation4 + $0x50] sm:$0xff] %v3136
        %3177 = vst [vmem:[#allocation4 + $0x58] sm:$0xff] %v3137
        %3178 = vst [vmem:[#allocation4 + $0x60] sm:$0xff] %v3138
        %3179 = vst [vmem:[#allocation4 + $0x68] sm:$0xff] %v3139
        %3180 = vst.msk [vmem:[#allocation4 + $0x70] sm:$0xff] %vm2049, %v3140
        %3181 = vst [vmem:[#allocation4 + $0x78] sm:$0xff] %v3141
        %3182 = vst [vmem:[#allocation4 + $0x80] sm:$0xff] %v3142
        %3183 = vst [vmem:[#allocation4 + $0x88] sm:$0xff] %v3143
        %3184 = vst [vmem:[#allocation4 + $0x90] sm:$0xff] %v3144
        %3185 = vst.msk [vmem:[#allocation4 + $0x98] sm:$0xff] %vm2049, %v3145
        %3186 = vst [vmem:[#allocation4 + $0xa0] sm:$0xff] %v3146
        %3187 = vst [vmem:[#allocation4 + $0xa8] sm:$0xff] %v3147
        %3188 = vst [vmem:[#allocation4 + $0xb0] sm:$0xff] %v3148
        %3189 = vst [vmem:[#allocation4 + $0xb8] sm:$0xff] %v3149
        %3190 = vst.msk [vmem:[#allocation4 + $0xc0] sm:$0xff] %vm2049, %v3150
        %3191 = vst [vmem:[#allocation4 + $0xc8] sm:$0xff] %v3151
        %3192 = vst [vmem:[#allocation4 + $0xd0] sm:$0xff] %v3152
        %3193 = vst [vmem:[#allocation4 + $0xd8] sm:$0xff] %v3153
        %3194 = vst [vmem:[#allocation4 + $0xe0] sm:$0xff] %v3154
        %3195 = vst.msk [vmem:[#allocation4 + $0xe8] sm:$0xff] %vm2049, %v3155
        %3196 = vst [vmem:[#allocation4 + $0xf0] sm:$0xff] %v3156
        %3197 = vst [vmem:[#allocation4 + $0xf8] sm:$0xff] %v3157
        %3198 = vst [vmem:[#allocation4 + $0x100] sm:$0xff] %v3158
        %3199 = vst [vmem:[#allocation4 + $0x108] sm:$0xff] %v3159
        %3200 = vst.msk [vmem:[#allocation4 + $0x110] sm:$0xff] %vm2049, %v3160
        %3201 = vst [vmem:[#allocation4 + $0x118] sm:$0xff] %v3161
        %3202 = vst [vmem:[#allocation4 + $0x120] sm:$0xff] %v3162
        %3203 = vst [vmem:[#allocation4 + $0x128] sm:$0xff] %v3163
        %3204 = vst [vmem:[#allocation4 + $0x130] sm:$0xff] %v3164
        %3205 = vst.msk [vmem:[#allocation4 + $0x138] sm:$0xff] %vm2049, %v3165
        %v3206 = vld [vmem:[#allocation3] sm:$0xff]
        %v3207 = vld [vmem:[#allocation3 + $0x8] sm:$0xff]
        %v3208 = vld [vmem:[#allocation3 + $0x10] sm:$0xff]
        %v3209 = vld [vmem:[#allocation3 + $0x18] sm:$0xff]
        %v3210 = vld [vmem:[#allocation3 + $0x20] sm:$0xff]
        %v3211 = vld [vmem:[#allocation3 + $0x28] sm:$0xff]
        %v3212 = vld [vmem:[#allocation3 + $0x30] sm:$0xff]
        %v3213 = vld [vmem:[#allocation3 + $0x38] sm:$0xff]
        %v3214 = vld [vmem:[#allocation3 + $0x40] sm:$0xff]
        %v3215 = vld [vmem:[#allocation3 + $0x48] sm:$0xff]
        %v3216 = vld [vmem:[#allocation3 + $0x50] sm:$0xff]
        %v3217 = vld [vmem:[#allocation3 + $0x58] sm:$0xff]
        %v3218 = vld [vmem:[#allocation3 + $0x60] sm:$0xff]
        %v3219 = vld [vmem:[#allocation3 + $0x68] sm:$0xff]
        %v3220 = vld [vmem:[#allocation3 + $0x70] sm:$0xff]
        %v3221 = vld [vmem:[#allocation3 + $0x78] sm:$0xff]
        %v3222 = vld [vmem:[#allocation3 + $0x80] sm:$0xff]
        %v3223 = vld [vmem:[#allocation3 + $0x88] sm:$0xff]
        %v3224 = vld [vmem:[#allocation3 + $0x90] sm:$0xff]
        %v3225 = vld [vmem:[#allocation3 + $0x98] sm:$0xff]
        %v3226 = vld [vmem:[#allocation3 + $0xa0] sm:$0xff]
        %v3227 = vld [vmem:[#allocation3 + $0xa8] sm:$0xff]
        %v3228 = vld [vmem:[#allocation3 + $0xb0] sm:$0xff]
        %v3229 = vld [vmem:[#allocation3 + $0xb8] sm:$0xff]
        %v3230 = vld [vmem:[#allocation3 + $0xc0] sm:$0xff]
        %v3231 = vld [vmem:[#allocation3 + $0xc8] sm:$0xff]
        %v3232 = vld [vmem:[#allocation3 + $0xd0] sm:$0xff]
        %v3233 = vld [vmem:[#allocation3 + $0xd8] sm:$0xff]
        %v3234 = vld [vmem:[#allocation3 + $0xe0] sm:$0xff]
        %v3235 = vld [vmem:[#allocation3 + $0xe8] sm:$0xff]
        %v3236 = vld [vmem:[#allocation3 + $0xf0] sm:$0xff]
        %v3237 = vld [vmem:[#allocation3 + $0xf8] sm:$0xff]
        %3270 = vrot.lane.b32.xlu0 %v3206, 19
        %v3271 = vpop.permute.xlu0 %3270
        %3272 = vrot.lane.b32.xlu0 %v3207, 19
        %v3273 = vpop.permute.xlu0 %3272
        %3274 = vrot.lane.b32.xlu0 %v3208, 19
        %v3275 = vpop.permute.xlu0 %3274
        %3276 = vrot.lane.b32.xlu0 %v3209, 19
        %v3277 = vpop.permute.xlu0 %3276
        %3278 = vrot.lane.b32.xlu0 %v3210, 19
        %v3279 = vpop.permute.xlu0 %3278
        %3280 = vrot.lane.b32.xlu0 %v3211, 19
        %v3281 = vpop.permute.xlu0 %3280
        %3282 = vrot.lane.b32.xlu0 %v3212, 19
        %v3283 = vpop.permute.xlu0 %3282
        %3284 = vrot.lane.b32.xlu0 %v3213, 19
        %v3285 = vpop.permute.xlu0 %3284
        %3286 = vrot.lane.b32.xlu0 %v3214, 19
        %v3287 = vpop.permute.xlu0 %3286
        %3288 = vrot.lane.b32.xlu0 %v3215, 19
        %v3289 = vpop.permute.xlu0 %3288
        %3290 = vrot.lane.b32.xlu0 %v3216, 19
        %v3291 = vpop.permute.xlu0 %3290
        %3292 = vrot.lane.b32.xlu0 %v3217, 19
        %v3293 = vpop.permute.xlu0 %3292
        %3294 = vrot.lane.b32.xlu0 %v3218, 19
        %v3295 = vpop.permute.xlu0 %3294
        %3296 = vrot.lane.b32.xlu0 %v3219, 19
        %v3297 = vpop.permute.xlu0 %3296
        %3298 = vrot.lane.b32.xlu0 %v3220, 19
        %v3299 = vpop.permute.xlu0 %3298
        %3300 = vrot.lane.b32.xlu0 %v3221, 19
        %v3301 = vpop.permute.xlu0 %3300
        %3302 = vrot.lane.b32.xlu0 %v3222, 19
        %v3303 = vpop.permute.xlu0 %3302
        %3304 = vrot.lane.b32.xlu0 %v3223, 19
        %v3305 = vpop.permute.xlu0 %3304
        %3306 = vrot.lane.b32.xlu0 %v3224, 19
        %v3307 = vpop.permute.xlu0 %3306
        %3308 = vrot.lane.b32.xlu0 %v3225, 19
        %v3309 = vpop.permute.xlu0 %3308
        %3310 = vrot.lane.b32.xlu0 %v3226, 19
        %v3311 = vpop.permute.xlu0 %3310
        %3312 = vrot.lane.b32.xlu0 %v3227, 19
        %v3313 = vpop.permute.xlu0 %3312
        %3314 = vrot.lane.b32.xlu0 %v3228, 19
        %v3315 = vpop.permute.xlu0 %3314
        %3316 = vrot.lane.b32.xlu0 %v3229, 19
        %v3317 = vpop.permute.xlu0 %3316
        %3318 = vrot.lane.b32.xlu0 %v3230, 19
        %v3319 = vpop.permute.xlu0 %3318
        %3320 = vrot.lane.b32.xlu0 %v3231, 19
        %v3321 = vpop.permute.xlu0 %3320
        %3322 = vrot.lane.b32.xlu0 %v3232, 19
        %v3323 = vpop.permute.xlu0 %3322
        %3324 = vrot.lane.b32.xlu0 %v3233, 19
        %v3325 = vpop.permute.xlu0 %3324
        %3326 = vrot.lane.b32.xlu0 %v3234, 19
        %v3327 = vpop.permute.xlu0 %3326
        %3328 = vrot.lane.b32.xlu0 %v3235, 19
        %v3329 = vpop.permute.xlu0 %3328
        %3330 = vrot.lane.b32.xlu0 %v3236, 19
        %v3331 = vpop.permute.xlu0 %3330
        %3332 = vrot.lane.b32.xlu0 %v3237, 19
        %v3333 = vpop.permute.xlu0 %3332
        %vm3334 = vcmask 154624
        %v3335 = vsel %vm3334, %v3271, %v3273
        %v3336 = vsel %vm3334, %v3273, %v3275
        %v3337 = vsel %vm3334, %v3275, %v3277
        %v3338 = vsel %vm3334, %v3279, %v3281
        %v3339 = vsel %vm3334, %v3281, %v3283
        %v3340 = vsel %vm3334, %v3283, %v3285
        %v3341 = vsel %vm3334, %v3287, %v3289
        %v3342 = vsel %vm3334, %v3289, %v3291
        %v3343 = vsel %vm3334, %v3291, %v3293
        %v3344 = vsel %vm3334, %v3295, %v3297
        %v3345 = vsel %vm3334, %v3297, %v3299
        %v3346 = vsel %vm3334, %v3299, %v3301
        %v3347 = vsel %vm3334, %v3303, %v3305
        %v3348 = vsel %vm3334, %v3305, %v3307
        %v3349 = vsel %vm3334, %v3307, %v3309
        %v3350 = vsel %vm3334, %v3311, %v3313
        %v3351 = vsel %vm3334, %v3313, %v3315
        %v3352 = vsel %vm3334, %v3315, %v3317
        %v3353 = vsel %vm3334, %v3319, %v3321
        %v3354 = vsel %vm3334, %v3321, %v3323
        %v3355 = vsel %vm3334, %v3323, %v3325
        %v3356 = vsel %vm3334, %v3327, %v3329
        %v3357 = vsel %vm3334, %v3329, %v3331
        %v3358 = vsel %vm3334, %v3331, %v3333
        %3383 = vst [vmem:[#allocation2] sm:$0xff] %v3335
        %3384 = vst [vmem:[#allocation2 + $0x8] sm:$0xff] %v3336
        %3385 = vst.msk [vmem:[#allocation2 + $0x10] sm:$0xff] %vm482, %v3337
        %3386 = vst [vmem:[#allocation2 + $0x18] sm:$0xff] %v3338
        %3387 = vst [vmem:[#allocation2 + $0x20] sm:$0xff] %v3339
        %3388 = vst.msk [vmem:[#allocation2 + $0x28] sm:$0xff] %vm482, %v3340
        %3389 = vst [vmem:[#allocation2 + $0x30] sm:$0xff] %v3341
        %3390 = vst [vmem:[#allocation2 + $0x38] sm:$0xff] %v3342
        %3391 = vst.msk [vmem:[#allocation2 + $0x40] sm:$0xff] %vm482, %v3343
        %3392 = vst [vmem:[#allocation2 + $0x48] sm:$0xff] %v3344
        %3393 = vst [vmem:[#allocation2 + $0x50] sm:$0xff] %v3345
        %3394 = vst.msk [vmem:[#allocation2 + $0x58] sm:$0xff] %vm482, %v3346
        %3395 = vst [vmem:[#allocation2 + $0x60] sm:$0xff] %v3347
        %3396 = vst [vmem:[#allocation2 + $0x68] sm:$0xff] %v3348
        %3397 = vst.msk [vmem:[#allocation2 + $0x70] sm:$0xff] %vm482, %v3349
        %3398 = vst [vmem:[#allocation2 + $0x78] sm:$0xff] %v3350
        %3399 = vst [vmem:[#allocation2 + $0x80] sm:$0xff] %v3351
        %3400 = vst.msk [vmem:[#allocation2 + $0x88] sm:$0xff] %vm482, %v3352
        %3401 = vst [vmem:[#allocation2 + $0x90] sm:$0xff] %v3353
        %3402 = vst [vmem:[#allocation2 + $0x98] sm:$0xff] %v3354
        %3403 = vst.msk [vmem:[#allocation2 + $0xa0] sm:$0xff] %vm482, %v3355
        %3404 = vst [vmem:[#allocation2 + $0xa8] sm:$0xff] %v3356
        %3405 = vst [vmem:[#allocation2 + $0xb0] sm:$0xff] %v3357
        %3406 = vst.msk [vmem:[#allocation2 + $0xb8] sm:$0xff] %vm482, %v3358
        %v3407 = vld [vmem:[#allocation3] sm:$0xff]
        %v3408 = vld [vmem:[#allocation3 + $0x8] sm:$0xff]
        %v3409 = vld [vmem:[#allocation3 + $0x10] sm:$0xff]
        %v3410 = vld [vmem:[#allocation3 + $0x18] sm:$0xff]
        %v3411 = vld [vmem:[#allocation3 + $0x20] sm:$0xff]
        %v3412 = vld [vmem:[#allocation3 + $0x28] sm:$0xff]
        %v3413 = vld [vmem:[#allocation3 + $0x30] sm:$0xff]
        %v3414 = vld [vmem:[#allocation3 + $0x38] sm:$0xff]
        %v3415 = vld [vmem:[#allocation3 + $0x40] sm:$0xff]
        %v3416 = vld [vmem:[#allocation3 + $0x48] sm:$0xff]
        %v3417 = vld [vmem:[#allocation3 + $0x50] sm:$0xff]
        %v3418 = vld [vmem:[#allocation3 + $0x58] sm:$0xff]
        %v3419 = vld [vmem:[#allocation3 + $0x60] sm:$0xff]
        %v3420 = vld [vmem:[#allocation3 + $0x68] sm:$0xff]
        %v3421 = vld [vmem:[#allocation3 + $0x70] sm:$0xff]
        %v3422 = vld [vmem:[#allocation3 + $0x78] sm:$0xff]
        %v3423 = vld [vmem:[#allocation3 + $0x80] sm:$0xff]
        %v3424 = vld [vmem:[#allocation3 + $0x88] sm:$0xff]
        %v3425 = vld [vmem:[#allocation3 + $0x90] sm:$0xff]
        %v3426 = vld [vmem:[#allocation3 + $0x98] sm:$0xff]
        %v3427 = vld [vmem:[#allocation3 + $0xa0] sm:$0xff]
        %v3428 = vld [vmem:[#allocation3 + $0xa8] sm:$0xff]
        %v3429 = vld [vmem:[#allocation3 + $0xb0] sm:$0xff]
        %v3430 = vld [vmem:[#allocation3 + $0xb8] sm:$0xff]
        %v3431 = vld [vmem:[#allocation3 + $0xc0] sm:$0xff]
        %v3432 = vld [vmem:[#allocation3 + $0xc8] sm:$0xff]
        %v3433 = vld [vmem:[#allocation3 + $0xd0] sm:$0xff]
        %v3434 = vld [vmem:[#allocation3 + $0xd8] sm:$0xff]
        %v3435 = vld [vmem:[#allocation3 + $0xe0] sm:$0xff]
        %v3436 = vld [vmem:[#allocation3 + $0xe8] sm:$0xff]
        %v3437 = vld [vmem:[#allocation3 + $0xf0] sm:$0xff]
        %v3438 = vld [vmem:[#allocation3 + $0xf8] sm:$0xff]
        %3471 = vrot.lane.b32.xlu0 %v3407, 18
        %v3472 = vpop.permute.xlu0 %3471
        %3473 = vrot.lane.b32.xlu0 %v3408, 18
        %v3474 = vpop.permute.xlu0 %3473
        %3475 = vrot.lane.b32.xlu0 %v3409, 18
        %v3476 = vpop.permute.xlu0 %3475
        %3477 = vrot.lane.b32.xlu0 %v3410, 18
        %v3478 = vpop.permute.xlu0 %3477
        %3479 = vrot.lane.b32.xlu0 %v3411, 18
        %v3480 = vpop.permute.xlu0 %3479
        %3481 = vrot.lane.b32.xlu0 %v3412, 18
        %v3482 = vpop.permute.xlu0 %3481
        %3483 = vrot.lane.b32.xlu0 %v3413, 18
        %v3484 = vpop.permute.xlu0 %3483
        %3485 = vrot.lane.b32.xlu0 %v3414, 18
        %v3486 = vpop.permute.xlu0 %3485
        %3487 = vrot.lane.b32.xlu0 %v3415, 18
        %v3488 = vpop.permute.xlu0 %3487
        %3489 = vrot.lane.b32.xlu0 %v3416, 18
        %v3490 = vpop.permute.xlu0 %3489
        %3491 = vrot.lane.b32.xlu0 %v3417, 18
        %v3492 = vpop.permute.xlu0 %3491
        %3493 = vrot.lane.b32.xlu0 %v3418, 18
        %v3494 = vpop.permute.xlu0 %3493
        %3495 = vrot.lane.b32.xlu0 %v3419, 18
        %v3496 = vpop.permute.xlu0 %3495
        %3497 = vrot.lane.b32.xlu0 %v3420, 18
        %v3498 = vpop.permute.xlu0 %3497
        %3499 = vrot.lane.b32.xlu0 %v3421, 18
        %v3500 = vpop.permute.xlu0 %3499
        %3501 = vrot.lane.b32.xlu0 %v3422, 18
        %v3502 = vpop.permute.xlu0 %3501
        %3503 = vrot.lane.b32.xlu0 %v3423, 18
        %v3504 = vpop.permute.xlu0 %3503
        %3505 = vrot.lane.b32.xlu0 %v3424, 18
        %v3506 = vpop.permute.xlu0 %3505
        %3507 = vrot.lane.b32.xlu0 %v3425, 18
        %v3508 = vpop.permute.xlu0 %3507
        %3509 = vrot.lane.b32.xlu0 %v3426, 18
        %v3510 = vpop.permute.xlu0 %3509
        %3511 = vrot.lane.b32.xlu0 %v3427, 18
        %v3512 = vpop.permute.xlu0 %3511
        %3513 = vrot.lane.b32.xlu0 %v3428, 18
        %v3514 = vpop.permute.xlu0 %3513
        %3515 = vrot.lane.b32.xlu0 %v3429, 18
        %v3516 = vpop.permute.xlu0 %3515
        %3517 = vrot.lane.b32.xlu0 %v3430, 18
        %v3518 = vpop.permute.xlu0 %3517
        %3519 = vrot.lane.b32.xlu0 %v3431, 18
        %v3520 = vpop.permute.xlu0 %3519
        %3521 = vrot.lane.b32.xlu0 %v3432, 18
        %v3522 = vpop.permute.xlu0 %3521
        %3523 = vrot.lane.b32.xlu0 %v3433, 18
        %v3524 = vpop.permute.xlu0 %3523
        %3525 = vrot.lane.b32.xlu0 %v3434, 18
        %v3526 = vpop.permute.xlu0 %3525
        %3527 = vrot.lane.b32.xlu0 %v3435, 18
        %v3528 = vpop.permute.xlu0 %3527
        %3529 = vrot.lane.b32.xlu0 %v3436, 18
        %v3530 = vpop.permute.xlu0 %3529
        %3531 = vrot.lane.b32.xlu0 %v3437, 18
        %v3532 = vpop.permute.xlu0 %3531
        %3533 = vrot.lane.b32.xlu0 %v3438, 18
        %v3534 = vpop.permute.xlu0 %3533
        %vm3535 = vcmask 146432
        %v3536 = vsel %vm3535, %v3472, %v3474
        %v3537 = vsel %vm3535, %v3474, %v3476
        %v3538 = vsel %vm3535, %v3476, %v3478
        %v3539 = vsel %vm3535, %v3480, %v3482
        %v3540 = vsel %vm3535, %v3482, %v3484
        %v3541 = vsel %vm3535, %v3484, %v3486
        %v3542 = vsel %vm3535, %v3488, %v3490
        %v3543 = vsel %vm3535, %v3490, %v3492
        %v3544 = vsel %vm3535, %v3492, %v3494
        %v3545 = vsel %vm3535, %v3496, %v3498
        %v3546 = vsel %vm3535, %v3498, %v3500
        %v3547 = vsel %vm3535, %v3500, %v3502
        %v3548 = vsel %vm3535, %v3504, %v3506
        %v3549 = vsel %vm3535, %v3506, %v3508
        %v3550 = vsel %vm3535, %v3508, %v3510
        %v3551 = vsel %vm3535, %v3512, %v3514
        %v3552 = vsel %vm3535, %v3514, %v3516
        %v3553 = vsel %vm3535, %v3516, %v3518
        %v3554 = vsel %vm3535, %v3520, %v3522
        %v3555 = vsel %vm3535, %v3522, %v3524
        %v3556 = vsel %vm3535, %v3524, %v3526
        %v3557 = vsel %vm3535, %v3528, %v3530
        %v3558 = vsel %vm3535, %v3530, %v3532
        %v3559 = vsel %vm3535, %v3532, %v3534
        %3584 = vst [vmem:[#allocation2 + $0xc0] sm:$0xff] %v3536
        %3585 = vst [vmem:[#allocation2 + $0xc8] sm:$0xff] %v3537
        %3586 = vst.msk [vmem:[#allocation2 + $0xd0] sm:$0xff] %vm482, %v3538
        %3587 = vst [vmem:[#allocation2 + $0xd8] sm:$0xff] %v3539
        %3588 = vst [vmem:[#allocation2 + $0xe0] sm:$0xff] %v3540
        %3589 = vst.msk [vmem:[#allocation2 + $0xe8] sm:$0xff] %vm482, %v3541
        %3590 = vst [vmem:[#allocation2 + $0xf0] sm:$0xff] %v3542
        %3591 = vst [vmem:[#allocation2 + $0xf8] sm:$0xff] %v3543
        %3592 = vst.msk [vmem:[#allocation2 + $0x100] sm:$0xff] %vm482, %v3544
        %3593 = vst [vmem:[#allocation2 + $0x108] sm:$0xff] %v3545
        %3594 = vst [vmem:[#allocation2 + $0x110] sm:$0xff] %v3546
        %3595 = vst.msk [vmem:[#allocation2 + $0x118] sm:$0xff] %vm482, %v3547
        %3596 = vst [vmem:[#allocation2 + $0x120] sm:$0xff] %v3548
        %3597 = vst [vmem:[#allocation2 + $0x128] sm:$0xff] %v3549
        %3598 = vst.msk [vmem:[#allocation2 + $0x130] sm:$0xff] %vm482, %v3550
        %3599 = vst [vmem:[#allocation2 + $0x138] sm:$0xff] %v3551
        %3600 = vst [vmem:[#allocation2 + $0x140] sm:$0xff] %v3552
        %3601 = vst.msk [vmem:[#allocation2 + $0x148] sm:$0xff] %vm482, %v3553
        %3602 = vst [vmem:[#allocation2 + $0x150] sm:$0xff] %v3554
        %3603 = vst [vmem:[#allocation2 + $0x158] sm:$0xff] %v3555
        %3604 = vst.msk [vmem:[#allocation2 + $0x160] sm:$0xff] %vm482, %v3556
        %3605 = vst [vmem:[#allocation2 + $0x168] sm:$0xff] %v3557
        %3606 = vst [vmem:[#allocation2 + $0x170] sm:$0xff] %v3558
        %3607 = vst.msk [vmem:[#allocation2 + $0x178] sm:$0xff] %vm482, %v3559
        %v3608 = vld [vmem:[#allocation3] sm:$0xff]
        %v3609 = vld [vmem:[#allocation3 + $0x8] sm:$0xff]
        %v3610 = vld [vmem:[#allocation3 + $0x10] sm:$0xff]
        %v3611 = vld [vmem:[#allocation3 + $0x18] sm:$0xff]
        %v3612 = vld [vmem:[#allocation3 + $0x20] sm:$0xff]
        %v3613 = vld [vmem:[#allocation3 + $0x28] sm:$0xff]
        %v3614 = vld [vmem:[#allocation3 + $0x30] sm:$0xff]
        %v3615 = vld [vmem:[#allocation3 + $0x38] sm:$0xff]
        %v3616 = vld [vmem:[#allocation3 + $0x40] sm:$0xff]
        %v3617 = vld [vmem:[#allocation3 + $0x48] sm:$0xff]
        %v3618 = vld [vmem:[#allocation3 + $0x50] sm:$0xff]
        %v3619 = vld [vmem:[#allocation3 + $0x58] sm:$0xff]
        %v3620 = vld [vmem:[#allocation3 + $0x60] sm:$0xff]
        %v3621 = vld [vmem:[#allocation3 + $0x68] sm:$0xff]
        %v3622 = vld [vmem:[#allocation3 + $0x70] sm:$0xff]
        %v3623 = vld [vmem:[#allocation3 + $0x78] sm:$0xff]
        %v3624 = vld [vmem:[#allocation3 + $0x80] sm:$0xff]
        %v3625 = vld [vmem:[#allocation3 + $0x88] sm:$0xff]
        %v3626 = vld [vmem:[#allocation3 + $0x90] sm:$0xff]
        %v3627 = vld [vmem:[#allocation3 + $0x98] sm:$0xff]
        %v3628 = vld [vmem:[#allocation3 + $0xa0] sm:$0xff]
        %v3629 = vld [vmem:[#allocation3 + $0xa8] sm:$0xff]
        %v3630 = vld [vmem:[#allocation3 + $0xb0] sm:$0xff]
        %v3631 = vld [vmem:[#allocation3 + $0xb8] sm:$0xff]
        %v3632 = vld [vmem:[#allocation3 + $0xc0] sm:$0xff]
        %v3633 = vld [vmem:[#allocation3 + $0xc8] sm:$0xff]
        %v3634 = vld [vmem:[#allocation3 + $0xd0] sm:$0xff]
        %v3635 = vld [vmem:[#allocation3 + $0xd8] sm:$0xff]
        %v3636 = vld [vmem:[#allocation3 + $0xe0] sm:$0xff]
        %v3637 = vld [vmem:[#allocation3 + $0xe8] sm:$0xff]
        %v3638 = vld [vmem:[#allocation3 + $0xf0] sm:$0xff]
        %v3639 = vld [vmem:[#allocation3 + $0xf8] sm:$0xff]
        %3672 = vrot.lane.b32.xlu0 %v3608, 17
        %v3673 = vpop.permute.xlu0 %3672
        %3674 = vrot.lane.b32.xlu0 %v3609, 17
        %v3675 = vpop.permute.xlu0 %3674
        %3676 = vrot.lane.b32.xlu0 %v3610, 17
        %v3677 = vpop.permute.xlu0 %3676
        %3678 = vrot.lane.b32.xlu0 %v3611, 17
        %v3679 = vpop.permute.xlu0 %3678
        %3680 = vrot.lane.b32.xlu0 %v3612, 17
        %v3681 = vpop.permute.xlu0 %3680
        %3682 = vrot.lane.b32.xlu0 %v3613, 17
        %v3683 = vpop.permute.xlu0 %3682
        %3684 = vrot.lane.b32.xlu0 %v3614, 17
        %v3685 = vpop.permute.xlu0 %3684
        %3686 = vrot.lane.b32.xlu0 %v3615, 17
        %v3687 = vpop.permute.xlu0 %3686
        %3688 = vrot.lane.b32.xlu0 %v3616, 17
        %v3689 = vpop.permute.xlu0 %3688
        %3690 = vrot.lane.b32.xlu0 %v3617, 17
        %v3691 = vpop.permute.xlu0 %3690
        %3692 = vrot.lane.b32.xlu0 %v3618, 17
        %v3693 = vpop.permute.xlu0 %3692
        %3694 = vrot.lane.b32.xlu0 %v3619, 17
        %v3695 = vpop.permute.xlu0 %3694
        %3696 = vrot.lane.b32.xlu0 %v3620, 17
        %v3697 = vpop.permute.xlu0 %3696
        %3698 = vrot.lane.b32.xlu0 %v3621, 17
        %v3699 = vpop.permute.xlu0 %3698
        %3700 = vrot.lane.b32.xlu0 %v3622, 17
        %v3701 = vpop.permute.xlu0 %3700
        %3702 = vrot.lane.b32.xlu0 %v3623, 17
        %v3703 = vpop.permute.xlu0 %3702
        %3704 = vrot.lane.b32.xlu0 %v3624, 17
        %v3705 = vpop.permute.xlu0 %3704
        %3706 = vrot.lane.b32.xlu0 %v3625, 17
        %v3707 = vpop.permute.xlu0 %3706
        %3708 = vrot.lane.b32.xlu0 %v3626, 17
        %v3709 = vpop.permute.xlu0 %3708
        %3710 = vrot.lane.b32.xlu0 %v3627, 17
        %v3711 = vpop.permute.xlu0 %3710
        %3712 = vrot.lane.b32.xlu0 %v3628, 17
        %v3713 = vpop.permute.xlu0 %3712
        %3714 = vrot.lane.b32.xlu0 %v3629, 17
        %v3715 = vpop.permute.xlu0 %3714
        %3716 = vrot.lane.b32.xlu0 %v3630, 17
        %v3717 = vpop.permute.xlu0 %3716
        %3718 = vrot.lane.b32.xlu0 %v3631, 17
        %v3719 = vpop.permute.xlu0 %3718
        %3720 = vrot.lane.b32.xlu0 %v3632, 17
        %v3721 = vpop.permute.xlu0 %3720
        %3722 = vrot.lane.b32.xlu0 %v3633, 17
        %v3723 = vpop.permute.xlu0 %3722
        %3724 = vrot.lane.b32.xlu0 %v3634, 17
        %v3725 = vpop.permute.xlu0 %3724
        %3726 = vrot.lane.b32.xlu0 %v3635, 17
        %v3727 = vpop.permute.xlu0 %3726
        %3728 = vrot.lane.b32.xlu0 %v3636, 17
        %v3729 = vpop.permute.xlu0 %3728
        %3730 = vrot.lane.b32.xlu0 %v3637, 17
        %v3731 = vpop.permute.xlu0 %3730
        %3732 = vrot.lane.b32.xlu0 %v3638, 17
        %v3733 = vpop.permute.xlu0 %3732
        %3734 = vrot.lane.b32.xlu0 %v3639, 17
        %v3735 = vpop.permute.xlu0 %3734
        %vm3736 = vcmask 138240
        %v3737 = vsel %vm3736, %v3673, %v3675
        %v3738 = vsel %vm3736, %v3675, %v3677
        %v3739 = vsel %vm3736, %v3677, %v3679
        %v3740 = vsel %vm3736, %v3681, %v3683
        %v3741 = vsel %vm3736, %v3683, %v3685
        %v3742 = vsel %vm3736, %v3685, %v3687
        %v3743 = vsel %vm3736, %v3689, %v3691
        %v3744 = vsel %vm3736, %v3691, %v3693
        %v3745 = vsel %vm3736, %v3693, %v3695
        %v3746 = vsel %vm3736, %v3697, %v3699
        %v3747 = vsel %vm3736, %v3699, %v3701
        %v3748 = vsel %vm3736, %v3701, %v3703
        %v3749 = vsel %vm3736, %v3705, %v3707
        %v3750 = vsel %vm3736, %v3707, %v3709
        %v3751 = vsel %vm3736, %v3709, %v3711
        %v3752 = vsel %vm3736, %v3713, %v3715
        %v3753 = vsel %vm3736, %v3715, %v3717
        %v3754 = vsel %vm3736, %v3717, %v3719
        %v3755 = vsel %vm3736, %v3721, %v3723
        %v3756 = vsel %vm3736, %v3723, %v3725
        %v3757 = vsel %vm3736, %v3725, %v3727
        %v3758 = vsel %vm3736, %v3729, %v3731
        %v3759 = vsel %vm3736, %v3731, %v3733
        %v3760 = vsel %vm3736, %v3733, %v3735
        %3785 = vst [vmem:[#allocation2 + $0x180] sm:$0xff] %v3737
        %3786 = vst [vmem:[#allocation2 + $0x188] sm:$0xff] %v3738
        %3787 = vst.msk [vmem:[#allocation2 + $0x190] sm:$0xff] %vm482, %v3739
        %3788 = vst [vmem:[#allocation2 + $0x198] sm:$0xff] %v3740
        %3789 = vst [vmem:[#allocation2 + $0x1a0] sm:$0xff] %v3741
        %3790 = vst.msk [vmem:[#allocation2 + $0x1a8] sm:$0xff] %vm482, %v3742
        %3791 = vst [vmem:[#allocation2 + $0x1b0] sm:$0xff] %v3743
        %3792 = vst [vmem:[#allocation2 + $0x1b8] sm:$0xff] %v3744
        %3793 = vst.msk [vmem:[#allocation2 + $0x1c0] sm:$0xff] %vm482, %v3745
        %3794 = vst [vmem:[#allocation2 + $0x1c8] sm:$0xff] %v3746
        %3795 = vst [vmem:[#allocation2 + $0x1d0] sm:$0xff] %v3747
        %3796 = vst.msk [vmem:[#allocation2 + $0x1d8] sm:$0xff] %vm482, %v3748
        %3797 = vst [vmem:[#allocation2 + $0x1e0] sm:$0xff] %v3749
        %3798 = vst [vmem:[#allocation2 + $0x1e8] sm:$0xff] %v3750
        %3799 = vst.msk [vmem:[#allocation2 + $0x1f0] sm:$0xff] %vm482, %v3751
        %3800 = vst [vmem:[#allocation2 + $0x1f8] sm:$0xff] %v3752
        %3801 = vst [vmem:[#allocation2 + $0x200] sm:$0xff] %v3753
        %3802 = vst.msk [vmem:[#allocation2 + $0x208] sm:$0xff] %vm482, %v3754
        %3803 = vst [vmem:[#allocation2 + $0x210] sm:$0xff] %v3755
        %3804 = vst [vmem:[#allocation2 + $0x218] sm:$0xff] %v3756
        %3805 = vst.msk [vmem:[#allocation2 + $0x220] sm:$0xff] %vm482, %v3757
        %3806 = vst [vmem:[#allocation2 + $0x228] sm:$0xff] %v3758
        %3807 = vst [vmem:[#allocation2 + $0x230] sm:$0xff] %v3759
        %3808 = vst.msk [vmem:[#allocation2 + $0x238] sm:$0xff] %vm482, %v3760
        %v3809 = vld [vmem:[#allocation3] sm:$0xff]
        %v3810 = vld [vmem:[#allocation3 + $0x8] sm:$0xff]
        %v3811 = vld [vmem:[#allocation3 + $0x10] sm:$0xff]
        %v3812 = vld [vmem:[#allocation3 + $0x18] sm:$0xff]
        %v3813 = vld [vmem:[#allocation3 + $0x20] sm:$0xff]
        %v3814 = vld [vmem:[#allocation3 + $0x28] sm:$0xff]
        %v3815 = vld [vmem:[#allocation3 + $0x30] sm:$0xff]
        %v3816 = vld [vmem:[#allocation3 + $0x38] sm:$0xff]
        %v3817 = vld [vmem:[#allocation3 + $0x40] sm:$0xff]
        %v3818 = vld [vmem:[#allocation3 + $0x48] sm:$0xff]
        %v3819 = vld [vmem:[#allocation3 + $0x50] sm:$0xff]
        %v3820 = vld [vmem:[#allocation3 + $0x58] sm:$0xff]
        %v3821 = vld [vmem:[#allocation3 + $0x60] sm:$0xff]
        %v3822 = vld [vmem:[#allocation3 + $0x68] sm:$0xff]
        %v3823 = vld [vmem:[#allocation3 + $0x70] sm:$0xff]
        %v3824 = vld [vmem:[#allocation3 + $0x78] sm:$0xff]
        %v3825 = vld [vmem:[#allocation3 + $0x80] sm:$0xff]
        %v3826 = vld [vmem:[#allocation3 + $0x88] sm:$0xff]
        %v3827 = vld [vmem:[#allocation3 + $0x90] sm:$0xff]
        %v3828 = vld [vmem:[#allocation3 + $0x98] sm:$0xff]
        %v3829 = vld [vmem:[#allocation3 + $0xa0] sm:$0xff]
        %v3830 = vld [vmem:[#allocation3 + $0xa8] sm:$0xff]
        %v3831 = vld [vmem:[#allocation3 + $0xb0] sm:$0xff]
        %v3832 = vld [vmem:[#allocation3 + $0xb8] sm:$0xff]
        %v3833 = vld [vmem:[#allocation3 + $0xc0] sm:$0xff]
        %v3834 = vld [vmem:[#allocation3 + $0xc8] sm:$0xff]
        %v3835 = vld [vmem:[#allocation3 + $0xd0] sm:$0xff]
        %v3836 = vld [vmem:[#allocation3 + $0xd8] sm:$0xff]
        %v3837 = vld [vmem:[#allocation3 + $0xe0] sm:$0xff]
        %v3838 = vld [vmem:[#allocation3 + $0xe8] sm:$0xff]
        %v3839 = vld [vmem:[#allocation3 + $0xf0] sm:$0xff]
        %v3840 = vld [vmem:[#allocation3 + $0xf8] sm:$0xff]
        %3873 = vrot.lane.b32.xlu0 %v3809, 1
        %v3874 = vpop.permute.xlu0 %3873
        %3875 = vrot.lane.b32.xlu0 %v3810, 1
        %v3876 = vpop.permute.xlu0 %3875
        %3877 = vrot.lane.b32.xlu0 %v3811, 1
        %v3878 = vpop.permute.xlu0 %3877
        %3879 = vrot.lane.b32.xlu0 %v3812, 1
        %v3880 = vpop.permute.xlu0 %3879
        %3881 = vrot.lane.b32.xlu0 %v3813, 1
        %v3882 = vpop.permute.xlu0 %3881
        %3883 = vrot.lane.b32.xlu0 %v3814, 1
        %v3884 = vpop.permute.xlu0 %3883
        %3885 = vrot.lane.b32.xlu0 %v3815, 1
        %v3886 = vpop.permute.xlu0 %3885
        %3887 = vrot.lane.b32.xlu0 %v3816, 1
        %v3888 = vpop.permute.xlu0 %3887
        %3889 = vrot.lane.b32.xlu0 %v3817, 1
        %v3890 = vpop.permute.xlu0 %3889
        %3891 = vrot.lane.b32.xlu0 %v3818, 1
        %v3892 = vpop.permute.xlu0 %3891
        %3893 = vrot.lane.b32.xlu0 %v3819, 1
        %v3894 = vpop.permute.xlu0 %3893
        %3895 = vrot.lane.b32.xlu0 %v3820, 1
        %v3896 = vpop.permute.xlu0 %3895
        %3897 = vrot.lane.b32.xlu0 %v3821, 1
        %v3898 = vpop.permute.xlu0 %3897
        %3899 = vrot.lane.b32.xlu0 %v3822, 1
        %v3900 = vpop.permute.xlu0 %3899
        %3901 = vrot.lane.b32.xlu0 %v3823, 1
        %v3902 = vpop.permute.xlu0 %3901
        %3903 = vrot.lane.b32.xlu0 %v3824, 1
        %v3904 = vpop.permute.xlu0 %3903
        %3905 = vrot.lane.b32.xlu0 %v3825, 1
        %v3906 = vpop.permute.xlu0 %3905
        %3907 = vrot.lane.b32.xlu0 %v3826, 1
        %v3908 = vpop.permute.xlu0 %3907
        %3909 = vrot.lane.b32.xlu0 %v3827, 1
        %v3910 = vpop.permute.xlu0 %3909
        %3911 = vrot.lane.b32.xlu0 %v3828, 1
        %v3912 = vpop.permute.xlu0 %3911
        %3913 = vrot.lane.b32.xlu0 %v3829, 1
        %v3914 = vpop.permute.xlu0 %3913
        %3915 = vrot.lane.b32.xlu0 %v3830, 1
        %v3916 = vpop.permute.xlu0 %3915
        %3917 = vrot.lane.b32.xlu0 %v3831, 1
        %v3918 = vpop.permute.xlu0 %3917
        %3919 = vrot.lane.b32.xlu0 %v3832, 1
        %v3920 = vpop.permute.xlu0 %3919
        %3921 = vrot.lane.b32.xlu0 %v3833, 1
        %v3922 = vpop.permute.xlu0 %3921
        %3923 = vrot.lane.b32.xlu0 %v3834, 1
        %v3924 = vpop.permute.xlu0 %3923
        %3925 = vrot.lane.b32.xlu0 %v3835, 1
        %v3926 = vpop.permute.xlu0 %3925
        %3927 = vrot.lane.b32.xlu0 %v3836, 1
        %v3928 = vpop.permute.xlu0 %3927
        %3929 = vrot.lane.b32.xlu0 %v3837, 1
        %v3930 = vpop.permute.xlu0 %3929
        %3931 = vrot.lane.b32.xlu0 %v3838, 1
        %v3932 = vpop.permute.xlu0 %3931
        %3933 = vrot.lane.b32.xlu0 %v3839, 1
        %v3934 = vpop.permute.xlu0 %3933
        %3935 = vrot.lane.b32.xlu0 %v3840, 1
        %v3936 = vpop.permute.xlu0 %3935
        %vm3937 = vcmask 7168
        %v3938 = vsel %vm3937, %v3874, %v3876
        %v3939 = vsel %vm3937, %v3876, %v3878
        %v3940 = vsel %vm3937, %v3878, %v3880
        %v3941 = vsel %vm3937, %v3882, %v3884
        %v3942 = vsel %vm3937, %v3884, %v3886
        %v3943 = vsel %vm3937, %v3886, %v3888
        %v3944 = vsel %vm3937, %v3890, %v3892
        %v3945 = vsel %vm3937, %v3892, %v3894
        %v3946 = vsel %vm3937, %v3894, %v3896
        %v3947 = vsel %vm3937, %v3898, %v3900
        %v3948 = vsel %vm3937, %v3900, %v3902
        %v3949 = vsel %vm3937, %v3902, %v3904
        %v3950 = vsel %vm3937, %v3906, %v3908
        %v3951 = vsel %vm3937, %v3908, %v3910
        %v3952 = vsel %vm3937, %v3910, %v3912
        %v3953 = vsel %vm3937, %v3914, %v3916
        %v3954 = vsel %vm3937, %v3916, %v3918
        %v3955 = vsel %vm3937, %v3918, %v3920
        %v3956 = vsel %vm3937, %v3922, %v3924
        %v3957 = vsel %vm3937, %v3924, %v3926
        %v3958 = vsel %vm3937, %v3926, %v3928
        %v3959 = vsel %vm3937, %v3930, %v3932
        %v3960 = vsel %vm3937, %v3932, %v3934
        %v3961 = vsel %vm3937, %v3934, %v3936
        %3986 = vst [vmem:[#allocation2 + $0x240] sm:$0xff] %v3938
        %3987 = vst [vmem:[#allocation2 + $0x248] sm:$0xff] %v3939
        %3988 = vst.msk [vmem:[#allocation2 + $0x250] sm:$0xff] %vm482, %v3940
        %3989 = vst [vmem:[#allocation2 + $0x258] sm:$0xff] %v3941
        %3990 = vst [vmem:[#allocation2 + $0x260] sm:$0xff] %v3942
        %3991 = vst.msk [vmem:[#allocation2 + $0x268] sm:$0xff] %vm482, %v3943
        %3992 = vst [vmem:[#allocation2 + $0x270] sm:$0xff] %v3944
        %3993 = vst [vmem:[#allocation2 + $0x278] sm:$0xff] %v3945
        %3994 = vst.msk [vmem:[#allocation2 + $0x280] sm:$0xff] %vm482, %v3946
        %3995 = vst [vmem:[#allocation2 + $0x288] sm:$0xff] %v3947
        %3996 = vst [vmem:[#allocation2 + $0x290] sm:$0xff] %v3948
        %3997 = vst.msk [vmem:[#allocation2 + $0x298] sm:$0xff] %vm482, %v3949
        %3998 = vst [vmem:[#allocation2 + $0x2a0] sm:$0xff] %v3950
        %3999 = vst [vmem:[#allocation2 + $0x2a8] sm:$0xff] %v3951
        %4000 = vst.msk [vmem:[#allocation2 + $0x2b0] sm:$0xff] %vm482, %v3952
        %4001 = vst [vmem:[#allocation2 + $0x2b8] sm:$0xff] %v3953
        %4002 = vst [vmem:[#allocation2 + $0x2c0] sm:$0xff] %v3954
        %4003 = vst.msk [vmem:[#allocation2 + $0x2c8] sm:$0xff] %vm482, %v3955
        %4004 = vst [vmem:[#allocation2 + $0x2d0] sm:$0xff] %v3956
        %4005 = vst [vmem:[#allocation2 + $0x2d8] sm:$0xff] %v3957
        %4006 = vst.msk [vmem:[#allocation2 + $0x2e0] sm:$0xff] %vm482, %v3958
        %4007 = vst [vmem:[#allocation2 + $0x2e8] sm:$0xff] %v3959
        %4008 = vst [vmem:[#allocation2 + $0x2f0] sm:$0xff] %v3960
        %4009 = vst.msk [vmem:[#allocation2 + $0x2f8] sm:$0xff] %vm482, %v3961
        %v4010 = vld [vmem:[#allocation3 + $0x8] sm:$0xff]
        %v4011 = vld [vmem:[#allocation3 + $0x10] sm:$0xff]
        %v4012 = vld [vmem:[#allocation3 + $0x18] sm:$0xff]
        %v4013 = vld [vmem:[#allocation3 + $0x28] sm:$0xff]
        %v4014 = vld [vmem:[#allocation3 + $0x30] sm:$0xff]
        %v4015 = vld [vmem:[#allocation3 + $0x38] sm:$0xff]
        %v4016 = vld [vmem:[#allocation3 + $0x48] sm:$0xff]
        %v4017 = vld [vmem:[#allocation3 + $0x50] sm:$0xff]
        %v4018 = vld [vmem:[#allocation3 + $0x58] sm:$0xff]
        %v4019 = vld [vmem:[#allocation3 + $0x68] sm:$0xff]
        %v4020 = vld [vmem:[#allocation3 + $0x70] sm:$0xff]
        %v4021 = vld [vmem:[#allocation3 + $0x78] sm:$0xff]
        %v4022 = vld [vmem:[#allocation3 + $0x88] sm:$0xff]
        %v4023 = vld [vmem:[#allocation3 + $0x90] sm:$0xff]
        %v4024 = vld [vmem:[#allocation3 + $0x98] sm:$0xff]
        %v4025 = vld [vmem:[#allocation3 + $0xa8] sm:$0xff]
        %v4026 = vld [vmem:[#allocation3 + $0xb0] sm:$0xff]
        %v4027 = vld [vmem:[#allocation3 + $0xb8] sm:$0xff]
        %v4028 = vld [vmem:[#allocation3 + $0xc8] sm:$0xff]
        %v4029 = vld [vmem:[#allocation3 + $0xd0] sm:$0xff]
        %v4030 = vld [vmem:[#allocation3 + $0xd8] sm:$0xff]
        %v4031 = vld [vmem:[#allocation3 + $0xe8] sm:$0xff]
        %v4032 = vld [vmem:[#allocation3 + $0xf0] sm:$0xff]
        %v4033 = vld [vmem:[#allocation3 + $0xf8] sm:$0xff]
        %4034 = vst [vmem:[#allocation2 + $0x300] sm:$0xff] %v4010
        %4035 = vst [vmem:[#allocation2 + $0x308] sm:$0xff] %v4011
        %4036 = vst.msk [vmem:[#allocation2 + $0x310] sm:$0xff] %vm482, %v4012
        %4037 = vst [vmem:[#allocation2 + $0x318] sm:$0xff] %v4013
        %4038 = vst [vmem:[#allocation2 + $0x320] sm:$0xff] %v4014
        %4039 = vst.msk [vmem:[#allocation2 + $0x328] sm:$0xff] %vm482, %v4015
        %4040 = vst [vmem:[#allocation2 + $0x330] sm:$0xff] %v4016
        %4041 = vst [vmem:[#allocation2 + $0x338] sm:$0xff] %v4017
        %4042 = vst.msk [vmem:[#allocation2 + $0x340] sm:$0xff] %vm482, %v4018
        %4043 = vst [vmem:[#allocation2 + $0x348] sm:$0xff] %v4019
        %4044 = vst [vmem:[#allocation2 + $0x350] sm:$0xff] %v4020
        %4045 = vst.msk [vmem:[#allocation2 + $0x358] sm:$0xff] %vm482, %v4021
        %4046 = vst [vmem:[#allocation2 + $0x360] sm:$0xff] %v4022
        %4047 = vst [vmem:[#allocation2 + $0x368] sm:$0xff] %v4023
        %4048 = vst.msk [vmem:[#allocation2 + $0x370] sm:$0xff] %vm482, %v4024
        %4049 = vst [vmem:[#allocation2 + $0x378] sm:$0xff] %v4025
        %4050 = vst [vmem:[#allocation2 + $0x380] sm:$0xff] %v4026
        %4051 = vst.msk [vmem:[#allocation2 + $0x388] sm:$0xff] %vm482, %v4027
        %4052 = vst [vmem:[#allocation2 + $0x390] sm:$0xff] %v4028
        %4053 = vst [vmem:[#allocation2 + $0x398] sm:$0xff] %v4029
        %4054 = vst.msk [vmem:[#allocation2 + $0x3a0] sm:$0xff] %vm482, %v4030
        %4055 = vst [vmem:[#allocation2 + $0x3a8] sm:$0xff] %v4031
        %4056 = vst [vmem:[#allocation2 + $0x3b0] sm:$0xff] %v4032
        %4057 = vst.msk [vmem:[#allocation2 + $0x3b8] sm:$0xff] %vm482, %v4033
        %v4058 = vld [vmem:[#allocation3 + $0x8] sm:$0xff]
        %v4059 = vld [vmem:[#allocation3 + $0x10] sm:$0xff]
        %v4060 = vld [vmem:[#allocation3 + $0x18] sm:$0xff]
        %v4061 = vld [vmem:[#allocation3 + $0x28] sm:$0xff]
        %v4062 = vld [vmem:[#allocation3 + $0x30] sm:$0xff]
        %v4063 = vld [vmem:[#allocation3 + $0x38] sm:$0xff]
        %v4064 = vld [vmem:[#allocation3 + $0x48] sm:$0xff]
        %v4065 = vld [vmem:[#allocation3 + $0x50] sm:$0xff]
        %v4066 = vld [vmem:[#allocation3 + $0x58] sm:$0xff]
        %v4067 = vld [vmem:[#allocation3 + $0x68] sm:$0xff]
        %v4068 = vld [vmem:[#allocation3 + $0x70] sm:$0xff]
        %v4069 = vld [vmem:[#allocation3 + $0x78] sm:$0xff]
        %v4070 = vld [vmem:[#allocation3 + $0x88] sm:$0xff]
        %v4071 = vld [vmem:[#allocation3 + $0x90] sm:$0xff]
        %v4072 = vld [vmem:[#allocation3 + $0x98] sm:$0xff]
        %v4073 = vld [vmem:[#allocation3 + $0xa8] sm:$0xff]
        %v4074 = vld [vmem:[#allocation3 + $0xb0] sm:$0xff]
        %v4075 = vld [vmem:[#allocation3 + $0xb8] sm:$0xff]
        %v4076 = vld [vmem:[#allocation3 + $0xc8] sm:$0xff]
        %v4077 = vld [vmem:[#allocation3 + $0xd0] sm:$0xff]
        %v4078 = vld [vmem:[#allocation3 + $0xd8] sm:$0xff]
        %v4079 = vld [vmem:[#allocation3 + $0xe8] sm:$0xff]
        %v4080 = vld [vmem:[#allocation3 + $0xf0] sm:$0xff]
        %v4081 = vld [vmem:[#allocation3 + $0xf8] sm:$0xff]
        %4106 = vrot.lane.b32.xlu0 %v4058, 127
        %v4107 = vpop.permute.xlu0 %4106
        %4108 = vrot.lane.b32.xlu0 %v4059, 127
        %v4109 = vpop.permute.xlu0 %4108
        %4110 = vrot.lane.b32.xlu0 %v4060, 127
        %v4111 = vpop.permute.xlu0 %4110
        %4112 = vrot.lane.b32.xlu0 %v4061, 127
        %v4113 = vpop.permute.xlu0 %4112
        %4114 = vrot.lane.b32.xlu0 %v4062, 127
        %v4115 = vpop.permute.xlu0 %4114
        %4116 = vrot.lane.b32.xlu0 %v4063, 127
        %v4117 = vpop.permute.xlu0 %4116
        %4118 = vrot.lane.b32.xlu0 %v4064, 127
        %v4119 = vpop.permute.xlu0 %4118
        %4120 = vrot.lane.b32.xlu0 %v4065, 127
        %v4121 = vpop.permute.xlu0 %4120
        %4122 = vrot.lane.b32.xlu0 %v4066, 127
        %v4123 = vpop.permute.xlu0 %4122
        %4124 = vrot.lane.b32.xlu0 %v4067, 127
        %v4125 = vpop.permute.xlu0 %4124
        %4126 = vrot.lane.b32.xlu0 %v4068, 127
        %v4127 = vpop.permute.xlu0 %4126
        %4128 = vrot.lane.b32.xlu0 %v4069, 127
        %v4129 = vpop.permute.xlu0 %4128
        %4130 = vrot.lane.b32.xlu0 %v4070, 127
        %v4131 = vpop.permute.xlu0 %4130
        %4132 = vrot.lane.b32.xlu0 %v4071, 127
        %v4133 = vpop.permute.xlu0 %4132
        %4134 = vrot.lane.b32.xlu0 %v4072, 127
        %v4135 = vpop.permute.xlu0 %4134
        %4136 = vrot.lane.b32.xlu0 %v4073, 127
        %v4137 = vpop.permute.xlu0 %4136
        %4138 = vrot.lane.b32.xlu0 %v4074, 127
        %v4139 = vpop.permute.xlu0 %4138
        %4140 = vrot.lane.b32.xlu0 %v4075, 127
        %v4141 = vpop.permute.xlu0 %4140
        %4142 = vrot.lane.b32.xlu0 %v4076, 127
        %v4143 = vpop.permute.xlu0 %4142
        %4144 = vrot.lane.b32.xlu0 %v4077, 127
        %v4145 = vpop.permute.xlu0 %4144
        %4146 = vrot.lane.b32.xlu0 %v4078, 127
        %v4147 = vpop.permute.xlu0 %4146
        %4148 = vrot.lane.b32.xlu0 %v4079, 127
        %v4149 = vpop.permute.xlu0 %4148
        %4150 = vrot.lane.b32.xlu0 %v4080, 127
        %v4151 = vpop.permute.xlu0 %4150
        %4152 = vrot.lane.b32.xlu0 %v4081, 127
        %v4153 = vpop.permute.xlu0 %4152
        %v4154 = vsel %vm601, %v4107, %v4109
        %v4155 = vsel %vm601, %v4109, %v4111
        %v4156 = vsel %vm601, %v4113, %v4115
        %v4157 = vsel %vm601, %v4115, %v4117
        %v4158 = vsel %vm601, %v4119, %v4121
        %v4159 = vsel %vm601, %v4121, %v4123
        %v4160 = vsel %vm601, %v4125, %v4127
        %v4161 = vsel %vm601, %v4127, %v4129
        %v4162 = vsel %vm601, %v4131, %v4133
        %v4163 = vsel %vm601, %v4133, %v4135
        %v4164 = vsel %vm601, %v4137, %v4139
        %v4165 = vsel %vm601, %v4139, %v4141
        %v4166 = vsel %vm601, %v4143, %v4145
        %v4167 = vsel %vm601, %v4145, %v4147
        %v4168 = vsel %vm601, %v4149, %v4151
        %v4169 = vsel %vm601, %v4151, %v4153
        %4194 = vst [vmem:[#allocation2 + $0x3c0] sm:$0xff] %v4154
        %4195 = vst [vmem:[#allocation2 + $0x3c8] sm:$0xff] %v4155
        %4196 = vst.msk [vmem:[#allocation2 + $0x3d0] sm:$0xff] %vm482, %v4111
        %4197 = vst [vmem:[#allocation2 + $0x3d8] sm:$0xff] %v4156
        %4198 = vst [vmem:[#allocation2 + $0x3e0] sm:$0xff] %v4157
        %4199 = vst.msk [vmem:[#allocation2 + $0x3e8] sm:$0xff] %vm482, %v4117
        %4200 = vst [vmem:[#allocation2 + $0x3f0] sm:$0xff] %v4158
        %4201 = vst [vmem:[#allocation2 + $0x3f8] sm:$0xff] %v4159
        %4202 = vst.msk [vmem:[#allocation2 + $0x400] sm:$0xff] %vm482, %v4123
        %4203 = vst [vmem:[#allocation2 + $0x408] sm:$0xff] %v4160
        %4204 = vst [vmem:[#allocation2 + $0x410] sm:$0xff] %v4161
        %4205 = vst.msk [vmem:[#allocation2 + $0x418] sm:$0xff] %vm482, %v4129
        %4206 = vst [vmem:[#allocation2 + $0x420] sm:$0xff] %v4162
        %4207 = vst [vmem:[#allocation2 + $0x428] sm:$0xff] %v4163
        %4208 = vst.msk [vmem:[#allocation2 + $0x430] sm:$0xff] %vm482, %v4135
        %4209 = vst [vmem:[#allocation2 + $0x438] sm:$0xff] %v4164
        %4210 = vst [vmem:[#allocation2 + $0x440] sm:$0xff] %v4165
        %4211 = vst.msk [vmem:[#allocation2 + $0x448] sm:$0xff] %vm482, %v4141
        %4212 = vst [vmem:[#allocation2 + $0x450] sm:$0xff] %v4166
        %4213 = vst [vmem:[#allocation2 + $0x458] sm:$0xff] %v4167
        %4214 = vst.msk [vmem:[#allocation2 + $0x460] sm:$0xff] %vm482, %v4147
        %4215 = vst [vmem:[#allocation2 + $0x468] sm:$0xff] %v4168
        %4216 = vst [vmem:[#allocation2 + $0x470] sm:$0xff] %v4169
        %4217 = vst.msk [vmem:[#allocation2 + $0x478] sm:$0xff] %vm482, %v4153
        %v4218 = vld [vmem:[#allocation3 + $0x8] sm:$0xff]
        %v4219 = vld [vmem:[#allocation3 + $0x10] sm:$0xff]
        %v4220 = vld [vmem:[#allocation3 + $0x18] sm:$0xff]
        %v4221 = vld [vmem:[#allocation3 + $0x28] sm:$0xff]
        %v4222 = vld [vmem:[#allocation3 + $0x30] sm:$0xff]
        %v4223 = vld [vmem:[#allocation3 + $0x38] sm:$0xff]
        %v4224 = vld [vmem:[#allocation3 + $0x48] sm:$0xff]
        %v4225 = vld [vmem:[#allocation3 + $0x50] sm:$0xff]
        %v4226 = vld [vmem:[#allocation3 + $0x58] sm:$0xff]
        %v4227 = vld [vmem:[#allocation3 + $0x68] sm:$0xff]
        %v4228 = vld [vmem:[#allocation3 + $0x70] sm:$0xff]
        %v4229 = vld [vmem:[#allocation3 + $0x78] sm:$0xff]
        %v4230 = vld [vmem:[#allocation3 + $0x88] sm:$0xff]
        %v4231 = vld [vmem:[#allocation3 + $0x90] sm:$0xff]
        %v4232 = vld [vmem:[#allocation3 + $0x98] sm:$0xff]
        %v4233 = vld [vmem:[#allocation3 + $0xa8] sm:$0xff]
        %v4234 = vld [vmem:[#allocation3 + $0xb0] sm:$0xff]
        %v4235 = vld [vmem:[#allocation3 + $0xb8] sm:$0xff]
        %v4236 = vld [vmem:[#allocation3 + $0xc8] sm:$0xff]
        %v4237 = vld [vmem:[#allocation3 + $0xd0] sm:$0xff]
        %v4238 = vld [vmem:[#allocation3 + $0xd8] sm:$0xff]
        %v4239 = vld [vmem:[#allocation3 + $0xe8] sm:$0xff]
        %v4240 = vld [vmem:[#allocation3 + $0xf0] sm:$0xff]
        %v4241 = vld [vmem:[#allocation3 + $0xf8] sm:$0xff]
        %4266 = vrot.lane.b32.xlu0 %v4218, 111
        %v4267 = vpop.permute.xlu0 %4266
        %4268 = vrot.lane.b32.xlu0 %v4219, 111
        %v4269 = vpop.permute.xlu0 %4268
        %4270 = vrot.lane.b32.xlu0 %v4220, 111
        %v4271 = vpop.permute.xlu0 %4270
        %4272 = vrot.lane.b32.xlu0 %v4221, 111
        %v4273 = vpop.permute.xlu0 %4272
        %4274 = vrot.lane.b32.xlu0 %v4222, 111
        %v4275 = vpop.permute.xlu0 %4274
        %4276 = vrot.lane.b32.xlu0 %v4223, 111
        %v4277 = vpop.permute.xlu0 %4276
        %4278 = vrot.lane.b32.xlu0 %v4224, 111
        %v4279 = vpop.permute.xlu0 %4278
        %4280 = vrot.lane.b32.xlu0 %v4225, 111
        %v4281 = vpop.permute.xlu0 %4280
        %4282 = vrot.lane.b32.xlu0 %v4226, 111
        %v4283 = vpop.permute.xlu0 %4282
        %4284 = vrot.lane.b32.xlu0 %v4227, 111
        %v4285 = vpop.permute.xlu0 %4284
        %4286 = vrot.lane.b32.xlu0 %v4228, 111
        %v4287 = vpop.permute.xlu0 %4286
        %4288 = vrot.lane.b32.xlu0 %v4229, 111
        %v4289 = vpop.permute.xlu0 %4288
        %4290 = vrot.lane.b32.xlu0 %v4230, 111
        %v4291 = vpop.permute.xlu0 %4290
        %4292 = vrot.lane.b32.xlu0 %v4231, 111
        %v4293 = vpop.permute.xlu0 %4292
        %4294 = vrot.lane.b32.xlu0 %v4232, 111
        %v4295 = vpop.permute.xlu0 %4294
        %4296 = vrot.lane.b32.xlu0 %v4233, 111
        %v4297 = vpop.permute.xlu0 %4296
        %4298 = vrot.lane.b32.xlu0 %v4234, 111
        %v4299 = vpop.permute.xlu0 %4298
        %4300 = vrot.lane.b32.xlu0 %v4235, 111
        %v4301 = vpop.permute.xlu0 %4300
        %4302 = vrot.lane.b32.xlu0 %v4236, 111
        %v4303 = vpop.permute.xlu0 %4302
        %4304 = vrot.lane.b32.xlu0 %v4237, 111
        %v4305 = vpop.permute.xlu0 %4304
        %4306 = vrot.lane.b32.xlu0 %v4238, 111
        %v4307 = vpop.permute.xlu0 %4306
        %4308 = vrot.lane.b32.xlu0 %v4239, 111
        %v4309 = vpop.permute.xlu0 %4308
        %4310 = vrot.lane.b32.xlu0 %v4240, 111
        %v4311 = vpop.permute.xlu0 %4310
        %4312 = vrot.lane.b32.xlu0 %v4241, 111
        %v4313 = vpop.permute.xlu0 %4312
        %vm4314 = vcmask 908288
        %v4315 = vsel %vm4314, %v4267, %v4269
        %v4316 = vsel %vm4314, %v4269, %v4271
        %v4317 = vsel %vm4314, %v4273, %v4275
        %v4318 = vsel %vm4314, %v4275, %v4277
        %v4319 = vsel %vm4314, %v4279, %v4281
        %v4320 = vsel %vm4314, %v4281, %v4283
        %v4321 = vsel %vm4314, %v4285, %v4287
        %v4322 = vsel %vm4314, %v4287, %v4289
        %v4323 = vsel %vm4314, %v4291, %v4293
        %v4324 = vsel %vm4314, %v4293, %v4295
        %v4325 = vsel %vm4314, %v4297, %v4299
        %v4326 = vsel %vm4314, %v4299, %v4301
        %v4327 = vsel %vm4314, %v4303, %v4305
        %v4328 = vsel %vm4314, %v4305, %v4307
        %v4329 = vsel %vm4314, %v4309, %v4311
        %v4330 = vsel %vm4314, %v4311, %v4313
        %4355 = vst [vmem:[#allocation2 + $0x480] sm:$0xff] %v4315
        %4356 = vst [vmem:[#allocation2 + $0x488] sm:$0xff] %v4316
        %4357 = vst.msk [vmem:[#allocation2 + $0x490] sm:$0xff] %vm482, %v4271
        %4358 = vst [vmem:[#allocation2 + $0x498] sm:$0xff] %v4317
        %4359 = vst [vmem:[#allocation2 + $0x4a0] sm:$0xff] %v4318
        %4360 = vst.msk [vmem:[#allocation2 + $0x4a8] sm:$0xff] %vm482, %v4277
        %4361 = vst [vmem:[#allocation2 + $0x4b0] sm:$0xff] %v4319
        %4362 = vst [vmem:[#allocation2 + $0x4b8] sm:$0xff] %v4320
        %4363 = vst.msk [vmem:[#allocation2 + $0x4c0] sm:$0xff] %vm482, %v4283
        %4364 = vst [vmem:[#allocation2 + $0x4c8] sm:$0xff] %v4321
        %4365 = vst [vmem:[#allocation2 + $0x4d0] sm:$0xff] %v4322
        %4366 = vst.msk [vmem:[#allocation2 + $0x4d8] sm:$0xff] %vm482, %v4289
        %4367 = vst [vmem:[#allocation2 + $0x4e0] sm:$0xff] %v4323
        %4368 = vst [vmem:[#allocation2 + $0x4e8] sm:$0xff] %v4324
        %4369 = vst.msk [vmem:[#allocation2 + $0x4f0] sm:$0xff] %vm482, %v4295
        %4370 = vst [vmem:[#allocation2 + $0x4f8] sm:$0xff] %v4325
        %4371 = vst [vmem:[#allocation2 + $0x500] sm:$0xff] %v4326
        %4372 = vst.msk [vmem:[#allocation2 + $0x508] sm:$0xff] %vm482, %v4301
        %4373 = vst [vmem:[#allocation2 + $0x510] sm:$0xff] %v4327
        %4374 = vst [vmem:[#allocation2 + $0x518] sm:$0xff] %v4328
        %4375 = vst.msk [vmem:[#allocation2 + $0x520] sm:$0xff] %vm482, %v4307
        %4376 = vst [vmem:[#allocation2 + $0x528] sm:$0xff] %v4329
        %4377 = vst [vmem:[#allocation2 + $0x530] sm:$0xff] %v4330
        %4378 = vst.msk [vmem:[#allocation2 + $0x538] sm:$0xff] %vm482, %v4313
        %v4379 = vld [vmem:[#allocation3 + $0x8] sm:$0xff]
        %v4380 = vld [vmem:[#allocation3 + $0x10] sm:$0xff]
        %v4381 = vld [vmem:[#allocation3 + $0x18] sm:$0xff]
        %v4382 = vld [vmem:[#allocation3 + $0x28] sm:$0xff]
        %v4383 = vld [vmem:[#allocation3 + $0x30] sm:$0xff]
        %v4384 = vld [vmem:[#allocation3 + $0x38] sm:$0xff]
        %v4385 = vld [vmem:[#allocation3 + $0x48] sm:$0xff]
        %v4386 = vld [vmem:[#allocation3 + $0x50] sm:$0xff]
        %v4387 = vld [vmem:[#allocation3 + $0x58] sm:$0xff]
        %v4388 = vld [vmem:[#allocation3 + $0x68] sm:$0xff]
        %v4389 = vld [vmem:[#allocation3 + $0x70] sm:$0xff]
        %v4390 = vld [vmem:[#allocation3 + $0x78] sm:$0xff]
        %v4391 = vld [vmem:[#allocation3 + $0x88] sm:$0xff]
        %v4392 = vld [vmem:[#allocation3 + $0x90] sm:$0xff]
        %v4393 = vld [vmem:[#allocation3 + $0x98] sm:$0xff]
        %v4394 = vld [vmem:[#allocation3 + $0xa8] sm:$0xff]
        %v4395 = vld [vmem:[#allocation3 + $0xb0] sm:$0xff]
        %v4396 = vld [vmem:[#allocation3 + $0xb8] sm:$0xff]
        %v4397 = vld [vmem:[#allocation3 + $0xc8] sm:$0xff]
        %v4398 = vld [vmem:[#allocation3 + $0xd0] sm:$0xff]
        %v4399 = vld [vmem:[#allocation3 + $0xd8] sm:$0xff]
        %v4400 = vld [vmem:[#allocation3 + $0xe8] sm:$0xff]
        %v4401 = vld [vmem:[#allocation3 + $0xf0] sm:$0xff]
        %v4402 = vld [vmem:[#allocation3 + $0xf8] sm:$0xff]
        %4427 = vrot.lane.b32.xlu0 %v4379, 110
        %v4428 = vpop.permute.xlu0 %4427
        %4429 = vrot.lane.b32.xlu0 %v4380, 110
        %v4430 = vpop.permute.xlu0 %4429
        %4431 = vrot.lane.b32.xlu0 %v4381, 110
        %v4432 = vpop.permute.xlu0 %4431
        %4433 = vrot.lane.b32.xlu0 %v4382, 110
        %v4434 = vpop.permute.xlu0 %4433
        %4435 = vrot.lane.b32.xlu0 %v4383, 110
        %v4436 = vpop.permute.xlu0 %4435
        %4437 = vrot.lane.b32.xlu0 %v4384, 110
        %v4438 = vpop.permute.xlu0 %4437
        %4439 = vrot.lane.b32.xlu0 %v4385, 110
        %v4440 = vpop.permute.xlu0 %4439
        %4441 = vrot.lane.b32.xlu0 %v4386, 110
        %v4442 = vpop.permute.xlu0 %4441
        %4443 = vrot.lane.b32.xlu0 %v4387, 110
        %v4444 = vpop.permute.xlu0 %4443
        %4445 = vrot.lane.b32.xlu0 %v4388, 110
        %v4446 = vpop.permute.xlu0 %4445
        %4447 = vrot.lane.b32.xlu0 %v4389, 110
        %v4448 = vpop.permute.xlu0 %4447
        %4449 = vrot.lane.b32.xlu0 %v4390, 110
        %v4450 = vpop.permute.xlu0 %4449
        %4451 = vrot.lane.b32.xlu0 %v4391, 110
        %v4452 = vpop.permute.xlu0 %4451
        %4453 = vrot.lane.b32.xlu0 %v4392, 110
        %v4454 = vpop.permute.xlu0 %4453
        %4455 = vrot.lane.b32.xlu0 %v4393, 110
        %v4456 = vpop.permute.xlu0 %4455
        %4457 = vrot.lane.b32.xlu0 %v4394, 110
        %v4458 = vpop.permute.xlu0 %4457
        %4459 = vrot.lane.b32.xlu0 %v4395, 110
        %v4460 = vpop.permute.xlu0 %4459
        %4461 = vrot.lane.b32.xlu0 %v4396, 110
        %v4462 = vpop.permute.xlu0 %4461
        %4463 = vrot.lane.b32.xlu0 %v4397, 110
        %v4464 = vpop.permute.xlu0 %4463
        %4465 = vrot.lane.b32.xlu0 %v4398, 110
        %v4466 = vpop.permute.xlu0 %4465
        %4467 = vrot.lane.b32.xlu0 %v4399, 110
        %v4468 = vpop.permute.xlu0 %4467
        %4469 = vrot.lane.b32.xlu0 %v4400, 110
        %v4470 = vpop.permute.xlu0 %4469
        %4471 = vrot.lane.b32.xlu0 %v4401, 110
        %v4472 = vpop.permute.xlu0 %4471
        %4473 = vrot.lane.b32.xlu0 %v4402, 110
        %v4474 = vpop.permute.xlu0 %4473
        %v4475 = vsel %vm923, %v4428, %v4430
        %v4476 = vsel %vm923, %v4430, %v4432
        %v4477 = vsel %vm923, %v4434, %v4436
        %v4478 = vsel %vm923, %v4436, %v4438
        %v4479 = vsel %vm923, %v4440, %v4442
        %v4480 = vsel %vm923, %v4442, %v4444
        %v4481 = vsel %vm923, %v4446, %v4448
        %v4482 = vsel %vm923, %v4448, %v4450
        %v4483 = vsel %vm923, %v4452, %v4454
        %v4484 = vsel %vm923, %v4454, %v4456
        %v4485 = vsel %vm923, %v4458, %v4460
        %v4486 = vsel %vm923, %v4460, %v4462
        %v4487 = vsel %vm923, %v4464, %v4466
        %v4488 = vsel %vm923, %v4466, %v4468
        %v4489 = vsel %vm923, %v4470, %v4472
        %v4490 = vsel %vm923, %v4472, %v4474
        %4515 = vst [vmem:[#allocation2 + $0x540] sm:$0xff] %v4475
        %4516 = vst [vmem:[#allocation2 + $0x548] sm:$0xff] %v4476
        %4517 = vst.msk [vmem:[#allocation2 + $0x550] sm:$0xff] %vm482, %v4432
        %4518 = vst [vmem:[#allocation2 + $0x558] sm:$0xff] %v4477
        %4519 = vst [vmem:[#allocation2 + $0x560] sm:$0xff] %v4478
        %4520 = vst.msk [vmem:[#allocation2 + $0x568] sm:$0xff] %vm482, %v4438
        %4521 = vst [vmem:[#allocation2 + $0x570] sm:$0xff] %v4479
        %4522 = vst [vmem:[#allocation2 + $0x578] sm:$0xff] %v4480
        %4523 = vst.msk [vmem:[#allocation2 + $0x580] sm:$0xff] %vm482, %v4444
        %4524 = vst [vmem:[#allocation2 + $0x588] sm:$0xff] %v4481
        %4525 = vst [vmem:[#allocation2 + $0x590] sm:$0xff] %v4482
        %4526 = vst.msk [vmem:[#allocation2 + $0x598] sm:$0xff] %vm482, %v4450
        %4527 = vst [vmem:[#allocation2 + $0x5a0] sm:$0xff] %v4483
        %4528 = vst [vmem:[#allocation2 + $0x5a8] sm:$0xff] %v4484
        %4529 = vst.msk [vmem:[#allocation2 + $0x5b0] sm:$0xff] %vm482, %v4456
        %4530 = vst [vmem:[#allocation2 + $0x5b8] sm:$0xff] %v4485
        %4531 = vst [vmem:[#allocation2 + $0x5c0] sm:$0xff] %v4486
        %4532 = vst.msk [vmem:[#allocation2 + $0x5c8] sm:$0xff] %vm482, %v4462
        %4533 = vst [vmem:[#allocation2 + $0x5d0] sm:$0xff] %v4487
        %4534 = vst [vmem:[#allocation2 + $0x5d8] sm:$0xff] %v4488
        %4535 = vst.msk [vmem:[#allocation2 + $0x5e0] sm:$0xff] %vm482, %v4468
        %4536 = vst [vmem:[#allocation2 + $0x5e8] sm:$0xff] %v4489
        %4537 = vst [vmem:[#allocation2 + $0x5f0] sm:$0xff] %v4490
        %4538 = vst.msk [vmem:[#allocation2 + $0x5f8] sm:$0xff] %vm482, %v4474
        %v4539 = vld [vmem:[#allocation3 + $0x8] sm:$0xff]
        %v4540 = vld [vmem:[#allocation3 + $0x10] sm:$0xff]
        %v4541 = vld [vmem:[#allocation3 + $0x18] sm:$0xff]
        %v4542 = vld [vmem:[#allocation3 + $0x28] sm:$0xff]
        %v4543 = vld [vmem:[#allocation3 + $0x30] sm:$0xff]
        %v4544 = vld [vmem:[#allocation3 + $0x38] sm:$0xff]
        %v4545 = vld [vmem:[#allocation3 + $0x48] sm:$0xff]
        %v4546 = vld [vmem:[#allocation3 + $0x50] sm:$0xff]
        %v4547 = vld [vmem:[#allocation3 + $0x58] sm:$0xff]
        %v4548 = vld [vmem:[#allocation3 + $0x68] sm:$0xff]
        %v4549 = vld [vmem:[#allocation3 + $0x70] sm:$0xff]
        %v4550 = vld [vmem:[#allocation3 + $0x78] sm:$0xff]
        %v4551 = vld [vmem:[#allocation3 + $0x88] sm:$0xff]
        %v4552 = vld [vmem:[#allocation3 + $0x90] sm:$0xff]
        %v4553 = vld [vmem:[#allocation3 + $0x98] sm:$0xff]
        %v4554 = vld [vmem:[#allocation3 + $0xa8] sm:$0xff]
        %v4555 = vld [vmem:[#allocation3 + $0xb0] sm:$0xff]
        %v4556 = vld [vmem:[#allocation3 + $0xb8] sm:$0xff]
        %v4557 = vld [vmem:[#allocation3 + $0xc8] sm:$0xff]
        %v4558 = vld [vmem:[#allocation3 + $0xd0] sm:$0xff]
        %v4559 = vld [vmem:[#allocation3 + $0xd8] sm:$0xff]
        %v4560 = vld [vmem:[#allocation3 + $0xe8] sm:$0xff]
        %v4561 = vld [vmem:[#allocation3 + $0xf0] sm:$0xff]
        %v4562 = vld [vmem:[#allocation3 + $0xf8] sm:$0xff]
        %4587 = vrot.lane.b32.xlu0 %v4539, 109
        %v4588 = vpop.permute.xlu0 %4587
        %4589 = vrot.lane.b32.xlu0 %v4540, 109
        %v4590 = vpop.permute.xlu0 %4589
        %4591 = vrot.lane.b32.xlu0 %v4541, 109
        %v4592 = vpop.permute.xlu0 %4591
        %4593 = vrot.lane.b32.xlu0 %v4542, 109
        %v4594 = vpop.permute.xlu0 %4593
        %4595 = vrot.lane.b32.xlu0 %v4543, 109
        %v4596 = vpop.permute.xlu0 %4595
        %4597 = vrot.lane.b32.xlu0 %v4544, 109
        %v4598 = vpop.permute.xlu0 %4597
        %4599 = vrot.lane.b32.xlu0 %v4545, 109
        %v4600 = vpop.permute.xlu0 %4599
        %4601 = vrot.lane.b32.xlu0 %v4546, 109
        %v4602 = vpop.permute.xlu0 %4601
        %4603 = vrot.lane.b32.xlu0 %v4547, 109
        %v4604 = vpop.permute.xlu0 %4603
        %4605 = vrot.lane.b32.xlu0 %v4548, 109
        %v4606 = vpop.permute.xlu0 %4605
        %4607 = vrot.lane.b32.xlu0 %v4549, 109
        %v4608 = vpop.permute.xlu0 %4607
        %4609 = vrot.lane.b32.xlu0 %v4550, 109
        %v4610 = vpop.permute.xlu0 %4609
        %4611 = vrot.lane.b32.xlu0 %v4551, 109
        %v4612 = vpop.permute.xlu0 %4611
        %4613 = vrot.lane.b32.xlu0 %v4552, 109
        %v4614 = vpop.permute.xlu0 %4613
        %4615 = vrot.lane.b32.xlu0 %v4553, 109
        %v4616 = vpop.permute.xlu0 %4615
        %4617 = vrot.lane.b32.xlu0 %v4554, 109
        %v4618 = vpop.permute.xlu0 %4617
        %4619 = vrot.lane.b32.xlu0 %v4555, 109
        %v4620 = vpop.permute.xlu0 %4619
        %4621 = vrot.lane.b32.xlu0 %v4556, 109
        %v4622 = vpop.permute.xlu0 %4621
        %4623 = vrot.lane.b32.xlu0 %v4557, 109
        %v4624 = vpop.permute.xlu0 %4623
        %4625 = vrot.lane.b32.xlu0 %v4558, 109
        %v4626 = vpop.permute.xlu0 %4625
        %4627 = vrot.lane.b32.xlu0 %v4559, 109
        %v4628 = vpop.permute.xlu0 %4627
        %4629 = vrot.lane.b32.xlu0 %v4560, 109
        %v4630 = vpop.permute.xlu0 %4629
        %4631 = vrot.lane.b32.xlu0 %v4561, 109
        %v4632 = vpop.permute.xlu0 %4631
        %4633 = vrot.lane.b32.xlu0 %v4562, 109
        %v4634 = vpop.permute.xlu0 %4633
        %v4635 = vsel %vm1084, %v4588, %v4590
        %v4636 = vsel %vm1084, %v4590, %v4592
        %v4637 = vsel %vm1084, %v4594, %v4596
        %v4638 = vsel %vm1084, %v4596, %v4598
        %v4639 = vsel %vm1084, %v4600, %v4602
        %v4640 = vsel %vm1084, %v4602, %v4604
        %v4641 = vsel %vm1084, %v4606, %v4608
        %v4642 = vsel %vm1084, %v4608, %v4610
        %v4643 = vsel %vm1084, %v4612, %v4614
        %v4644 = vsel %vm1084, %v4614, %v4616
        %v4645 = vsel %vm1084, %v4618, %v4620
        %v4646 = vsel %vm1084, %v4620, %v4622
        %v4647 = vsel %vm1084, %v4624, %v4626
        %v4648 = vsel %vm1084, %v4626, %v4628
        %v4649 = vsel %vm1084, %v4630, %v4632
        %v4650 = vsel %vm1084, %v4632, %v4634
        %4675 = vst [vmem:[#allocation2 + $0x600] sm:$0xff] %v4635
        %4676 = vst [vmem:[#allocation2 + $0x608] sm:$0xff] %v4636
        %4677 = vst.msk [vmem:[#allocation2 + $0x610] sm:$0xff] %vm482, %v4592
        %4678 = vst [vmem:[#allocation2 + $0x618] sm:$0xff] %v4637
        %4679 = vst [vmem:[#allocation2 + $0x620] sm:$0xff] %v4638
        %4680 = vst.msk [vmem:[#allocation2 + $0x628] sm:$0xff] %vm482, %v4598
        %4681 = vst [vmem:[#allocation2 + $0x630] sm:$0xff] %v4639
        %4682 = vst [vmem:[#allocation2 + $0x638] sm:$0xff] %v4640
        %4683 = vst.msk [vmem:[#allocation2 + $0x640] sm:$0xff] %vm482, %v4604
        %4684 = vst [vmem:[#allocation2 + $0x648] sm:$0xff] %v4641
        %4685 = vst [vmem:[#allocation2 + $0x650] sm:$0xff] %v4642
        %4686 = vst.msk [vmem:[#allocation2 + $0x658] sm:$0xff] %vm482, %v4610
        %4687 = vst [vmem:[#allocation2 + $0x660] sm:$0xff] %v4643
        %4688 = vst [vmem:[#allocation2 + $0x668] sm:$0xff] %v4644
        %4689 = vst.msk [vmem:[#allocation2 + $0x670] sm:$0xff] %vm482, %v4616
        %4690 = vst [vmem:[#allocation2 + $0x678] sm:$0xff] %v4645
        %4691 = vst [vmem:[#allocation2 + $0x680] sm:$0xff] %v4646
        %4692 = vst.msk [vmem:[#allocation2 + $0x688] sm:$0xff] %vm482, %v4622
        %4693 = vst [vmem:[#allocation2 + $0x690] sm:$0xff] %v4647
        %4694 = vst [vmem:[#allocation2 + $0x698] sm:$0xff] %v4648
        %4695 = vst.msk [vmem:[#allocation2 + $0x6a0] sm:$0xff] %vm482, %v4628
        %4696 = vst [vmem:[#allocation2 + $0x6a8] sm:$0xff] %v4649
        %4697 = vst [vmem:[#allocation2 + $0x6b0] sm:$0xff] %v4650
        %4698 = vst.msk [vmem:[#allocation2 + $0x6b8] sm:$0xff] %vm482, %v4634
        %v4699 = vld [vmem:[#allocation4] sm:$0xff]
        %v4700 = vld [vmem:[#allocation4 + $0x8] sm:$0xff]
        %v4701 = vld [vmem:[#allocation4 + $0x10] sm:$0xff]
        %v4702 = vld [vmem:[#allocation4 + $0x18] sm:$0xff]
        %v4703 = vld [vmem:[#allocation4 + $0x20] sm:$0xff]
        %v4704 = vld [vmem:[#allocation4 + $0x28] sm:$0xff]
        %v4705 = vld [vmem:[#allocation4 + $0x30] sm:$0xff]
        %v4706 = vld [vmem:[#allocation4 + $0x38] sm:$0xff]
        %v4707 = vld [vmem:[#allocation4 + $0x40] sm:$0xff]
        %v4708 = vld [vmem:[#allocation4 + $0x48] sm:$0xff]
        %v4709 = vld [vmem:[#allocation4 + $0x50] sm:$0xff]
        %v4710 = vld [vmem:[#allocation4 + $0x58] sm:$0xff]
        %v4711 = vld [vmem:[#allocation4 + $0x60] sm:$0xff]
        %v4712 = vld [vmem:[#allocation4 + $0x68] sm:$0xff]
        %v4713 = vld [vmem:[#allocation4 + $0x70] sm:$0xff]
        %v4714 = vld [vmem:[#allocation4 + $0x78] sm:$0xff]
        %v4715 = vld [vmem:[#allocation4 + $0x80] sm:$0xff]
        %v4716 = vld [vmem:[#allocation4 + $0x88] sm:$0xff]
        %v4717 = vld [vmem:[#allocation4 + $0x90] sm:$0xff]
        %v4718 = vld [vmem:[#allocation4 + $0x98] sm:$0xff]
        %v4719 = vld [vmem:[#allocation4 + $0xa0] sm:$0xff]
        %v4720 = vld [vmem:[#allocation4 + $0xa8] sm:$0xff]
        %v4721 = vld [vmem:[#allocation4 + $0xb0] sm:$0xff]
        %v4722 = vld [vmem:[#allocation4 + $0xb8] sm:$0xff]
        %v4723 = vld [vmem:[#allocation4 + $0xc0] sm:$0xff]
        %v4724 = vld [vmem:[#allocation4 + $0xc8] sm:$0xff]
        %v4725 = vld [vmem:[#allocation4 + $0xd0] sm:$0xff]
        %v4726 = vld [vmem:[#allocation4 + $0xd8] sm:$0xff]
        %v4727 = vld [vmem:[#allocation4 + $0xe0] sm:$0xff]
        %v4728 = vld [vmem:[#allocation4 + $0xe8] sm:$0xff]
        %v4729 = vld [vmem:[#allocation4 + $0xf0] sm:$0xff]
        %v4730 = vld [vmem:[#allocation4 + $0xf8] sm:$0xff]
        %v4731 = vld [vmem:[#allocation4 + $0x100] sm:$0xff]
        %v4732 = vld [vmem:[#allocation4 + $0x108] sm:$0xff]
        %v4733 = vld [vmem:[#allocation4 + $0x110] sm:$0xff]
        %v4734 = vld [vmem:[#allocation4 + $0x118] sm:$0xff]
        %v4735 = vld [vmem:[#allocation4 + $0x120] sm:$0xff]
        %v4736 = vld [vmem:[#allocation4 + $0x128] sm:$0xff]
        %v4737 = vld [vmem:[#allocation4 + $0x130] sm:$0xff]
        %v4738 = vld [vmem:[#allocation4 + $0x138] sm:$0xff]
        %v4739 = vld [vmem:[#allocation2] sm:$0xff]
        %v4740 = vld [vmem:[#allocation2 + $0x8] sm:$0xff]
        %v4741 = vld [vmem:[#allocation2 + $0x10] sm:$0xff]
        %v4742 = vld [vmem:[#allocation2 + $0x18] sm:$0xff]
        %v4743 = vld [vmem:[#allocation2 + $0x20] sm:$0xff]
        %v4744 = vld [vmem:[#allocation2 + $0x28] sm:$0xff]
        %v4745 = vld [vmem:[#allocation2 + $0x30] sm:$0xff]
        %v4746 = vld [vmem:[#allocation2 + $0x38] sm:$0xff]
        %v4747 = vld [vmem:[#allocation2 + $0x40] sm:$0xff]
        %v4748 = vld [vmem:[#allocation2 + $0x48] sm:$0xff]
        %v4749 = vld [vmem:[#allocation2 + $0x50] sm:$0xff]
        %v4750 = vld [vmem:[#allocation2 + $0x58] sm:$0xff]
        %v4751 = vld [vmem:[#allocation2 + $0x60] sm:$0xff]
        %v4752 = vld [vmem:[#allocation2 + $0x68] sm:$0xff]
        %v4753 = vld [vmem:[#allocation2 + $0x70] sm:$0xff]
        %v4754 = vld [vmem:[#allocation2 + $0x78] sm:$0xff]
        %v4755 = vld [vmem:[#allocation2 + $0x80] sm:$0xff]
        %v4756 = vld [vmem:[#allocation2 + $0x88] sm:$0xff]
        %v4757 = vld [vmem:[#allocation2 + $0x90] sm:$0xff]
        %v4758 = vld [vmem:[#allocation2 + $0x98] sm:$0xff]
        %v4759 = vld [vmem:[#allocation2 + $0xa0] sm:$0xff]
        %v4760 = vld [vmem:[#allocation2 + $0xa8] sm:$0xff]
        %v4761 = vld [vmem:[#allocation2 + $0xb0] sm:$0xff]
        %v4762 = vld [vmem:[#allocation2 + $0xb8] sm:$0xff]
        %v4763 = vld [vmem:[#allocation2 + $0xc0] sm:$0xff]
        %v4764 = vld [vmem:[#allocation2 + $0xc8] sm:$0xff]
        %v4765 = vld [vmem:[#allocation2 + $0xd0] sm:$0xff]
        %v4766 = vld [vmem:[#allocation2 + $0xd8] sm:$0xff]
        %v4767 = vld [vmem:[#allocation2 + $0xe0] sm:$0xff]
        %v4768 = vld [vmem:[#allocation2 + $0xe8] sm:$0xff]
        %v4769 = vld [vmem:[#allocation2 + $0xf0] sm:$0xff]
        %v4770 = vld [vmem:[#allocation2 + $0xf8] sm:$0xff]
        %v4771 = vld [vmem:[#allocation2 + $0x100] sm:$0xff]
        %v4772 = vld [vmem:[#allocation2 + $0x108] sm:$0xff]
        %v4773 = vld [vmem:[#allocation2 + $0x110] sm:$0xff]
        %v4774 = vld [vmem:[#allocation2 + $0x118] sm:$0xff]
        %v4775 = vld [vmem:[#allocation2 + $0x120] sm:$0xff]
        %v4776 = vld [vmem:[#allocation2 + $0x128] sm:$0xff]
        %v4777 = vld [vmem:[#allocation2 + $0x130] sm:$0xff]
        %v4778 = vld [vmem:[#allocation2 + $0x138] sm:$0xff]
        %v4779 = vld [vmem:[#allocation2 + $0x140] sm:$0xff]
        %v4780 = vld [vmem:[#allocation2 + $0x148] sm:$0xff]
        %v4781 = vld [vmem:[#allocation2 + $0x150] sm:$0xff]
        %v4782 = vld [vmem:[#allocation2 + $0x158] sm:$0xff]
        %v4783 = vld [vmem:[#allocation2 + $0x160] sm:$0xff]
        %v4784 = vld [vmem:[#allocation2 + $0x168] sm:$0xff]
        %v4785 = vld [vmem:[#allocation2 + $0x170] sm:$0xff]
        %v4786 = vld [vmem:[#allocation2 + $0x178] sm:$0xff]
        %v4787 = vld [vmem:[#allocation2 + $0x180] sm:$0xff]
        %v4788 = vld [vmem:[#allocation2 + $0x188] sm:$0xff]
        %v4789 = vld [vmem:[#allocation2 + $0x190] sm:$0xff]
        %v4790 = vld [vmem:[#allocation2 + $0x198] sm:$0xff]
        %v4791 = vld [vmem:[#allocation2 + $0x1a0] sm:$0xff]
        %v4792 = vld [vmem:[#allocation2 + $0x1a8] sm:$0xff]
        %v4793 = vld [vmem:[#allocation2 + $0x1b0] sm:$0xff]
        %v4794 = vld [vmem:[#allocation2 + $0x1b8] sm:$0xff]
        %v4795 = vld [vmem:[#allocation2 + $0x1c0] sm:$0xff]
        %v4796 = vld [vmem:[#allocation2 + $0x1c8] sm:$0xff]
        %v4797 = vld [vmem:[#allocation2 + $0x1d0] sm:$0xff]
        %v4798 = vld [vmem:[#allocation2 + $0x1d8] sm:$0xff]
        %v4799 = vld [vmem:[#allocation2 + $0x1e0] sm:$0xff]
        %v4800 = vld [vmem:[#allocation2 + $0x1e8] sm:$0xff]
        %v4801 = vld [vmem:[#allocation2 + $0x1f0] sm:$0xff]
        %v4802 = vld [vmem:[#allocation2 + $0x1f8] sm:$0xff]
        %v4803 = vld [vmem:[#allocation2 + $0x200] sm:$0xff]
        %v4804 = vld [vmem:[#allocation2 + $0x208] sm:$0xff]
        %v4805 = vld [vmem:[#allocation2 + $0x210] sm:$0xff]
        %v4806 = vld [vmem:[#allocation2 + $0x218] sm:$0xff]
        %v4807 = vld [vmem:[#allocation2 + $0x220] sm:$0xff]
        %v4808 = vld [vmem:[#allocation2 + $0x228] sm:$0xff]
        %v4809 = vld [vmem:[#allocation2 + $0x230] sm:$0xff]
        %v4810 = vld [vmem:[#allocation2 + $0x238] sm:$0xff]
        %v4811 = vld [vmem:[#allocation2 + $0x240] sm:$0xff]
        %v4812 = vld [vmem:[#allocation2 + $0x248] sm:$0xff]
        %v4813 = vld [vmem:[#allocation2 + $0x250] sm:$0xff]
        %v4814 = vld [vmem:[#allocation2 + $0x258] sm:$0xff]
        %v4815 = vld [vmem:[#allocation2 + $0x260] sm:$0xff]
        %v4816 = vld [vmem:[#allocation2 + $0x268] sm:$0xff]
        %v4817 = vld [vmem:[#allocation2 + $0x270] sm:$0xff]
        %v4818 = vld [vmem:[#allocation2 + $0x278] sm:$0xff]
        %v4819 = vld [vmem:[#allocation2 + $0x280] sm:$0xff]
        %v4820 = vld [vmem:[#allocation2 + $0x288] sm:$0xff]
        %v4821 = vld [vmem:[#allocation2 + $0x290] sm:$0xff]
        %v4822 = vld [vmem:[#allocation2 + $0x298] sm:$0xff]
        %v4823 = vld [vmem:[#allocation2 + $0x2a0] sm:$0xff]
        %v4824 = vld [vmem:[#allocation2 + $0x2a8] sm:$0xff]
        %v4825 = vld [vmem:[#allocation2 + $0x2b0] sm:$0xff]
        %v4826 = vld [vmem:[#allocation2 + $0x2b8] sm:$0xff]
        %v4827 = vld [vmem:[#allocation2 + $0x2c0] sm:$0xff]
        %v4828 = vld [vmem:[#allocation2 + $0x2c8] sm:$0xff]
        %v4829 = vld [vmem:[#allocation2 + $0x2d0] sm:$0xff]
        %v4830 = vld [vmem:[#allocation2 + $0x2d8] sm:$0xff]
        %v4831 = vld [vmem:[#allocation2 + $0x2e0] sm:$0xff]
        %v4832 = vld [vmem:[#allocation2 + $0x2e8] sm:$0xff]
        %v4833 = vld [vmem:[#allocation2 + $0x2f0] sm:$0xff]
        %v4834 = vld [vmem:[#allocation2 + $0x2f8] sm:$0xff]
        %v4835 = vld [vmem:[#allocation2 + $0x300] sm:$0xff]
        %v4836 = vld [vmem:[#allocation2 + $0x308] sm:$0xff]
        %v4837 = vld [vmem:[#allocation2 + $0x310] sm:$0xff]
        %v4838 = vld [vmem:[#allocation2 + $0x318] sm:$0xff]
        %v4839 = vld [vmem:[#allocation2 + $0x320] sm:$0xff]
        %v4840 = vld [vmem:[#allocation2 + $0x328] sm:$0xff]
        %v4841 = vld [vmem:[#allocation2 + $0x330] sm:$0xff]
        %v4842 = vld [vmem:[#allocation2 + $0x338] sm:$0xff]
        %v4843 = vld [vmem:[#allocation2 + $0x340] sm:$0xff]
        %v4844 = vld [vmem:[#allocation2 + $0x348] sm:$0xff]
        %v4845 = vld [vmem:[#allocation2 + $0x350] sm:$0xff]
        %v4846 = vld [vmem:[#allocation2 + $0x358] sm:$0xff]
        %v4847 = vld [vmem:[#allocation2 + $0x360] sm:$0xff]
        %v4848 = vld [vmem:[#allocation2 + $0x368] sm:$0xff]
        %v4849 = vld [vmem:[#allocation2 + $0x370] sm:$0xff]
        %v4850 = vld [vmem:[#allocation2 + $0x378] sm:$0xff]
        %v4851 = vld [vmem:[#allocation2 + $0x380] sm:$0xff]
        %v4852 = vld [vmem:[#allocation2 + $0x388] sm:$0xff]
        %v4853 = vld [vmem:[#allocation2 + $0x390] sm:$0xff]
        %v4854 = vld [vmem:[#allocation2 + $0x398] sm:$0xff]
        %v4855 = vld [vmem:[#allocation2 + $0x3a0] sm:$0xff]
        %v4856 = vld [vmem:[#allocation2 + $0x3a8] sm:$0xff]
        %v4857 = vld [vmem:[#allocation2 + $0x3b0] sm:$0xff]
        %v4858 = vld [vmem:[#allocation2 + $0x3b8] sm:$0xff]
        %v4859 = vld [vmem:[#allocation2 + $0x3c0] sm:$0xff]
        %v4860 = vld [vmem:[#allocation2 + $0x3c8] sm:$0xff]
        %v4861 = vld [vmem:[#allocation2 + $0x3d0] sm:$0xff]
        %v4862 = vld [vmem:[#allocation2 + $0x3d8] sm:$0xff]
        %v4863 = vld [vmem:[#allocation2 + $0x3e0] sm:$0xff]
        %v4864 = vld [vmem:[#allocation2 + $0x3e8] sm:$0xff]
        %v4865 = vld [vmem:[#allocation2 + $0x3f0] sm:$0xff]
        %v4866 = vld [vmem:[#allocation2 + $0x3f8] sm:$0xff]
        %v4867 = vld [vmem:[#allocation2 + $0x400] sm:$0xff]
        %v4868 = vld [vmem:[#allocation2 + $0x408] sm:$0xff]
        %v4869 = vld [vmem:[#allocation2 + $0x410] sm:$0xff]
        %v4870 = vld [vmem:[#allocation2 + $0x418] sm:$0xff]
        %v4871 = vld [vmem:[#allocation2 + $0x420] sm:$0xff]
        %v4872 = vld [vmem:[#allocation2 + $0x428] sm:$0xff]
        %v4873 = vld [vmem:[#allocation2 + $0x430] sm:$0xff]
        %v4874 = vld [vmem:[#allocation2 + $0x438] sm:$0xff]
        %v4875 = vld [vmem:[#allocation2 + $0x440] sm:$0xff]
        %v4876 = vld [vmem:[#allocation2 + $0x448] sm:$0xff]
        %v4877 = vld [vmem:[#allocation2 + $0x450] sm:$0xff]
        %v4878 = vld [vmem:[#allocation2 + $0x458] sm:$0xff]
        %v4879 = vld [vmem:[#allocation2 + $0x460] sm:$0xff]
        %v4880 = vld [vmem:[#allocation2 + $0x468] sm:$0xff]
        %v4881 = vld [vmem:[#allocation2 + $0x470] sm:$0xff]
        %v4882 = vld [vmem:[#allocation2 + $0x478] sm:$0xff]
        %v4883 = vld [vmem:[#allocation2 + $0x480] sm:$0xff]
        %v4884 = vld [vmem:[#allocation2 + $0x488] sm:$0xff]
        %v4885 = vld [vmem:[#allocation2 + $0x490] sm:$0xff]
        %v4886 = vld [vmem:[#allocation2 + $0x498] sm:$0xff]
        %v4887 = vld [vmem:[#allocation2 + $0x4a0] sm:$0xff]
        %v4888 = vld [vmem:[#allocation2 + $0x4a8] sm:$0xff]
        %v4889 = vld [vmem:[#allocation2 + $0x4b0] sm:$0xff]
        %v4890 = vld [vmem:[#allocation2 + $0x4b8] sm:$0xff]
        %v4891 = vld [vmem:[#allocation2 + $0x4c0] sm:$0xff]
        %v4892 = vld [vmem:[#allocation2 + $0x4c8] sm:$0xff]
        %v4893 = vld [vmem:[#allocation2 + $0x4d0] sm:$0xff]
        %v4894 = vld [vmem:[#allocation2 + $0x4d8] sm:$0xff]
        %v4895 = vld [vmem:[#allocation2 + $0x4e0] sm:$0xff]
        %v4896 = vld [vmem:[#allocation2 + $0x4e8] sm:$0xff]
        %v4897 = vld [vmem:[#allocation2 + $0x4f0] sm:$0xff]
        %v4898 = vld [vmem:[#allocation2 + $0x4f8] sm:$0xff]
        %v4899 = vld [vmem:[#allocation2 + $0x500] sm:$0xff]
        %v4900 = vld [vmem:[#allocation2 + $0x508] sm:$0xff]
        %v4901 = vld [vmem:[#allocation2 + $0x510] sm:$0xff]
        %v4902 = vld [vmem:[#allocation2 + $0x518] sm:$0xff]
        %v4903 = vld [vmem:[#allocation2 + $0x520] sm:$0xff]
        %v4904 = vld [vmem:[#allocation2 + $0x528] sm:$0xff]
        %v4905 = vld [vmem:[#allocation2 + $0x530] sm:$0xff]
        %v4906 = vld [vmem:[#allocation2 + $0x538] sm:$0xff]
        %v4907 = vld [vmem:[#allocation2 + $0x540] sm:$0xff]
        %v4908 = vld [vmem:[#allocation2 + $0x548] sm:$0xff]
        %v4909 = vld [vmem:[#allocation2 + $0x550] sm:$0xff]
        %v4910 = vld [vmem:[#allocation2 + $0x558] sm:$0xff]
        %v4911 = vld [vmem:[#allocation2 + $0x560] sm:$0xff]
        %v4912 = vld [vmem:[#allocation2 + $0x568] sm:$0xff]
        %v4913 = vld [vmem:[#allocation2 + $0x570] sm:$0xff]
        %v4914 = vld [vmem:[#allocation2 + $0x578] sm:$0xff]
        %v4915 = vld [vmem:[#allocation2 + $0x580] sm:$0xff]
        %v4916 = vld [vmem:[#allocation2 + $0x588] sm:$0xff]
        %v4917 = vld [vmem:[#allocation2 + $0x590] sm:$0xff]
        %v4918 = vld [vmem:[#allocation2 + $0x598] sm:$0xff]
        %v4919 = vld [vmem:[#allocation2 + $0x5a0] sm:$0xff]
        %v4920 = vld [vmem:[#allocation2 + $0x5a8] sm:$0xff]
        %v4921 = vld [vmem:[#allocation2 + $0x5b0] sm:$0xff]
        %v4922 = vld [vmem:[#allocation2 + $0x5b8] sm:$0xff]
        %v4923 = vld [vmem:[#allocation2 + $0x5c0] sm:$0xff]
        %v4924 = vld [vmem:[#allocation2 + $0x5c8] sm:$0xff]
        %v4925 = vld [vmem:[#allocation2 + $0x5d0] sm:$0xff]
        %v4926 = vld [vmem:[#allocation2 + $0x5d8] sm:$0xff]
        %v4927 = vld [vmem:[#allocation2 + $0x5e0] sm:$0xff]
        %v4928 = vld [vmem:[#allocation2 + $0x5e8] sm:$0xff]
        %v4929 = vld [vmem:[#allocation2 + $0x5f0] sm:$0xff]
        %v4930 = vld [vmem:[#allocation2 + $0x5f8] sm:$0xff]
        %v4931 = vld [vmem:[#allocation2 + $0x600] sm:$0xff]
        %v4932 = vld [vmem:[#allocation2 + $0x608] sm:$0xff]
        %v4933 = vld [vmem:[#allocation2 + $0x610] sm:$0xff]
        %v4934 = vld [vmem:[#allocation2 + $0x618] sm:$0xff]
        %v4935 = vld [vmem:[#allocation2 + $0x620] sm:$0xff]
        %v4936 = vld [vmem:[#allocation2 + $0x628] sm:$0xff]
        %v4937 = vld [vmem:[#allocation2 + $0x630] sm:$0xff]
        %v4938 = vld [vmem:[#allocation2 + $0x638] sm:$0xff]
        %v4939 = vld [vmem:[#allocation2 + $0x640] sm:$0xff]
        %v4940 = vld [vmem:[#allocation2 + $0x648] sm:$0xff]
        %v4941 = vld [vmem:[#allocation2 + $0x650] sm:$0xff]
        %v4942 = vld [vmem:[#allocation2 + $0x658] sm:$0xff]
        %v4943 = vld [vmem:[#allocation2 + $0x660] sm:$0xff]
        %v4944 = vld [vmem:[#allocation2 + $0x668] sm:$0xff]
        %v4945 = vld [vmem:[#allocation2 + $0x670] sm:$0xff]
        %v4946 = vld [vmem:[#allocation2 + $0x678] sm:$0xff]
        %v4947 = vld [vmem:[#allocation2 + $0x680] sm:$0xff]
        %v4948 = vld [vmem:[#allocation2 + $0x688] sm:$0xff]
        %v4949 = vld [vmem:[#allocation2 + $0x690] sm:$0xff]
        %v4950 = vld [vmem:[#allocation2 + $0x698] sm:$0xff]
        %v4951 = vld [vmem:[#allocation2 + $0x6a0] sm:$0xff]
        %v4952 = vld [vmem:[#allocation2 + $0x6a8] sm:$0xff]
        %v4953 = vld [vmem:[#allocation2 + $0x6b0] sm:$0xff]
        %v4954 = vld [vmem:[#allocation2 + $0x6b8] sm:$0xff]
        %v4956 = vsel %vm2049, %v4703, 0
        %v4959 = vsel %vm2049, %v4708, 0
        %v4962 = vsel %vm2049, %v4713, 0
        %v4965 = vsel %vm2049, %v4718, 0
        %v4968 = vsel %vm2049, %v4723, 0
        %v4971 = vsel %vm2049, %v4728, 0
        %v4974 = vsel %vm2049, %v4733, 0
        %v4977 = vsel %vm2049, %v4738, 0
        %4979 = vmatpush.msra.mxu0 %v4784
        %4980 = vmatpush.msra.mxu0 %v4781
        %4981 = vmatpush.msra.mxu0 %v4778
        %4982 = vmatpush.msra.mxu0 %v4775
        %4983 = vmatpush.msra.mxu0 %v4772
        %4984 = vmatpush.msra.mxu0 %v4769
        %4985 = vmatpush.msra.mxu0 %v4766
        %4986 = vmatpush.msra.mxu0 %v4763
        %4987 = vmatpush.msra.mxu0 %v4760
        %4988 = vmatpush.msra.mxu0 %v4757
        %4989 = vmatpush.msra.mxu0 %v4754
        %4990 = vmatpush.msra.mxu0 %v4751
        %4991 = vmatpush.msra.mxu0 %v4748
        %4992 = vmatpush.msra.mxu0 %v4745
        %4993 = vmatpush.msra.mxu0 %v4742
        %4994 = vmatpush.msra.mxu0 %v4739
        %4995 = vmatmul.f32.gmra.mxu0 %v4699
        %v4996 = vpop.f32.mrf.mxu0
        %v4997 = vadd.f32 0.0, %v4996
        %4998 = vmatmul.f32.gmra.mxu0 %v4704
        %v4999 = vpop.f32.mrf.mxu0
        %v5000 = vadd.f32 0.0, %v4999
        %5001 = vmatmul.f32.gmra.mxu0 %v4709
        %v5002 = vpop.f32.mrf.mxu0
        %v5003 = vadd.f32 0.0, %v5002
        %5004 = vmatmul.f32.gmra.mxu0 %v4714
        %v5005 = vpop.f32.mrf.mxu0
        %v5006 = vadd.f32 0.0, %v5005
        %5007 = vmatmul.f32.gmra.mxu0 %v4719
        %v5008 = vpop.f32.mrf.mxu0
        %v5009 = vadd.f32 0.0, %v5008
        %5010 = vmatmul.f32.gmra.mxu0 %v4724
        %v5011 = vpop.f32.mrf.mxu0
        %v5012 = vadd.f32 0.0, %v5011
        %5013 = vmatmul.f32.gmra.mxu0 %v4729
        %v5014 = vpop.f32.mrf.mxu0
        %v5015 = vadd.f32 0.0, %v5014
        %5016 = vmatmul.f32.gmra.mxu0 %v4734
        %v5017 = vpop.f32.mrf.mxu0
        %v5018 = vadd.f32 0.0, %v5017
        %5019 = vdwg.mxu0
        %5020 = vmatpush.msra.mxu0 %v4832
        %5021 = vmatpush.msra.mxu0 %v4829
        %5022 = vmatpush.msra.mxu0 %v4826
        %5023 = vmatpush.msra.mxu0 %v4823
        %5024 = vmatpush.msra.mxu0 %v4820
        %5025 = vmatpush.msra.mxu0 %v4817
        %5026 = vmatpush.msra.mxu0 %v4814
        %5027 = vmatpush.msra.mxu0 %v4811
        %5028 = vmatpush.msra.mxu0 %v4808
        %5029 = vmatpush.msra.mxu0 %v4805
        %5030 = vmatpush.msra.mxu0 %v4802
        %5031 = vmatpush.msra.mxu0 %v4799
        %5032 = vmatpush.msra.mxu0 %v4796
        %5033 = vmatpush.msra.mxu0 %v4793
        %5034 = vmatpush.msra.mxu0 %v4790
        %5035 = vmatpush.msra.mxu0 %v4787
        %5036 = vmatmul.f32.gmra.mxu0 %v4700
        %v5037 = vpop.f32.mrf.mxu0
        %v5038 = vadd.f32 %v4997, %v5037
        %5039 = vmatmul.f32.gmra.mxu0 %v4705
        %v5040 = vpop.f32.mrf.mxu0
        %v5041 = vadd.f32 %v5000, %v5040
        %5042 = vmatmul.f32.gmra.mxu0 %v4710
        %v5043 = vpop.f32.mrf.mxu0
        %v5044 = vadd.f32 %v5003, %v5043
        %5045 = vmatmul.f32.gmra.mxu0 %v4715
        %v5046 = vpop.f32.mrf.mxu0
        %v5047 = vadd.f32 %v5006, %v5046
        %5048 = vmatmul.f32.gmra.mxu0 %v4720
        %v5049 = vpop.f32.mrf.mxu0
        %v5050 = vadd.f32 %v5009, %v5049
        %5051 = vmatmul.f32.gmra.mxu0 %v4725
        %v5052 = vpop.f32.mrf.mxu0
        %v5053 = vadd.f32 %v5012, %v5052
        %5054 = vmatmul.f32.gmra.mxu0 %v4730
        %v5055 = vpop.f32.mrf.mxu0
        %v5056 = vadd.f32 %v5015, %v5055
        %5057 = vmatmul.f32.gmra.mxu0 %v4735
        %v5058 = vpop.f32.mrf.mxu0
        %v5059 = vadd.f32 %v5018, %v5058
        %5060 = vdwg.mxu0
        %5061 = vmatpush.msra.mxu0 %v4880
        %5062 = vmatpush.msra.mxu0 %v4877
        %5063 = vmatpush.msra.mxu0 %v4874
        %5064 = vmatpush.msra.mxu0 %v4871
        %5065 = vmatpush.msra.mxu0 %v4868
        %5066 = vmatpush.msra.mxu0 %v4865
        %5067 = vmatpush.msra.mxu0 %v4862
        %5068 = vmatpush.msra.mxu0 %v4859
        %5069 = vmatpush.msra.mxu0 %v4856
        %5070 = vmatpush.msra.mxu0 %v4853
        %5071 = vmatpush.msra.mxu0 %v4850
        %5072 = vmatpush.msra.mxu0 %v4847
        %5073 = vmatpush.msra.mxu0 %v4844
        %5074 = vmatpush.msra.mxu0 %v4841
        %5075 = vmatpush.msra.mxu0 %v4838
        %5076 = vmatpush.msra.mxu0 %v4835
        %5077 = vmatmul.f32.gmra.mxu0 %v4701
        %v5078 = vpop.f32.mrf.mxu0
        %v5079 = vadd.f32 %v5038, %v5078
        %5080 = vmatmul.f32.gmra.mxu0 %v4706
        %v5081 = vpop.f32.mrf.mxu0
        %v5082 = vadd.f32 %v5041, %v5081
        %5083 = vmatmul.f32.gmra.mxu0 %v4711
        %v5084 = vpop.f32.mrf.mxu0
        %v5085 = vadd.f32 %v5044, %v5084
        %5086 = vmatmul.f32.gmra.mxu0 %v4716
        %v5087 = vpop.f32.mrf.mxu0
        %v5088 = vadd.f32 %v5047, %v5087
        %5089 = vmatmul.f32.gmra.mxu0 %v4721
        %v5090 = vpop.f32.mrf.mxu0
        %v5091 = vadd.f32 %v5050, %v5090
        %5092 = vmatmul.f32.gmra.mxu0 %v4726
        %v5093 = vpop.f32.mrf.mxu0
        %v5094 = vadd.f32 %v5053, %v5093
        %5095 = vmatmul.f32.gmra.mxu0 %v4731
        %v5096 = vpop.f32.mrf.mxu0
        %v5097 = vadd.f32 %v5056, %v5096
        %5098 = vmatmul.f32.gmra.mxu0 %v4736
        %v5099 = vpop.f32.mrf.mxu0
        %v5100 = vadd.f32 %v5059, %v5099
        %5101 = vdwg.mxu0
        %5102 = vmatpush.msra.mxu0 %v4928
        %5103 = vmatpush.msra.mxu0 %v4925
        %5104 = vmatpush.msra.mxu0 %v4922
        %5105 = vmatpush.msra.mxu0 %v4919
        %5106 = vmatpush.msra.mxu0 %v4916
        %5107 = vmatpush.msra.mxu0 %v4913
        %5108 = vmatpush.msra.mxu0 %v4910
        %5109 = vmatpush.msra.mxu0 %v4907
        %5110 = vmatpush.msra.mxu0 %v4904
        %5111 = vmatpush.msra.mxu0 %v4901
        %5112 = vmatpush.msra.mxu0 %v4898
        %5113 = vmatpush.msra.mxu0 %v4895
        %5114 = vmatpush.msra.mxu0 %v4892
        %5115 = vmatpush.msra.mxu0 %v4889
        %5116 = vmatpush.msra.mxu0 %v4886
        %5117 = vmatpush.msra.mxu0 %v4883
        %5118 = vmatmul.f32.gmra.mxu0 %v4702
        %v5119 = vpop.f32.mrf.mxu0
        %v5120 = vadd.f32 %v5079, %v5119
        %5121 = vmatmul.f32.gmra.mxu0 %v4707
        %v5122 = vpop.f32.mrf.mxu0
        %v5123 = vadd.f32 %v5082, %v5122
        %5124 = vmatmul.f32.gmra.mxu0 %v4712
        %v5125 = vpop.f32.mrf.mxu0
        %v5126 = vadd.f32 %v5085, %v5125
        %5127 = vmatmul.f32.gmra.mxu0 %v4717
        %v5128 = vpop.f32.mrf.mxu0
        %v5129 = vadd.f32 %v5088, %v5128
        %5130 = vmatmul.f32.gmra.mxu0 %v4722
        %v5131 = vpop.f32.mrf.mxu0
        %v5132 = vadd.f32 %v5091, %v5131
        %5133 = vmatmul.f32.gmra.mxu0 %v4727
        %v5134 = vpop.f32.mrf.mxu0
        %v5135 = vadd.f32 %v5094, %v5134
        %5136 = vmatmul.f32.gmra.mxu0 %v4732
        %v5137 = vpop.f32.mrf.mxu0
        %v5138 = vadd.f32 %v5097, %v5137
        %5139 = vmatmul.f32.gmra.mxu0 %v4737
        %v5140 = vpop.f32.mrf.mxu0
        %v5141 = vadd.f32 %v5100, %v5140
        %5142 = vdwg.mxu0
        %5143 = vmatpush.msra.mxu0 0.0
        %5144 = vmatpush.msra.mxu0 0.0
        %5145 = vmatpush.msra.mxu0 0.0
        %5146 = vmatpush.msra.mxu0 0.0
        %5147 = vmatpush.msra.mxu0 0.0
        %5148 = vmatpush.msra.mxu0 0.0
        %5149 = vmatpush.msra.mxu0 0.0
        %5150 = vmatpush.msra.mxu0 0.0
        %5151 = vmatpush.msra.mxu0 %v4952
        %5152 = vmatpush.msra.mxu0 %v4949
        %5153 = vmatpush.msra.mxu0 %v4946
        %5154 = vmatpush.msra.mxu0 %v4943
        %5155 = vmatpush.msra.mxu0 %v4940
        %5156 = vmatpush.msra.mxu0 %v4937
        %5157 = vmatpush.msra.mxu0 %v4934
        %5158 = vmatpush.msra.mxu0 %v4931
        %5159 = vmatmul.f32.gmra.mxu0 %v4956
        %v5160 = vpop.f32.mrf.mxu0
        %v5161 = vadd.f32 %v5120, %v5160
        %5162 = vmatmul.f32.gmra.mxu0 %v4959
        %v5163 = vpop.f32.mrf.mxu0
        %v5164 = vadd.f32 %v5123, %v5163
        %5165 = vmatmul.f32.gmra.mxu0 %v4962
        %v5166 = vpop.f32.mrf.mxu0
        %v5167 = vadd.f32 %v5126, %v5166
        %5168 = vmatmul.f32.gmra.mxu0 %v4965
        %v5169 = vpop.f32.mrf.mxu0
        %v5170 = vadd.f32 %v5129, %v5169
        %5171 = vmatmul.f32.gmra.mxu0 %v4968
        %v5172 = vpop.f32.mrf.mxu0
        %v5173 = vadd.f32 %v5132, %v5172
        %5174 = vmatmul.f32.gmra.mxu0 %v4971
        %v5175 = vpop.f32.mrf.mxu0
        %v5176 = vadd.f32 %v5135, %v5175
        %5177 = vmatmul.f32.gmra.mxu0 %v4974
        %v5178 = vpop.f32.mrf.mxu0
        %v5179 = vadd.f32 %v5138, %v5178
        %5180 = vmatmul.f32.gmra.mxu0 %v4977
        %v5181 = vpop.f32.mrf.mxu0
        %v5182 = vadd.f32 %v5141, %v5181
        %5183 = vdwg.mxu0
        %5184 = vmatpush.msra.mxu0 %v4785
        %5185 = vmatpush.msra.mxu0 %v4782
        %5186 = vmatpush.msra.mxu0 %v4779
        %5187 = vmatpush.msra.mxu0 %v4776
        %5188 = vmatpush.msra.mxu0 %v4773
        %5189 = vmatpush.msra.mxu0 %v4770
        %5190 = vmatpush.msra.mxu0 %v4767
        %5191 = vmatpush.msra.mxu0 %v4764
        %5192 = vmatpush.msra.mxu0 %v4761
        %5193 = vmatpush.msra.mxu0 %v4758
        %5194 = vmatpush.msra.mxu0 %v4755
        %5195 = vmatpush.msra.mxu0 %v4752
        %5196 = vmatpush.msra.mxu0 %v4749
        %5197 = vmatpush.msra.mxu0 %v4746
        %5198 = vmatpush.msra.mxu0 %v4743
        %5199 = vmatpush.msra.mxu0 %v4740
        %5200 = vmatmul.f32.gmra.mxu0 %v4699
        %v5201 = vpop.f32.mrf.mxu0
        %v5202 = vadd.f32 0.0, %v5201
        %5203 = vmatmul.f32.gmra.mxu0 %v4704
        %v5204 = vpop.f32.mrf.mxu0
        %v5205 = vadd.f32 0.0, %v5204
        %5206 = vmatmul.f32.gmra.mxu0 %v4709
        %v5207 = vpop.f32.mrf.mxu0
        %v5208 = vadd.f32 0.0, %v5207
        %5209 = vmatmul.f32.gmra.mxu0 %v4714
        %v5210 = vpop.f32.mrf.mxu0
        %v5211 = vadd.f32 0.0, %v5210
        %5212 = vmatmul.f32.gmra.mxu0 %v4719
        %v5213 = vpop.f32.mrf.mxu0
        %v5214 = vadd.f32 0.0, %v5213
        %5215 = vmatmul.f32.gmra.mxu0 %v4724
        %v5216 = vpop.f32.mrf.mxu0
        %v5217 = vadd.f32 0.0, %v5216
        %5218 = vmatmul.f32.gmra.mxu0 %v4729
        %v5219 = vpop.f32.mrf.mxu0
        %v5220 = vadd.f32 0.0, %v5219
        %5221 = vmatmul.f32.gmra.mxu0 %v4734
        %v5222 = vpop.f32.mrf.mxu0
        %v5223 = vadd.f32 0.0, %v5222
        %5224 = vdwg.mxu0
        %5225 = vmatpush.msra.mxu0 %v4833
        %5226 = vmatpush.msra.mxu0 %v4830
        %5227 = vmatpush.msra.mxu0 %v4827
        %5228 = vmatpush.msra.mxu0 %v4824
        %5229 = vmatpush.msra.mxu0 %v4821
        %5230 = vmatpush.msra.mxu0 %v4818
        %5231 = vmatpush.msra.mxu0 %v4815
        %5232 = vmatpush.msra.mxu0 %v4812
        %5233 = vmatpush.msra.mxu0 %v4809
        %5234 = vmatpush.msra.mxu0 %v4806
        %5235 = vmatpush.msra.mxu0 %v4803
        %5236 = vmatpush.msra.mxu0 %v4800
        %5237 = vmatpush.msra.mxu0 %v4797
        %5238 = vmatpush.msra.mxu0 %v4794
        %5239 = vmatpush.msra.mxu0 %v4791
        %5240 = vmatpush.msra.mxu0 %v4788
        %5241 = vmatmul.f32.gmra.mxu0 %v4700
        %v5242 = vpop.f32.mrf.mxu0
        %v5243 = vadd.f32 %v5202, %v5242
        %5244 = vmatmul.f32.gmra.mxu0 %v4705
        %v5245 = vpop.f32.mrf.mxu0
        %v5246 = vadd.f32 %v5205, %v5245
        %5247 = vmatmul.f32.gmra.mxu0 %v4710
        %v5248 = vpop.f32.mrf.mxu0
        %v5249 = vadd.f32 %v5208, %v5248
        %5250 = vmatmul.f32.gmra.mxu0 %v4715
        %v5251 = vpop.f32.mrf.mxu0
        %v5252 = vadd.f32 %v5211, %v5251
        %5253 = vmatmul.f32.gmra.mxu0 %v4720
        %v5254 = vpop.f32.mrf.mxu0
        %v5255 = vadd.f32 %v5214, %v5254
        %5256 = vmatmul.f32.gmra.mxu0 %v4725
        %v5257 = vpop.f32.mrf.mxu0
        %v5258 = vadd.f32 %v5217, %v5257
        %5259 = vmatmul.f32.gmra.mxu0 %v4730
        %v5260 = vpop.f32.mrf.mxu0
        %v5261 = vadd.f32 %v5220, %v5260
        %5262 = vmatmul.f32.gmra.mxu0 %v4735
        %v5263 = vpop.f32.mrf.mxu0
        %v5264 = vadd.f32 %v5223, %v5263
        %5265 = vdwg.mxu0
        %5266 = vmatpush.msra.mxu0 %v4881
        %5267 = vmatpush.msra.mxu0 %v4878
        %5268 = vmatpush.msra.mxu0 %v4875
        %5269 = vmatpush.msra.mxu0 %v4872
        %5270 = vmatpush.msra.mxu0 %v4869
        %5271 = vmatpush.msra.mxu0 %v4866
        %5272 = vmatpush.msra.mxu0 %v4863
        %5273 = vmatpush.msra.mxu0 %v4860
        %5274 = vmatpush.msra.mxu0 %v4857
        %5275 = vmatpush.msra.mxu0 %v4854
        %5276 = vmatpush.msra.mxu0 %v4851
        %5277 = vmatpush.msra.mxu0 %v4848
        %5278 = vmatpush.msra.mxu0 %v4845
        %5279 = vmatpush.msra.mxu0 %v4842
        %5280 = vmatpush.msra.mxu0 %v4839
        %5281 = vmatpush.msra.mxu0 %v4836
        %5282 = vmatmul.f32.gmra.mxu0 %v4701
        %v5283 = vpop.f32.mrf.mxu0
        %v5284 = vadd.f32 %v5243, %v5283
        %5285 = vmatmul.f32.gmra.mxu0 %v4706
        %v5286 = vpop.f32.mrf.mxu0
        %v5287 = vadd.f32 %v5246, %v5286
        %5288 = vmatmul.f32.gmra.mxu0 %v4711
        %v5289 = vpop.f32.mrf.mxu0
        %v5290 = vadd.f32 %v5249, %v5289
        %5291 = vmatmul.f32.gmra.mxu0 %v4716
        %v5292 = vpop.f32.mrf.mxu0
        %v5293 = vadd.f32 %v5252, %v5292
        %5294 = vmatmul.f32.gmra.mxu0 %v4721
        %v5295 = vpop.f32.mrf.mxu0
        %v5296 = vadd.f32 %v5255, %v5295
        %5297 = vmatmul.f32.gmra.mxu0 %v4726
        %v5298 = vpop.f32.mrf.mxu0
        %v5299 = vadd.f32 %v5258, %v5298
        %5300 = vmatmul.f32.gmra.mxu0 %v4731
        %v5301 = vpop.f32.mrf.mxu0
        %v5302 = vadd.f32 %v5261, %v5301
        %5303 = vmatmul.f32.gmra.mxu0 %v4736
        %v5304 = vpop.f32.mrf.mxu0
        %v5305 = vadd.f32 %v5264, %v5304
        %5306 = vdwg.mxu0
        %5307 = vmatpush.msra.mxu0 %v4929
        %5308 = vmatpush.msra.mxu0 %v4926
        %5309 = vmatpush.msra.mxu0 %v4923
        %5310 = vmatpush.msra.mxu0 %v4920
        %5311 = vmatpush.msra.mxu0 %v4917
        %5312 = vmatpush.msra.mxu0 %v4914
        %5313 = vmatpush.msra.mxu0 %v4911
        %5314 = vmatpush.msra.mxu0 %v4908
        %5315 = vmatpush.msra.mxu0 %v4905
        %5316 = vmatpush.msra.mxu0 %v4902
        %5317 = vmatpush.msra.mxu0 %v4899
        %5318 = vmatpush.msra.mxu0 %v4896
        %5319 = vmatpush.msra.mxu0 %v4893
        %5320 = vmatpush.msra.mxu0 %v4890
        %5321 = vmatpush.msra.mxu0 %v4887
        %5322 = vmatpush.msra.mxu0 %v4884
        %5323 = vmatmul.f32.gmra.mxu0 %v4702
        %v5324 = vpop.f32.mrf.mxu0
        %v5325 = vadd.f32 %v5284, %v5324
        %5326 = vmatmul.f32.gmra.mxu0 %v4707
        %v5327 = vpop.f32.mrf.mxu0
        %v5328 = vadd.f32 %v5287, %v5327
        %5329 = vmatmul.f32.gmra.mxu0 %v4712
        %v5330 = vpop.f32.mrf.mxu0
        %v5331 = vadd.f32 %v5290, %v5330
        %5332 = vmatmul.f32.gmra.mxu0 %v4717
        %v5333 = vpop.f32.mrf.mxu0
        %v5334 = vadd.f32 %v5293, %v5333
        %5335 = vmatmul.f32.gmra.mxu0 %v4722
        %v5336 = vpop.f32.mrf.mxu0
        %v5337 = vadd.f32 %v5296, %v5336
        %5338 = vmatmul.f32.gmra.mxu0 %v4727
        %v5339 = vpop.f32.mrf.mxu0
        %v5340 = vadd.f32 %v5299, %v5339
        %5341 = vmatmul.f32.gmra.mxu0 %v4732
        %v5342 = vpop.f32.mrf.mxu0
        %v5343 = vadd.f32 %v5302, %v5342
        %5344 = vmatmul.f32.gmra.mxu0 %v4737
        %v5345 = vpop.f32.mrf.mxu0
        %v5346 = vadd.f32 %v5305, %v5345
        %5347 = vdwg.mxu0
        %5348 = vmatpush.msra.mxu0 0.0
        %5349 = vmatpush.msra.mxu0 0.0
        %5350 = vmatpush.msra.mxu0 0.0
        %5351 = vmatpush.msra.mxu0 0.0
        %5352 = vmatpush.msra.mxu0 0.0
        %5353 = vmatpush.msra.mxu0 0.0
        %5354 = vmatpush.msra.mxu0 0.0
        %5355 = vmatpush.msra.mxu0 0.0
        %5356 = vmatpush.msra.mxu0 %v4953
        %5357 = vmatpush.msra.mxu0 %v4950
        %5358 = vmatpush.msra.mxu0 %v4947
        %5359 = vmatpush.msra.mxu0 %v4944
        %5360 = vmatpush.msra.mxu0 %v4941
        %5361 = vmatpush.msra.mxu0 %v4938
        %5362 = vmatpush.msra.mxu0 %v4935
        %5363 = vmatpush.msra.mxu0 %v4932
        %5364 = vmatmul.f32.gmra.mxu0 %v4956
        %v5365 = vpop.f32.mrf.mxu0
        %v5366 = vadd.f32 %v5325, %v5365
        %5367 = vmatmul.f32.gmra.mxu0 %v4959
        %v5368 = vpop.f32.mrf.mxu0
        %v5369 = vadd.f32 %v5328, %v5368
        %5370 = vmatmul.f32.gmra.mxu0 %v4962
        %v5371 = vpop.f32.mrf.mxu0
        %v5372 = vadd.f32 %v5331, %v5371
        %5373 = vmatmul.f32.gmra.mxu0 %v4965
        %v5374 = vpop.f32.mrf.mxu0
        %v5375 = vadd.f32 %v5334, %v5374
        %5376 = vmatmul.f32.gmra.mxu0 %v4968
        %v5377 = vpop.f32.mrf.mxu0
        %v5378 = vadd.f32 %v5337, %v5377
        %5379 = vmatmul.f32.gmra.mxu0 %v4971
        %v5380 = vpop.f32.mrf.mxu0
        %v5381 = vadd.f32 %v5340, %v5380
        %5382 = vmatmul.f32.gmra.mxu0 %v4974
        %v5383 = vpop.f32.mrf.mxu0
        %v5384 = vadd.f32 %v5343, %v5383
        %5385 = vmatmul.f32.gmra.mxu0 %v4977
        %v5386 = vpop.f32.mrf.mxu0
        %v5387 = vadd.f32 %v5346, %v5386
        %5388 = vdwg.mxu0
        %5389 = vmatpush.msra.mxu0 %v4786
        %5390 = vmatpush.msra.mxu0 %v4783
        %5391 = vmatpush.msra.mxu0 %v4780
        %5392 = vmatpush.msra.mxu0 %v4777
        %5393 = vmatpush.msra.mxu0 %v4774
        %5394 = vmatpush.msra.mxu0 %v4771
        %5395 = vmatpush.msra.mxu0 %v4768
        %5396 = vmatpush.msra.mxu0 %v4765
        %5397 = vmatpush.msra.mxu0 %v4762
        %5398 = vmatpush.msra.mxu0 %v4759
        %5399 = vmatpush.msra.mxu0 %v4756
        %5400 = vmatpush.msra.mxu0 %v4753
        %5401 = vmatpush.msra.mxu0 %v4750
        %5402 = vmatpush.msra.mxu0 %v4747
        %5403 = vmatpush.msra.mxu0 %v4744
        %5404 = vmatpush.msra.mxu0 %v4741
        %5405 = vmatmul.f32.gmra.mxu0 %v4699
        %v5406 = vpop.f32.mrf.mxu0
        %v5407 = vadd.f32 0.0, %v5406
        %5408 = vmatmul.f32.gmra.mxu0 %v4704
        %v5409 = vpop.f32.mrf.mxu0
        %v5410 = vadd.f32 0.0, %v5409
        %5411 = vmatmul.f32.gmra.mxu0 %v4709
        %v5412 = vpop.f32.mrf.mxu0
        %v5413 = vadd.f32 0.0, %v5412
        %5414 = vmatmul.f32.gmra.mxu0 %v4714
        %v5415 = vpop.f32.mrf.mxu0
        %v5416 = vadd.f32 0.0, %v5415
        %5417 = vmatmul.f32.gmra.mxu0 %v4719
        %v5418 = vpop.f32.mrf.mxu0
        %v5419 = vadd.f32 0.0, %v5418
        %5420 = vmatmul.f32.gmra.mxu0 %v4724
        %v5421 = vpop.f32.mrf.mxu0
        %v5422 = vadd.f32 0.0, %v5421
        %5423 = vmatmul.f32.gmra.mxu0 %v4729
        %v5424 = vpop.f32.mrf.mxu0
        %v5425 = vadd.f32 0.0, %v5424
        %5426 = vmatmul.f32.gmra.mxu0 %v4734
        %v5427 = vpop.f32.mrf.mxu0
        %v5428 = vadd.f32 0.0, %v5427
        %5429 = vdwg.mxu0
        %5430 = vmatpush.msra.mxu0 %v4834
        %5431 = vmatpush.msra.mxu0 %v4831
        %5432 = vmatpush.msra.mxu0 %v4828
        %5433 = vmatpush.msra.mxu0 %v4825
        %5434 = vmatpush.msra.mxu0 %v4822
        %5435 = vmatpush.msra.mxu0 %v4819
        %5436 = vmatpush.msra.mxu0 %v4816
        %5437 = vmatpush.msra.mxu0 %v4813
        %5438 = vmatpush.msra.mxu0 %v4810
        %5439 = vmatpush.msra.mxu0 %v4807
        %5440 = vmatpush.msra.mxu0 %v4804
        %5441 = vmatpush.msra.mxu0 %v4801
        %5442 = vmatpush.msra.mxu0 %v4798
        %5443 = vmatpush.msra.mxu0 %v4795
        %5444 = vmatpush.msra.mxu0 %v4792
        %5445 = vmatpush.msra.mxu0 %v4789
        %5446 = vmatmul.f32.gmra.mxu0 %v4700
        %v5447 = vpop.f32.mrf.mxu0
        %v5448 = vadd.f32 %v5407, %v5447
        %5449 = vmatmul.f32.gmra.mxu0 %v4705
        %v5450 = vpop.f32.mrf.mxu0
        %v5451 = vadd.f32 %v5410, %v5450
        %5452 = vmatmul.f32.gmra.mxu0 %v4710
        %v5453 = vpop.f32.mrf.mxu0
        %v5454 = vadd.f32 %v5413, %v5453
        %5455 = vmatmul.f32.gmra.mxu0 %v4715
        %v5456 = vpop.f32.mrf.mxu0
        %v5457 = vadd.f32 %v5416, %v5456
        %5458 = vmatmul.f32.gmra.mxu0 %v4720
        %v5459 = vpop.f32.mrf.mxu0
        %v5460 = vadd.f32 %v5419, %v5459
        %5461 = vmatmul.f32.gmra.mxu0 %v4725
        %v5462 = vpop.f32.mrf.mxu0
        %v5463 = vadd.f32 %v5422, %v5462
        %5464 = vmatmul.f32.gmra.mxu0 %v4730
        %v5465 = vpop.f32.mrf.mxu0
        %v5466 = vadd.f32 %v5425, %v5465
        %5467 = vmatmul.f32.gmra.mxu0 %v4735
        %v5468 = vpop.f32.mrf.mxu0
        %v5469 = vadd.f32 %v5428, %v5468
        %5470 = vdwg.mxu0
        %5471 = vmatpush.msra.mxu0 %v4882
        %5472 = vmatpush.msra.mxu0 %v4879
        %5473 = vmatpush.msra.mxu0 %v4876
        %5474 = vmatpush.msra.mxu0 %v4873
        %5475 = vmatpush.msra.mxu0 %v4870
        %5476 = vmatpush.msra.mxu0 %v4867
        %5477 = vmatpush.msra.mxu0 %v4864
        %5478 = vmatpush.msra.mxu0 %v4861
        %5479 = vmatpush.msra.mxu0 %v4858
        %5480 = vmatpush.msra.mxu0 %v4855
        %5481 = vmatpush.msra.mxu0 %v4852
        %5482 = vmatpush.msra.mxu0 %v4849
        %5483 = vmatpush.msra.mxu0 %v4846
        %5484 = vmatpush.msra.mxu0 %v4843
        %5485 = vmatpush.msra.mxu0 %v4840
        %5486 = vmatpush.msra.mxu0 %v4837
        %5487 = vmatmul.f32.gmra.mxu0 %v4701
        %v5488 = vpop.f32.mrf.mxu0
        %v5489 = vadd.f32 %v5448, %v5488
        %5490 = vmatmul.f32.gmra.mxu0 %v4706
        %v5491 = vpop.f32.mrf.mxu0
        %v5492 = vadd.f32 %v5451, %v5491
        %5493 = vmatmul.f32.gmra.mxu0 %v4711
        %v5494 = vpop.f32.mrf.mxu0
        %v5495 = vadd.f32 %v5454, %v5494
        %5496 = vmatmul.f32.gmra.mxu0 %v4716
        %v5497 = vpop.f32.mrf.mxu0
        %v5498 = vadd.f32 %v5457, %v5497
        %5499 = vmatmul.f32.gmra.mxu0 %v4721
        %v5500 = vpop.f32.mrf.mxu0
        %v5501 = vadd.f32 %v5460, %v5500
        %5502 = vmatmul.f32.gmra.mxu0 %v4726
        %v5503 = vpop.f32.mrf.mxu0
        %v5504 = vadd.f32 %v5463, %v5503
        %5505 = vmatmul.f32.gmra.mxu0 %v4731
        %v5506 = vpop.f32.mrf.mxu0
        %v5507 = vadd.f32 %v5466, %v5506
        %5508 = vmatmul.f32.gmra.mxu0 %v4736
        %v5509 = vpop.f32.mrf.mxu0
        %v5510 = vadd.f32 %v5469, %v5509
        %5511 = vdwg.mxu0
        %5512 = vmatpush.msra.mxu0 %v4930
        %5513 = vmatpush.msra.mxu0 %v4927
        %5514 = vmatpush.msra.mxu0 %v4924
        %5515 = vmatpush.msra.mxu0 %v4921
        %5516 = vmatpush.msra.mxu0 %v4918
        %5517 = vmatpush.msra.mxu0 %v4915
        %5518 = vmatpush.msra.mxu0 %v4912
        %5519 = vmatpush.msra.mxu0 %v4909
        %5520 = vmatpush.msra.mxu0 %v4906
        %5521 = vmatpush.msra.mxu0 %v4903
        %5522 = vmatpush.msra.mxu0 %v4900
        %5523 = vmatpush.msra.mxu0 %v4897
        %5524 = vmatpush.msra.mxu0 %v4894
        %5525 = vmatpush.msra.mxu0 %v4891
        %5526 = vmatpush.msra.mxu0 %v4888
        %5527 = vmatpush.msra.mxu0 %v4885
        %5528 = vmatmul.f32.gmra.mxu0 %v4702
        %v5529 = vpop.f32.mrf.mxu0
        %v5530 = vadd.f32 %v5489, %v5529
        %5531 = vmatmul.f32.gmra.mxu0 %v4707
        %v5532 = vpop.f32.mrf.mxu0
        %v5533 = vadd.f32 %v5492, %v5532
        %5534 = vmatmul.f32.gmra.mxu0 %v4712
        %v5535 = vpop.f32.mrf.mxu0
        %v5536 = vadd.f32 %v5495, %v5535
        %5537 = vmatmul.f32.gmra.mxu0 %v4717
        %v5538 = vpop.f32.mrf.mxu0
        %v5539 = vadd.f32 %v5498, %v5538
        %5540 = vmatmul.f32.gmra.mxu0 %v4722
        %v5541 = vpop.f32.mrf.mxu0
        %v5542 = vadd.f32 %v5501, %v5541
        %5543 = vmatmul.f32.gmra.mxu0 %v4727
        %v5544 = vpop.f32.mrf.mxu0
        %v5545 = vadd.f32 %v5504, %v5544
        %5546 = vmatmul.f32.gmra.mxu0 %v4732
        %v5547 = vpop.f32.mrf.mxu0
        %v5548 = vadd.f32 %v5507, %v5547
        %5549 = vmatmul.f32.gmra.mxu0 %v4737
        %v5550 = vpop.f32.mrf.mxu0
        %v5551 = vadd.f32 %v5510, %v5550
        %5552 = vdwg.mxu0
        %5553 = vmatpush.msra.mxu0 0.0
        %5554 = vmatpush.msra.mxu0 0.0
        %5555 = vmatpush.msra.mxu0 0.0
        %5556 = vmatpush.msra.mxu0 0.0
        %5557 = vmatpush.msra.mxu0 0.0
        %5558 = vmatpush.msra.mxu0 0.0
        %5559 = vmatpush.msra.mxu0 0.0
        %5560 = vmatpush.msra.mxu0 0.0
        %5561 = vmatpush.msra.mxu0 %v4954
        %5562 = vmatpush.msra.mxu0 %v4951
        %5563 = vmatpush.msra.mxu0 %v4948
        %5564 = vmatpush.msra.mxu0 %v4945
        %5565 = vmatpush.msra.mxu0 %v4942
        %5566 = vmatpush.msra.mxu0 %v4939
        %5567 = vmatpush.msra.mxu0 %v4936
        %5568 = vmatpush.msra.mxu0 %v4933
        %5569 = vmatmul.f32.gmra.mxu0 %v4956
        %v5570 = vpop.f32.mrf.mxu0
        %v5571 = vadd.f32 %v5530, %v5570
        %5572 = vmatmul.f32.gmra.mxu0 %v4959
        %v5573 = vpop.f32.mrf.mxu0
        %v5574 = vadd.f32 %v5533, %v5573
        %5575 = vmatmul.f32.gmra.mxu0 %v4962
        %v5576 = vpop.f32.mrf.mxu0
        %v5577 = vadd.f32 %v5536, %v5576
        %5578 = vmatmul.f32.gmra.mxu0 %v4965
        %v5579 = vpop.f32.mrf.mxu0
        %v5580 = vadd.f32 %v5539, %v5579
        %5581 = vmatmul.f32.gmra.mxu0 %v4968
        %v5582 = vpop.f32.mrf.mxu0
        %v5583 = vadd.f32 %v5542, %v5582
        %5584 = vmatmul.f32.gmra.mxu0 %v4971
        %v5585 = vpop.f32.mrf.mxu0
        %v5586 = vadd.f32 %v5545, %v5585
        %5587 = vmatmul.f32.gmra.mxu0 %v4974
        %v5588 = vpop.f32.mrf.mxu0
        %v5589 = vadd.f32 %v5548, %v5588
        %5590 = vmatmul.f32.gmra.mxu0 %v4977
        %v5591 = vpop.f32.mrf.mxu0
        %v5592 = vadd.f32 %v5551, %v5591
        %5593 = vdwg.mxu0
        %v5594 = vsel %vm2766, %v5161, 0.0
        %v5595 = vsel %vm2767, %v5366, 0.0
        %v5596 = vsel %vm2768, %v5571, 0.0
        %v5597 = vsel %vm2766, %v5164, 0.0
        %v5598 = vsel %vm2767, %v5369, 0.0
        %v5599 = vsel %vm2768, %v5574, 0.0
        %v5600 = vsel %vm2766, %v5167, 0.0
        %v5601 = vsel %vm2767, %v5372, 0.0
        %v5602 = vsel %vm2768, %v5577, 0.0
        %v5603 = vsel %vm2766, %v5170, 0.0
        %v5604 = vsel %vm2767, %v5375, 0.0
        %v5605 = vsel %vm2768, %v5580, 0.0
        %v5606 = vsel %vm2766, %v5173, 0.0
        %v5607 = vsel %vm2767, %v5378, 0.0
        %v5608 = vsel %vm2768, %v5583, 0.0
        %v5609 = vsel %vm2766, %v5176, 0.0
        %v5610 = vsel %vm2767, %v5381, 0.0
        %v5611 = vsel %vm2768, %v5586, 0.0
        %v5612 = vsel %vm2766, %v5179, 0.0
        %v5613 = vsel %vm2767, %v5384, 0.0
        %v5614 = vsel %vm2768, %v5589, 0.0
        %v5615 = vsel %vm2766, %v5182, 0.0
        %v5616 = vsel %vm2767, %v5387, 0.0
        %v5617 = vsel %vm2768, %v5592, 0.0
        %v5618 = vadd.f32 %v5594, %v5595
        %v5619 = vsel %vm482, %v5596, 0.0
        %v5620 = vadd.f32 %v5618, %v5619
        %5621 = vadd.xlane.f32.xlu0 %v5620
        %v5622 = vpop.xlane.xlu0 %5621
        %v5623 = vadd.f32 %v5597, %v5598
        %v5624 = vsel %vm482, %v5599, 0.0
        %v5625 = vadd.f32 %v5623, %v5624
        %5626 = vadd.xlane.f32.xlu0 %v5625
        %v5627 = vpop.xlane.xlu0 %5626
        %v5628 = vadd.f32 %v5600, %v5601
        %v5629 = vsel %vm482, %v5602, 0.0
        %v5630 = vadd.f32 %v5628, %v5629
        %5631 = vadd.xlane.f32.xlu0 %v5630
        %v5632 = vpop.xlane.xlu0 %5631
        %v5633 = vadd.f32 %v5603, %v5604
        %v5634 = vsel %vm482, %v5605, 0.0
        %v5635 = vadd.f32 %v5633, %v5634
        %5636 = vadd.xlane.f32.xlu0 %v5635
        %v5637 = vpop.xlane.xlu0 %5636
        %v5638 = vadd.f32 %v5606, %v5607
        %v5639 = vsel %vm482, %v5608, 0.0
        %v5640 = vadd.f32 %v5638, %v5639
        %5641 = vadd.xlane.f32.xlu0 %v5640
        %v5642 = vpop.xlane.xlu0 %5641
        %v5643 = vadd.f32 %v5609, %v5610
        %v5644 = vsel %vm482, %v5611, 0.0
        %v5645 = vadd.f32 %v5643, %v5644
        %5646 = vadd.xlane.f32.xlu0 %v5645
        %v5647 = vpop.xlane.xlu0 %5646
        %v5648 = vadd.f32 %v5612, %v5613
        %v5649 = vsel %vm482, %v5614, 0.0
        %v5650 = vadd.f32 %v5648, %v5649
        %5651 = vadd.xlane.f32.xlu0 %v5650
        %v5652 = vpop.xlane.xlu0 %5651
        %v5653 = vadd.f32 %v5615, %v5616
        %v5654 = vsel %vm482, %v5617, 0.0
        %v5655 = vadd.f32 %v5653, %v5654
        %5656 = vadd.xlane.f32.xlu0 %v5655
        %v5657 = vpop.xlane.xlu0 %5656
        %v5658 = vmul.f32 %v5622, 0.00390625
        %v5659 = vmul.f32 %v5627, 0.00390625
        %v5660 = vmul.f32 %v5632, 0.00390625
        %v5661 = vmul.f32 %v5637, 0.00390625
        %v5662 = vmul.f32 %v5642, 0.00390625
        %v5663 = vmul.f32 %v5647, 0.00390625
        %v5664 = vmul.f32 %v5652, 0.00390625
        %v5665 = vmul.f32 %v5657, 0.00390625
        %v5666 = vld [vmem:[%s3] sm:$0xff]
        %v5667 = vld [vmem:[%s3 + $0x8] sm:$0xff]
        %v5669 = vsel %vm2049, %v5666, 0
        %v5672 = vsel %vm2049, %v5667, 0
        %5674 = vmatpush.msra.mxu0 0.0
        %5675 = vmatpush.msra.mxu0 0.0
        %5676 = vmatpush.msra.mxu0 0.0
        %5677 = vmatpush.msra.mxu0 0.0
        %5678 = vmatpush.msra.mxu0 0.0
        %5679 = vmatpush.msra.mxu0 0.0
        %5680 = vmatpush.msra.mxu0 0.0
        %5681 = vmatpush.msra.mxu0 0.0
        %5682 = vmatpush.msra.mxu0 %v5665
        %5683 = vmatpush.msra.mxu0 %v5664
        %5684 = vmatpush.msra.mxu0 %v5663
        %5685 = vmatpush.msra.mxu0 %v5662
        %5686 = vmatpush.msra.mxu0 %v5661
        %5687 = vmatpush.msra.mxu0 %v5660
        %5688 = vmatpush.msra.mxu0 %v5659
        %5689 = vmatpush.msra.mxu0 %v5658
        %5690 = vmatmul.f32.gmra.mxu0 %v5669
        %v5691 = vpop.f32.mrf.mxu0
        %v5692 = vadd.f32 0.0, %v5691
        %5693 = vmatmul.f32.gmra.mxu0 %v5672
        %v5694 = vpop.f32.mrf.mxu0
        %v5695 = vadd.f32 0.0, %v5694
        %5696 = vdwg.mxu0
        %v5697 = vmax.f32 %v5692, 0.0
        %v5698 = vmax.f32 %v5695, 0.0
        %v5699 = vld [vmem:[%s4] sm:$0xff]
        %v5700 = vld [vmem:[%s4 + $0x8] sm:$0xff]
        %v5701 = vld [vmem:[%s4 + $0x10] sm:$0xff]
        %v5702 = vld [vmem:[%s4 + $0x18] sm:$0xff]
        %v5703 = vld [vmem:[%s4 + $0x20] sm:$0xff]
        %v5704 = vld [vmem:[%s4 + $0x28] sm:$0xff]
        %v5705 = vld [vmem:[%s4 + $0x30] sm:$0xff]
        %v5706 = vld [vmem:[%s4 + $0x38] sm:$0xff]
        %vm5707 = vcmask 130048
        %v5709 = vsel %vm5707, %v5699, 0
        %v5712 = vsel %vm5707, %v5700, 0
        %v5715 = vsel %vm5707, %v5701, 0
        %v5718 = vsel %vm5707, %v5702, 0
        %v5721 = vsel %vm5707, %v5703, 0
        %v5724 = vsel %vm5707, %v5704, 0
        %v5727 = vsel %vm5707, %v5705, 0
        %v5730 = vsel %vm5707, %v5706, 0
        %5732 = vmatpush.msra.mxu0 0.0
        %5733 = vmatpush.msra.mxu0 0.0
        %5734 = vmatpush.msra.mxu0 0.0
        %5735 = vmatpush.msra.mxu0 0.0
        %5736 = vmatpush.msra.mxu0 0.0
        %5737 = vmatpush.msra.mxu0 0.0
        %5738 = vmatpush.msra.mxu0 0.0
        %5739 = vmatpush.msra.mxu0 0.0
        %5740 = vmatpush.msra.mxu0 0.0
        %5741 = vmatpush.msra.mxu0 0.0
        %5742 = vmatpush.msra.mxu0 0.0
        %5743 = vmatpush.msra.mxu0 0.0
        %5744 = vmatpush.msra.mxu0 0.0
        %5745 = vmatpush.msra.mxu0 0.0
        %5746 = vmatpush.msra.mxu0 %v5698
        %5747 = vmatpush.msra.mxu0 %v5697
        %5748 = vmatmul.f32.gmra.mxu0 %v5709
        %v5749 = vpop.f32.mrf.mxu0
        %v5750 = vadd.f32 0.0, %v5749
        %5751 = vmatmul.f32.gmra.mxu0 %v5712
        %v5752 = vpop.f32.mrf.mxu0
        %v5753 = vadd.f32 0.0, %v5752
        %5754 = vmatmul.f32.gmra.mxu0 %v5715
        %v5755 = vpop.f32.mrf.mxu0
        %v5756 = vadd.f32 0.0, %v5755
        %5757 = vmatmul.f32.gmra.mxu0 %v5718
        %v5758 = vpop.f32.mrf.mxu0
        %v5759 = vadd.f32 0.0, %v5758
        %5760 = vmatmul.f32.gmra.mxu0 %v5721
        %v5761 = vpop.f32.mrf.mxu0
        %v5762 = vadd.f32 0.0, %v5761
        %5763 = vmatmul.f32.gmra.mxu0 %v5724
        %v5764 = vpop.f32.mrf.mxu0
        %v5765 = vadd.f32 0.0, %v5764
        %5766 = vmatmul.f32.gmra.mxu0 %v5727
        %v5767 = vpop.f32.mrf.mxu0
        %v5768 = vadd.f32 0.0, %v5767
        %5769 = vmatmul.f32.gmra.mxu0 %v5730
        %v5770 = vpop.f32.mrf.mxu0
        %v5771 = vadd.f32 0.0, %v5770
        %5772 = vdwg.mxu0
        %v5773 = vxor.u32 %v5750, 2147483648
        %v5774 = vxor.u32 %v5753, 2147483648
        %v5775 = vxor.u32 %v5756, 2147483648
        %v5776 = vxor.u32 %v5759, 2147483648
        %v5777 = vxor.u32 %v5762, 2147483648
        %v5778 = vxor.u32 %v5765, 2147483648
        %v5779 = vxor.u32 %v5768, 2147483648
        %v5780 = vxor.u32 %v5771, 2147483648
        %v5781 = vmul.f32 %v5773, 1.442695
        %v5782 = vpow.pop %v5781
        %v5783 = vmul.f32 %v5774, 1.442695
        %v5784 = vpow.pop %v5783
        %v5785 = vmul.f32 %v5775, 1.442695
        %v5786 = vpow.pop %v5785
        %v5787 = vmul.f32 %v5776, 1.442695
        %v5788 = vpow.pop %v5787
        %v5789 = vmul.f32 %v5777, 1.442695
        %v5790 = vpow.pop %v5789
        %v5791 = vmul.f32 %v5778, 1.442695
        %v5792 = vpow.pop %v5791
        %v5793 = vmul.f32 %v5779, 1.442695
        %v5794 = vpow.pop %v5793
        %v5795 = vmul.f32 %v5780, 1.442695
        %v5796 = vpow.pop %v5795
        %v5797 = vadd.f32 %v5782, 1.0
        %v5798 = vadd.f32 %v5784, 1.0
        %v5799 = vadd.f32 %v5786, 1.0
        %v5800 = vadd.f32 %v5788, 1.0
        %v5801 = vadd.f32 %v5790, 1.0
        %v5802 = vadd.f32 %v5792, 1.0
        %v5803 = vadd.f32 %v5794, 1.0
        %v5804 = vadd.f32 %v5796, 1.0
        %v5805 = vrcp.pop %v5797
        %v5806 = vmul.f32 %v5797, %v5805
        %v5807 = vsub.f32 1.0, %v5806
        %v5808 = vmul.f32 %v5805, %v5807
        %v5809 = vadd.f32 %v5805, %v5808
        %vm5810 = vweird.f32 %v5797
        %vm5811 = vweird.f32 %v5805
        %vm5812 = vmor %vm5810, %vm5811
        %v5813 = vsel %vm5812, %v5805, %v5809
        %v5814 = vand.u32 2147483647, %v5797
        %vm5815 = vcmp.eq.f32.partialorder %v5814, 8.507059e+37
        %v5816 = vand.u32 %v5797, 2147483648
        %v5817 = vor.u32 1.1754944e-38, %v5816
        %v5818 = vsel %vm5815, %v5817, %v5813
        %v5819 = vmul.f32 1.0, %v5818
        %v5820 = vrcp.pop %v5798
        %v5821 = vmul.f32 %v5798, %v5820
        %v5822 = vsub.f32 1.0, %v5821
        %v5823 = vmul.f32 %v5820, %v5822
        %v5824 = vadd.f32 %v5820, %v5823
        %vm5825 = vweird.f32 %v5798
        %vm5826 = vweird.f32 %v5820
        %vm5827 = vmor %vm5825, %vm5826
        %v5828 = vsel %vm5827, %v5820, %v5824
        %v5829 = vand.u32 2147483647, %v5798
        %vm5830 = vcmp.eq.f32.partialorder %v5829, 8.507059e+37
        %v5831 = vand.u32 %v5798, 2147483648
        %v5832 = vor.u32 1.1754944e-38, %v5831
        %v5833 = vsel %vm5830, %v5832, %v5828
        %v5834 = vmul.f32 1.0, %v5833
        %v5835 = vrcp.pop %v5799
        %v5836 = vmul.f32 %v5799, %v5835
        %v5837 = vsub.f32 1.0, %v5836
        %v5838 = vmul.f32 %v5835, %v5837
        %v5839 = vadd.f32 %v5835, %v5838
        %vm5840 = vweird.f32 %v5799
        %vm5841 = vweird.f32 %v5835
        %vm5842 = vmor %vm5840, %vm5841
        %v5843 = vsel %vm5842, %v5835, %v5839
        %v5844 = vand.u32 2147483647, %v5799
        %vm5845 = vcmp.eq.f32.partialorder %v5844, 8.507059e+37
        %v5846 = vand.u32 %v5799, 2147483648
        %v5847 = vor.u32 1.1754944e-38, %v5846
        %v5848 = vsel %vm5845, %v5847, %v5843
        %v5849 = vmul.f32 1.0, %v5848
        %v5850 = vrcp.pop %v5800
        %v5851 = vmul.f32 %v5800, %v5850
        %v5852 = vsub.f32 1.0, %v5851
        %v5853 = vmul.f32 %v5850, %v5852
        %v5854 = vadd.f32 %v5850, %v5853
        %vm5855 = vweird.f32 %v5800
        %vm5856 = vweird.f32 %v5850
        %vm5857 = vmor %vm5855, %vm5856
        %v5858 = vsel %vm5857, %v5850, %v5854
        %v5859 = vand.u32 2147483647, %v5800
        %vm5860 = vcmp.eq.f32.partialorder %v5859, 8.507059e+37
        %v5861 = vand.u32 %v5800, 2147483648
        %v5862 = vor.u32 1.1754944e-38, %v5861
        %v5863 = vsel %vm5860, %v5862, %v5858
        %v5864 = vmul.f32 1.0, %v5863
        %v5865 = vrcp.pop %v5801
        %v5866 = vmul.f32 %v5801, %v5865
        %v5867 = vsub.f32 1.0, %v5866
        %v5868 = vmul.f32 %v5865, %v5867
        %v5869 = vadd.f32 %v5865, %v5868
        %vm5870 = vweird.f32 %v5801
        %vm5871 = vweird.f32 %v5865
        %vm5872 = vmor %vm5870, %vm5871
        %v5873 = vsel %vm5872, %v5865, %v5869
        %v5874 = vand.u32 2147483647, %v5801
        %vm5875 = vcmp.eq.f32.partialorder %v5874, 8.507059e+37
        %v5876 = vand.u32 %v5801, 2147483648
        %v5877 = vor.u32 1.1754944e-38, %v5876
        %v5878 = vsel %vm5875, %v5877, %v5873
        %v5879 = vmul.f32 1.0, %v5878
        %v5880 = vrcp.pop %v5802
        %v5881 = vmul.f32 %v5802, %v5880
        %v5882 = vsub.f32 1.0, %v5881
        %v5883 = vmul.f32 %v5880, %v5882
        %v5884 = vadd.f32 %v5880, %v5883
        %vm5885 = vweird.f32 %v5802
        %vm5886 = vweird.f32 %v5880
        %vm5887 = vmor %vm5885, %vm5886
        %v5888 = vsel %vm5887, %v5880, %v5884
        %v5889 = vand.u32 2147483647, %v5802
        %vm5890 = vcmp.eq.f32.partialorder %v5889, 8.507059e+37
        %v5891 = vand.u32 %v5802, 2147483648
        %v5892 = vor.u32 1.1754944e-38, %v5891
        %v5893 = vsel %vm5890, %v5892, %v5888
        %v5894 = vmul.f32 1.0, %v5893
        %v5895 = vrcp.pop %v5803
        %v5896 = vmul.f32 %v5803, %v5895
        %v5897 = vsub.f32 1.0, %v5896
        %v5898 = vmul.f32 %v5895, %v5897
        %v5899 = vadd.f32 %v5895, %v5898
        %vm5900 = vweird.f32 %v5803
        %vm5901 = vweird.f32 %v5895
        %vm5902 = vmor %vm5900, %vm5901
        %v5903 = vsel %vm5902, %v5895, %v5899
        %v5904 = vand.u32 2147483647, %v5803
        %vm5905 = vcmp.eq.f32.partialorder %v5904, 8.507059e+37
        %v5906 = vand.u32 %v5803, 2147483648
        %v5907 = vor.u32 1.1754944e-38, %v5906
        %v5908 = vsel %vm5905, %v5907, %v5903
        %v5909 = vmul.f32 1.0, %v5908
        %v5910 = vrcp.pop %v5804
        %v5911 = vmul.f32 %v5804, %v5910
        %v5912 = vsub.f32 1.0, %v5911
        %v5913 = vmul.f32 %v5910, %v5912
        %v5914 = vadd.f32 %v5910, %v5913
        %vm5915 = vweird.f32 %v5804
        %vm5916 = vweird.f32 %v5910
        %vm5917 = vmor %vm5915, %vm5916
        %v5918 = vsel %vm5917, %v5910, %v5914
        %v5919 = vand.u32 2147483647, %v5804
        %vm5920 = vcmp.eq.f32.partialorder %v5919, 8.507059e+37
        %v5921 = vand.u32 %v5804, 2147483648
        %v5922 = vor.u32 1.1754944e-38, %v5921
        %v5923 = vsel %vm5920, %v5922, %v5918
        %v5924 = vmul.f32 1.0, %v5923
        %v5925 = vld [vmem:[%s299] sm:$0xff]
        %v5926 = vld [vmem:[%s299 + $0x8] sm:$0xff]
        %v5927 = vld [vmem:[%s299 + $0x10] sm:$0xff]
        %v5928 = vld [vmem:[%s299 + $0x18] sm:$0xff]
        %v5929 = vld [vmem:[%s299 + $0x20] sm:$0xff]
        %v5930 = vld [vmem:[%s299 + $0x28] sm:$0xff]
        %v5931 = vld [vmem:[%s299 + $0x30] sm:$0xff]
        %v5932 = vld [vmem:[%s299 + $0x38] sm:$0xff]
        %v5933 = vld [vmem:[%s299 + $0x40] sm:$0xff]
        %v5934 = vld [vmem:[%s299 + $0x48] sm:$0xff]
        %v5935 = vld [vmem:[%s299 + $0x50] sm:$0xff]
        %v5936 = vld [vmem:[%s299 + $0x58] sm:$0xff]
        %v5937 = vld [vmem:[%s299 + $0x60] sm:$0xff]
        %v5938 = vld [vmem:[%s299 + $0x68] sm:$0xff]
        %v5939 = vld [vmem:[%s299 + $0x70] sm:$0xff]
        %v5940 = vld [vmem:[%s299 + $0x78] sm:$0xff]
        %v5941 = vld [vmem:[%s299 + $0x80] sm:$0xff]
        %v5942 = vld [vmem:[%s299 + $0x88] sm:$0xff]
        %v5943 = vld [vmem:[%s299 + $0x90] sm:$0xff]
        %v5944 = vld [vmem:[%s299 + $0x98] sm:$0xff]
        %v5945 = vld [vmem:[%s299 + $0xa0] sm:$0xff]
        %v5946 = vld [vmem:[%s299 + $0xa8] sm:$0xff]
        %v5947 = vld [vmem:[%s299 + $0xb0] sm:$0xff]
        %v5948 = vld [vmem:[%s299 + $0xb8] sm:$0xff]
        %5950 = vset.pattern.permute.xlu0 0
        %5951 = vperm.xlu0 %5950, %v5819
        %v5952 = vpop.permute.xlu0 %5951
        %5955 = vset.pattern.permute.xlu0 0
        %5956 = vperm.xlu0 %5955, %v5834
        %v5957 = vpop.permute.xlu0 %5956
        %5960 = vset.pattern.permute.xlu0 0
        %5961 = vperm.xlu0 %5960, %v5849
        %v5962 = vpop.permute.xlu0 %5961
        %5965 = vset.pattern.permute.xlu0 0
        %5966 = vperm.xlu0 %5965, %v5864
        %v5967 = vpop.permute.xlu0 %5966
        %5970 = vset.pattern.permute.xlu0 0
        %5971 = vperm.xlu0 %5970, %v5879
        %v5972 = vpop.permute.xlu0 %5971
        %5975 = vset.pattern.permute.xlu0 0
        %5976 = vperm.xlu0 %5975, %v5894
        %v5977 = vpop.permute.xlu0 %5976
        %5980 = vset.pattern.permute.xlu0 0
        %5981 = vperm.xlu0 %5980, %v5909
        %v5982 = vpop.permute.xlu0 %5981
        %5985 = vset.pattern.permute.xlu0 0
        %5986 = vperm.xlu0 %5985, %v5924
        %v5987 = vpop.permute.xlu0 %5986
        %v5989 = vmul.f32 %v5161, %v5952
        %v5990 = vmul.f32 %v5366, %v5952
        %v5991 = vmul.f32 %v5571, %v5952
        %v5992 = vmul.f32 %v5164, %v5957
        %v5993 = vmul.f32 %v5369, %v5957
        %v5994 = vmul.f32 %v5574, %v5957
        %v5995 = vmul.f32 %v5167, %v5962
        %v5996 = vmul.f32 %v5372, %v5962
        %v5997 = vmul.f32 %v5577, %v5962
        %v5998 = vmul.f32 %v5170, %v5967
        %v5999 = vmul.f32 %v5375, %v5967
        %v6000 = vmul.f32 %v5580, %v5967
        %v6001 = vmul.f32 %v5173, %v5972
        %v6002 = vmul.f32 %v5378, %v5972
        %v6003 = vmul.f32 %v5583, %v5972
        %v6004 = vmul.f32 %v5176, %v5977
        %v6005 = vmul.f32 %v5381, %v5977
        %v6006 = vmul.f32 %v5586, %v5977
        %v6007 = vmul.f32 %v5179, %v5982
        %v6008 = vmul.f32 %v5384, %v5982
        %v6009 = vmul.f32 %v5589, %v5982
        %v6010 = vmul.f32 %v5182, %v5987
        %v6011 = vmul.f32 %v5387, %v5987
        %v6012 = vmul.f32 %v5592, %v5987
        %6037 = vrot.lane.b32.xlu0 %v5925, 109
        %v6038 = vpop.permute.xlu0 %6037
        %6039 = vrot.lane.b32.xlu0 %v5926, 109
        %v6040 = vpop.permute.xlu0 %6039
        %6041 = vrot.lane.b32.xlu0 %v5927, 109
        %v6042 = vpop.permute.xlu0 %6041
        %6043 = vrot.lane.b32.xlu0 %v5928, 109
        %v6044 = vpop.permute.xlu0 %6043
        %6045 = vrot.lane.b32.xlu0 %v5929, 109
        %v6046 = vpop.permute.xlu0 %6045
        %6047 = vrot.lane.b32.xlu0 %v5930, 109
        %v6048 = vpop.permute.xlu0 %6047
        %6049 = vrot.lane.b32.xlu0 %v5931, 109
        %v6050 = vpop.permute.xlu0 %6049
        %6051 = vrot.lane.b32.xlu0 %v5932, 109
        %v6052 = vpop.permute.xlu0 %6051
        %6053 = vrot.lane.b32.xlu0 %v5933, 109
        %v6054 = vpop.permute.xlu0 %6053
        %6055 = vrot.lane.b32.xlu0 %v5934, 109
        %v6056 = vpop.permute.xlu0 %6055
        %6057 = vrot.lane.b32.xlu0 %v5935, 109
        %v6058 = vpop.permute.xlu0 %6057
        %6059 = vrot.lane.b32.xlu0 %v5936, 109
        %v6060 = vpop.permute.xlu0 %6059
        %6061 = vrot.lane.b32.xlu0 %v5937, 109
        %v6062 = vpop.permute.xlu0 %6061
        %6063 = vrot.lane.b32.xlu0 %v5938, 109
        %v6064 = vpop.permute.xlu0 %6063
        %6065 = vrot.lane.b32.xlu0 %v5939, 109
        %v6066 = vpop.permute.xlu0 %6065
        %6067 = vrot.lane.b32.xlu0 %v5940, 109
        %v6068 = vpop.permute.xlu0 %6067
        %6069 = vrot.lane.b32.xlu0 %v5941, 109
        %v6070 = vpop.permute.xlu0 %6069
        %6071 = vrot.lane.b32.xlu0 %v5942, 109
        %v6072 = vpop.permute.xlu0 %6071
        %6073 = vrot.lane.b32.xlu0 %v5943, 109
        %v6074 = vpop.permute.xlu0 %6073
        %6075 = vrot.lane.b32.xlu0 %v5944, 109
        %v6076 = vpop.permute.xlu0 %6075
        %6077 = vrot.lane.b32.xlu0 %v5945, 109
        %v6078 = vpop.permute.xlu0 %6077
        %6079 = vrot.lane.b32.xlu0 %v5946, 109
        %v6080 = vpop.permute.xlu0 %6079
        %6081 = vrot.lane.b32.xlu0 %v5947, 109
        %v6082 = vpop.permute.xlu0 %6081
        %6083 = vrot.lane.b32.xlu0 %v5948, 109
        %v6084 = vpop.permute.xlu0 %6083
        %v6085 = vsel %vm1084, %v6038, %v6040
        %v6086 = vsel %vm1084, %v6040, %v6042
        %v6087 = vsel %vm1084, %v6044, %v6046
        %v6088 = vsel %vm1084, %v6046, %v6048
        %v6089 = vsel %vm1084, %v6050, %v6052
        %v6090 = vsel %vm1084, %v6052, %v6054
        %v6091 = vsel %vm1084, %v6056, %v6058
        %v6092 = vsel %vm1084, %v6058, %v6060
        %v6093 = vsel %vm1084, %v6062, %v6064
        %v6094 = vsel %vm1084, %v6064, %v6066
        %v6095 = vsel %vm1084, %v6068, %v6070
        %v6096 = vsel %vm1084, %v6070, %v6072
        %v6097 = vsel %vm1084, %v6074, %v6076
        %v6098 = vsel %vm1084, %v6076, %v6078
        %v6099 = vsel %vm1084, %v6080, %v6082
        %v6100 = vsel %vm1084, %v6082, %v6084
        %v6125 = vadd.f32 %v5989, %v6085
        %v6126 = vadd.f32 %v5990, %v6086
        %v6127 = vadd.f32 %v5991, %v6042
        %v6128 = vadd.f32 %v5992, %v6087
        %v6129 = vadd.f32 %v5993, %v6088
        %v6130 = vadd.f32 %v5994, %v6048
        %v6131 = vadd.f32 %v5995, %v6089
        %v6132 = vadd.f32 %v5996, %v6090
        %v6133 = vadd.f32 %v5997, %v6054
        %v6134 = vadd.f32 %v5998, %v6091
        %v6135 = vadd.f32 %v5999, %v6092
        %v6136 = vadd.f32 %v6000, %v6060
        %v6137 = vadd.f32 %v6001, %v6093
        %v6138 = vadd.f32 %v6002, %v6094
        %v6139 = vadd.f32 %v6003, %v6066
        %v6140 = vadd.f32 %v6004, %v6095
        %v6141 = vadd.f32 %v6005, %v6096
        %v6142 = vadd.f32 %v6006, %v6072
        %v6143 = vadd.f32 %v6007, %v6097
        %v6144 = vadd.f32 %v6008, %v6098
        %v6145 = vadd.f32 %v6009, %v6078
        %v6146 = vadd.f32 %v6010, %v6099
        %v6147 = vadd.f32 %v6011, %v6100
        %v6148 = vadd.f32 %v6012, %v6084
        %6149 = vst [vmem:[%s346] sm:$0xff] %v6125
        %6150 = vst [vmem:[%s346 + $0x8] sm:$0xff] %v6126
        %6151 = vst.msk [vmem:[%s346 + $0x10] sm:$0xff] %vm482, %v6127
        %6152 = vst [vmem:[%s346 + $0x18] sm:$0xff] %v6128
        %6153 = vst [vmem:[%s346 + $0x20] sm:$0xff] %v6129
        %6154 = vst.msk [vmem:[%s346 + $0x28] sm:$0xff] %vm482, %v6130
        %6155 = vst [vmem:[%s346 + $0x30] sm:$0xff] %v6131
        %6156 = vst [vmem:[%s346 + $0x38] sm:$0xff] %v6132
        %6157 = vst.msk [vmem:[%s346 + $0x40] sm:$0xff] %vm482, %v6133
        %6158 = vst [vmem:[%s346 + $0x48] sm:$0xff] %v6134
        %6159 = vst [vmem:[%s346 + $0x50] sm:$0xff] %v6135
        %6160 = vst.msk [vmem:[%s346 + $0x58] sm:$0xff] %vm482, %v6136
        %6161 = vst [vmem:[%s346 + $0x60] sm:$0xff] %v6137
        %6162 = vst [vmem:[%s346 + $0x68] sm:$0xff] %v6138
        %6163 = vst.msk [vmem:[%s346 + $0x70] sm:$0xff] %vm482, %v6139
        %6164 = vst [vmem:[%s346 + $0x78] sm:$0xff] %v6140
        %6165 = vst [vmem:[%s346 + $0x80] sm:$0xff] %v6141
        %6166 = vst.msk [vmem:[%s346 + $0x88] sm:$0xff] %vm482, %v6142
        %6167 = vst [vmem:[%s346 + $0x90] sm:$0xff] %v6143
        %6168 = vst [vmem:[%s346 + $0x98] sm:$0xff] %v6144
        %6169 = vst.msk [vmem:[%s346 + $0xa0] sm:$0xff] %vm482, %v6145
        %6170 = vst [vmem:[%s346 + $0xa8] sm:$0xff] %v6146
        %6171 = vst [vmem:[%s346 + $0xb0] sm:$0xff] %v6147
        %6172 = vst.msk [vmem:[%s346 + $0xb8] sm:$0xff] %vm482, %v6148
        %s6173 = sand.u32 %s187, 1
        %s6174 = scalar_lea.sflag [#allocation8], %s6173
        %s6175 = sand.u32 %s187, 1
        %s6176 = smul.addr %s6175, 192
        %s6177 = scalar_lea.vmem [#allocation14], %s6176
        // Predicated region
        $region65: #{tpu_custom_call.1} parent=47 // pred_check
          %p6178 = pneg %p197
        $region66: #{tpu_custom_call.1} parent=47 // pred_check_branch
          %6180 = sbr.rel (%p6178) target = $region68
        $region67: #{tpu_custom_call.1} parent=47 // pred_region
          %6182 = vsyncadd %s6174, 0
          %s6183 = smul.addr %s27, 24
          %s6184 = smul.addr %s6183, 8
          %s6185 = scalar_lea.hbm %s7, %s6184
          %s6186 = sshll.u32 %s6177, 4
          %s6187 = int_to_ptr.vmem [resolvable:$true] %s6186
          %s6188 = sshll.u32 %s6185, 4
          %s6189 = int_to_ptr.hbm [resolvable:$true] %s6188
          %6194 = dma.vmem_to_hbm [thread:$0]  %s6187, 3072, %s6189, %s6174, 384, 384, 24
        $region68: #{tpu_custom_call.1} parent=47 // pred_fallthru
          _
      $region48: #{tpu_custom_call.1} parent=5 // pred_fallthru
        _
      %p6195 = scmp.le.s32.totalorder 2, %s22
      // Predicated region
      $region69: #{tpu_custom_call.1} parent=5 // pred_check
        %p6196 = pneg %p6195
      $region70: #{tpu_custom_call.1} parent=5 // pred_check_branch
        %6198 = sbr.rel (%p6196) target = $region72
      $region71: #{tpu_custom_call.1} parent=5 // pred_region
        %s6199 = ssub.s32 %s22, 2
        // Predicated region
        $region73: #{tpu_custom_call.1} parent=71 // pred_check
          %p6200 = pneg %p203
        $region74: #{tpu_custom_call.1} parent=71 // pred_check_branch
          %6202 = sbr.rel (%p6200) target = $region76
        $region75: #{tpu_custom_call.1} parent=71 // pred_region
          %s6203 = sand.u32 %s188, 1
          %s6204 = scalar_lea.sflag [#allocation8], %s6203
          %s6205 = sand.u32 %s188, 1
          %s6206 = smul.addr %s6205, 192
          %s6207 = scalar_lea.vmem [#allocation14], %s6206
          %6209 = dma.done %s6204, 3072
        $region76: #{tpu_custom_call.1} parent=71 // pred_fallthru
          _
      $region72: #{tpu_custom_call.1} parent=5 // pred_fallthru
        _
    $region6: #{tpu_custom_call.1} parent=1 // loop_footer
      %s26 = sadd.s32 1, %s22
    $region7: #{tpu_custom_call.1} parent=1 // loop_footer_branch
      %21 = sbr.rel target = $region3
    $region8: #{tpu_custom_call.1} parent=1 // loop_exit
      _
    %6210 = vsyncpa [#allocation7], 1
    %s6211 = scalar_lea.sflag [#allocation7], 1
    %6212 = vsyncpa %s6211, 1
    %6213 = vsyncpa [#allocation11], 1
    %6214 = vsyncpa [#allocation8], 1
    %s6215 = scalar_lea.sflag [#allocation8], 1
    %6216 = vsyncpa %s6215, 1
    %6217 = vsyncpa [#allocation9], 1
    %s6218 = scalar_lea.sflag [#allocation9], 1
    %6219 = vsyncpa %s6218, 1

</llo_original>
